<compile_context>
chip_gen: v5e
topology: v5e:2x2
jax: 0.10.0
libtpu: 0.0.40
codegen_flags: <defaults>
</compile_context>

<pallas_src>
import jax
import jax.numpy as jnp
from jax.experimental import pallas as pl
from jax.experimental.pallas import tpu as pltpu  # noqa: F401  (TPU backend / params)

EPS = 1e-5


# ----------------------------------------------------------------------------
# Pallas kernels
# ----------------------------------------------------------------------------
def _conv_bn_prelu_kernel(w_ref, x_ref, shift_ref, alpha_ref, o_ref):
    """o = prelu((W @ X) + shift);  W:(Cout,K)  X:(K,M)  shift:(Cout,1)  alpha:(1,1)."""
    y = jnp.dot(w_ref[...], x_ref[...], preferred_element_type=jnp.float32)
    y = y + shift_ref[...]                        # per-output-channel shift (lane bcast)
    y = jnp.where(y > 0, y, alpha_ref[...] * y)   # PReLU
    o_ref[...] = y.astype(o_ref.dtype)


def _max4_kernel(a_ref, b_ref, c_ref, d_ref, o_ref):
    o_ref[...] = jnp.maximum(jnp.maximum(a_ref[...], b_ref[...]),
                             jnp.maximum(c_ref[...], d_ref[...]))


def _fc_fused_kernel(x_ref, w1_ref, b1_ref, w2_ref, b2_ref, o_ref):
    """Fused Linear->Linear.  w1 is bf16 (HBM-bytes win), accumulation in f32."""
    h = jnp.dot(x_ref[...].astype(jnp.bfloat16), w1_ref[...],
                preferred_element_type=jnp.float32) + b1_ref[...]
    o_ref[...] = (jnp.dot(h, w2_ref[...], preferred_element_type=jnp.float32)
                  + b2_ref[...]).astype(o_ref.dtype)


# ----------------------------------------------------------------------------
# Wrappers around pallas_call
# ----------------------------------------------------------------------------
def conv_bn_prelu(x_cnhw, wmat, shift, alpha, *, k, pad):
    """Conv2d(stride=1) + folded BN(eval) + PReLU.  x is (Cin, N, H, W)."""
    C, N, H, W = x_cnhw.shape
    Cout = wmat.shape[0]
    Ho = H + 2 * pad - k + 1
    Wo = W + 2 * pad - k + 1
    xp = jnp.pad(x_cnhw, ((0, 0), (0, 0), (pad, pad), (pad, pad)))

    # im2col directly in (Cin*k*k, N*Ho*Wo) layout (no transpose, K order = ci*k*k+kh*k+kw).
    cols = []
    for kh in range(k):
        for kw in range(k):
            cols.append(jax.lax.slice(xp, (0, 0, kh, kw), (C, N, kh + Ho, kw + Wo)))
    patches = jnp.stack(cols, axis=1).reshape(C * k * k, N * Ho * Wo)

    out = pl.pallas_call(
        _conv_bn_prelu_kernel,
        out_shape=jax.ShapeDtypeStruct((Cout, N * Ho * Wo), jnp.float32),
    )(wmat, patches, shift, alpha)
    return out.reshape(Cout, N, Ho, Wo)


def maxpool_2x2_s2_p1(x_cnhw):
    """PyTorch MaxPool2d(kernel_size=2, stride=2, padding=1) on (C, N, H, W) input."""
    C, N, H, W = x_cnhw.shape
    Ho = (H + 2 - 2) // 2 + 1
    Wo = (W + 2 - 2) // 2 + 1
    ph = 2 * Ho - 1 - H            # low-side pad so every window is in-bounds
    pw = 2 * Wo - 1 - W
    xp = jnp.pad(x_cnhw, ((0, 0), (0, 0), (1, ph), (1, pw)),
                 constant_values=-jnp.inf)           # maxpool pads with -inf

    def corner(di, dj):            # strided view of one 2x2-window corner (XLA glue)
        v = jax.lax.slice(xp, (0, 0, di, dj),
                          (C, N, di + 2 * (Ho - 1) + 1, dj + 2 * (Wo - 1) + 1),
                          (1, 1, 2, 2))
        return v.reshape(C * N, Ho * Wo)             # lane-dense 2-D view

    a, b, c, d = corner(0, 0), corner(0, 1), corner(1, 0), corner(1, 1)
    out = pl.pallas_call(
        _max4_kernel,
        out_shape=jax.ShapeDtypeStruct((C * N, Ho * Wo), x_cnhw.dtype),
    )(a, b, c, d)
    return out.reshape(C, N, Ho, Wo)


def fc_fused(flat, w1t_bf16, b1, w2t, b2):
    """flat:(N,2048)  w1t:(2048,1024)bf16  w2t:(1024,4)f32  →  (N,4)."""
    N = flat.shape[0]
    return pl.pallas_call(
        _fc_fused_kernel,
        out_shape=jax.ShapeDtypeStruct((N, w2t.shape[1]), jnp.float32),
    )(flat, w1t_bf16, b1.reshape(1, -1), w2t, b2.reshape(1, -1))


# ----------------------------------------------------------------------------
# Parameters (deterministic synthetic init) and one-time folding/packing
# ----------------------------------------------------------------------------
def init_params(key):
    ks = jax.random.split(key, 16)

    def normal(k, shape, s=1.0):
        return s * jax.random.normal(k, shape, jnp.float32)

    def bn(k, c):
        k1, k2, k3, k4 = jax.random.split(k, 4)
        gamma = jax.random.uniform(k1, (c,), jnp.float32, 0.8, 1.2)
        beta = 0.1 * jax.random.normal(k2, (c,), jnp.float32)
        mean = 0.1 * jax.random.normal(k3, (c,), jnp.float32)
        var = jax.random.uniform(k4, (c,), jnp.float32, 0.5, 1.5)
        return gamma, beta, mean, var

    p = {}
    p['bn0'] = bn(ks[0], 3)
    p['w1'] = normal(ks[1], (8, 3, 5, 5), 1.0 / (3 * 25) ** 0.5)
    p['b1'] = normal(ks[2], (8,), 0.05)
    p['bn1'] = bn(ks[3], 8)
    p['alpha1'] = jnp.float32(0.25)
    p['w2'] = normal(ks[4], (8, 8, 3, 3), 1.0 / 72 ** 0.5)
    p['b2'] = normal(ks[5], (8,), 0.05)
    p['bn2'] = bn(ks[6], 8)
    p['alpha2'] = jnp.float32(0.25)
    p['w3'] = normal(ks[7], (8, 8, 3, 3), 1.0 / 72 ** 0.5)
    p['b3'] = normal(ks[8], (8,), 0.05)
    p['bn3'] = bn(ks[9], 8)
    p['alpha3'] = jnp.float32(0.25)
    p['fc1_w'] = normal(ks[10], (1024, 2048), 1.0 / 2048 ** 0.5)   # torch (out, in)
    p['fc1_b'] = normal(ks[11], (1024,), 0.05)
    p['fc2_w'] = normal(ks[12], (4, 1024), 1.0 / 1024 ** 0.5)
    p['fc2_b'] = normal(ks[13], (4,), 0.05)
    return p


def fold_params(p):
    """Exact eval-mode BN folding + one-time weight packing (no per-forward transposes)."""
    d = {}
    # BN0 (before conv1): exact per-channel affine applied to the input.
    g0, be0, m0, v0 = p['bn0']
    s0 = g0 / jnp.sqrt(v0 + EPS)
    d['bn0_scale'] = s0.reshape(-1, 1, 1, 1)
    d['bn0_shift'] = (be0 - m0 * s0).reshape(-1, 1, 1, 1)

    def fold_conv(w, b, bnp):
        g, be, m, v = bnp
        s = g / jnp.sqrt(v + EPS)
        w_eff = w * s[:, None, None, None]        # fold BN scale into weight (exact)
        shift = s * b + be - m * s                # conv bias + BN shift
        cout = w.shape[0]
        return w_eff.reshape(cout, -1), shift.reshape(cout, 1)

    d['wmat1'], d['shift1'] = fold_conv(p['w1'], p['b1'], p['bn1'])
    d['wmat2'], d['shift2'] = fold_conv(p['w2'], p['b2'], p['bn2'])
    d['wmat3'], d['shift3'] = fold_conv(p['w3'], p['b3'], p['bn3'])
    d['alpha1'] = jnp.asarray(p['alpha1'], jnp.float32).reshape(1, 1)
    d['alpha2'] = jnp.asarray(p['alpha2'], jnp.float32).reshape(1, 1)
    d['alpha3'] = jnp.asarray(p['alpha3'], jnp.float32).reshape(1, 1)

    # FC weights: pre-transpose ONCE; FC1 stored in bf16 (dominant HBM read halved).
    d['fc1_wT'] = p['fc1_w'].T.astype(jnp.bfloat16)     # (2048, 1024)
    d['fc1_b'] = p['fc1_b'].astype(jnp.float32)
    d['fc2_wT'] = p['fc2_w'].T.astype(jnp.float32)      # (1024, 4)
    d['fc2_b'] = p['fc2_b'].astype(jnp.float32)
    return d


# ----------------------------------------------------------------------------
# Forward pass
# ----------------------------------------------------------------------------
def simple_cnn_forward(x, params):
    # NCHW -> CNHW once: conv/pool stages run channel-major so matmul outputs are lane-dense.
    y = jnp.transpose(x, (1, 0, 2, 3))
    y = y * params['bn0_scale'] + params['bn0_shift']          # BatchNorm2d(3), eval
    y = conv_bn_prelu(y, params['wmat1'], params['shift1'], params['alpha1'], k=5, pad=2)
    y = maxpool_2x2_s2_p1(y)
    y = conv_bn_prelu(y, params['wmat2'], params['shift2'], params['alpha2'], k=3, pad=1)
    # Dropout(p=0.1): identity in eval mode
    y = maxpool_2x2_s2_p1(y)
    y = conv_bn_prelu(y, params['wmat3'], params['shift3'], params['alpha3'], k=3, pad=1)
    # flatten: (C, N, H, W) -> (N, C*H*W), matching torch .view on contiguous NCHW
    C, N, H, W = y.shape
    flat = jnp.transpose(y, (1, 0, 2, 3)).reshape(N, C * H * W)
    return fc_fused(flat, params['fc1_wT'], params['fc1_b'],
                    params['fc2_wT'], params['fc2_b'])


# ----------------------------------------------------------------------------
# Pure-JAX reference (eval-mode PyTorch semantics) for validation
# ----------------------------------------------------------------------------
def reference_forward(x, p):
    hi = jax.lax.Precision.HIGHEST

    def bn(x, bnp):
        g, b, m, v = bnp
        s = g / jnp.sqrt(v + EPS)
        return x * s[None, :, None, None] + (b - m * s)[None, :, None, None]

    def conv(x, w, b, pad):
        y = jax.lax.conv_general_dilated(
            x, w, (1, 1), [(pad, pad), (pad, pad)],
            dimension_numbers=('NCHW', 'OIHW', 'NCHW'), precision=hi)
        return y + b[None, :, None, None]

    def prelu(x, a):
        return jnp.where(x > 0, x, a * x)

    def pool(x):
        return jax.lax.reduce_window(x, -jnp.inf, jax.lax.max,
                                     (1, 1, 2, 2), (1, 1, 2, 2),
                                     ((0, 0), (0, 0), (1, 1), (1, 1)))

    y = bn(x, p['bn0'])
    y = prelu(bn(conv(y, p['w1'], p['b1'], 2), p['bn1']), p['alpha1'])
    y = pool(y)
    y = prelu(bn(conv(y, p['w2'], p['b2'], 1), p['bn2']), p['alpha2'])
    y = pool(y)
    y = prelu(bn(conv(y, p['w3'], p['b3'], 1), p['bn3']), p['alpha3'])
    flat = y.reshape(y.shape[0], -1)
    h = jnp.dot(flat, p['fc1_w'].T, precision=hi) + p['fc1_b']
    return jnp.dot(h, p['fc2_w'].T, precision=hi) + p['fc2_b']


# ----------------------------------------------------------------------------
if __name__ == "__main__":
    key = jax.random.PRNGKey(0)
    kx, kp = jax.random.split(key)
    # Input implied by the module: 3 channels, 61x61 spatial (init_ft_length=61).
    x = jax.random.normal(kx, (2, 3, 61, 61), jnp.float32)

    raw = init_params(kp)
    params = fold_params(raw)

    fwd = jax.jit(simple_cnn_forward)
    out = jax.block_until_ready(fwd(x, params))

    assert out.shape == (2, 4), out.shape
    assert bool(jnp.all(jnp.isfinite(out)))

    ref = reference_forward(x, raw)
    assert bool(jnp.allclose(out, ref, rtol=1e-2, atol=1e-2)), (out, ref)

    print("KERNEL_OK")
</pallas_src>

<mosaic_0001>
module attributes {stable_mosaic.version = 11 : i64} {
  func.func @_conv_bn_prelu_kernel(%arg0: memref<8x75xf32, #tpu.memory_space<vmem>>, %arg1: memref<75x7442xf32, #tpu.memory_space<vmem>>, %arg2: memref<8x1xf32, #tpu.memory_space<vmem>>, %arg3: memref<1x1xf32, #tpu.memory_space<vmem>>, %arg4: memref<8x7442xf32, #tpu.memory_space<vmem>>) attributes {dimension_semantics = [], scalar_prefetch = 0 : i64, scratch_operands = 0 : i64, tpu.core_type = #tpu.core_type<tc>} {
    %c0 = arith.constant 0 : index
    %c0_0 = arith.constant 0 : index
    %0 = vector.load %arg0[%c0, %c0_0] : memref<8x75xf32, #tpu.memory_space<vmem>>, vector<8x75xf32>
    %c0_1 = arith.constant 0 : index
    %c0_2 = arith.constant 0 : index
    %1 = vector.load %arg1[%c0_1, %c0_2] : memref<75x7442xf32, #tpu.memory_space<vmem>>, vector<75x7442xf32>
    %cst = arith.constant dense<0.000000e+00> : vector<8x7442xf32>
    %2 = tpu.matmul %0, %1, %cst {dimension_numbers = #tpu.dot_dimension_numbers<[1], [0], [0], [1], [0, 0, 1, 1], [], []>} : vector<8x75xf32>, vector<75x7442xf32>, vector<8x7442xf32> -> vector<8x7442xf32>
    %c0_3 = arith.constant 0 : index
    %c0_4 = arith.constant 0 : index
    %3 = vector.load %arg2[%c0_3, %c0_4] : memref<8x1xf32, #tpu.memory_space<vmem>>, vector<8x1xf32>
    %4 = vector.broadcast %3 : vector<8x1xf32> to vector<8x7442xf32>
    %5 = arith.addf %2, %4 : vector<8x7442xf32>
    %cst_5 = arith.constant 0.000000e+00 : f32
    %6 = vector.broadcast %cst_5 : f32 to vector<8x7442xf32>
    %7 = arith.cmpf ogt, %5, %6 : vector<8x7442xf32>
    %c0_6 = arith.constant 0 : index
    %c0_7 = arith.constant 0 : index
    %8 = vector.load %arg3[%c0_6, %c0_7] : memref<1x1xf32, #tpu.memory_space<vmem>>, vector<1x1xf32>
    %9 = vector.broadcast %8 : vector<1x1xf32> to vector<8x7442xf32>
    %10 = arith.mulf %9, %5 : vector<8x7442xf32>
    %11 = arith.select %7, %5, %10 : vector<8x7442xi1>, vector<8x7442xf32>
    %c0_8 = arith.constant 0 : index
    %c0_9 = arith.constant 0 : index
    %12 = vector.load %arg4[%c0_8, %c0_9] : memref<8x7442xf32, #tpu.memory_space<vmem>>, vector<8x7442xf32>
    tpu.vector_store %arg4[%c0_8, %c0_9], %11 {strides = array<i32>} : memref<8x7442xf32, #tpu.memory_space<vmem>>, vector<8x7442xf32>,
    return
  }
}

module attributes {stable_mosaic.version = 11 : i64} {
  func.func @_max4_kernel(%arg0: memref<16x961xf32, #tpu.memory_space<vmem>>, %arg1: memref<16x961xf32, #tpu.memory_space<vmem>>, %arg2: memref<16x961xf32, #tpu.memory_space<vmem>>, %arg3: memref<16x961xf32, #tpu.memory_space<vmem>>, %arg4: memref<16x961xf32, #tpu.memory_space<vmem>>) attributes {dimension_semantics = [], scalar_prefetch = 0 : i64, scratch_operands = 0 : i64, tpu.core_type = #tpu.core_type<tc>} {
    %c0 = arith.constant 0 : index
    %c0_0 = arith.constant 0 : index
    %0 = vector.load %arg0[%c0, %c0_0] : memref<16x961xf32, #tpu.memory_space<vmem>>, vector<16x961xf32>
    %c0_1 = arith.constant 0 : index
    %c0_2 = arith.constant 0 : index
    %1 = vector.load %arg1[%c0_1, %c0_2] : memref<16x961xf32, #tpu.memory_space<vmem>>, vector<16x961xf32>
    %2 = arith.maximumf %0, %1 : vector<16x961xf32>
    %c0_3 = arith.constant 0 : index
    %c0_4 = arith.constant 0 : index
    %3 = vector.load %arg2[%c0_3, %c0_4] : memref<16x961xf32, #tpu.memory_space<vmem>>, vector<16x961xf32>
    %c0_5 = arith.constant 0 : index
    %c0_6 = arith.constant 0 : index
    %4 = vector.load %arg3[%c0_5, %c0_6] : memref<16x961xf32, #tpu.memory_space<vmem>>, vector<16x961xf32>
    %5 = arith.maximumf %3, %4 : vector<16x961xf32>
    %6 = arith.maximumf %2, %5 : vector<16x961xf32>
    %c0_7 = arith.constant 0 : index
    %c0_8 = arith.constant 0 : index
    %7 = vector.load %arg4[%c0_7, %c0_8] : memref<16x961xf32, #tpu.memory_space<vmem>>, vector<16x961xf32>
    tpu.vector_store %arg4[%c0_7, %c0_8], %6 {strides = array<i32>} : memref<16x961xf32, #tpu.memory_space<vmem>>, vector<16x961xf32>,
    return
  }
}

module attributes {stable_mosaic.version = 11 : i64} {
  func.func @_conv_bn_prelu_kernel(%arg0: memref<8x72xf32, #tpu.memory_space<vmem>>, %arg1: memref<72x1922xf32, #tpu.memory_space<vmem>>, %arg2: memref<8x1xf32, #tpu.memory_space<vmem>>, %arg3: memref<1x1xf32, #tpu.memory_space<vmem>>, %arg4: memref<8x1922xf32, #tpu.memory_space<vmem>>) attributes {dimension_semantics = [], scalar_prefetch = 0 : i64, scratch_operands = 0 : i64, tpu.core_type = #tpu.core_type<tc>} {
    %c0 = arith.constant 0 : index
    %c0_0 = arith.constant 0 : index
    %0 = vector.load %arg0[%c0, %c0_0] : memref<8x72xf32, #tpu.memory_space<vmem>>, vector<8x72xf32>
    %c0_1 = arith.constant 0 : index
    %c0_2 = arith.constant 0 : index
    %1 = vector.load %arg1[%c0_1, %c0_2] : memref<72x1922xf32, #tpu.memory_space<vmem>>, vector<72x1922xf32>
    %cst = arith.constant dense<0.000000e+00> : vector<8x1922xf32>
    %2 = tpu.matmul %0, %1, %cst {dimension_numbers = #tpu.dot_dimension_numbers<[1], [0], [0], [1], [0, 0, 1, 1], [], []>} : vector<8x72xf32>, vector<72x1922xf32>, vector<8x1922xf32> -> vector<8x1922xf32>
    %c0_3 = arith.constant 0 : index
    %c0_4 = arith.constant 0 : index
    %3 = vector.load %arg2[%c0_3, %c0_4] : memref<8x1xf32, #tpu.memory_space<vmem>>, vector<8x1xf32>
    %4 = vector.broadcast %3 : vector<8x1xf32> to vector<8x1922xf32>
    %5 = arith.addf %2, %4 : vector<8x1922xf32>
    %cst_5 = arith.constant 0.000000e+00 : f32
    %6 = vector.broadcast %cst_5 : f32 to vector<8x1922xf32>
    %7 = arith.cmpf ogt, %5, %6 : vector<8x1922xf32>
    %c0_6 = arith.constant 0 : index
    %c0_7 = arith.constant 0 : index
    %8 = vector.load %arg3[%c0_6, %c0_7] : memref<1x1xf32, #tpu.memory_space<vmem>>, vector<1x1xf32>
    %9 = vector.broadcast %8 : vector<1x1xf32> to vector<8x1922xf32>
    %10 = arith.mulf %9, %5 : vector<8x1922xf32>
    %11 = arith.select %7, %5, %10 : vector<8x1922xi1>, vector<8x1922xf32>
    %c0_8 = arith.constant 0 : index
    %c0_9 = arith.constant 0 : index
    %12 = vector.load %arg4[%c0_8, %c0_9] : memref<8x1922xf32, #tpu.memory_space<vmem>>, vector<8x1922xf32>
    tpu.vector_store %arg4[%c0_8, %c0_9], %11 {strides = array<i32>} : memref<8x1922xf32, #tpu.memory_space<vmem>>, vector<8x1922xf32>,
    return
  }
}

module attributes {stable_mosaic.version = 11 : i64} {
  func.func @_max4_kernel(%arg0: memref<16x256xf32, #tpu.memory_space<vmem>>, %arg1: memref<16x256xf32, #tpu.memory_space<vmem>>, %arg2: memref<16x256xf32, #tpu.memory_space<vmem>>, %arg3: memref<16x256xf32, #tpu.memory_space<vmem>>, %arg4: memref<16x256xf32, #tpu.memory_space<vmem>>) attributes {dimension_semantics = [], scalar_prefetch = 0 : i64, scratch_operands = 0 : i64, tpu.core_type = #tpu.core_type<tc>} {
    %c0 = arith.constant 0 : index
    %c0_0 = arith.constant 0 : index
    %0 = vector.load %arg0[%c0, %c0_0] : memref<16x256xf32, #tpu.memory_space<vmem>>, vector<16x256xf32>
    %c0_1 = arith.constant 0 : index
    %c0_2 = arith.constant 0 : index
    %1 = vector.load %arg1[%c0_1, %c0_2] : memref<16x256xf32, #tpu.memory_space<vmem>>, vector<16x256xf32>
    %2 = arith.maximumf %0, %1 : vector<16x256xf32>
    %c0_3 = arith.constant 0 : index
    %c0_4 = arith.constant 0 : index
    %3 = vector.load %arg2[%c0_3, %c0_4] : memref<16x256xf32, #tpu.memory_space<vmem>>, vector<16x256xf32>
    %c0_5 = arith.constant 0 : index
    %c0_6 = arith.constant 0 : index
    %4 = vector.load %arg3[%c0_5, %c0_6] : memref<16x256xf32, #tpu.memory_space<vmem>>, vector<16x256xf32>
    %5 = arith.maximumf %3, %4 : vector<16x256xf32>
    %6 = arith.maximumf %2, %5 : vector<16x256xf32>
    %c0_7 = arith.constant 0 : index
    %c0_8 = arith.constant 0 : index
    %7 = vector.load %arg4[%c0_7, %c0_8] : memref<16x256xf32, #tpu.memory_space<vmem>>, vector<16x256xf32>
    tpu.vector_store %arg4[%c0_7, %c0_8], %6 {strides = array<i32>} : memref<16x256xf32, #tpu.memory_space<vmem>>, vector<16x256xf32>,
    return
  }
}

module attributes {stable_mosaic.version = 11 : i64} {
  func.func @_conv_bn_prelu_kernel(%arg0: memref<8x72xf32, #tpu.memory_space<vmem>>, %arg1: memref<72x512xf32, #tpu.memory_space<vmem>>, %arg2: memref<8x1xf32, #tpu.memory_space<vmem>>, %arg3: memref<1x1xf32, #tpu.memory_space<vmem>>, %arg4: memref<8x512xf32, #tpu.memory_space<vmem>>) attributes {dimension_semantics = [], scalar_prefetch = 0 : i64, scratch_operands = 0 : i64, tpu.core_type = #tpu.core_type<tc>} {
    %c0 = arith.constant 0 : index
    %c0_0 = arith.constant 0 : index
    %0 = vector.load %arg0[%c0, %c0_0] : memref<8x72xf32, #tpu.memory_space<vmem>>, vector<8x72xf32>
    %c0_1 = arith.constant 0 : index
    %c0_2 = arith.constant 0 : index
    %1 = vector.load %arg1[%c0_1, %c0_2] : memref<72x512xf32, #tpu.memory_space<vmem>>, vector<72x512xf32>
    %cst = arith.constant dense<0.000000e+00> : vector<8x512xf32>
    %2 = tpu.matmul %0, %1, %cst {dimension_numbers = #tpu.dot_dimension_numbers<[1], [0], [0], [1], [0, 0, 1, 1], [], []>} : vector<8x72xf32>, vector<72x512xf32>, vector<8x512xf32> -> vector<8x512xf32>
    %c0_3 = arith.constant 0 : index
    %c0_4 = arith.constant 0 : index
    %3 = vector.load %arg2[%c0_3, %c0_4] : memref<8x1xf32, #tpu.memory_space<vmem>>, vector<8x1xf32>
    %4 = vector.broadcast %3 : vector<8x1xf32> to vector<8x512xf32>
    %5 = arith.addf %2, %4 : vector<8x512xf32>
    %cst_5 = arith.constant 0.000000e+00 : f32
    %6 = vector.broadcast %cst_5 : f32 to vector<8x512xf32>
    %7 = arith.cmpf ogt, %5, %6 : vector<8x512xf32>
    %c0_6 = arith.constant 0 : index
    %c0_7 = arith.constant 0 : index
    %8 = vector.load %arg3[%c0_6, %c0_7] : memref<1x1xf32, #tpu.memory_space<vmem>>, vector<1x1xf32>
    %9 = vector.broadcast %8 : vector<1x1xf32> to vector<8x512xf32>
    %10 = arith.mulf %9, %5 : vector<8x512xf32>
    %11 = arith.select %7, %5, %10 : vector<8x512xi1>, vector<8x512xf32>
    %c0_8 = arith.constant 0 : index
    %c0_9 = arith.constant 0 : index
    %12 = vector.load %arg4[%c0_8, %c0_9] : memref<8x512xf32, #tpu.memory_space<vmem>>, vector<8x512xf32>
    tpu.vector_store %arg4[%c0_8, %c0_9], %11 {strides = array<i32>} : memref<8x512xf32, #tpu.memory_space<vmem>>, vector<8x512xf32>,
    return
  }
}

module attributes {stable_mosaic.version = 11 : i64} {
  func.func @_fc_fused_kernel(%arg0: memref<2x2048xf32, #tpu.memory_space<vmem>>, %arg1: memref<2048x1024xbf16, #tpu.memory_space<vmem>>, %arg2: memref<1x1024xf32, #tpu.memory_space<vmem>>, %arg3: memref<1024x4xf32, #tpu.memory_space<vmem>>, %arg4: memref<1x4xf32, #tpu.memory_space<vmem>>, %arg5: memref<2x4xf32, #tpu.memory_space<vmem>>) attributes {dimension_semantics = [], scalar_prefetch = 0 : i64, scratch_operands = 0 : i64, tpu.core_type = #tpu.core_type<tc>} {
    %c0 = arith.constant 0 : index
    %c0_0 = arith.constant 0 : index
    %0 = vector.load %arg0[%c0, %c0_0] : memref<2x2048xf32, #tpu.memory_space<vmem>>, vector<2x2048xf32>
    %1 = arith.truncf %0 : vector<2x2048xf32> to vector<2x2048xbf16>
    %c0_1 = arith.constant 0 : index
    %c0_2 = arith.constant 0 : index
    %2 = vector.load %arg1[%c0_1, %c0_2] : memref<2048x1024xbf16, #tpu.memory_space<vmem>>, vector<2048x1024xbf16>
    %cst = arith.constant dense<0.000000e+00> : vector<2x1024xf32>
    %3 = tpu.matmul %1, %2, %cst {dimension_numbers = #tpu.dot_dimension_numbers<[1], [0], [0], [1], [0, 0, 1, 1], [], []>} : vector<2x2048xbf16>, vector<2048x1024xbf16>, vector<2x1024xf32> -> vector<2x1024xf32>
    %c0_3 = arith.constant 0 : index
    %c0_4 = arith.constant 0 : index
    %4 = vector.load %arg2[%c0_3, %c0_4] : memref<1x1024xf32, #tpu.memory_space<vmem>>, vector<1x1024xf32>
    %5 = vector.broadcast %4 : vector<1x1024xf32> to vector<2x1024xf32>
    %6 = arith.addf %3, %5 : vector<2x1024xf32>
    %c0_5 = arith.constant 0 : index
    %c0_6 = arith.constant 0 : index
    %7 = vector.load %arg3[%c0_5, %c0_6] : memref<1024x4xf32, #tpu.memory_space<vmem>>, vector<1024x4xf32>
    %cst_7 = arith.constant dense<0.000000e+00> : vector<2x4xf32>
    %8 = tpu.matmul %6, %7, %cst_7 {dimension_numbers = #tpu.dot_dimension_numbers<[1], [0], [0], [1], [0, 0, 1, 1], [], []>} : vector<2x1024xf32>, vector<1024x4xf32>, vector<2x4xf32> -> vector<2x4xf32>
    %c0_8 = arith.constant 0 : index
    %c0_9 = arith.constant 0 : index
    %9 = vector.load %arg4[%c0_8, %c0_9] : memref<1x4xf32, #tpu.memory_space<vmem>>, vector<1x4xf32>
    %10 = vector.broadcast %9 : vector<1x4xf32> to vector<2x4xf32>
    %11 = arith.addf %8, %10 : vector<2x4xf32>
    %c0_10 = arith.constant 0 : index
    %c0_11 = arith.constant 0 : index
    %12 = vector.load %arg5[%c0_10, %c0_11] : memref<2x4xf32, #tpu.memory_space<vmem>>, vector<2x4xf32>
    tpu.vector_store %arg5[%c0_10, %c0_11], %11 {strides = array<i32>} : memref<2x4xf32, #tpu.memory_space<vmem>>, vector<2x4xf32>,
    return
  }
}

</mosaic_0001>

<llo_original>
// kernel: simple_cnn_forward.6
$region0: #{simple_cnn_forward.6}
  #allocation0 [shape = 'u32[]', space=smem, size = 0x4, offset = 0x4, fixed_abs, tag = 'smem constant byte address 0x4 - core index']
  #allocation1 [shape = 'u32[72,128]{1,0:T(1,128)}', space=vmem, size = 0x9000, scoped, tag = 'internal scratch']
  #allocation2 [shape = 'f32[1,1]{1,0:T(1,128)S(1)}', space=vmem, size = 0x200, scoped, tag = 'scoped memory for simple_cnn_forward.6']
  %s0 = inlined_call_operand.vmem [shape: f32[8,75], index: 0, kind: input, shape index: {}]
  %s1 = inlined_call_operand.vmem [shape: f32[75,7442], index: 1, kind: input, shape index: {}]
  %s2 = inlined_call_operand.vmem [shape: f32[8,1], index: 2, kind: input, shape index: {}]
  %s3 = inlined_call_operand.<no memory space> [shape: f32[1,1], index: 3, kind: input, shape index: {}]
  %s4 = inlined_call_operand.vmem [shape: f32[8,7442], index: 4, kind: output, shape index: {}]
  %s5 = sld [smem:[#allocation0]]
  $region26: #{simple_cnn_forward.6} parent=0
    _
  %s7 = ssub.s32 1, %s5
  %s8 = scalar_select 0, %s7, %s5
  %v9 = vstv %s3
  %10 = vst [vmem:[#allocation2] sm:$0x1] %v9
  // Predicated region
  $region2: #{simple_cnn_forward.6} parent=0 // pred_check
    _
  $region3: #{simple_cnn_forward.6} parent=0 // pred_check_branch
    %12 = sbr.rel (0) target = $region5
  $region4: #{simple_cnn_forward.6} parent=0 // pred_region
    _
  $region5: #{simple_cnn_forward.6} parent=0 // pred_fallthru
    _
  // Predicated region
  $region6: #{simple_cnn_forward.6} parent=0 // pred_check
    _
  $region7: #{simple_cnn_forward.6} parent=0 // pred_check_branch
    %14 = sbr.rel (0) target = $region9
  $region8: #{simple_cnn_forward.6} parent=0 // pred_region
    _
  $region9: #{simple_cnn_forward.6} parent=0 // pred_fallthru
    _
  // Predicated region
  $region10: #{simple_cnn_forward.6} parent=0 // pred_check
    _
  $region11: #{simple_cnn_forward.6} parent=0 // pred_check_branch
    %16 = sbr.rel (0) target = $region13
  $region12: #{simple_cnn_forward.6} parent=0 // pred_region
    _
  $region13: #{simple_cnn_forward.6} parent=0 // pred_fallthru
    _
  // Predicated region
  $region14: #{simple_cnn_forward.6} parent=0 // pred_check
    _
  $region15: #{simple_cnn_forward.6} parent=0 // pred_check_branch
    %18 = sbr.rel (0) target = $region17
  $region16: #{simple_cnn_forward.6} parent=0 // pred_region
    _
  $region17: #{simple_cnn_forward.6} parent=0 // pred_fallthru
    _
  %v19 = vld [vmem:[%s0] sm:$0xff]
  %v20 = vld [vmem:[%s1] sm:$0xff]
  %v21 = vld [vmem:[%s1 + $0x8] sm:$0xff]
  %v22 = vld [vmem:[%s1 + $0x10] sm:$0xff]
  %v23 = vld [vmem:[%s1 + $0x18] sm:$0xff]
  %v24 = vld [vmem:[%s1 + $0x20] sm:$0xff]
  %v25 = vld [vmem:[%s1 + $0x28] sm:$0xff]
  %v26 = vld [vmem:[%s1 + $0x30] sm:$0xff]
  %v27 = vld [vmem:[%s1 + $0x38] sm:$0xff]
  %v28 = vld [vmem:[%s1 + $0x40] sm:$0xff]
  %v29 = vld [vmem:[%s1 + $0x48] sm:$0xff]
  %v30 = vld [vmem:[%s1 + $0x50] sm:$0xff]
  %v31 = vld [vmem:[%s1 + $0x58] sm:$0xff]
  %v32 = vld [vmem:[%s1 + $0x60] sm:$0xff]
  %v33 = vld [vmem:[%s1 + $0x68] sm:$0xff]
  %v34 = vld [vmem:[%s1 + $0x70] sm:$0xff]
  %v35 = vld [vmem:[%s1 + $0x78] sm:$0xff]
  %v36 = vld [vmem:[%s1 + $0x80] sm:$0xff]
  %v37 = vld [vmem:[%s1 + $0x88] sm:$0xff]
  %v38 = vld [vmem:[%s1 + $0x90] sm:$0xff]
  %v39 = vld [vmem:[%s1 + $0x98] sm:$0xff]
  %v40 = vld [vmem:[%s1 + $0xa0] sm:$0xff]
  %v41 = vld [vmem:[%s1 + $0xa8] sm:$0xff]
  %v42 = vld [vmem:[%s1 + $0xb0] sm:$0xff]
  %v43 = vld [vmem:[%s1 + $0xb8] sm:$0xff]
  %v44 = vld [vmem:[%s1 + $0xc0] sm:$0xff]
  %v45 = vld [vmem:[%s1 + $0xc8] sm:$0xff]
  %v46 = vld [vmem:[%s1 + $0xd0] sm:$0xff]
  %v47 = vld [vmem:[%s1 + $0xd8] sm:$0xff]
  %v48 = vld [vmem:[%s1 + $0xe0] sm:$0xff]
  %v49 = vld [vmem:[%s1 + $0xe8] sm:$0xff]
  %v50 = vld [vmem:[%s1 + $0xf0] sm:$0xff]
  %v51 = vld [vmem:[%s1 + $0xf8] sm:$0xff]
  %v52 = vld [vmem:[%s1 + $0x100] sm:$0xff]
  %v53 = vld [vmem:[%s1 + $0x108] sm:$0xff]
  %v54 = vld [vmem:[%s1 + $0x110] sm:$0xff]
  %v55 = vld [vmem:[%s1 + $0x118] sm:$0xff]
  %v56 = vld [vmem:[%s1 + $0x120] sm:$0xff]
  %v57 = vld [vmem:[%s1 + $0x128] sm:$0xff]
  %v58 = vld [vmem:[%s1 + $0x130] sm:$0xff]
  %v59 = vld [vmem:[%s1 + $0x138] sm:$0xff]
  %v60 = vld [vmem:[%s1 + $0x140] sm:$0xff]
  %v61 = vld [vmem:[%s1 + $0x148] sm:$0xff]
  %v62 = vld [vmem:[%s1 + $0x150] sm:$0xff]
  %v63 = vld [vmem:[%s1 + $0x158] sm:$0xff]
  %v64 = vld [vmem:[%s1 + $0x160] sm:$0xff]
  %v65 = vld [vmem:[%s1 + $0x168] sm:$0xff]
  %v66 = vld [vmem:[%s1 + $0x170] sm:$0xff]
  %v67 = vld [vmem:[%s1 + $0x178] sm:$0xff]
  %v68 = vld [vmem:[%s1 + $0x180] sm:$0xff]
  %v69 = vld [vmem:[%s1 + $0x188] sm:$0xff]
  %v70 = vld [vmem:[%s1 + $0x190] sm:$0xff]
  %v71 = vld [vmem:[%s1 + $0x198] sm:$0xff]
  %v72 = vld [vmem:[%s1 + $0x1a0] sm:$0xff]
  %v73 = vld [vmem:[%s1 + $0x1a8] sm:$0xff]
  %v74 = vld [vmem:[%s1 + $0x1b0] sm:$0xff]
  %v75 = vld [vmem:[%s1 + $0x1b8] sm:$0xff]
  %v76 = vld [vmem:[%s1 + $0x1c0] sm:$0xff]
  %v77 = vld [vmem:[%s1 + $0x1c8] sm:$0xff]
  %v78 = vld [vmem:[%s1 + $0x1d0] sm:$0xff]
  %v79 = vld [vmem:[%s1 + $0x1d8] sm:$0xff]
  %v80 = vld [vmem:[%s1 + $0x1e0] sm:$0xff]
  %v81 = vld [vmem:[%s1 + $0x1e8] sm:$0xff]
  %v82 = vld [vmem:[%s1 + $0x1f0] sm:$0xff]
  %v83 = vld [vmem:[%s1 + $0x1f8] sm:$0xff]
  %v84 = vld [vmem:[%s1 + $0x200] sm:$0xff]
  %v85 = vld [vmem:[%s1 + $0x208] sm:$0xff]
  %v86 = vld [vmem:[%s1 + $0x210] sm:$0xff]
  %v87 = vld [vmem:[%s1 + $0x218] sm:$0xff]
  %v88 = vld [vmem:[%s1 + $0x220] sm:$0xff]
  %v89 = vld [vmem:[%s1 + $0x228] sm:$0xff]
  %v90 = vld [vmem:[%s1 + $0x230] sm:$0xff]
  %v91 = vld [vmem:[%s1 + $0x238] sm:$0xff]
  %v92 = vld [vmem:[%s1 + $0x240] sm:$0xff]
  %v93 = vld [vmem:[%s1 + $0x248] sm:$0xff]
  %v94 = vld [vmem:[%s1 + $0x250] sm:$0xff]
  %v95 = vld [vmem:[%s1 + $0x258] sm:$0xff]
  %v96 = vld [vmem:[%s1 + $0x260] sm:$0xff]
  %v97 = vld [vmem:[%s1 + $0x268] sm:$0xff]
  %v98 = vld [vmem:[%s1 + $0x270] sm:$0xff]
  %v99 = vld [vmem:[%s1 + $0x278] sm:$0xff]
  %v100 = vld [vmem:[%s1 + $0x280] sm:$0xff]
  %v101 = vld [vmem:[%s1 + $0x288] sm:$0xff]
  %v102 = vld [vmem:[%s1 + $0x290] sm:$0xff]
  %v103 = vld [vmem:[%s1 + $0x298] sm:$0xff]
  %v104 = vld [vmem:[%s1 + $0x2a0] sm:$0xff]
  %v105 = vld [vmem:[%s1 + $0x2a8] sm:$0xff]
  %v106 = vld [vmem:[%s1 + $0x2b0] sm:$0xff]
  %v107 = vld [vmem:[%s1 + $0x2b8] sm:$0xff]
  %v108 = vld [vmem:[%s1 + $0x2c0] sm:$0xff]
  %v109 = vld [vmem:[%s1 + $0x2c8] sm:$0xff]
  %v110 = vld [vmem:[%s1 + $0x2d0] sm:$0xff]
  %v111 = vld [vmem:[%s1 + $0x2d8] sm:$0xff]
  %v112 = vld [vmem:[%s1 + $0x2e0] sm:$0xff]
  %v113 = vld [vmem:[%s1 + $0x2e8] sm:$0xff]
  %v114 = vld [vmem:[%s1 + $0x2f0] sm:$0xff]
  %v115 = vld [vmem:[%s1 + $0x2f8] sm:$0xff]
  %v116 = vld [vmem:[%s1 + $0x300] sm:$0xff]
  %v117 = vld [vmem:[%s1 + $0x308] sm:$0xff]
  %v118 = vld [vmem:[%s1 + $0x310] sm:$0xff]
  %v119 = vld [vmem:[%s1 + $0x318] sm:$0xff]
  %v120 = vld [vmem:[%s1 + $0x320] sm:$0xff]
  %v121 = vld [vmem:[%s1 + $0x328] sm:$0xff]
  %v122 = vld [vmem:[%s1 + $0x330] sm:$0xff]
  %v123 = vld [vmem:[%s1 + $0x338] sm:$0xff]
  %v124 = vld [vmem:[%s1 + $0x340] sm:$0xff]
  %v125 = vld [vmem:[%s1 + $0x348] sm:$0xff]
  %v126 = vld [vmem:[%s1 + $0x350] sm:$0xff]
  %v127 = vld [vmem:[%s1 + $0x358] sm:$0xff]
  %v128 = vld [vmem:[%s1 + $0x360] sm:$0xff]
  %v129 = vld [vmem:[%s1 + $0x368] sm:$0xff]
  %v130 = vld [vmem:[%s1 + $0x370] sm:$0xff]
  %v131 = vld [vmem:[%s1 + $0x378] sm:$0xff]
  %v132 = vld [vmem:[%s1 + $0x380] sm:$0xff]
  %v133 = vld [vmem:[%s1 + $0x388] sm:$0xff]
  %v134 = vld [vmem:[%s1 + $0x390] sm:$0xff]
  %v135 = vld [vmem:[%s1 + $0x398] sm:$0xff]
  %v136 = vld [vmem:[%s1 + $0x3a0] sm:$0xff]
  %v137 = vld [vmem:[%s1 + $0x3a8] sm:$0xff]
  %v138 = vld [vmem:[%s1 + $0x3b0] sm:$0xff]
  %v139 = vld [vmem:[%s1 + $0x3b8] sm:$0xff]
  %v140 = vld [vmem:[%s1 + $0x3c0] sm:$0xff]
  %v141 = vld [vmem:[%s1 + $0x3c8] sm:$0xff]
  %v142 = vld [vmem:[%s1 + $0x3d0] sm:$0xff]
  %v143 = vld [vmem:[%s1 + $0x3d8] sm:$0xff]
  %v144 = vld [vmem:[%s1 + $0x3e0] sm:$0xff]
  %v145 = vld [vmem:[%s1 + $0x3e8] sm:$0xff]
  %v146 = vld [vmem:[%s1 + $0x3f0] sm:$0xff]
  %v147 = vld [vmem:[%s1 + $0x3f8] sm:$0xff]
  %v148 = vld [vmem:[%s1 + $0x400] sm:$0xff]
  %v149 = vld [vmem:[%s1 + $0x408] sm:$0xff]
  %v150 = vld [vmem:[%s1 + $0x410] sm:$0xff]
  %v151 = vld [vmem:[%s1 + $0x418] sm:$0xff]
  %v152 = vld [vmem:[%s1 + $0x420] sm:$0xff]
  %v153 = vld [vmem:[%s1 + $0x428] sm:$0xff]
  %v154 = vld [vmem:[%s1 + $0x430] sm:$0xff]
  %v155 = vld [vmem:[%s1 + $0x438] sm:$0xff]
  %v156 = vld [vmem:[%s1 + $0x440] sm:$0xff]
  %v157 = vld [vmem:[%s1 + $0x448] sm:$0xff]
  %v158 = vld [vmem:[%s1 + $0x450] sm:$0xff]
  %v159 = vld [vmem:[%s1 + $0x458] sm:$0xff]
  %v160 = vld [vmem:[%s1 + $0x460] sm:$0xff]
  %v161 = vld [vmem:[%s1 + $0x468] sm:$0xff]
  %v162 = vld [vmem:[%s1 + $0x470] sm:$0xff]
  %v163 = vld [vmem:[%s1 + $0x478] sm:$0xff]
  %v164 = vld [vmem:[%s1 + $0x480] sm:$0xff]
  %v165 = vld [vmem:[%s1 + $0x488] sm:$0xff]
  %v166 = vld [vmem:[%s1 + $0x490] sm:$0xff]
  %v167 = vld [vmem:[%s1 + $0x498] sm:$0xff]
  %v168 = vld [vmem:[%s1 + $0x4a0] sm:$0xff]
  %v169 = vld [vmem:[%s1 + $0x4a8] sm:$0xff]
  %v170 = vld [vmem:[%s1 + $0x4b0] sm:$0xff]
  %v171 = vld [vmem:[%s1 + $0x4b8] sm:$0xff]
  %v172 = vld [vmem:[%s1 + $0x4c0] sm:$0xff]
  %v173 = vld [vmem:[%s1 + $0x4c8] sm:$0xff]
  %v174 = vld [vmem:[%s1 + $0x4d0] sm:$0xff]
  %v175 = vld [vmem:[%s1 + $0x4d8] sm:$0xff]
  %v176 = vld [vmem:[%s1 + $0x4e0] sm:$0xff]
  %v177 = vld [vmem:[%s1 + $0x4e8] sm:$0xff]
  %v178 = vld [vmem:[%s1 + $0x4f0] sm:$0xff]
  %v179 = vld [vmem:[%s1 + $0x4f8] sm:$0xff]
  %v180 = vld [vmem:[%s1 + $0x500] sm:$0xff]
  %v181 = vld [vmem:[%s1 + $0x508] sm:$0xff]
  %v182 = vld [vmem:[%s1 + $0x510] sm:$0xff]
  %v183 = vld [vmem:[%s1 + $0x518] sm:$0xff]
  %v184 = vld [vmem:[%s1 + $0x520] sm:$0xff]
  %v185 = vld [vmem:[%s1 + $0x528] sm:$0xff]
  %v186 = vld [vmem:[%s1 + $0x530] sm:$0xff]
  %v187 = vld [vmem:[%s1 + $0x538] sm:$0xff]
  %v188 = vld [vmem:[%s1 + $0x540] sm:$0xff]
  %v189 = vld [vmem:[%s1 + $0x548] sm:$0xff]
  %v190 = vld [vmem:[%s1 + $0x550] sm:$0xff]
  %v191 = vld [vmem:[%s1 + $0x558] sm:$0xff]
  %v192 = vld [vmem:[%s1 + $0x560] sm:$0xff]
  %v193 = vld [vmem:[%s1 + $0x568] sm:$0xff]
  %v194 = vld [vmem:[%s1 + $0x570] sm:$0xff]
  %v195 = vld [vmem:[%s1 + $0x578] sm:$0xff]
  %v196 = vld [vmem:[%s1 + $0x580] sm:$0xff]
  %v197 = vld [vmem:[%s1 + $0x588] sm:$0xff]
  %v198 = vld [vmem:[%s1 + $0x590] sm:$0xff]
  %v199 = vld [vmem:[%s1 + $0x598] sm:$0xff]
  %v200 = vld [vmem:[%s1 + $0x5a0] sm:$0xff]
  %v201 = vld [vmem:[%s1 + $0x5a8] sm:$0xff]
  %v202 = vld [vmem:[%s1 + $0x5b0] sm:$0xff]
  %v203 = vld [vmem:[%s1 + $0x5b8] sm:$0xff]
  %v204 = vld [vmem:[%s1 + $0x5c0] sm:$0xff]
  %v205 = vld [vmem:[%s1 + $0x5c8] sm:$0xff]
  %v206 = vld [vmem:[%s1 + $0x5d0] sm:$0xff]
  %v207 = vld [vmem:[%s1 + $0x5d8] sm:$0xff]
  %v208 = vld [vmem:[%s1 + $0x5e0] sm:$0xff]
  %v209 = vld [vmem:[%s1 + $0x5e8] sm:$0xff]
  %v210 = vld [vmem:[%s1 + $0x5f0] sm:$0xff]
  %v211 = vld [vmem:[%s1 + $0x5f8] sm:$0xff]
  %v212 = vld [vmem:[%s1 + $0x600] sm:$0xff]
  %v213 = vld [vmem:[%s1 + $0x608] sm:$0xff]
  %v214 = vld [vmem:[%s1 + $0x610] sm:$0xff]
  %v215 = vld [vmem:[%s1 + $0x618] sm:$0xff]
  %v216 = vld [vmem:[%s1 + $0x620] sm:$0xff]
  %v217 = vld [vmem:[%s1 + $0x628] sm:$0xff]
  %v218 = vld [vmem:[%s1 + $0x630] sm:$0xff]
  %v219 = vld [vmem:[%s1 + $0x638] sm:$0xff]
  %v220 = vld [vmem:[%s1 + $0x640] sm:$0xff]
  %v221 = vld [vmem:[%s1 + $0x648] sm:$0xff]
  %v222 = vld [vmem:[%s1 + $0x650] sm:$0xff]
  %v223 = vld [vmem:[%s1 + $0x658] sm:$0xff]
  %v224 = vld [vmem:[%s1 + $0x660] sm:$0xff]
  %v225 = vld [vmem:[%s1 + $0x668] sm:$0xff]
  %v226 = vld [vmem:[%s1 + $0x670] sm:$0xff]
  %v227 = vld [vmem:[%s1 + $0x678] sm:$0xff]
  %v228 = vld [vmem:[%s1 + $0x680] sm:$0xff]
  %v229 = vld [vmem:[%s1 + $0x688] sm:$0xff]
  %v230 = vld [vmem:[%s1 + $0x690] sm:$0xff]
  %v231 = vld [vmem:[%s1 + $0x698] sm:$0xff]
  %v232 = vld [vmem:[%s1 + $0x6a0] sm:$0xff]
  %v233 = vld [vmem:[%s1 + $0x6a8] sm:$0xff]
  %v234 = vld [vmem:[%s1 + $0x6b0] sm:$0xff]
  %v235 = vld [vmem:[%s1 + $0x6b8] sm:$0xff]
  %v236 = vld [vmem:[%s1 + $0x6c0] sm:$0xff]
  %v237 = vld [vmem:[%s1 + $0x6c8] sm:$0xff]
  %v238 = vld [vmem:[%s1 + $0x6d0] sm:$0xff]
  %v239 = vld [vmem:[%s1 + $0x6d8] sm:$0xff]
  %v240 = vld [vmem:[%s1 + $0x6e0] sm:$0xff]
  %v241 = vld [vmem:[%s1 + $0x6e8] sm:$0xff]
  %v242 = vld [vmem:[%s1 + $0x6f0] sm:$0xff]
  %v243 = vld [vmem:[%s1 + $0x6f8] sm:$0xff]
  %v244 = vld [vmem:[%s1 + $0x700] sm:$0xff]
  %v245 = vld [vmem:[%s1 + $0x708] sm:$0xff]
  %v246 = vld [vmem:[%s1 + $0x710] sm:$0xff]
  %v247 = vld [vmem:[%s1 + $0x718] sm:$0xff]
  %v248 = vld [vmem:[%s1 + $0x720] sm:$0xff]
  %v249 = vld [vmem:[%s1 + $0x728] sm:$0xff]
  %v250 = vld [vmem:[%s1 + $0x730] sm:$0xff]
  %v251 = vld [vmem:[%s1 + $0x738] sm:$0xff]
  %v252 = vld [vmem:[%s1 + $0x740] sm:$0xff]
  %v253 = vld [vmem:[%s1 + $0x748] sm:$0xff]
  %v254 = vld [vmem:[%s1 + $0x750] sm:$0xff]
  %v255 = vld [vmem:[%s1 + $0x758] sm:$0xff]
  %v256 = vld [vmem:[%s1 + $0x760] sm:$0xff]
  %v257 = vld [vmem:[%s1 + $0x768] sm:$0xff]
  %v258 = vld [vmem:[%s1 + $0x770] sm:$0xff]
  %v259 = vld [vmem:[%s1 + $0x778] sm:$0xff]
  %v260 = vld [vmem:[%s1 + $0x780] sm:$0xff]
  %v261 = vld [vmem:[%s1 + $0x788] sm:$0xff]
  %v262 = vld [vmem:[%s1 + $0x790] sm:$0xff]
  %v263 = vld [vmem:[%s1 + $0x798] sm:$0xff]
  %v264 = vld [vmem:[%s1 + $0x7a0] sm:$0xff]
  %v265 = vld [vmem:[%s1 + $0x7a8] sm:$0xff]
  %v266 = vld [vmem:[%s1 + $0x7b0] sm:$0xff]
  %v267 = vld [vmem:[%s1 + $0x7b8] sm:$0xff]
  %v268 = vld [vmem:[%s1 + $0x7c0] sm:$0xff]
  %v269 = vld [vmem:[%s1 + $0x7c8] sm:$0xff]
  %v270 = vld [vmem:[%s1 + $0x7d0] sm:$0xff]
  %v271 = vld [vmem:[%s1 + $0x7d8] sm:$0xff]
  %v272 = vld [vmem:[%s1 + $0x7e0] sm:$0xff]
  %v273 = vld [vmem:[%s1 + $0x7e8] sm:$0xff]
  %v274 = vld [vmem:[%s1 + $0x7f0] sm:$0xff]
  %v275 = vld [vmem:[%s1 + $0x7f8] sm:$0xff]
  %v276 = vld [vmem:[%s1 + $0x800] sm:$0xff]
  %v277 = vld [vmem:[%s1 + $0x808] sm:$0xff]
  %v278 = vld [vmem:[%s1 + $0x810] sm:$0xff]
  %v279 = vld [vmem:[%s1 + $0x818] sm:$0xff]
  %v280 = vld [vmem:[%s1 + $0x820] sm:$0xff]
  %v281 = vld [vmem:[%s1 + $0x828] sm:$0xff]
  %v282 = vld [vmem:[%s1 + $0x830] sm:$0xff]
  %v283 = vld [vmem:[%s1 + $0x838] sm:$0xff]
  %v284 = vld [vmem:[%s1 + $0x840] sm:$0xff]
  %v285 = vld [vmem:[%s1 + $0x848] sm:$0xff]
  %v286 = vld [vmem:[%s1 + $0x850] sm:$0xff]
  %v287 = vld [vmem:[%s1 + $0x858] sm:$0xff]
  %v288 = vld [vmem:[%s1 + $0x860] sm:$0xff]
  %v289 = vld [vmem:[%s1 + $0x868] sm:$0xff]
  %v290 = vld [vmem:[%s1 + $0x870] sm:$0xff]
  %v291 = vld [vmem:[%s1 + $0x878] sm:$0xff]
  %v292 = vld [vmem:[%s1 + $0x880] sm:$0xff]
  %v293 = vld [vmem:[%s1 + $0x888] sm:$0xff]
  %v294 = vld [vmem:[%s1 + $0x890] sm:$0xff]
  %v295 = vld [vmem:[%s1 + $0x898] sm:$0xff]
  %v296 = vld [vmem:[%s1 + $0x8a0] sm:$0xff]
  %v297 = vld [vmem:[%s1 + $0x8a8] sm:$0xff]
  %v298 = vld [vmem:[%s1 + $0x8b0] sm:$0xff]
  %v299 = vld [vmem:[%s1 + $0x8b8] sm:$0xff]
  %v300 = vld [vmem:[%s1 + $0x8c0] sm:$0xff]
  %v301 = vld [vmem:[%s1 + $0x8c8] sm:$0xff]
  %v302 = vld [vmem:[%s1 + $0x8d0] sm:$0xff]
  %v303 = vld [vmem:[%s1 + $0x8d8] sm:$0xff]
  %v304 = vld [vmem:[%s1 + $0x8e0] sm:$0xff]
  %v305 = vld [vmem:[%s1 + $0x8e8] sm:$0xff]
  %v306 = vld [vmem:[%s1 + $0x8f0] sm:$0xff]
  %v307 = vld [vmem:[%s1 + $0x8f8] sm:$0xff]
  %v308 = vld [vmem:[%s1 + $0x900] sm:$0xff]
  %v309 = vld [vmem:[%s1 + $0x908] sm:$0xff]
  %v310 = vld [vmem:[%s1 + $0x910] sm:$0xff]
  %v311 = vld [vmem:[%s1 + $0x918] sm:$0xff]
  %v312 = vld [vmem:[%s1 + $0x920] sm:$0xff]
  %v313 = vld [vmem:[%s1 + $0x928] sm:$0xff]
  %v314 = vld [vmem:[%s1 + $0x930] sm:$0xff]
  %v315 = vld [vmem:[%s1 + $0x938] sm:$0xff]
  %v316 = vld [vmem:[%s1 + $0x940] sm:$0xff]
  %v317 = vld [vmem:[%s1 + $0x948] sm:$0xff]
  %v318 = vld [vmem:[%s1 + $0x950] sm:$0xff]
  %v319 = vld [vmem:[%s1 + $0x958] sm:$0xff]
  %v320 = vld [vmem:[%s1 + $0x960] sm:$0xff]
  %v321 = vld [vmem:[%s1 + $0x968] sm:$0xff]
  %v322 = vld [vmem:[%s1 + $0x970] sm:$0xff]
  %v323 = vld [vmem:[%s1 + $0x978] sm:$0xff]
  %v324 = vld [vmem:[%s1 + $0x980] sm:$0xff]
  %v325 = vld [vmem:[%s1 + $0x988] sm:$0xff]
  %v326 = vld [vmem:[%s1 + $0x990] sm:$0xff]
  %v327 = vld [vmem:[%s1 + $0x998] sm:$0xff]
  %v328 = vld [vmem:[%s1 + $0x9a0] sm:$0xff]
  %v329 = vld [vmem:[%s1 + $0x9a8] sm:$0xff]
  %v330 = vld [vmem:[%s1 + $0x9b0] sm:$0xff]
  %v331 = vld [vmem:[%s1 + $0x9b8] sm:$0xff]
  %v332 = vld [vmem:[%s1 + $0x9c0] sm:$0xff]
  %v333 = vld [vmem:[%s1 + $0x9c8] sm:$0xff]
  %v334 = vld [vmem:[%s1 + $0x9d0] sm:$0xff]
  %v335 = vld [vmem:[%s1 + $0x9d8] sm:$0xff]
  %v336 = vld [vmem:[%s1 + $0x9e0] sm:$0xff]
  %v337 = vld [vmem:[%s1 + $0x9e8] sm:$0xff]
  %v338 = vld [vmem:[%s1 + $0x9f0] sm:$0xff]
  %v339 = vld [vmem:[%s1 + $0x9f8] sm:$0xff]
  %v340 = vld [vmem:[%s1 + $0xa00] sm:$0xff]
  %v341 = vld [vmem:[%s1 + $0xa08] sm:$0xff]
  %v342 = vld [vmem:[%s1 + $0xa10] sm:$0xff]
  %v343 = vld [vmem:[%s1 + $0xa18] sm:$0xff]
  %v344 = vld [vmem:[%s1 + $0xa20] sm:$0xff]
  %v345 = vld [vmem:[%s1 + $0xa28] sm:$0xff]
  %v346 = vld [vmem:[%s1 + $0xa30] sm:$0xff]
  %v347 = vld [vmem:[%s1 + $0xa38] sm:$0xff]
  %v348 = vld [vmem:[%s1 + $0xa40] sm:$0xff]
  %v349 = vld [vmem:[%s1 + $0xa48] sm:$0xff]
  %v350 = vld [vmem:[%s1 + $0xa50] sm:$0xff]
  %v351 = vld [vmem:[%s1 + $0xa58] sm:$0xff]
  %v352 = vld [vmem:[%s1 + $0xa60] sm:$0xff]
  %v353 = vld [vmem:[%s1 + $0xa68] sm:$0xff]
  %v354 = vld [vmem:[%s1 + $0xa70] sm:$0xff]
  %v355 = vld [vmem:[%s1 + $0xa78] sm:$0xff]
  %v356 = vld [vmem:[%s1 + $0xa80] sm:$0xff]
  %v357 = vld [vmem:[%s1 + $0xa88] sm:$0xff]
  %v358 = vld [vmem:[%s1 + $0xa90] sm:$0xff]
  %v359 = vld [vmem:[%s1 + $0xa98] sm:$0xff]
  %v360 = vld [vmem:[%s1 + $0xaa0] sm:$0xff]
  %v361 = vld [vmem:[%s1 + $0xaa8] sm:$0xff]
  %v362 = vld [vmem:[%s1 + $0xab0] sm:$0xff]
  %v363 = vld [vmem:[%s1 + $0xab8] sm:$0xff]
  %v364 = vld [vmem:[%s1 + $0xac0] sm:$0xff]
  %v365 = vld [vmem:[%s1 + $0xac8] sm:$0xff]
  %v366 = vld [vmem:[%s1 + $0xad0] sm:$0xff]
  %v367 = vld [vmem:[%s1 + $0xad8] sm:$0xff]
  %v368 = vld [vmem:[%s1 + $0xae0] sm:$0xff]
  %v369 = vld [vmem:[%s1 + $0xae8] sm:$0xff]
  %v370 = vld [vmem:[%s1 + $0xaf0] sm:$0xff]
  %v371 = vld [vmem:[%s1 + $0xaf8] sm:$0xff]
  %v372 = vld [vmem:[%s1 + $0xb00] sm:$0xff]
  %v373 = vld [vmem:[%s1 + $0xb08] sm:$0xff]
  %v374 = vld [vmem:[%s1 + $0xb10] sm:$0xff]
  %v375 = vld [vmem:[%s1 + $0xb18] sm:$0xff]
  %v376 = vld [vmem:[%s1 + $0xb20] sm:$0xff]
  %v377 = vld [vmem:[%s1 + $0xb28] sm:$0xff]
  %v378 = vld [vmem:[%s1 + $0xb30] sm:$0xff]
  %v379 = vld [vmem:[%s1 + $0xb38] sm:$0xff]
  %v380 = vld [vmem:[%s1 + $0xb40] sm:$0xff]
  %v381 = vld [vmem:[%s1 + $0xb48] sm:$0xff]
  %v382 = vld [vmem:[%s1 + $0xb50] sm:$0xff]
  %v383 = vld [vmem:[%s1 + $0xb58] sm:$0xff]
  %v384 = vld [vmem:[%s1 + $0xb60] sm:$0xff]
  %v385 = vld [vmem:[%s1 + $0xb68] sm:$0xff]
  %v386 = vld [vmem:[%s1 + $0xb70] sm:$0xff]
  %v387 = vld [vmem:[%s1 + $0xb78] sm:$0xff]
  %v388 = vld [vmem:[%s1 + $0xb80] sm:$0xff]
  %v389 = vld [vmem:[%s1 + $0xb88] sm:$0xff]
  %v390 = vld [vmem:[%s1 + $0xb90] sm:$0xff]
  %v391 = vld [vmem:[%s1 + $0xb98] sm:$0xff]
  %v392 = vld [vmem:[%s1 + $0xba0] sm:$0xff]
  %v393 = vld [vmem:[%s1 + $0xba8] sm:$0xff]
  %v394 = vld [vmem:[%s1 + $0xbb0] sm:$0xff]
  %v395 = vld [vmem:[%s1 + $0xbb8] sm:$0xff]
  %v396 = vld [vmem:[%s1 + $0xbc0] sm:$0xff]
  %v397 = vld [vmem:[%s1 + $0xbc8] sm:$0xff]
  %v398 = vld [vmem:[%s1 + $0xbd0] sm:$0xff]
  %v399 = vld [vmem:[%s1 + $0xbd8] sm:$0xff]
  %v400 = vld [vmem:[%s1 + $0xbe0] sm:$0xff]
  %v401 = vld [vmem:[%s1 + $0xbe8] sm:$0xff]
  %v402 = vld [vmem:[%s1 + $0xbf0] sm:$0xff]
  %v403 = vld [vmem:[%s1 + $0xbf8] sm:$0xff]
  %v404 = vld [vmem:[%s1 + $0xc00] sm:$0xff]
  %v405 = vld [vmem:[%s1 + $0xc08] sm:$0xff]
  %v406 = vld [vmem:[%s1 + $0xc10] sm:$0xff]
  %v407 = vld [vmem:[%s1 + $0xc18] sm:$0xff]
  %v408 = vld [vmem:[%s1 + $0xc20] sm:$0xff]
  %v409 = vld [vmem:[%s1 + $0xc28] sm:$0xff]
  %v410 = vld [vmem:[%s1 + $0xc30] sm:$0xff]
  %v411 = vld [vmem:[%s1 + $0xc38] sm:$0xff]
  %v412 = vld [vmem:[%s1 + $0xc40] sm:$0xff]
  %v413 = vld [vmem:[%s1 + $0xc48] sm:$0xff]
  %v414 = vld [vmem:[%s1 + $0xc50] sm:$0xff]
  %v415 = vld [vmem:[%s1 + $0xc58] sm:$0xff]
  %v416 = vld [vmem:[%s1 + $0xc60] sm:$0xff]
  %v417 = vld [vmem:[%s1 + $0xc68] sm:$0xff]
  %v418 = vld [vmem:[%s1 + $0xc70] sm:$0xff]
  %v419 = vld [vmem:[%s1 + $0xc78] sm:$0xff]
  %v420 = vld [vmem:[%s1 + $0xc80] sm:$0xff]
  %v421 = vld [vmem:[%s1 + $0xc88] sm:$0xff]
  %v422 = vld [vmem:[%s1 + $0xc90] sm:$0xff]
  %v423 = vld [vmem:[%s1 + $0xc98] sm:$0xff]
  %v424 = vld [vmem:[%s1 + $0xca0] sm:$0xff]
  %v425 = vld [vmem:[%s1 + $0xca8] sm:$0xff]
  %v426 = vld [vmem:[%s1 + $0xcb0] sm:$0xff]
  %v427 = vld [vmem:[%s1 + $0xcb8] sm:$0xff]
  %v428 = vld [vmem:[%s1 + $0xcc0] sm:$0xff]
  %v429 = vld [vmem:[%s1 + $0xcc8] sm:$0xff]
  %v430 = vld [vmem:[%s1 + $0xcd0] sm:$0xff]
  %v431 = vld [vmem:[%s1 + $0xcd8] sm:$0xff]
  %v432 = vld [vmem:[%s1 + $0xce0] sm:$0xff]
  %v433 = vld [vmem:[%s1 + $0xce8] sm:$0xff]
  %v434 = vld [vmem:[%s1 + $0xcf0] sm:$0xff]
  %v435 = vld [vmem:[%s1 + $0xcf8] sm:$0xff]
  %v436 = vld [vmem:[%s1 + $0xd00] sm:$0xff]
  %v437 = vld [vmem:[%s1 + $0xd08] sm:$0xff]
  %v438 = vld [vmem:[%s1 + $0xd10] sm:$0xff]
  %v439 = vld [vmem:[%s1 + $0xd18] sm:$0xff]
  %v440 = vld [vmem:[%s1 + $0xd20] sm:$0xff]
  %v441 = vld [vmem:[%s1 + $0xd28] sm:$0xff]
  %v442 = vld [vmem:[%s1 + $0xd30] sm:$0xff]
  %v443 = vld [vmem:[%s1 + $0xd38] sm:$0xff]
  %v444 = vld [vmem:[%s1 + $0xd40] sm:$0xff]
  %v445 = vld [vmem:[%s1 + $0xd48] sm:$0xff]
  %v446 = vld [vmem:[%s1 + $0xd50] sm:$0xff]
  %v447 = vld [vmem:[%s1 + $0xd58] sm:$0xff]
  %v448 = vld [vmem:[%s1 + $0xd60] sm:$0xff]
  %v449 = vld [vmem:[%s1 + $0xd68] sm:$0xff]
  %v450 = vld [vmem:[%s1 + $0xd70] sm:$0xff]
  %v451 = vld [vmem:[%s1 + $0xd78] sm:$0xff]
  %v452 = vld [vmem:[%s1 + $0xd80] sm:$0xff]
  %v453 = vld [vmem:[%s1 + $0xd88] sm:$0xff]
  %v454 = vld [vmem:[%s1 + $0xd90] sm:$0xff]
  %v455 = vld [vmem:[%s1 + $0xd98] sm:$0xff]
  %v456 = vld [vmem:[%s1 + $0xda0] sm:$0xff]
  %v457 = vld [vmem:[%s1 + $0xda8] sm:$0xff]
  %v458 = vld [vmem:[%s1 + $0xdb0] sm:$0xff]
  %v459 = vld [vmem:[%s1 + $0xdb8] sm:$0xff]
  %v460 = vld [vmem:[%s1 + $0xdc0] sm:$0xff]
  %v461 = vld [vmem:[%s1 + $0xdc8] sm:$0xff]
  %v462 = vld [vmem:[%s1 + $0xdd0] sm:$0xff]
  %v463 = vld [vmem:[%s1 + $0xdd8] sm:$0xff]
  %v464 = vld [vmem:[%s1 + $0xde0] sm:$0xff]
  %v465 = vld [vmem:[%s1 + $0xde8] sm:$0xff]
  %v466 = vld [vmem:[%s1 + $0xdf0] sm:$0xff]
  %v467 = vld [vmem:[%s1 + $0xdf8] sm:$0xff]
  %v468 = vld [vmem:[%s1 + $0xe00] sm:$0xff]
  %v469 = vld [vmem:[%s1 + $0xe08] sm:$0xff]
  %v470 = vld [vmem:[%s1 + $0xe10] sm:$0xff]
  %v471 = vld [vmem:[%s1 + $0xe18] sm:$0xff]
  %v472 = vld [vmem:[%s1 + $0xe20] sm:$0xff]
  %v473 = vld [vmem:[%s1 + $0xe28] sm:$0xff]
  %v474 = vld [vmem:[%s1 + $0xe30] sm:$0xff]
  %v475 = vld [vmem:[%s1 + $0xe38] sm:$0xff]
  %v476 = vld [vmem:[%s1 + $0xe40] sm:$0xff]
  %v477 = vld [vmem:[%s1 + $0xe48] sm:$0xff]
  %v478 = vld [vmem:[%s1 + $0xe50] sm:$0xff]
  %v479 = vld [vmem:[%s1 + $0xe58] sm:$0xff]
  %v480 = vld [vmem:[%s1 + $0xe60] sm:$0xff]
  %v481 = vld [vmem:[%s1 + $0xe68] sm:$0xff]
  %v482 = vld [vmem:[%s1 + $0xe70] sm:$0xff]
  %v483 = vld [vmem:[%s1 + $0xe78] sm:$0xff]
  %v484 = vld [vmem:[%s1 + $0xe80] sm:$0xff]
  %v485 = vld [vmem:[%s1 + $0xe88] sm:$0xff]
  %v486 = vld [vmem:[%s1 + $0xe90] sm:$0xff]
  %v487 = vld [vmem:[%s1 + $0xe98] sm:$0xff]
  %v488 = vld [vmem:[%s1 + $0xea0] sm:$0xff]
  %v489 = vld [vmem:[%s1 + $0xea8] sm:$0xff]
  %v490 = vld [vmem:[%s1 + $0xeb0] sm:$0xff]
  %v491 = vld [vmem:[%s1 + $0xeb8] sm:$0xff]
  %v492 = vld [vmem:[%s1 + $0xec0] sm:$0xff]
  %v493 = vld [vmem:[%s1 + $0xec8] sm:$0xff]
  %v494 = vld [vmem:[%s1 + $0xed0] sm:$0xff]
  %v495 = vld [vmem:[%s1 + $0xed8] sm:$0xff]
  %v496 = vld [vmem:[%s1 + $0xee0] sm:$0xff]
  %v497 = vld [vmem:[%s1 + $0xee8] sm:$0xff]
  %v498 = vld [vmem:[%s1 + $0xef0] sm:$0xff]
  %v499 = vld [vmem:[%s1 + $0xef8] sm:$0xff]
  %v500 = vld [vmem:[%s1 + $0xf00] sm:$0xff]
  %v501 = vld [vmem:[%s1 + $0xf08] sm:$0xff]
  %v502 = vld [vmem:[%s1 + $0xf10] sm:$0xff]
  %v503 = vld [vmem:[%s1 + $0xf18] sm:$0xff]
  %v504 = vld [vmem:[%s1 + $0xf20] sm:$0xff]
  %v505 = vld [vmem:[%s1 + $0xf28] sm:$0xff]
  %v506 = vld [vmem:[%s1 + $0xf30] sm:$0xff]
  %v507 = vld [vmem:[%s1 + $0xf38] sm:$0xff]
  %v508 = vld [vmem:[%s1 + $0xf40] sm:$0xff]
  %v509 = vld [vmem:[%s1 + $0xf48] sm:$0xff]
  %v510 = vld [vmem:[%s1 + $0xf50] sm:$0xff]
  %v511 = vld [vmem:[%s1 + $0xf58] sm:$0xff]
  %v512 = vld [vmem:[%s1 + $0xf60] sm:$0xff]
  %v513 = vld [vmem:[%s1 + $0xf68] sm:$0xff]
  %v514 = vld [vmem:[%s1 + $0xf70] sm:$0xff]
  %v515 = vld [vmem:[%s1 + $0xf78] sm:$0xff]
  %v516 = vld [vmem:[%s1 + $0xf80] sm:$0xff]
  %v517 = vld [vmem:[%s1 + $0xf88] sm:$0xff]
  %v518 = vld [vmem:[%s1 + $0xf90] sm:$0xff]
  %v519 = vld [vmem:[%s1 + $0xf98] sm:$0xff]
  %v520 = vld [vmem:[%s1 + $0xfa0] sm:$0xff]
  %v521 = vld [vmem:[%s1 + $0xfa8] sm:$0xff]
  %v522 = vld [vmem:[%s1 + $0xfb0] sm:$0xff]
  %v523 = vld [vmem:[%s1 + $0xfb8] sm:$0xff]
  %v524 = vld [vmem:[%s1 + $0xfc0] sm:$0xff]
  %v525 = vld [vmem:[%s1 + $0xfc8] sm:$0xff]
  %v526 = vld [vmem:[%s1 + $0xfd0] sm:$0xff]
  %v527 = vld [vmem:[%s1 + $0xfd8] sm:$0xff]
  %v528 = vld [vmem:[%s1 + $0xfe0] sm:$0xff]
  %v529 = vld [vmem:[%s1 + $0xfe8] sm:$0xff]
  %v530 = vld [vmem:[%s1 + $0xff0] sm:$0xff]
  %v531 = vld [vmem:[%s1 + $0xff8] sm:$0xff]
  %v532 = vld [vmem:[%s1 + $0x1000] sm:$0xff]
  %v533 = vld [vmem:[%s1 + $0x1008] sm:$0xff]
  %v534 = vld [vmem:[%s1 + $0x1010] sm:$0xff]
  %v535 = vld [vmem:[%s1 + $0x1018] sm:$0xff]
  %v536 = vld [vmem:[%s1 + $0x1020] sm:$0xff]
  %v537 = vld [vmem:[%s1 + $0x1028] sm:$0xff]
  %v538 = vld [vmem:[%s1 + $0x1030] sm:$0xff]
  %v539 = vld [vmem:[%s1 + $0x1038] sm:$0xff]
  %v540 = vld [vmem:[%s1 + $0x1040] sm:$0xff]
  %v541 = vld [vmem:[%s1 + $0x1048] sm:$0xff]
  %v542 = vld [vmem:[%s1 + $0x1050] sm:$0xff]
  %v543 = vld [vmem:[%s1 + $0x1058] sm:$0xff]
  %v544 = vld [vmem:[%s1 + $0x1060] sm:$0xff]
  %v545 = vld [vmem:[%s1 + $0x1068] sm:$0xff]
  %v546 = vld [vmem:[%s1 + $0x1070] sm:$0xff]
  %v547 = vld [vmem:[%s1 + $0x1078] sm:$0xff]
  %v548 = vld [vmem:[%s1 + $0x1080] sm:$0xff]
  %v549 = vld [vmem:[%s1 + $0x1088] sm:$0xff]
  %v550 = vld [vmem:[%s1 + $0x1090] sm:$0xff]
  %v551 = vld [vmem:[%s1 + $0x1098] sm:$0x7]
  %v552 = vld [vmem:[%s1 + $0x10a0] sm:$0x7]
  %v553 = vld [vmem:[%s1 + $0x10a8] sm:$0x7]
  %v554 = vld [vmem:[%s1 + $0x10b0] sm:$0x7]
  %v555 = vld [vmem:[%s1 + $0x10b8] sm:$0x7]
  %v556 = vld [vmem:[%s1 + $0x10c0] sm:$0x7]
  %v557 = vld [vmem:[%s1 + $0x10c8] sm:$0x7]
  %v558 = vld [vmem:[%s1 + $0x10d0] sm:$0x7]
  %v559 = vld [vmem:[%s1 + $0x10d8] sm:$0x7]
  %v560 = vld [vmem:[%s1 + $0x10e0] sm:$0x7]
  %v561 = vld [vmem:[%s1 + $0x10e8] sm:$0x7]
  %v562 = vld [vmem:[%s1 + $0x10f0] sm:$0x7]
  %v563 = vld [vmem:[%s1 + $0x10f8] sm:$0x7]
  %v564 = vld [vmem:[%s1 + $0x1100] sm:$0x7]
  %v565 = vld [vmem:[%s1 + $0x1108] sm:$0x7]
  %v566 = vld [vmem:[%s1 + $0x1110] sm:$0x7]
  %v567 = vld [vmem:[%s1 + $0x1118] sm:$0x7]
  %v568 = vld [vmem:[%s1 + $0x1120] sm:$0x7]
  %v569 = vld [vmem:[%s1 + $0x1128] sm:$0x7]
  %v570 = vld [vmem:[%s1 + $0x1130] sm:$0x7]
  %v571 = vld [vmem:[%s1 + $0x1138] sm:$0x7]
  %v572 = vld [vmem:[%s1 + $0x1140] sm:$0x7]
  %v573 = vld [vmem:[%s1 + $0x1148] sm:$0x7]
  %v574 = vld [vmem:[%s1 + $0x1150] sm:$0x7]
  %v575 = vld [vmem:[%s1 + $0x1158] sm:$0x7]
  %v576 = vld [vmem:[%s1 + $0x1160] sm:$0x7]
  %v577 = vld [vmem:[%s1 + $0x1168] sm:$0x7]
  %v578 = vld [vmem:[%s1 + $0x1170] sm:$0x7]
  %v579 = vld [vmem:[%s1 + $0x1178] sm:$0x7]
  %v580 = vld [vmem:[%s1 + $0x1180] sm:$0x7]
  %v581 = vld [vmem:[%s1 + $0x1188] sm:$0x7]
  %v582 = vld [vmem:[%s1 + $0x1190] sm:$0x7]
  %v583 = vld [vmem:[%s1 + $0x1198] sm:$0x7]
  %v584 = vld [vmem:[%s1 + $0x11a0] sm:$0x7]
  %v585 = vld [vmem:[%s1 + $0x11a8] sm:$0x7]
  %v586 = vld [vmem:[%s1 + $0x11b0] sm:$0x7]
  %v587 = vld [vmem:[%s1 + $0x11b8] sm:$0x7]
  %v588 = vld [vmem:[%s1 + $0x11c0] sm:$0x7]
  %v589 = vld [vmem:[%s1 + $0x11c8] sm:$0x7]
  %v590 = vld [vmem:[%s1 + $0x11d0] sm:$0x7]
  %v591 = vld [vmem:[%s1 + $0x11d8] sm:$0x7]
  %v592 = vld [vmem:[%s1 + $0x11e0] sm:$0x7]
  %v593 = vld [vmem:[%s1 + $0x11e8] sm:$0x7]
  %v594 = vld [vmem:[%s1 + $0x11f0] sm:$0x7]
  %v595 = vld [vmem:[%s1 + $0x11f8] sm:$0x7]
  %v596 = vld [vmem:[%s1 + $0x1200] sm:$0x7]
  %v597 = vld [vmem:[%s1 + $0x1208] sm:$0x7]
  %v598 = vld [vmem:[%s1 + $0x1210] sm:$0x7]
  %v599 = vld [vmem:[%s1 + $0x1218] sm:$0x7]
  %v600 = vld [vmem:[%s1 + $0x1220] sm:$0x7]
  %v601 = vld [vmem:[%s1 + $0x1228] sm:$0x7]
  %v602 = vld [vmem:[%s1 + $0x1230] sm:$0x7]
  %v603 = vld [vmem:[%s1 + $0x1238] sm:$0x7]
  %v604 = vld [vmem:[%s1 + $0x1240] sm:$0x7]
  %v605 = vld [vmem:[%s1 + $0x1248] sm:$0x7]
  %v606 = vld [vmem:[%s1 + $0x1250] sm:$0x7]
  %v607 = vld [vmem:[%s1 + $0x1258] sm:$0x7]
  %v608 = vld [vmem:[%s1 + $0x1260] sm:$0x7]
  %v609 = vld [vmem:[%s1 + $0x1268] sm:$0x7]
  %v610 = vld [vmem:[%s2] sm:$0xff]
  %612 = vset.pattern.permute.xlu0 0
  %613 = vperm.xlu0 %612, %v610
  %v614 = vpop.permute.xlu0 %613
  %vm616 = vcmask 613376
  %v618 = vsel %vm616, %v19, 0
  %vm620 = vcmask 1042432
  %v622 = vsel %vm620, %v551, 0
  %v625 = vsel %vm620, %v552, 0
  %v628 = vsel %vm620, %v553, 0
  %v631 = vsel %vm620, %v554, 0
  %v634 = vsel %vm620, %v555, 0
  %v637 = vsel %vm620, %v556, 0
  %v640 = vsel %vm620, %v557, 0
  %v643 = vsel %vm620, %v558, 0
  %v646 = vsel %vm620, %v559, 0
  %v649 = vsel %vm620, %v560, 0
  %v652 = vsel %vm620, %v561, 0
  %v655 = vsel %vm620, %v562, 0
  %v658 = vsel %vm620, %v563, 0
  %v661 = vsel %vm620, %v564, 0
  %v664 = vsel %vm620, %v565, 0
  %v667 = vsel %vm620, %v566, 0
  %v670 = vsel %vm620, %v567, 0
  %v673 = vsel %vm620, %v568, 0
  %v676 = vsel %vm620, %v569, 0
  %v679 = vsel %vm620, %v570, 0
  %v682 = vsel %vm620, %v571, 0
  %v685 = vsel %vm620, %v572, 0
  %v688 = vsel %vm620, %v573, 0
  %v691 = vsel %vm620, %v574, 0
  %v694 = vsel %vm620, %v575, 0
  %v697 = vsel %vm620, %v576, 0
  %v700 = vsel %vm620, %v577, 0
  %v703 = vsel %vm620, %v578, 0
  %v706 = vsel %vm620, %v579, 0
  %v709 = vsel %vm620, %v580, 0
  %v712 = vsel %vm620, %v581, 0
  %v715 = vsel %vm620, %v582, 0
  %v718 = vsel %vm620, %v583, 0
  %v721 = vsel %vm620, %v584, 0
  %v724 = vsel %vm620, %v585, 0
  %v727 = vsel %vm620, %v586, 0
  %v730 = vsel %vm620, %v587, 0
  %v733 = vsel %vm620, %v588, 0
  %v736 = vsel %vm620, %v589, 0
  %v739 = vsel %vm620, %v590, 0
  %v742 = vsel %vm620, %v591, 0
  %v745 = vsel %vm620, %v592, 0
  %v748 = vsel %vm620, %v593, 0
  %v751 = vsel %vm620, %v594, 0
  %v754 = vsel %vm620, %v595, 0
  %v757 = vsel %vm620, %v596, 0
  %v760 = vsel %vm620, %v597, 0
  %v763 = vsel %vm620, %v598, 0
  %v766 = vsel %vm620, %v599, 0
  %v769 = vsel %vm620, %v600, 0
  %v772 = vsel %vm620, %v601, 0
  %v775 = vsel %vm620, %v602, 0
  %v778 = vsel %vm620, %v603, 0
  %v781 = vsel %vm620, %v604, 0
  %v784 = vsel %vm620, %v605, 0
  %v787 = vsel %vm620, %v606, 0
  %v790 = vsel %vm620, %v607, 0
  %v793 = vsel %vm620, %v608, 0
  %v796 = vsel %vm620, %v609, 0
  %798 = vmatpush.msra.mxu0 0.0
  %799 = vmatpush.msra.mxu0 0.0
  %800 = vmatpush.msra.mxu0 0.0
  %801 = vmatpush.msra.mxu0 0.0
  %802 = vmatpush.msra.mxu0 0.0
  %803 = vmatpush.msra.mxu0 0.0
  %804 = vmatpush.msra.mxu0 %v622
  %805 = vmatpush.msra.mxu0 %v492
  %806 = vmatpush.msra.mxu0 %v433
  %807 = vmatpush.msra.mxu0 %v374
  %808 = vmatpush.msra.mxu0 %v315
  %809 = vmatpush.msra.mxu0 %v256
  %810 = vmatpush.msra.mxu0 %v197
  %811 = vmatpush.msra.mxu0 %v138
  %812 = vmatpush.msra.mxu0 %v79
  %813 = vmatpush.msra.mxu0 %v20
  %814 = vmatmul.f32.gmra.mxu0 %v618
  %v815 = vpop.f32.mrf.mxu0
  %v816 = vadd.f32 %v614, %v815
  %817 = vdwg.mxu0
  %818 = vmatpush.msra.mxu0 0.0
  %819 = vmatpush.msra.mxu0 0.0
  %820 = vmatpush.msra.mxu0 0.0
  %821 = vmatpush.msra.mxu0 0.0
  %822 = vmatpush.msra.mxu0 0.0
  %823 = vmatpush.msra.mxu0 0.0
  %824 = vmatpush.msra.mxu0 %v625
  %825 = vmatpush.msra.mxu0 %v493
  %826 = vmatpush.msra.mxu0 %v434
  %827 = vmatpush.msra.mxu0 %v375
  %828 = vmatpush.msra.mxu0 %v316
  %829 = vmatpush.msra.mxu0 %v257
  %830 = vmatpush.msra.mxu0 %v198
  %831 = vmatpush.msra.mxu0 %v139
  %832 = vmatpush.msra.mxu0 %v80
  %833 = vmatpush.msra.mxu0 %v21
  %834 = vmatmul.f32.gmra.mxu0 %v618
  %v835 = vpop.f32.mrf.mxu0
  %v836 = vadd.f32 %v614, %v835
  %837 = vdwg.mxu0
  %838 = vmatpush.msra.mxu0 0.0
  %839 = vmatpush.msra.mxu0 0.0
  %840 = vmatpush.msra.mxu0 0.0
  %841 = vmatpush.msra.mxu0 0.0
  %842 = vmatpush.msra.mxu0 0.0
  %843 = vmatpush.msra.mxu0 0.0
  %844 = vmatpush.msra.mxu0 %v628
  %845 = vmatpush.msra.mxu0 %v494
  %846 = vmatpush.msra.mxu0 %v435
  %847 = vmatpush.msra.mxu0 %v376
  %848 = vmatpush.msra.mxu0 %v317
  %849 = vmatpush.msra.mxu0 %v258
  %850 = vmatpush.msra.mxu0 %v199
  %851 = vmatpush.msra.mxu0 %v140
  %852 = vmatpush.msra.mxu0 %v81
  %853 = vmatpush.msra.mxu0 %v22
  %854 = vmatmul.f32.gmra.mxu0 %v618
  %v855 = vpop.f32.mrf.mxu0
  %v856 = vadd.f32 %v614, %v855
  %857 = vdwg.mxu0
  %858 = vmatpush.msra.mxu0 0.0
  %859 = vmatpush.msra.mxu0 0.0
  %860 = vmatpush.msra.mxu0 0.0
  %861 = vmatpush.msra.mxu0 0.0
  %862 = vmatpush.msra.mxu0 0.0
  %863 = vmatpush.msra.mxu0 0.0
  %864 = vmatpush.msra.mxu0 %v631
  %865 = vmatpush.msra.mxu0 %v495
  %866 = vmatpush.msra.mxu0 %v436
  %867 = vmatpush.msra.mxu0 %v377
  %868 = vmatpush.msra.mxu0 %v318
  %869 = vmatpush.msra.mxu0 %v259
  %870 = vmatpush.msra.mxu0 %v200
  %871 = vmatpush.msra.mxu0 %v141
  %872 = vmatpush.msra.mxu0 %v82
  %873 = vmatpush.msra.mxu0 %v23
  %874 = vmatmul.f32.gmra.mxu0 %v618
  %v875 = vpop.f32.mrf.mxu0
  %v876 = vadd.f32 %v614, %v875
  %877 = vdwg.mxu0
  %878 = vmatpush.msra.mxu0 0.0
  %879 = vmatpush.msra.mxu0 0.0
  %880 = vmatpush.msra.mxu0 0.0
  %881 = vmatpush.msra.mxu0 0.0
  %882 = vmatpush.msra.mxu0 0.0
  %883 = vmatpush.msra.mxu0 0.0
  %884 = vmatpush.msra.mxu0 %v634
  %885 = vmatpush.msra.mxu0 %v496
  %886 = vmatpush.msra.mxu0 %v437
  %887 = vmatpush.msra.mxu0 %v378
  %888 = vmatpush.msra.mxu0 %v319
  %889 = vmatpush.msra.mxu0 %v260
  %890 = vmatpush.msra.mxu0 %v201
  %891 = vmatpush.msra.mxu0 %v142
  %892 = vmatpush.msra.mxu0 %v83
  %893 = vmatpush.msra.mxu0 %v24
  %894 = vmatmul.f32.gmra.mxu0 %v618
  %v895 = vpop.f32.mrf.mxu0
  %v896 = vadd.f32 %v614, %v895
  %897 = vdwg.mxu0
  %898 = vmatpush.msra.mxu0 0.0
  %899 = vmatpush.msra.mxu0 0.0
  %900 = vmatpush.msra.mxu0 0.0
  %901 = vmatpush.msra.mxu0 0.0
  %902 = vmatpush.msra.mxu0 0.0
  %903 = vmatpush.msra.mxu0 0.0
  %904 = vmatpush.msra.mxu0 %v637
  %905 = vmatpush.msra.mxu0 %v497
  %906 = vmatpush.msra.mxu0 %v438
  %907 = vmatpush.msra.mxu0 %v379
  %908 = vmatpush.msra.mxu0 %v320
  %909 = vmatpush.msra.mxu0 %v261
  %910 = vmatpush.msra.mxu0 %v202
  %911 = vmatpush.msra.mxu0 %v143
  %912 = vmatpush.msra.mxu0 %v84
  %913 = vmatpush.msra.mxu0 %v25
  %914 = vmatmul.f32.gmra.mxu0 %v618
  %v915 = vpop.f32.mrf.mxu0
  %v916 = vadd.f32 %v614, %v915
  %917 = vdwg.mxu0
  %918 = vmatpush.msra.mxu0 0.0
  %919 = vmatpush.msra.mxu0 0.0
  %920 = vmatpush.msra.mxu0 0.0
  %921 = vmatpush.msra.mxu0 0.0
  %922 = vmatpush.msra.mxu0 0.0
  %923 = vmatpush.msra.mxu0 0.0
  %924 = vmatpush.msra.mxu0 %v640
  %925 = vmatpush.msra.mxu0 %v498
  %926 = vmatpush.msra.mxu0 %v439
  %927 = vmatpush.msra.mxu0 %v380
  %928 = vmatpush.msra.mxu0 %v321
  %929 = vmatpush.msra.mxu0 %v262
  %930 = vmatpush.msra.mxu0 %v203
  %931 = vmatpush.msra.mxu0 %v144
  %932 = vmatpush.msra.mxu0 %v85
  %933 = vmatpush.msra.mxu0 %v26
  %934 = vmatmul.f32.gmra.mxu0 %v618
  %v935 = vpop.f32.mrf.mxu0
  %v936 = vadd.f32 %v614, %v935
  %937 = vdwg.mxu0
  %938 = vmatpush.msra.mxu0 0.0
  %939 = vmatpush.msra.mxu0 0.0
  %940 = vmatpush.msra.mxu0 0.0
  %941 = vmatpush.msra.mxu0 0.0
  %942 = vmatpush.msra.mxu0 0.0
  %943 = vmatpush.msra.mxu0 0.0
  %944 = vmatpush.msra.mxu0 %v643
  %945 = vmatpush.msra.mxu0 %v499
  %946 = vmatpush.msra.mxu0 %v440
  %947 = vmatpush.msra.mxu0 %v381
  %948 = vmatpush.msra.mxu0 %v322
  %949 = vmatpush.msra.mxu0 %v263
  %950 = vmatpush.msra.mxu0 %v204
  %951 = vmatpush.msra.mxu0 %v145
  %952 = vmatpush.msra.mxu0 %v86
  %953 = vmatpush.msra.mxu0 %v27
  %954 = vmatmul.f32.gmra.mxu0 %v618
  %v955 = vpop.f32.mrf.mxu0
  %v956 = vadd.f32 %v614, %v955
  %957 = vdwg.mxu0
  %958 = vmatpush.msra.mxu0 0.0
  %959 = vmatpush.msra.mxu0 0.0
  %960 = vmatpush.msra.mxu0 0.0
  %961 = vmatpush.msra.mxu0 0.0
  %962 = vmatpush.msra.mxu0 0.0
  %963 = vmatpush.msra.mxu0 0.0
  %964 = vmatpush.msra.mxu0 %v646
  %965 = vmatpush.msra.mxu0 %v500
  %966 = vmatpush.msra.mxu0 %v441
  %967 = vmatpush.msra.mxu0 %v382
  %968 = vmatpush.msra.mxu0 %v323
  %969 = vmatpush.msra.mxu0 %v264
  %970 = vmatpush.msra.mxu0 %v205
  %971 = vmatpush.msra.mxu0 %v146
  %972 = vmatpush.msra.mxu0 %v87
  %973 = vmatpush.msra.mxu0 %v28
  %974 = vmatmul.f32.gmra.mxu0 %v618
  %v975 = vpop.f32.mrf.mxu0
  %v976 = vadd.f32 %v614, %v975
  %977 = vdwg.mxu0
  %978 = vmatpush.msra.mxu0 0.0
  %979 = vmatpush.msra.mxu0 0.0
  %980 = vmatpush.msra.mxu0 0.0
  %981 = vmatpush.msra.mxu0 0.0
  %982 = vmatpush.msra.mxu0 0.0
  %983 = vmatpush.msra.mxu0 0.0
  %984 = vmatpush.msra.mxu0 %v649
  %985 = vmatpush.msra.mxu0 %v501
  %986 = vmatpush.msra.mxu0 %v442
  %987 = vmatpush.msra.mxu0 %v383
  %988 = vmatpush.msra.mxu0 %v324
  %989 = vmatpush.msra.mxu0 %v265
  %990 = vmatpush.msra.mxu0 %v206
  %991 = vmatpush.msra.mxu0 %v147
  %992 = vmatpush.msra.mxu0 %v88
  %993 = vmatpush.msra.mxu0 %v29
  %994 = vmatmul.f32.gmra.mxu0 %v618
  %v995 = vpop.f32.mrf.mxu0
  %v996 = vadd.f32 %v614, %v995
  %997 = vdwg.mxu0
  %998 = vmatpush.msra.mxu0 0.0
  %999 = vmatpush.msra.mxu0 0.0
  %1000 = vmatpush.msra.mxu0 0.0
  %1001 = vmatpush.msra.mxu0 0.0
  %1002 = vmatpush.msra.mxu0 0.0
  %1003 = vmatpush.msra.mxu0 0.0
  %1004 = vmatpush.msra.mxu0 %v652
  %1005 = vmatpush.msra.mxu0 %v502
  %1006 = vmatpush.msra.mxu0 %v443
  %1007 = vmatpush.msra.mxu0 %v384
  %1008 = vmatpush.msra.mxu0 %v325
  %1009 = vmatpush.msra.mxu0 %v266
  %1010 = vmatpush.msra.mxu0 %v207
  %1011 = vmatpush.msra.mxu0 %v148
  %1012 = vmatpush.msra.mxu0 %v89
  %1013 = vmatpush.msra.mxu0 %v30
  %1014 = vmatmul.f32.gmra.mxu0 %v618
  %v1015 = vpop.f32.mrf.mxu0
  %v1016 = vadd.f32 %v614, %v1015
  %1017 = vdwg.mxu0
  %1018 = vmatpush.msra.mxu0 0.0
  %1019 = vmatpush.msra.mxu0 0.0
  %1020 = vmatpush.msra.mxu0 0.0
  %1021 = vmatpush.msra.mxu0 0.0
  %1022 = vmatpush.msra.mxu0 0.0
  %1023 = vmatpush.msra.mxu0 0.0
  %1024 = vmatpush.msra.mxu0 %v655
  %1025 = vmatpush.msra.mxu0 %v503
  %1026 = vmatpush.msra.mxu0 %v444
  %1027 = vmatpush.msra.mxu0 %v385
  %1028 = vmatpush.msra.mxu0 %v326
  %1029 = vmatpush.msra.mxu0 %v267
  %1030 = vmatpush.msra.mxu0 %v208
  %1031 = vmatpush.msra.mxu0 %v149
  %1032 = vmatpush.msra.mxu0 %v90
  %1033 = vmatpush.msra.mxu0 %v31
  %1034 = vmatmul.f32.gmra.mxu0 %v618
  %v1035 = vpop.f32.mrf.mxu0
  %v1036 = vadd.f32 %v614, %v1035
  %1037 = vdwg.mxu0
  %1038 = vmatpush.msra.mxu0 0.0
  %1039 = vmatpush.msra.mxu0 0.0
  %1040 = vmatpush.msra.mxu0 0.0
  %1041 = vmatpush.msra.mxu0 0.0
  %1042 = vmatpush.msra.mxu0 0.0
  %1043 = vmatpush.msra.mxu0 0.0
  %1044 = vmatpush.msra.mxu0 %v658
  %1045 = vmatpush.msra.mxu0 %v504
  %1046 = vmatpush.msra.mxu0 %v445
  %1047 = vmatpush.msra.mxu0 %v386
  %1048 = vmatpush.msra.mxu0 %v327
  %1049 = vmatpush.msra.mxu0 %v268
  %1050 = vmatpush.msra.mxu0 %v209
  %1051 = vmatpush.msra.mxu0 %v150
  %1052 = vmatpush.msra.mxu0 %v91
  %1053 = vmatpush.msra.mxu0 %v32
  %1054 = vmatmul.f32.gmra.mxu0 %v618
  %v1055 = vpop.f32.mrf.mxu0
  %v1056 = vadd.f32 %v614, %v1055
  %1057 = vdwg.mxu0
  %1058 = vmatpush.msra.mxu0 0.0
  %1059 = vmatpush.msra.mxu0 0.0
  %1060 = vmatpush.msra.mxu0 0.0
  %1061 = vmatpush.msra.mxu0 0.0
  %1062 = vmatpush.msra.mxu0 0.0
  %1063 = vmatpush.msra.mxu0 0.0
  %1064 = vmatpush.msra.mxu0 %v661
  %1065 = vmatpush.msra.mxu0 %v505
  %1066 = vmatpush.msra.mxu0 %v446
  %1067 = vmatpush.msra.mxu0 %v387
  %1068 = vmatpush.msra.mxu0 %v328
  %1069 = vmatpush.msra.mxu0 %v269
  %1070 = vmatpush.msra.mxu0 %v210
  %1071 = vmatpush.msra.mxu0 %v151
  %1072 = vmatpush.msra.mxu0 %v92
  %1073 = vmatpush.msra.mxu0 %v33
  %1074 = vmatmul.f32.gmra.mxu0 %v618
  %v1075 = vpop.f32.mrf.mxu0
  %v1076 = vadd.f32 %v614, %v1075
  %1077 = vdwg.mxu0
  %1078 = vmatpush.msra.mxu0 0.0
  %1079 = vmatpush.msra.mxu0 0.0
  %1080 = vmatpush.msra.mxu0 0.0
  %1081 = vmatpush.msra.mxu0 0.0
  %1082 = vmatpush.msra.mxu0 0.0
  %1083 = vmatpush.msra.mxu0 0.0
  %1084 = vmatpush.msra.mxu0 %v664
  %1085 = vmatpush.msra.mxu0 %v506
  %1086 = vmatpush.msra.mxu0 %v447
  %1087 = vmatpush.msra.mxu0 %v388
  %1088 = vmatpush.msra.mxu0 %v329
  %1089 = vmatpush.msra.mxu0 %v270
  %1090 = vmatpush.msra.mxu0 %v211
  %1091 = vmatpush.msra.mxu0 %v152
  %1092 = vmatpush.msra.mxu0 %v93
  %1093 = vmatpush.msra.mxu0 %v34
  %1094 = vmatmul.f32.gmra.mxu0 %v618
  %v1095 = vpop.f32.mrf.mxu0
  %v1096 = vadd.f32 %v614, %v1095
  %1097 = vdwg.mxu0
  %1098 = vmatpush.msra.mxu0 0.0
  %1099 = vmatpush.msra.mxu0 0.0
  %1100 = vmatpush.msra.mxu0 0.0
  %1101 = vmatpush.msra.mxu0 0.0
  %1102 = vmatpush.msra.mxu0 0.0
  %1103 = vmatpush.msra.mxu0 0.0
  %1104 = vmatpush.msra.mxu0 %v667
  %1105 = vmatpush.msra.mxu0 %v507
  %1106 = vmatpush.msra.mxu0 %v448
  %1107 = vmatpush.msra.mxu0 %v389
  %1108 = vmatpush.msra.mxu0 %v330
  %1109 = vmatpush.msra.mxu0 %v271
  %1110 = vmatpush.msra.mxu0 %v212
  %1111 = vmatpush.msra.mxu0 %v153
  %1112 = vmatpush.msra.mxu0 %v94
  %1113 = vmatpush.msra.mxu0 %v35
  %1114 = vmatmul.f32.gmra.mxu0 %v618
  %v1115 = vpop.f32.mrf.mxu0
  %v1116 = vadd.f32 %v614, %v1115
  %1117 = vdwg.mxu0
  %1118 = vmatpush.msra.mxu0 0.0
  %1119 = vmatpush.msra.mxu0 0.0
  %1120 = vmatpush.msra.mxu0 0.0
  %1121 = vmatpush.msra.mxu0 0.0
  %1122 = vmatpush.msra.mxu0 0.0
  %1123 = vmatpush.msra.mxu0 0.0
  %1124 = vmatpush.msra.mxu0 %v670
  %1125 = vmatpush.msra.mxu0 %v508
  %1126 = vmatpush.msra.mxu0 %v449
  %1127 = vmatpush.msra.mxu0 %v390
  %1128 = vmatpush.msra.mxu0 %v331
  %1129 = vmatpush.msra.mxu0 %v272
  %1130 = vmatpush.msra.mxu0 %v213
  %1131 = vmatpush.msra.mxu0 %v154
  %1132 = vmatpush.msra.mxu0 %v95
  %1133 = vmatpush.msra.mxu0 %v36
  %1134 = vmatmul.f32.gmra.mxu0 %v618
  %v1135 = vpop.f32.mrf.mxu0
  %v1136 = vadd.f32 %v614, %v1135
  %1137 = vdwg.mxu0
  %1138 = vmatpush.msra.mxu0 0.0
  %1139 = vmatpush.msra.mxu0 0.0
  %1140 = vmatpush.msra.mxu0 0.0
  %1141 = vmatpush.msra.mxu0 0.0
  %1142 = vmatpush.msra.mxu0 0.0
  %1143 = vmatpush.msra.mxu0 0.0
  %1144 = vmatpush.msra.mxu0 %v673
  %1145 = vmatpush.msra.mxu0 %v509
  %1146 = vmatpush.msra.mxu0 %v450
  %1147 = vmatpush.msra.mxu0 %v391
  %1148 = vmatpush.msra.mxu0 %v332
  %1149 = vmatpush.msra.mxu0 %v273
  %1150 = vmatpush.msra.mxu0 %v214
  %1151 = vmatpush.msra.mxu0 %v155
  %1152 = vmatpush.msra.mxu0 %v96
  %1153 = vmatpush.msra.mxu0 %v37
  %1154 = vmatmul.f32.gmra.mxu0 %v618
  %v1155 = vpop.f32.mrf.mxu0
  %v1156 = vadd.f32 %v614, %v1155
  %1157 = vdwg.mxu0
  %1158 = vmatpush.msra.mxu0 0.0
  %1159 = vmatpush.msra.mxu0 0.0
  %1160 = vmatpush.msra.mxu0 0.0
  %1161 = vmatpush.msra.mxu0 0.0
  %1162 = vmatpush.msra.mxu0 0.0
  %1163 = vmatpush.msra.mxu0 0.0
  %1164 = vmatpush.msra.mxu0 %v676
  %1165 = vmatpush.msra.mxu0 %v510
  %1166 = vmatpush.msra.mxu0 %v451
  %1167 = vmatpush.msra.mxu0 %v392
  %1168 = vmatpush.msra.mxu0 %v333
  %1169 = vmatpush.msra.mxu0 %v274
  %1170 = vmatpush.msra.mxu0 %v215
  %1171 = vmatpush.msra.mxu0 %v156
  %1172 = vmatpush.msra.mxu0 %v97
  %1173 = vmatpush.msra.mxu0 %v38
  %1174 = vmatmul.f32.gmra.mxu0 %v618
  %v1175 = vpop.f32.mrf.mxu0
  %v1176 = vadd.f32 %v614, %v1175
  %1177 = vdwg.mxu0
  %1178 = vmatpush.msra.mxu0 0.0
  %1179 = vmatpush.msra.mxu0 0.0
  %1180 = vmatpush.msra.mxu0 0.0
  %1181 = vmatpush.msra.mxu0 0.0
  %1182 = vmatpush.msra.mxu0 0.0
  %1183 = vmatpush.msra.mxu0 0.0
  %1184 = vmatpush.msra.mxu0 %v679
  %1185 = vmatpush.msra.mxu0 %v511
  %1186 = vmatpush.msra.mxu0 %v452
  %1187 = vmatpush.msra.mxu0 %v393
  %1188 = vmatpush.msra.mxu0 %v334
  %1189 = vmatpush.msra.mxu0 %v275
  %1190 = vmatpush.msra.mxu0 %v216
  %1191 = vmatpush.msra.mxu0 %v157
  %1192 = vmatpush.msra.mxu0 %v98
  %1193 = vmatpush.msra.mxu0 %v39
  %1194 = vmatmul.f32.gmra.mxu0 %v618
  %v1195 = vpop.f32.mrf.mxu0
  %v1196 = vadd.f32 %v614, %v1195
  %1197 = vdwg.mxu0
  %1198 = vmatpush.msra.mxu0 0.0
  %1199 = vmatpush.msra.mxu0 0.0
  %1200 = vmatpush.msra.mxu0 0.0
  %1201 = vmatpush.msra.mxu0 0.0
  %1202 = vmatpush.msra.mxu0 0.0
  %1203 = vmatpush.msra.mxu0 0.0
  %1204 = vmatpush.msra.mxu0 %v682
  %1205 = vmatpush.msra.mxu0 %v512
  %1206 = vmatpush.msra.mxu0 %v453
  %1207 = vmatpush.msra.mxu0 %v394
  %1208 = vmatpush.msra.mxu0 %v335
  %1209 = vmatpush.msra.mxu0 %v276
  %1210 = vmatpush.msra.mxu0 %v217
  %1211 = vmatpush.msra.mxu0 %v158
  %1212 = vmatpush.msra.mxu0 %v99
  %1213 = vmatpush.msra.mxu0 %v40
  %1214 = vmatmul.f32.gmra.mxu0 %v618
  %v1215 = vpop.f32.mrf.mxu0
  %v1216 = vadd.f32 %v614, %v1215
  %1217 = vdwg.mxu0
  %1218 = vmatpush.msra.mxu0 0.0
  %1219 = vmatpush.msra.mxu0 0.0
  %1220 = vmatpush.msra.mxu0 0.0
  %1221 = vmatpush.msra.mxu0 0.0
  %1222 = vmatpush.msra.mxu0 0.0
  %1223 = vmatpush.msra.mxu0 0.0
  %1224 = vmatpush.msra.mxu0 %v685
  %1225 = vmatpush.msra.mxu0 %v513
  %1226 = vmatpush.msra.mxu0 %v454
  %1227 = vmatpush.msra.mxu0 %v395
  %1228 = vmatpush.msra.mxu0 %v336
  %1229 = vmatpush.msra.mxu0 %v277
  %1230 = vmatpush.msra.mxu0 %v218
  %1231 = vmatpush.msra.mxu0 %v159
  %1232 = vmatpush.msra.mxu0 %v100
  %1233 = vmatpush.msra.mxu0 %v41
  %1234 = vmatmul.f32.gmra.mxu0 %v618
  %v1235 = vpop.f32.mrf.mxu0
  %v1236 = vadd.f32 %v614, %v1235
  %1237 = vdwg.mxu0
  %1238 = vmatpush.msra.mxu0 0.0
  %1239 = vmatpush.msra.mxu0 0.0
  %1240 = vmatpush.msra.mxu0 0.0
  %1241 = vmatpush.msra.mxu0 0.0
  %1242 = vmatpush.msra.mxu0 0.0
  %1243 = vmatpush.msra.mxu0 0.0
  %1244 = vmatpush.msra.mxu0 %v688
  %1245 = vmatpush.msra.mxu0 %v514
  %1246 = vmatpush.msra.mxu0 %v455
  %1247 = vmatpush.msra.mxu0 %v396
  %1248 = vmatpush.msra.mxu0 %v337
  %1249 = vmatpush.msra.mxu0 %v278
  %1250 = vmatpush.msra.mxu0 %v219
  %1251 = vmatpush.msra.mxu0 %v160
  %1252 = vmatpush.msra.mxu0 %v101
  %1253 = vmatpush.msra.mxu0 %v42
  %1254 = vmatmul.f32.gmra.mxu0 %v618
  %v1255 = vpop.f32.mrf.mxu0
  %v1256 = vadd.f32 %v614, %v1255
  %1257 = vdwg.mxu0
  %1258 = vmatpush.msra.mxu0 0.0
  %1259 = vmatpush.msra.mxu0 0.0
  %1260 = vmatpush.msra.mxu0 0.0
  %1261 = vmatpush.msra.mxu0 0.0
  %1262 = vmatpush.msra.mxu0 0.0
  %1263 = vmatpush.msra.mxu0 0.0
  %1264 = vmatpush.msra.mxu0 %v691
  %1265 = vmatpush.msra.mxu0 %v515
  %1266 = vmatpush.msra.mxu0 %v456
  %1267 = vmatpush.msra.mxu0 %v397
  %1268 = vmatpush.msra.mxu0 %v338
  %1269 = vmatpush.msra.mxu0 %v279
  %1270 = vmatpush.msra.mxu0 %v220
  %1271 = vmatpush.msra.mxu0 %v161
  %1272 = vmatpush.msra.mxu0 %v102
  %1273 = vmatpush.msra.mxu0 %v43
  %1274 = vmatmul.f32.gmra.mxu0 %v618
  %v1275 = vpop.f32.mrf.mxu0
  %v1276 = vadd.f32 %v614, %v1275
  %1277 = vdwg.mxu0
  %1278 = vmatpush.msra.mxu0 0.0
  %1279 = vmatpush.msra.mxu0 0.0
  %1280 = vmatpush.msra.mxu0 0.0
  %1281 = vmatpush.msra.mxu0 0.0
  %1282 = vmatpush.msra.mxu0 0.0
  %1283 = vmatpush.msra.mxu0 0.0
  %1284 = vmatpush.msra.mxu0 %v694
  %1285 = vmatpush.msra.mxu0 %v516
  %1286 = vmatpush.msra.mxu0 %v457
  %1287 = vmatpush.msra.mxu0 %v398
  %1288 = vmatpush.msra.mxu0 %v339
  %1289 = vmatpush.msra.mxu0 %v280
  %1290 = vmatpush.msra.mxu0 %v221
  %1291 = vmatpush.msra.mxu0 %v162
  %1292 = vmatpush.msra.mxu0 %v103
  %1293 = vmatpush.msra.mxu0 %v44
  %1294 = vmatmul.f32.gmra.mxu0 %v618
  %v1295 = vpop.f32.mrf.mxu0
  %v1296 = vadd.f32 %v614, %v1295
  %1297 = vdwg.mxu0
  %1298 = vmatpush.msra.mxu0 0.0
  %1299 = vmatpush.msra.mxu0 0.0
  %1300 = vmatpush.msra.mxu0 0.0
  %1301 = vmatpush.msra.mxu0 0.0
  %1302 = vmatpush.msra.mxu0 0.0
  %1303 = vmatpush.msra.mxu0 0.0
  %1304 = vmatpush.msra.mxu0 %v697
  %1305 = vmatpush.msra.mxu0 %v517
  %1306 = vmatpush.msra.mxu0 %v458
  %1307 = vmatpush.msra.mxu0 %v399
  %1308 = vmatpush.msra.mxu0 %v340
  %1309 = vmatpush.msra.mxu0 %v281
  %1310 = vmatpush.msra.mxu0 %v222
  %1311 = vmatpush.msra.mxu0 %v163
  %1312 = vmatpush.msra.mxu0 %v104
  %1313 = vmatpush.msra.mxu0 %v45
  %1314 = vmatmul.f32.gmra.mxu0 %v618
  %v1315 = vpop.f32.mrf.mxu0
  %v1316 = vadd.f32 %v614, %v1315
  %1317 = vdwg.mxu0
  %1318 = vmatpush.msra.mxu0 0.0
  %1319 = vmatpush.msra.mxu0 0.0
  %1320 = vmatpush.msra.mxu0 0.0
  %1321 = vmatpush.msra.mxu0 0.0
  %1322 = vmatpush.msra.mxu0 0.0
  %1323 = vmatpush.msra.mxu0 0.0
  %1324 = vmatpush.msra.mxu0 %v700
  %1325 = vmatpush.msra.mxu0 %v518
  %1326 = vmatpush.msra.mxu0 %v459
  %1327 = vmatpush.msra.mxu0 %v400
  %1328 = vmatpush.msra.mxu0 %v341
  %1329 = vmatpush.msra.mxu0 %v282
  %1330 = vmatpush.msra.mxu0 %v223
  %1331 = vmatpush.msra.mxu0 %v164
  %1332 = vmatpush.msra.mxu0 %v105
  %1333 = vmatpush.msra.mxu0 %v46
  %1334 = vmatmul.f32.gmra.mxu0 %v618
  %v1335 = vpop.f32.mrf.mxu0
  %v1336 = vadd.f32 %v614, %v1335
  %1337 = vdwg.mxu0
  %1338 = vmatpush.msra.mxu0 0.0
  %1339 = vmatpush.msra.mxu0 0.0
  %1340 = vmatpush.msra.mxu0 0.0
  %1341 = vmatpush.msra.mxu0 0.0
  %1342 = vmatpush.msra.mxu0 0.0
  %1343 = vmatpush.msra.mxu0 0.0
  %1344 = vmatpush.msra.mxu0 %v703
  %1345 = vmatpush.msra.mxu0 %v519
  %1346 = vmatpush.msra.mxu0 %v460
  %1347 = vmatpush.msra.mxu0 %v401
  %1348 = vmatpush.msra.mxu0 %v342
  %1349 = vmatpush.msra.mxu0 %v283
  %1350 = vmatpush.msra.mxu0 %v224
  %1351 = vmatpush.msra.mxu0 %v165
  %1352 = vmatpush.msra.mxu0 %v106
  %1353 = vmatpush.msra.mxu0 %v47
  %1354 = vmatmul.f32.gmra.mxu0 %v618
  %v1355 = vpop.f32.mrf.mxu0
  %v1356 = vadd.f32 %v614, %v1355
  %1357 = vdwg.mxu0
  %1358 = vmatpush.msra.mxu0 0.0
  %1359 = vmatpush.msra.mxu0 0.0
  %1360 = vmatpush.msra.mxu0 0.0
  %1361 = vmatpush.msra.mxu0 0.0
  %1362 = vmatpush.msra.mxu0 0.0
  %1363 = vmatpush.msra.mxu0 0.0
  %1364 = vmatpush.msra.mxu0 %v706
  %1365 = vmatpush.msra.mxu0 %v520
  %1366 = vmatpush.msra.mxu0 %v461
  %1367 = vmatpush.msra.mxu0 %v402
  %1368 = vmatpush.msra.mxu0 %v343
  %1369 = vmatpush.msra.mxu0 %v284
  %1370 = vmatpush.msra.mxu0 %v225
  %1371 = vmatpush.msra.mxu0 %v166
  %1372 = vmatpush.msra.mxu0 %v107
  %1373 = vmatpush.msra.mxu0 %v48
  %1374 = vmatmul.f32.gmra.mxu0 %v618
  %v1375 = vpop.f32.mrf.mxu0
  %v1376 = vadd.f32 %v614, %v1375
  %1377 = vdwg.mxu0
  %1378 = vmatpush.msra.mxu0 0.0
  %1379 = vmatpush.msra.mxu0 0.0
  %1380 = vmatpush.msra.mxu0 0.0
  %1381 = vmatpush.msra.mxu0 0.0
  %1382 = vmatpush.msra.mxu0 0.0
  %1383 = vmatpush.msra.mxu0 0.0
  %1384 = vmatpush.msra.mxu0 %v709
  %1385 = vmatpush.msra.mxu0 %v521
  %1386 = vmatpush.msra.mxu0 %v462
  %1387 = vmatpush.msra.mxu0 %v403
  %1388 = vmatpush.msra.mxu0 %v344
  %1389 = vmatpush.msra.mxu0 %v285
  %1390 = vmatpush.msra.mxu0 %v226
  %1391 = vmatpush.msra.mxu0 %v167
  %1392 = vmatpush.msra.mxu0 %v108
  %1393 = vmatpush.msra.mxu0 %v49
  %1394 = vmatmul.f32.gmra.mxu0 %v618
  %v1395 = vpop.f32.mrf.mxu0
  %v1396 = vadd.f32 %v614, %v1395
  %1397 = vdwg.mxu0
  %1398 = vmatpush.msra.mxu0 0.0
  %1399 = vmatpush.msra.mxu0 0.0
  %1400 = vmatpush.msra.mxu0 0.0
  %1401 = vmatpush.msra.mxu0 0.0
  %1402 = vmatpush.msra.mxu0 0.0
  %1403 = vmatpush.msra.mxu0 0.0
  %1404 = vmatpush.msra.mxu0 %v712
  %1405 = vmatpush.msra.mxu0 %v522
  %1406 = vmatpush.msra.mxu0 %v463
  %1407 = vmatpush.msra.mxu0 %v404
  %1408 = vmatpush.msra.mxu0 %v345
  %1409 = vmatpush.msra.mxu0 %v286
  %1410 = vmatpush.msra.mxu0 %v227
  %1411 = vmatpush.msra.mxu0 %v168
  %1412 = vmatpush.msra.mxu0 %v109
  %1413 = vmatpush.msra.mxu0 %v50
  %1414 = vmatmul.f32.gmra.mxu0 %v618
  %v1415 = vpop.f32.mrf.mxu0
  %v1416 = vadd.f32 %v614, %v1415
  %1417 = vdwg.mxu0
  %1418 = vmatpush.msra.mxu0 0.0
  %1419 = vmatpush.msra.mxu0 0.0
  %1420 = vmatpush.msra.mxu0 0.0
  %1421 = vmatpush.msra.mxu0 0.0
  %1422 = vmatpush.msra.mxu0 0.0
  %1423 = vmatpush.msra.mxu0 0.0
  %1424 = vmatpush.msra.mxu0 %v715
  %1425 = vmatpush.msra.mxu0 %v523
  %1426 = vmatpush.msra.mxu0 %v464
  %1427 = vmatpush.msra.mxu0 %v405
  %1428 = vmatpush.msra.mxu0 %v346
  %1429 = vmatpush.msra.mxu0 %v287
  %1430 = vmatpush.msra.mxu0 %v228
  %1431 = vmatpush.msra.mxu0 %v169
  %1432 = vmatpush.msra.mxu0 %v110
  %1433 = vmatpush.msra.mxu0 %v51
  %1434 = vmatmul.f32.gmra.mxu0 %v618
  %v1435 = vpop.f32.mrf.mxu0
  %v1436 = vadd.f32 %v614, %v1435
  %1437 = vdwg.mxu0
  %1438 = vmatpush.msra.mxu0 0.0
  %1439 = vmatpush.msra.mxu0 0.0
  %1440 = vmatpush.msra.mxu0 0.0
  %1441 = vmatpush.msra.mxu0 0.0
  %1442 = vmatpush.msra.mxu0 0.0
  %1443 = vmatpush.msra.mxu0 0.0
  %1444 = vmatpush.msra.mxu0 %v718
  %1445 = vmatpush.msra.mxu0 %v524
  %1446 = vmatpush.msra.mxu0 %v465
  %1447 = vmatpush.msra.mxu0 %v406
  %1448 = vmatpush.msra.mxu0 %v347
  %1449 = vmatpush.msra.mxu0 %v288
  %1450 = vmatpush.msra.mxu0 %v229
  %1451 = vmatpush.msra.mxu0 %v170
  %1452 = vmatpush.msra.mxu0 %v111
  %1453 = vmatpush.msra.mxu0 %v52
  %1454 = vmatmul.f32.gmra.mxu0 %v618
  %v1455 = vpop.f32.mrf.mxu0
  %v1456 = vadd.f32 %v614, %v1455
  %1457 = vdwg.mxu0
  %1458 = vmatpush.msra.mxu0 0.0
  %1459 = vmatpush.msra.mxu0 0.0
  %1460 = vmatpush.msra.mxu0 0.0
  %1461 = vmatpush.msra.mxu0 0.0
  %1462 = vmatpush.msra.mxu0 0.0
  %1463 = vmatpush.msra.mxu0 0.0
  %1464 = vmatpush.msra.mxu0 %v721
  %1465 = vmatpush.msra.mxu0 %v525
  %1466 = vmatpush.msra.mxu0 %v466
  %1467 = vmatpush.msra.mxu0 %v407
  %1468 = vmatpush.msra.mxu0 %v348
  %1469 = vmatpush.msra.mxu0 %v289
  %1470 = vmatpush.msra.mxu0 %v230
  %1471 = vmatpush.msra.mxu0 %v171
  %1472 = vmatpush.msra.mxu0 %v112
  %1473 = vmatpush.msra.mxu0 %v53
  %1474 = vmatmul.f32.gmra.mxu0 %v618
  %v1475 = vpop.f32.mrf.mxu0
  %v1476 = vadd.f32 %v614, %v1475
  %1477 = vdwg.mxu0
  %1478 = vmatpush.msra.mxu0 0.0
  %1479 = vmatpush.msra.mxu0 0.0
  %1480 = vmatpush.msra.mxu0 0.0
  %1481 = vmatpush.msra.mxu0 0.0
  %1482 = vmatpush.msra.mxu0 0.0
  %1483 = vmatpush.msra.mxu0 0.0
  %1484 = vmatpush.msra.mxu0 %v724
  %1485 = vmatpush.msra.mxu0 %v526
  %1486 = vmatpush.msra.mxu0 %v467
  %1487 = vmatpush.msra.mxu0 %v408
  %1488 = vmatpush.msra.mxu0 %v349
  %1489 = vmatpush.msra.mxu0 %v290
  %1490 = vmatpush.msra.mxu0 %v231
  %1491 = vmatpush.msra.mxu0 %v172
  %1492 = vmatpush.msra.mxu0 %v113
  %1493 = vmatpush.msra.mxu0 %v54
  %1494 = vmatmul.f32.gmra.mxu0 %v618
  %v1495 = vpop.f32.mrf.mxu0
  %v1496 = vadd.f32 %v614, %v1495
  %1497 = vdwg.mxu0
  %1498 = vmatpush.msra.mxu0 0.0
  %1499 = vmatpush.msra.mxu0 0.0
  %1500 = vmatpush.msra.mxu0 0.0
  %1501 = vmatpush.msra.mxu0 0.0
  %1502 = vmatpush.msra.mxu0 0.0
  %1503 = vmatpush.msra.mxu0 0.0
  %1504 = vmatpush.msra.mxu0 %v727
  %1505 = vmatpush.msra.mxu0 %v527
  %1506 = vmatpush.msra.mxu0 %v468
  %1507 = vmatpush.msra.mxu0 %v409
  %1508 = vmatpush.msra.mxu0 %v350
  %1509 = vmatpush.msra.mxu0 %v291
  %1510 = vmatpush.msra.mxu0 %v232
  %1511 = vmatpush.msra.mxu0 %v173
  %1512 = vmatpush.msra.mxu0 %v114
  %1513 = vmatpush.msra.mxu0 %v55
  %1514 = vmatmul.f32.gmra.mxu0 %v618
  %v1515 = vpop.f32.mrf.mxu0
  %v1516 = vadd.f32 %v614, %v1515
  %1517 = vdwg.mxu0
  %1518 = vmatpush.msra.mxu0 0.0
  %1519 = vmatpush.msra.mxu0 0.0
  %1520 = vmatpush.msra.mxu0 0.0
  %1521 = vmatpush.msra.mxu0 0.0
  %1522 = vmatpush.msra.mxu0 0.0
  %1523 = vmatpush.msra.mxu0 0.0
  %1524 = vmatpush.msra.mxu0 %v730
  %1525 = vmatpush.msra.mxu0 %v528
  %1526 = vmatpush.msra.mxu0 %v469
  %1527 = vmatpush.msra.mxu0 %v410
  %1528 = vmatpush.msra.mxu0 %v351
  %1529 = vmatpush.msra.mxu0 %v292
  %1530 = vmatpush.msra.mxu0 %v233
  %1531 = vmatpush.msra.mxu0 %v174
  %1532 = vmatpush.msra.mxu0 %v115
  %1533 = vmatpush.msra.mxu0 %v56
  %1534 = vmatmul.f32.gmra.mxu0 %v618
  %v1535 = vpop.f32.mrf.mxu0
  %v1536 = vadd.f32 %v614, %v1535
  %1537 = vdwg.mxu0
  %1538 = vmatpush.msra.mxu0 0.0
  %1539 = vmatpush.msra.mxu0 0.0
  %1540 = vmatpush.msra.mxu0 0.0
  %1541 = vmatpush.msra.mxu0 0.0
  %1542 = vmatpush.msra.mxu0 0.0
  %1543 = vmatpush.msra.mxu0 0.0
  %1544 = vmatpush.msra.mxu0 %v733
  %1545 = vmatpush.msra.mxu0 %v529
  %1546 = vmatpush.msra.mxu0 %v470
  %1547 = vmatpush.msra.mxu0 %v411
  %1548 = vmatpush.msra.mxu0 %v352
  %1549 = vmatpush.msra.mxu0 %v293
  %1550 = vmatpush.msra.mxu0 %v234
  %1551 = vmatpush.msra.mxu0 %v175
  %1552 = vmatpush.msra.mxu0 %v116
  %1553 = vmatpush.msra.mxu0 %v57
  %1554 = vmatmul.f32.gmra.mxu0 %v618
  %v1555 = vpop.f32.mrf.mxu0
  %v1556 = vadd.f32 %v614, %v1555
  %1557 = vdwg.mxu0
  %1558 = vmatpush.msra.mxu0 0.0
  %1559 = vmatpush.msra.mxu0 0.0
  %1560 = vmatpush.msra.mxu0 0.0
  %1561 = vmatpush.msra.mxu0 0.0
  %1562 = vmatpush.msra.mxu0 0.0
  %1563 = vmatpush.msra.mxu0 0.0
  %1564 = vmatpush.msra.mxu0 %v736
  %1565 = vmatpush.msra.mxu0 %v530
  %1566 = vmatpush.msra.mxu0 %v471
  %1567 = vmatpush.msra.mxu0 %v412
  %1568 = vmatpush.msra.mxu0 %v353
  %1569 = vmatpush.msra.mxu0 %v294
  %1570 = vmatpush.msra.mxu0 %v235
  %1571 = vmatpush.msra.mxu0 %v176
  %1572 = vmatpush.msra.mxu0 %v117
  %1573 = vmatpush.msra.mxu0 %v58
  %1574 = vmatmul.f32.gmra.mxu0 %v618
  %v1575 = vpop.f32.mrf.mxu0
  %v1576 = vadd.f32 %v614, %v1575
  %1577 = vdwg.mxu0
  %1578 = vmatpush.msra.mxu0 0.0
  %1579 = vmatpush.msra.mxu0 0.0
  %1580 = vmatpush.msra.mxu0 0.0
  %1581 = vmatpush.msra.mxu0 0.0
  %1582 = vmatpush.msra.mxu0 0.0
  %1583 = vmatpush.msra.mxu0 0.0
  %1584 = vmatpush.msra.mxu0 %v739
  %1585 = vmatpush.msra.mxu0 %v531
  %1586 = vmatpush.msra.mxu0 %v472
  %1587 = vmatpush.msra.mxu0 %v413
  %1588 = vmatpush.msra.mxu0 %v354
  %1589 = vmatpush.msra.mxu0 %v295
  %1590 = vmatpush.msra.mxu0 %v236
  %1591 = vmatpush.msra.mxu0 %v177
  %1592 = vmatpush.msra.mxu0 %v118
  %1593 = vmatpush.msra.mxu0 %v59
  %1594 = vmatmul.f32.gmra.mxu0 %v618
  %v1595 = vpop.f32.mrf.mxu0
  %v1596 = vadd.f32 %v614, %v1595
  %1597 = vdwg.mxu0
  %1598 = vmatpush.msra.mxu0 0.0
  %1599 = vmatpush.msra.mxu0 0.0
  %1600 = vmatpush.msra.mxu0 0.0
  %1601 = vmatpush.msra.mxu0 0.0
  %1602 = vmatpush.msra.mxu0 0.0
  %1603 = vmatpush.msra.mxu0 0.0
  %1604 = vmatpush.msra.mxu0 %v742
  %1605 = vmatpush.msra.mxu0 %v532
  %1606 = vmatpush.msra.mxu0 %v473
  %1607 = vmatpush.msra.mxu0 %v414
  %1608 = vmatpush.msra.mxu0 %v355
  %1609 = vmatpush.msra.mxu0 %v296
  %1610 = vmatpush.msra.mxu0 %v237
  %1611 = vmatpush.msra.mxu0 %v178
  %1612 = vmatpush.msra.mxu0 %v119
  %1613 = vmatpush.msra.mxu0 %v60
  %1614 = vmatmul.f32.gmra.mxu0 %v618
  %v1615 = vpop.f32.mrf.mxu0
  %v1616 = vadd.f32 %v614, %v1615
  %1617 = vdwg.mxu0
  %1618 = vmatpush.msra.mxu0 0.0
  %1619 = vmatpush.msra.mxu0 0.0
  %1620 = vmatpush.msra.mxu0 0.0
  %1621 = vmatpush.msra.mxu0 0.0
  %1622 = vmatpush.msra.mxu0 0.0
  %1623 = vmatpush.msra.mxu0 0.0
  %1624 = vmatpush.msra.mxu0 %v745
  %1625 = vmatpush.msra.mxu0 %v533
  %1626 = vmatpush.msra.mxu0 %v474
  %1627 = vmatpush.msra.mxu0 %v415
  %1628 = vmatpush.msra.mxu0 %v356
  %1629 = vmatpush.msra.mxu0 %v297
  %1630 = vmatpush.msra.mxu0 %v238
  %1631 = vmatpush.msra.mxu0 %v179
  %1632 = vmatpush.msra.mxu0 %v120
  %1633 = vmatpush.msra.mxu0 %v61
  %1634 = vmatmul.f32.gmra.mxu0 %v618
  %v1635 = vpop.f32.mrf.mxu0
  %v1636 = vadd.f32 %v614, %v1635
  %1637 = vdwg.mxu0
  %1638 = vmatpush.msra.mxu0 0.0
  %1639 = vmatpush.msra.mxu0 0.0
  %1640 = vmatpush.msra.mxu0 0.0
  %1641 = vmatpush.msra.mxu0 0.0
  %1642 = vmatpush.msra.mxu0 0.0
  %1643 = vmatpush.msra.mxu0 0.0
  %1644 = vmatpush.msra.mxu0 %v748
  %1645 = vmatpush.msra.mxu0 %v534
  %1646 = vmatpush.msra.mxu0 %v475
  %1647 = vmatpush.msra.mxu0 %v416
  %1648 = vmatpush.msra.mxu0 %v357
  %1649 = vmatpush.msra.mxu0 %v298
  %1650 = vmatpush.msra.mxu0 %v239
  %1651 = vmatpush.msra.mxu0 %v180
  %1652 = vmatpush.msra.mxu0 %v121
  %1653 = vmatpush.msra.mxu0 %v62
  %1654 = vmatmul.f32.gmra.mxu0 %v618
  %v1655 = vpop.f32.mrf.mxu0
  %v1656 = vadd.f32 %v614, %v1655
  %1657 = vdwg.mxu0
  %1658 = vmatpush.msra.mxu0 0.0
  %1659 = vmatpush.msra.mxu0 0.0
  %1660 = vmatpush.msra.mxu0 0.0
  %1661 = vmatpush.msra.mxu0 0.0
  %1662 = vmatpush.msra.mxu0 0.0
  %1663 = vmatpush.msra.mxu0 0.0
  %1664 = vmatpush.msra.mxu0 %v751
  %1665 = vmatpush.msra.mxu0 %v535
  %1666 = vmatpush.msra.mxu0 %v476
  %1667 = vmatpush.msra.mxu0 %v417
  %1668 = vmatpush.msra.mxu0 %v358
  %1669 = vmatpush.msra.mxu0 %v299
  %1670 = vmatpush.msra.mxu0 %v240
  %1671 = vmatpush.msra.mxu0 %v181
  %1672 = vmatpush.msra.mxu0 %v122
  %1673 = vmatpush.msra.mxu0 %v63
  %1674 = vmatmul.f32.gmra.mxu0 %v618
  %v1675 = vpop.f32.mrf.mxu0
  %v1676 = vadd.f32 %v614, %v1675
  %1677 = vdwg.mxu0
  %1678 = vmatpush.msra.mxu0 0.0
  %1679 = vmatpush.msra.mxu0 0.0
  %1680 = vmatpush.msra.mxu0 0.0
  %1681 = vmatpush.msra.mxu0 0.0
  %1682 = vmatpush.msra.mxu0 0.0
  %1683 = vmatpush.msra.mxu0 0.0
  %1684 = vmatpush.msra.mxu0 %v754
  %1685 = vmatpush.msra.mxu0 %v536
  %1686 = vmatpush.msra.mxu0 %v477
  %1687 = vmatpush.msra.mxu0 %v418
  %1688 = vmatpush.msra.mxu0 %v359
  %1689 = vmatpush.msra.mxu0 %v300
  %1690 = vmatpush.msra.mxu0 %v241
  %1691 = vmatpush.msra.mxu0 %v182
  %1692 = vmatpush.msra.mxu0 %v123
  %1693 = vmatpush.msra.mxu0 %v64
  %1694 = vmatmul.f32.gmra.mxu0 %v618
  %v1695 = vpop.f32.mrf.mxu0
  %v1696 = vadd.f32 %v614, %v1695
  %1697 = vdwg.mxu0
  %1698 = vmatpush.msra.mxu0 0.0
  %1699 = vmatpush.msra.mxu0 0.0
  %1700 = vmatpush.msra.mxu0 0.0
  %1701 = vmatpush.msra.mxu0 0.0
  %1702 = vmatpush.msra.mxu0 0.0
  %1703 = vmatpush.msra.mxu0 0.0
  %1704 = vmatpush.msra.mxu0 %v757
  %1705 = vmatpush.msra.mxu0 %v537
  %1706 = vmatpush.msra.mxu0 %v478
  %1707 = vmatpush.msra.mxu0 %v419
  %1708 = vmatpush.msra.mxu0 %v360
  %1709 = vmatpush.msra.mxu0 %v301
  %1710 = vmatpush.msra.mxu0 %v242
  %1711 = vmatpush.msra.mxu0 %v183
  %1712 = vmatpush.msra.mxu0 %v124
  %1713 = vmatpush.msra.mxu0 %v65
  %1714 = vmatmul.f32.gmra.mxu0 %v618
  %v1715 = vpop.f32.mrf.mxu0
  %v1716 = vadd.f32 %v614, %v1715
  %1717 = vdwg.mxu0
  %1718 = vmatpush.msra.mxu0 0.0
  %1719 = vmatpush.msra.mxu0 0.0
  %1720 = vmatpush.msra.mxu0 0.0
  %1721 = vmatpush.msra.mxu0 0.0
  %1722 = vmatpush.msra.mxu0 0.0
  %1723 = vmatpush.msra.mxu0 0.0
  %1724 = vmatpush.msra.mxu0 %v760
  %1725 = vmatpush.msra.mxu0 %v538
  %1726 = vmatpush.msra.mxu0 %v479
  %1727 = vmatpush.msra.mxu0 %v420
  %1728 = vmatpush.msra.mxu0 %v361
  %1729 = vmatpush.msra.mxu0 %v302
  %1730 = vmatpush.msra.mxu0 %v243
  %1731 = vmatpush.msra.mxu0 %v184
  %1732 = vmatpush.msra.mxu0 %v125
  %1733 = vmatpush.msra.mxu0 %v66
  %1734 = vmatmul.f32.gmra.mxu0 %v618
  %v1735 = vpop.f32.mrf.mxu0
  %v1736 = vadd.f32 %v614, %v1735
  %1737 = vdwg.mxu0
  %1738 = vmatpush.msra.mxu0 0.0
  %1739 = vmatpush.msra.mxu0 0.0
  %1740 = vmatpush.msra.mxu0 0.0
  %1741 = vmatpush.msra.mxu0 0.0
  %1742 = vmatpush.msra.mxu0 0.0
  %1743 = vmatpush.msra.mxu0 0.0
  %1744 = vmatpush.msra.mxu0 %v763
  %1745 = vmatpush.msra.mxu0 %v539
  %1746 = vmatpush.msra.mxu0 %v480
  %1747 = vmatpush.msra.mxu0 %v421
  %1748 = vmatpush.msra.mxu0 %v362
  %1749 = vmatpush.msra.mxu0 %v303
  %1750 = vmatpush.msra.mxu0 %v244
  %1751 = vmatpush.msra.mxu0 %v185
  %1752 = vmatpush.msra.mxu0 %v126
  %1753 = vmatpush.msra.mxu0 %v67
  %1754 = vmatmul.f32.gmra.mxu0 %v618
  %v1755 = vpop.f32.mrf.mxu0
  %v1756 = vadd.f32 %v614, %v1755
  %1757 = vdwg.mxu0
  %1758 = vmatpush.msra.mxu0 0.0
  %1759 = vmatpush.msra.mxu0 0.0
  %1760 = vmatpush.msra.mxu0 0.0
  %1761 = vmatpush.msra.mxu0 0.0
  %1762 = vmatpush.msra.mxu0 0.0
  %1763 = vmatpush.msra.mxu0 0.0
  %1764 = vmatpush.msra.mxu0 %v766
  %1765 = vmatpush.msra.mxu0 %v540
  %1766 = vmatpush.msra.mxu0 %v481
  %1767 = vmatpush.msra.mxu0 %v422
  %1768 = vmatpush.msra.mxu0 %v363
  %1769 = vmatpush.msra.mxu0 %v304
  %1770 = vmatpush.msra.mxu0 %v245
  %1771 = vmatpush.msra.mxu0 %v186
  %1772 = vmatpush.msra.mxu0 %v127
  %1773 = vmatpush.msra.mxu0 %v68
  %1774 = vmatmul.f32.gmra.mxu0 %v618
  %v1775 = vpop.f32.mrf.mxu0
  %v1776 = vadd.f32 %v614, %v1775
  %1777 = vdwg.mxu0
  %1778 = vmatpush.msra.mxu0 0.0
  %1779 = vmatpush.msra.mxu0 0.0
  %1780 = vmatpush.msra.mxu0 0.0
  %1781 = vmatpush.msra.mxu0 0.0
  %1782 = vmatpush.msra.mxu0 0.0
  %1783 = vmatpush.msra.mxu0 0.0
  %1784 = vmatpush.msra.mxu0 %v769
  %1785 = vmatpush.msra.mxu0 %v541
  %1786 = vmatpush.msra.mxu0 %v482
  %1787 = vmatpush.msra.mxu0 %v423
  %1788 = vmatpush.msra.mxu0 %v364
  %1789 = vmatpush.msra.mxu0 %v305
  %1790 = vmatpush.msra.mxu0 %v246
  %1791 = vmatpush.msra.mxu0 %v187
  %1792 = vmatpush.msra.mxu0 %v128
  %1793 = vmatpush.msra.mxu0 %v69
  %1794 = vmatmul.f32.gmra.mxu0 %v618
  %v1795 = vpop.f32.mrf.mxu0
  %v1796 = vadd.f32 %v614, %v1795
  %1797 = vdwg.mxu0
  %1798 = vmatpush.msra.mxu0 0.0
  %1799 = vmatpush.msra.mxu0 0.0
  %1800 = vmatpush.msra.mxu0 0.0
  %1801 = vmatpush.msra.mxu0 0.0
  %1802 = vmatpush.msra.mxu0 0.0
  %1803 = vmatpush.msra.mxu0 0.0
  %1804 = vmatpush.msra.mxu0 %v772
  %1805 = vmatpush.msra.mxu0 %v542
  %1806 = vmatpush.msra.mxu0 %v483
  %1807 = vmatpush.msra.mxu0 %v424
  %1808 = vmatpush.msra.mxu0 %v365
  %1809 = vmatpush.msra.mxu0 %v306
  %1810 = vmatpush.msra.mxu0 %v247
  %1811 = vmatpush.msra.mxu0 %v188
  %1812 = vmatpush.msra.mxu0 %v129
  %1813 = vmatpush.msra.mxu0 %v70
  %1814 = vmatmul.f32.gmra.mxu0 %v618
  %v1815 = vpop.f32.mrf.mxu0
  %v1816 = vadd.f32 %v614, %v1815
  %1817 = vdwg.mxu0
  %1818 = vmatpush.msra.mxu0 0.0
  %1819 = vmatpush.msra.mxu0 0.0
  %1820 = vmatpush.msra.mxu0 0.0
  %1821 = vmatpush.msra.mxu0 0.0
  %1822 = vmatpush.msra.mxu0 0.0
  %1823 = vmatpush.msra.mxu0 0.0
  %1824 = vmatpush.msra.mxu0 %v775
  %1825 = vmatpush.msra.mxu0 %v543
  %1826 = vmatpush.msra.mxu0 %v484
  %1827 = vmatpush.msra.mxu0 %v425
  %1828 = vmatpush.msra.mxu0 %v366
  %1829 = vmatpush.msra.mxu0 %v307
  %1830 = vmatpush.msra.mxu0 %v248
  %1831 = vmatpush.msra.mxu0 %v189
  %1832 = vmatpush.msra.mxu0 %v130
  %1833 = vmatpush.msra.mxu0 %v71
  %1834 = vmatmul.f32.gmra.mxu0 %v618
  %v1835 = vpop.f32.mrf.mxu0
  %v1836 = vadd.f32 %v614, %v1835
  %1837 = vdwg.mxu0
  %1838 = vmatpush.msra.mxu0 0.0
  %1839 = vmatpush.msra.mxu0 0.0
  %1840 = vmatpush.msra.mxu0 0.0
  %1841 = vmatpush.msra.mxu0 0.0
  %1842 = vmatpush.msra.mxu0 0.0
  %1843 = vmatpush.msra.mxu0 0.0
  %1844 = vmatpush.msra.mxu0 %v778
  %1845 = vmatpush.msra.mxu0 %v544
  %1846 = vmatpush.msra.mxu0 %v485
  %1847 = vmatpush.msra.mxu0 %v426
  %1848 = vmatpush.msra.mxu0 %v367
  %1849 = vmatpush.msra.mxu0 %v308
  %1850 = vmatpush.msra.mxu0 %v249
  %1851 = vmatpush.msra.mxu0 %v190
  %1852 = vmatpush.msra.mxu0 %v131
  %1853 = vmatpush.msra.mxu0 %v72
  %1854 = vmatmul.f32.gmra.mxu0 %v618
  %v1855 = vpop.f32.mrf.mxu0
  %v1856 = vadd.f32 %v614, %v1855
  %1857 = vdwg.mxu0
  %1858 = vmatpush.msra.mxu0 0.0
  %1859 = vmatpush.msra.mxu0 0.0
  %1860 = vmatpush.msra.mxu0 0.0
  %1861 = vmatpush.msra.mxu0 0.0
  %1862 = vmatpush.msra.mxu0 0.0
  %1863 = vmatpush.msra.mxu0 0.0
  %1864 = vmatpush.msra.mxu0 %v781
  %1865 = vmatpush.msra.mxu0 %v545
  %1866 = vmatpush.msra.mxu0 %v486
  %1867 = vmatpush.msra.mxu0 %v427
  %1868 = vmatpush.msra.mxu0 %v368
  %1869 = vmatpush.msra.mxu0 %v309
  %1870 = vmatpush.msra.mxu0 %v250
  %1871 = vmatpush.msra.mxu0 %v191
  %1872 = vmatpush.msra.mxu0 %v132
  %1873 = vmatpush.msra.mxu0 %v73
  %1874 = vmatmul.f32.gmra.mxu0 %v618
  %v1875 = vpop.f32.mrf.mxu0
  %v1876 = vadd.f32 %v614, %v1875
  %1877 = vdwg.mxu0
  %1878 = vmatpush.msra.mxu0 0.0
  %1879 = vmatpush.msra.mxu0 0.0
  %1880 = vmatpush.msra.mxu0 0.0
  %1881 = vmatpush.msra.mxu0 0.0
  %1882 = vmatpush.msra.mxu0 0.0
  %1883 = vmatpush.msra.mxu0 0.0
  %1884 = vmatpush.msra.mxu0 %v784
  %1885 = vmatpush.msra.mxu0 %v546
  %1886 = vmatpush.msra.mxu0 %v487
  %1887 = vmatpush.msra.mxu0 %v428
  %1888 = vmatpush.msra.mxu0 %v369
  %1889 = vmatpush.msra.mxu0 %v310
  %1890 = vmatpush.msra.mxu0 %v251
  %1891 = vmatpush.msra.mxu0 %v192
  %1892 = vmatpush.msra.mxu0 %v133
  %1893 = vmatpush.msra.mxu0 %v74
  %1894 = vmatmul.f32.gmra.mxu0 %v618
  %v1895 = vpop.f32.mrf.mxu0
  %v1896 = vadd.f32 %v614, %v1895
  %1897 = vdwg.mxu0
  %1898 = vmatpush.msra.mxu0 0.0
  %1899 = vmatpush.msra.mxu0 0.0
  %1900 = vmatpush.msra.mxu0 0.0
  %1901 = vmatpush.msra.mxu0 0.0
  %1902 = vmatpush.msra.mxu0 0.0
  %1903 = vmatpush.msra.mxu0 0.0
  %1904 = vmatpush.msra.mxu0 %v787
  %1905 = vmatpush.msra.mxu0 %v547
  %1906 = vmatpush.msra.mxu0 %v488
  %1907 = vmatpush.msra.mxu0 %v429
  %1908 = vmatpush.msra.mxu0 %v370
  %1909 = vmatpush.msra.mxu0 %v311
  %1910 = vmatpush.msra.mxu0 %v252
  %1911 = vmatpush.msra.mxu0 %v193
  %1912 = vmatpush.msra.mxu0 %v134
  %1913 = vmatpush.msra.mxu0 %v75
  %1914 = vmatmul.f32.gmra.mxu0 %v618
  %v1915 = vpop.f32.mrf.mxu0
  %v1916 = vadd.f32 %v614, %v1915
  %1917 = vdwg.mxu0
  %1918 = vmatpush.msra.mxu0 0.0
  %1919 = vmatpush.msra.mxu0 0.0
  %1920 = vmatpush.msra.mxu0 0.0
  %1921 = vmatpush.msra.mxu0 0.0
  %1922 = vmatpush.msra.mxu0 0.0
  %1923 = vmatpush.msra.mxu0 0.0
  %1924 = vmatpush.msra.mxu0 %v790
  %1925 = vmatpush.msra.mxu0 %v548
  %1926 = vmatpush.msra.mxu0 %v489
  %1927 = vmatpush.msra.mxu0 %v430
  %1928 = vmatpush.msra.mxu0 %v371
  %1929 = vmatpush.msra.mxu0 %v312
  %1930 = vmatpush.msra.mxu0 %v253
  %1931 = vmatpush.msra.mxu0 %v194
  %1932 = vmatpush.msra.mxu0 %v135
  %1933 = vmatpush.msra.mxu0 %v76
  %1934 = vmatmul.f32.gmra.mxu0 %v618
  %v1935 = vpop.f32.mrf.mxu0
  %v1936 = vadd.f32 %v614, %v1935
  %1937 = vdwg.mxu0
  %1938 = vmatpush.msra.mxu0 0.0
  %1939 = vmatpush.msra.mxu0 0.0
  %1940 = vmatpush.msra.mxu0 0.0
  %1941 = vmatpush.msra.mxu0 0.0
  %1942 = vmatpush.msra.mxu0 0.0
  %1943 = vmatpush.msra.mxu0 0.0
  %1944 = vmatpush.msra.mxu0 %v793
  %1945 = vmatpush.msra.mxu0 %v549
  %1946 = vmatpush.msra.mxu0 %v490
  %1947 = vmatpush.msra.mxu0 %v431
  %1948 = vmatpush.msra.mxu0 %v372
  %1949 = vmatpush.msra.mxu0 %v313
  %1950 = vmatpush.msra.mxu0 %v254
  %1951 = vmatpush.msra.mxu0 %v195
  %1952 = vmatpush.msra.mxu0 %v136
  %1953 = vmatpush.msra.mxu0 %v77
  %1954 = vmatmul.f32.gmra.mxu0 %v618
  %v1955 = vpop.f32.mrf.mxu0
  %v1956 = vadd.f32 %v614, %v1955
  %1957 = vdwg.mxu0
  %1958 = vmatpush.msra.mxu0 0.0
  %1959 = vmatpush.msra.mxu0 0.0
  %1960 = vmatpush.msra.mxu0 0.0
  %1961 = vmatpush.msra.mxu0 0.0
  %1962 = vmatpush.msra.mxu0 0.0
  %1963 = vmatpush.msra.mxu0 0.0
  %1964 = vmatpush.msra.mxu0 %v796
  %1965 = vmatpush.msra.mxu0 %v550
  %1966 = vmatpush.msra.mxu0 %v491
  %1967 = vmatpush.msra.mxu0 %v432
  %1968 = vmatpush.msra.mxu0 %v373
  %1969 = vmatpush.msra.mxu0 %v314
  %1970 = vmatpush.msra.mxu0 %v255
  %1971 = vmatpush.msra.mxu0 %v196
  %1972 = vmatpush.msra.mxu0 %v137
  %1973 = vmatpush.msra.mxu0 %v78
  %1974 = vmatmul.f32.gmra.mxu0 %v618
  %v1975 = vpop.f32.mrf.mxu0
  %v1976 = vadd.f32 %v614, %v1975
  %1977 = vdwg.mxu0
  %vm1978 = vcmp.gt.f32.partialorder %v816, 0.0
  %vm1979 = vcmp.gt.f32.partialorder %v836, 0.0
  %vm1980 = vcmp.gt.f32.partialorder %v856, 0.0
  %vm1981 = vcmp.gt.f32.partialorder %v876, 0.0
  %vm1982 = vcmp.gt.f32.partialorder %v896, 0.0
  %vm1983 = vcmp.gt.f32.partialorder %v916, 0.0
  %vm1984 = vcmp.gt.f32.partialorder %v936, 0.0
  %vm1985 = vcmp.gt.f32.partialorder %v956, 0.0
  %vm1986 = vcmp.gt.f32.partialorder %v976, 0.0
  %vm1987 = vcmp.gt.f32.partialorder %v996, 0.0
  %vm1988 = vcmp.gt.f32.partialorder %v1016, 0.0
  %vm1989 = vcmp.gt.f32.partialorder %v1036, 0.0
  %vm1990 = vcmp.gt.f32.partialorder %v1056, 0.0
  %vm1991 = vcmp.gt.f32.partialorder %v1076, 0.0
  %vm1992 = vcmp.gt.f32.partialorder %v1096, 0.0
  %vm1993 = vcmp.gt.f32.partialorder %v1116, 0.0
  %vm1994 = vcmp.gt.f32.partialorder %v1136, 0.0
  %vm1995 = vcmp.gt.f32.partialorder %v1156, 0.0
  %vm1996 = vcmp.gt.f32.partialorder %v1176, 0.0
  %vm1997 = vcmp.gt.f32.partialorder %v1196, 0.0
  %vm1998 = vcmp.gt.f32.partialorder %v1216, 0.0
  %vm1999 = vcmp.gt.f32.partialorder %v1236, 0.0
  %vm2000 = vcmp.gt.f32.partialorder %v1256, 0.0
  %vm2001 = vcmp.gt.f32.partialorder %v1276, 0.0
  %vm2002 = vcmp.gt.f32.partialorder %v1296, 0.0
  %vm2003 = vcmp.gt.f32.partialorder %v1316, 0.0
  %vm2004 = vcmp.gt.f32.partialorder %v1336, 0.0
  %vm2005 = vcmp.gt.f32.partialorder %v1356, 0.0
  %vm2006 = vcmp.gt.f32.partialorder %v1376, 0.0
  %vm2007 = vcmp.gt.f32.partialorder %v1396, 0.0
  %vm2008 = vcmp.gt.f32.partialorder %v1416, 0.0
  %vm2009 = vcmp.gt.f32.partialorder %v1436, 0.0
  %vm2010 = vcmp.gt.f32.partialorder %v1456, 0.0
  %vm2011 = vcmp.gt.f32.partialorder %v1476, 0.0
  %vm2012 = vcmp.gt.f32.partialorder %v1496, 0.0
  %vm2013 = vcmp.gt.f32.partialorder %v1516, 0.0
  %vm2014 = vcmp.gt.f32.partialorder %v1536, 0.0
  %vm2015 = vcmp.gt.f32.partialorder %v1556, 0.0
  %vm2016 = vcmp.gt.f32.partialorder %v1576, 0.0
  %vm2017 = vcmp.gt.f32.partialorder %v1596, 0.0
  %vm2018 = vcmp.gt.f32.partialorder %v1616, 0.0
  %vm2019 = vcmp.gt.f32.partialorder %v1636, 0.0
  %vm2020 = vcmp.gt.f32.partialorder %v1656, 0.0
  %vm2021 = vcmp.gt.f32.partialorder %v1676, 0.0
  %vm2022 = vcmp.gt.f32.partialorder %v1696, 0.0
  %vm2023 = vcmp.gt.f32.partialorder %v1716, 0.0
  %vm2024 = vcmp.gt.f32.partialorder %v1736, 0.0
  %vm2025 = vcmp.gt.f32.partialorder %v1756, 0.0
  %vm2026 = vcmp.gt.f32.partialorder %v1776, 0.0
  %vm2027 = vcmp.gt.f32.partialorder %v1796, 0.0
  %vm2028 = vcmp.gt.f32.partialorder %v1816, 0.0
  %vm2029 = vcmp.gt.f32.partialorder %v1836, 0.0
  %vm2030 = vcmp.gt.f32.partialorder %v1856, 0.0
  %vm2031 = vcmp.gt.f32.partialorder %v1876, 0.0
  %vm2032 = vcmp.gt.f32.partialorder %v1896, 0.0
  %vm2033 = vcmp.gt.f32.partialorder %v1916, 0.0
  %vm2034 = vcmp.gt.f32.partialorder %v1936, 0.0
  %vm2035 = vcmp.gt.f32.partialorder %v1956, 0.0
  %vm2036 = vcmp.gt.f32.partialorder %v1976, 0.0
  %v2037 = vld [vmem:[#allocation2] sm:$0x1]
  %v2039 = vperm.slane %v2037, 0
  %2040 = vset.pattern.permute.xlu0 0
  %2041 = vperm.xlu0 %2040, %v2039
  %v2042 = vpop.permute.xlu0 %2041
  %v2044 = vmul.f32 %v2042, %v816
  %v2045 = vmul.f32 %v2042, %v836
  %v2046 = vmul.f32 %v2042, %v856
  %v2047 = vmul.f32 %v2042, %v876
  %v2048 = vmul.f32 %v2042, %v896
  %v2049 = vmul.f32 %v2042, %v916
  %v2050 = vmul.f32 %v2042, %v936
  %v2051 = vmul.f32 %v2042, %v956
  %v2052 = vmul.f32 %v2042, %v976
  %v2053 = vmul.f32 %v2042, %v996
  %v2054 = vmul.f32 %v2042, %v1016
  %v2055 = vmul.f32 %v2042, %v1036
  %v2056 = vmul.f32 %v2042, %v1056
  %v2057 = vmul.f32 %v2042, %v1076
  %v2058 = vmul.f32 %v2042, %v1096
  %v2059 = vmul.f32 %v2042, %v1116
  %v2060 = vmul.f32 %v2042, %v1136
  %v2061 = vmul.f32 %v2042, %v1156
  %v2062 = vmul.f32 %v2042, %v1176
  %v2063 = vmul.f32 %v2042, %v1196
  %v2064 = vmul.f32 %v2042, %v1216
  %v2065 = vmul.f32 %v2042, %v1236
  %v2066 = vmul.f32 %v2042, %v1256
  %v2067 = vmul.f32 %v2042, %v1276
  %v2068 = vmul.f32 %v2042, %v1296
  %v2069 = vmul.f32 %v2042, %v1316
  %v2070 = vmul.f32 %v2042, %v1336
  %v2071 = vmul.f32 %v2042, %v1356
  %v2072 = vmul.f32 %v2042, %v1376
  %v2073 = vmul.f32 %v2042, %v1396
  %v2074 = vmul.f32 %v2042, %v1416
  %v2075 = vmul.f32 %v2042, %v1436
  %v2076 = vmul.f32 %v2042, %v1456
  %v2077 = vmul.f32 %v2042, %v1476
  %v2078 = vmul.f32 %v2042, %v1496
  %v2079 = vmul.f32 %v2042, %v1516
  %v2080 = vmul.f32 %v2042, %v1536
  %v2081 = vmul.f32 %v2042, %v1556
  %v2082 = vmul.f32 %v2042, %v1576
  %v2083 = vmul.f32 %v2042, %v1596
  %v2084 = vmul.f32 %v2042, %v1616
  %v2085 = vmul.f32 %v2042, %v1636
  %v2086 = vmul.f32 %v2042, %v1656
  %v2087 = vmul.f32 %v2042, %v1676
  %v2088 = vmul.f32 %v2042, %v1696
  %v2089 = vmul.f32 %v2042, %v1716
  %v2090 = vmul.f32 %v2042, %v1736
  %v2091 = vmul.f32 %v2042, %v1756
  %v2092 = vmul.f32 %v2042, %v1776
  %v2093 = vmul.f32 %v2042, %v1796
  %v2094 = vmul.f32 %v2042, %v1816
  %v2095 = vmul.f32 %v2042, %v1836
  %v2096 = vmul.f32 %v2042, %v1856
  %v2097 = vmul.f32 %v2042, %v1876
  %v2098 = vmul.f32 %v2042, %v1896
  %v2099 = vmul.f32 %v2042, %v1916
  %v2100 = vmul.f32 %v2042, %v1936
  %v2101 = vmul.f32 %v2042, %v1956
  %v2102 = vmul.f32 %v2042, %v1976
  %v2103 = vsel %vm1978, %v816, %v2044
  %v2104 = vsel %vm1979, %v836, %v2045
  %v2105 = vsel %vm1980, %v856, %v2046
  %v2106 = vsel %vm1981, %v876, %v2047
  %v2107 = vsel %vm1982, %v896, %v2048
  %v2108 = vsel %vm1983, %v916, %v2049
  %v2109 = vsel %vm1984, %v936, %v2050
  %v2110 = vsel %vm1985, %v956, %v2051
  %v2111 = vsel %vm1986, %v976, %v2052
  %v2112 = vsel %vm1987, %v996, %v2053
  %v2113 = vsel %vm1988, %v1016, %v2054
  %v2114 = vsel %vm1989, %v1036, %v2055
  %v2115 = vsel %vm1990, %v1056, %v2056
  %v2116 = vsel %vm1991, %v1076, %v2057
  %v2117 = vsel %vm1992, %v1096, %v2058
  %v2118 = vsel %vm1993, %v1116, %v2059
  %v2119 = vsel %vm1994, %v1136, %v2060
  %v2120 = vsel %vm1995, %v1156, %v2061
  %v2121 = vsel %vm1996, %v1176, %v2062
  %v2122 = vsel %vm1997, %v1196, %v2063
  %v2123 = vsel %vm1998, %v1216, %v2064
  %v2124 = vsel %vm1999, %v1236, %v2065
  %v2125 = vsel %vm2000, %v1256, %v2066
  %v2126 = vsel %vm2001, %v1276, %v2067
  %v2127 = vsel %vm2002, %v1296, %v2068
  %v2128 = vsel %vm2003, %v1316, %v2069
  %v2129 = vsel %vm2004, %v1336, %v2070
  %v2130 = vsel %vm2005, %v1356, %v2071
  %v2131 = vsel %vm2006, %v1376, %v2072
  %v2132 = vsel %vm2007, %v1396, %v2073
  %v2133 = vsel %vm2008, %v1416, %v2074
  %v2134 = vsel %vm2009, %v1436, %v2075
  %v2135 = vsel %vm2010, %v1456, %v2076
  %v2136 = vsel %vm2011, %v1476, %v2077
  %v2137 = vsel %vm2012, %v1496, %v2078
  %v2138 = vsel %vm2013, %v1516, %v2079
  %v2139 = vsel %vm2014, %v1536, %v2080
  %v2140 = vsel %vm2015, %v1556, %v2081
  %v2141 = vsel %vm2016, %v1576, %v2082
  %v2142 = vsel %vm2017, %v1596, %v2083
  %v2143 = vsel %vm2018, %v1616, %v2084
  %v2144 = vsel %vm2019, %v1636, %v2085
  %v2145 = vsel %vm2020, %v1656, %v2086
  %v2146 = vsel %vm2021, %v1676, %v2087
  %v2147 = vsel %vm2022, %v1696, %v2088
  %v2148 = vsel %vm2023, %v1716, %v2089
  %v2149 = vsel %vm2024, %v1736, %v2090
  %v2150 = vsel %vm2025, %v1756, %v2091
  %v2151 = vsel %vm2026, %v1776, %v2092
  %v2152 = vsel %vm2027, %v1796, %v2093
  %v2153 = vsel %vm2028, %v1816, %v2094
  %v2154 = vsel %vm2029, %v1836, %v2095
  %v2155 = vsel %vm2030, %v1856, %v2096
  %v2156 = vsel %vm2031, %v1876, %v2097
  %v2157 = vsel %vm2032, %v1896, %v2098
  %v2158 = vsel %vm2033, %v1916, %v2099
  %v2159 = vsel %vm2034, %v1936, %v2100
  %v2160 = vsel %vm2035, %v1956, %v2101
  %v2161 = vsel %vm2036, %v1976, %v2102
  %2162 = vst [vmem:[%s4] sm:$0xff] %v2103
  %2163 = vst [vmem:[%s4 + $0x8] sm:$0xff] %v2104
  %2164 = vst [vmem:[%s4 + $0x10] sm:$0xff] %v2105
  %2165 = vst [vmem:[%s4 + $0x18] sm:$0xff] %v2106
  %2166 = vst [vmem:[%s4 + $0x20] sm:$0xff] %v2107
  %2167 = vst [vmem:[%s4 + $0x28] sm:$0xff] %v2108
  %2168 = vst [vmem:[%s4 + $0x30] sm:$0xff] %v2109
  %2169 = vst [vmem:[%s4 + $0x38] sm:$0xff] %v2110
  %2170 = vst [vmem:[%s4 + $0x40] sm:$0xff] %v2111
  %2171 = vst [vmem:[%s4 + $0x48] sm:$0xff] %v2112
  %2172 = vst [vmem:[%s4 + $0x50] sm:$0xff] %v2113
  %2173 = vst [vmem:[%s4 + $0x58] sm:$0xff] %v2114
  %2174 = vst [vmem:[%s4 + $0x60] sm:$0xff] %v2115
  %2175 = vst [vmem:[%s4 + $0x68] sm:$0xff] %v2116
  %2176 = vst [vmem:[%s4 + $0x70] sm:$0xff] %v2117
  %2177 = vst [vmem:[%s4 + $0x78] sm:$0xff] %v2118
  %2178 = vst [vmem:[%s4 + $0x80] sm:$0xff] %v2119
  %2179 = vst [vmem:[%s4 + $0x88] sm:$0xff] %v2120
  %2180 = vst [vmem:[%s4 + $0x90] sm:$0xff] %v2121
  %2181 = vst [vmem:[%s4 + $0x98] sm:$0xff] %v2122
  %2182 = vst [vmem:[%s4 + $0xa0] sm:$0xff] %v2123
  %2183 = vst [vmem:[%s4 + $0xa8] sm:$0xff] %v2124
  %2184 = vst [vmem:[%s4 + $0xb0] sm:$0xff] %v2125
  %2185 = vst [vmem:[%s4 + $0xb8] sm:$0xff] %v2126
  %2186 = vst [vmem:[%s4 + $0xc0] sm:$0xff] %v2127
  %2187 = vst [vmem:[%s4 + $0xc8] sm:$0xff] %v2128
  %2188 = vst [vmem:[%s4 + $0xd0] sm:$0xff] %v2129
  %2189 = vst [vmem:[%s4 + $0xd8] sm:$0xff] %v2130
  %2190 = vst [vmem:[%s4 + $0xe0] sm:$0xff] %v2131
  %2191 = vst [vmem:[%s4 + $0xe8] sm:$0xff] %v2132
  %2192 = vst [vmem:[%s4 + $0xf0] sm:$0xff] %v2133
  %2193 = vst [vmem:[%s4 + $0xf8] sm:$0xff] %v2134
  %2194 = vst [vmem:[%s4 + $0x100] sm:$0xff] %v2135
  %2195 = vst [vmem:[%s4 + $0x108] sm:$0xff] %v2136
  %2196 = vst [vmem:[%s4 + $0x110] sm:$0xff] %v2137
  %2197 = vst [vmem:[%s4 + $0x118] sm:$0xff] %v2138
  %2198 = vst [vmem:[%s4 + $0x120] sm:$0xff] %v2139
  %2199 = vst [vmem:[%s4 + $0x128] sm:$0xff] %v2140
  %2200 = vst [vmem:[%s4 + $0x130] sm:$0xff] %v2141
  %2201 = vst [vmem:[%s4 + $0x138] sm:$0xff] %v2142
  %2202 = vst [vmem:[%s4 + $0x140] sm:$0xff] %v2143
  %2203 = vst [vmem:[%s4 + $0x148] sm:$0xff] %v2144
  %2204 = vst [vmem:[%s4 + $0x150] sm:$0xff] %v2145
  %2205 = vst [vmem:[%s4 + $0x158] sm:$0xff] %v2146
  %2206 = vst [vmem:[%s4 + $0x160] sm:$0xff] %v2147
  %2207 = vst [vmem:[%s4 + $0x168] sm:$0xff] %v2148
  %2208 = vst [vmem:[%s4 + $0x170] sm:$0xff] %v2149
  %2209 = vst [vmem:[%s4 + $0x178] sm:$0xff] %v2150
  %2210 = vst [vmem:[%s4 + $0x180] sm:$0xff] %v2151
  %2211 = vst [vmem:[%s4 + $0x188] sm:$0xff] %v2152
  %2212 = vst [vmem:[%s4 + $0x190] sm:$0xff] %v2153
  %2213 = vst [vmem:[%s4 + $0x198] sm:$0xff] %v2154
  %2214 = vst [vmem:[%s4 + $0x1a0] sm:$0xff] %v2155
  %2215 = vst [vmem:[%s4 + $0x1a8] sm:$0xff] %v2156
  %2216 = vst [vmem:[%s4 + $0x1b0] sm:$0xff] %v2157
  %2217 = vst [vmem:[%s4 + $0x1b8] sm:$0xff] %v2158
  %2218 = vst [vmem:[%s4 + $0x1c0] sm:$0xff] %v2159
  %2219 = vst [vmem:[%s4 + $0x1c8] sm:$0xff] %v2160
  %vm2220 = vcmask 146432
  %2221 = vst.msk [vmem:[%s4 + $0x1d0] sm:$0xff] %vm2220, %v2161
  // Predicated region
  $region18: #{simple_cnn_forward.6} parent=0 // pred_check
    _
  $region19: #{simple_cnn_forward.6} parent=0 // pred_check_branch
    %2223 = sbr.rel (0) target = $region21
  $region20: #{simple_cnn_forward.6} parent=0 // pred_region
    _
  $region21: #{simple_cnn_forward.6} parent=0 // pred_fallthru
    _
  // Predicated region
  $region22: #{simple_cnn_forward.6} parent=0 // pred_check
    _
  $region23: #{simple_cnn_forward.6} parent=0 // pred_check_branch
    %2225 = sbr.rel (0) target = $region25
  $region24: #{simple_cnn_forward.6} parent=0 // pred_region
    _
  $region25: #{simple_cnn_forward.6} parent=0 // pred_fallthru
    _

// kernel: simple_cnn_forward.7
$region0: #{simple_cnn_forward.7}
  #allocation0 [shape = 'u32[]', space=smem, size = 0x4, offset = 0x4, fixed_abs, tag = 'smem constant byte address 0x4 - core index']
  #allocation1 [shape = 'u32[72,128]{1,0:T(1,128)}', space=vmem, size = 0x9000, scoped, tag = 'internal scratch']
  %s0 = inlined_call_operand.vmem [shape: f32[16,961], index: 0, kind: input, shape index: {}]
  %s1 = inlined_call_operand.vmem [shape: f32[16,961], index: 1, kind: input, shape index: {}]
  %s2 = inlined_call_operand.vmem [shape: f32[16,961], index: 2, kind: input, shape index: {}]
  %s3 = inlined_call_operand.vmem [shape: f32[16,961], index: 3, kind: input, shape index: {}]
  %s4 = inlined_call_operand.vmem [shape: f32[16,961], index: 4, kind: output, shape index: {}]
  %s5 = sld [smem:[#allocation0]]
  $region26: #{simple_cnn_forward.7} parent=0
    _
  %s7 = ssub.s32 1, %s5
  %s8 = scalar_select 0, %s7, %s5
  // Predicated region
  $region2: #{simple_cnn_forward.7} parent=0 // pred_check
    _
  $region3: #{simple_cnn_forward.7} parent=0 // pred_check_branch
    %10 = sbr.rel (0) target = $region5
  $region4: #{simple_cnn_forward.7} parent=0 // pred_region
    _
  $region5: #{simple_cnn_forward.7} parent=0 // pred_fallthru
    _
  // Predicated region
  $region6: #{simple_cnn_forward.7} parent=0 // pred_check
    _
  $region7: #{simple_cnn_forward.7} parent=0 // pred_check_branch
    %12 = sbr.rel (0) target = $region9
  $region8: #{simple_cnn_forward.7} parent=0 // pred_region
    _
  $region9: #{simple_cnn_forward.7} parent=0 // pred_fallthru
    _
  // Predicated region
  $region10: #{simple_cnn_forward.7} parent=0 // pred_check
    _
  $region11: #{simple_cnn_forward.7} parent=0 // pred_check_branch
    %14 = sbr.rel (0) target = $region13
  $region12: #{simple_cnn_forward.7} parent=0 // pred_region
    _
  $region13: #{simple_cnn_forward.7} parent=0 // pred_fallthru
    _
  // Predicated region
  $region14: #{simple_cnn_forward.7} parent=0 // pred_check
    _
  $region15: #{simple_cnn_forward.7} parent=0 // pred_check_branch
    %16 = sbr.rel (0) target = $region17
  $region16: #{simple_cnn_forward.7} parent=0 // pred_region
    _
  $region17: #{simple_cnn_forward.7} parent=0 // pred_fallthru
    _
  %v17 = vld [vmem:[%s0] sm:$0xff]
  %v18 = vld [vmem:[%s0 + $0x8] sm:$0xff]
  %v19 = vld [vmem:[%s0 + $0x10] sm:$0xff]
  %v20 = vld [vmem:[%s0 + $0x18] sm:$0xff]
  %v21 = vld [vmem:[%s0 + $0x20] sm:$0xff]
  %v22 = vld [vmem:[%s0 + $0x28] sm:$0xff]
  %v23 = vld [vmem:[%s0 + $0x30] sm:$0xff]
  %v24 = vld [vmem:[%s0 + $0x38] sm:$0xff]
  %v25 = vld [vmem:[%s0 + $0x40] sm:$0xff]
  %v26 = vld [vmem:[%s0 + $0x48] sm:$0xff]
  %v27 = vld [vmem:[%s0 + $0x50] sm:$0xff]
  %v28 = vld [vmem:[%s0 + $0x58] sm:$0xff]
  %v29 = vld [vmem:[%s0 + $0x60] sm:$0xff]
  %v30 = vld [vmem:[%s0 + $0x68] sm:$0xff]
  %v31 = vld [vmem:[%s0 + $0x70] sm:$0xff]
  %v32 = vld [vmem:[%s0 + $0x78] sm:$0xff]
  %v33 = vld [vmem:[%s1] sm:$0xff]
  %v34 = vld [vmem:[%s1 + $0x8] sm:$0xff]
  %v35 = vld [vmem:[%s1 + $0x10] sm:$0xff]
  %v36 = vld [vmem:[%s1 + $0x18] sm:$0xff]
  %v37 = vld [vmem:[%s1 + $0x20] sm:$0xff]
  %v38 = vld [vmem:[%s1 + $0x28] sm:$0xff]
  %v39 = vld [vmem:[%s1 + $0x30] sm:$0xff]
  %v40 = vld [vmem:[%s1 + $0x38] sm:$0xff]
  %v41 = vld [vmem:[%s1 + $0x40] sm:$0xff]
  %v42 = vld [vmem:[%s1 + $0x48] sm:$0xff]
  %v43 = vld [vmem:[%s1 + $0x50] sm:$0xff]
  %v44 = vld [vmem:[%s1 + $0x58] sm:$0xff]
  %v45 = vld [vmem:[%s1 + $0x60] sm:$0xff]
  %v46 = vld [vmem:[%s1 + $0x68] sm:$0xff]
  %v47 = vld [vmem:[%s1 + $0x70] sm:$0xff]
  %v48 = vld [vmem:[%s1 + $0x78] sm:$0xff]
  %v49 = vmax.f32 %v17, %v33
  %v50 = vmax.f32 %v18, %v34
  %v51 = vmax.f32 %v19, %v35
  %v52 = vmax.f32 %v20, %v36
  %v53 = vmax.f32 %v21, %v37
  %v54 = vmax.f32 %v22, %v38
  %v55 = vmax.f32 %v23, %v39
  %v56 = vmax.f32 %v24, %v40
  %v57 = vmax.f32 %v25, %v41
  %v58 = vmax.f32 %v26, %v42
  %v59 = vmax.f32 %v27, %v43
  %v60 = vmax.f32 %v28, %v44
  %v61 = vmax.f32 %v29, %v45
  %v62 = vmax.f32 %v30, %v46
  %v63 = vmax.f32 %v31, %v47
  %v64 = vmax.f32 %v32, %v48
  %v65 = vld [vmem:[%s2] sm:$0xff]
  %v66 = vld [vmem:[%s2 + $0x8] sm:$0xff]
  %v67 = vld [vmem:[%s2 + $0x10] sm:$0xff]
  %v68 = vld [vmem:[%s2 + $0x18] sm:$0xff]
  %v69 = vld [vmem:[%s2 + $0x20] sm:$0xff]
  %v70 = vld [vmem:[%s2 + $0x28] sm:$0xff]
  %v71 = vld [vmem:[%s2 + $0x30] sm:$0xff]
  %v72 = vld [vmem:[%s2 + $0x38] sm:$0xff]
  %v73 = vld [vmem:[%s2 + $0x40] sm:$0xff]
  %v74 = vld [vmem:[%s2 + $0x48] sm:$0xff]
  %v75 = vld [vmem:[%s2 + $0x50] sm:$0xff]
  %v76 = vld [vmem:[%s2 + $0x58] sm:$0xff]
  %v77 = vld [vmem:[%s2 + $0x60] sm:$0xff]
  %v78 = vld [vmem:[%s2 + $0x68] sm:$0xff]
  %v79 = vld [vmem:[%s2 + $0x70] sm:$0xff]
  %v80 = vld [vmem:[%s2 + $0x78] sm:$0xff]
  %v81 = vld [vmem:[%s3] sm:$0xff]
  %v82 = vld [vmem:[%s3 + $0x8] sm:$0xff]
  %v83 = vld [vmem:[%s3 + $0x10] sm:$0xff]
  %v84 = vld [vmem:[%s3 + $0x18] sm:$0xff]
  %v85 = vld [vmem:[%s3 + $0x20] sm:$0xff]
  %v86 = vld [vmem:[%s3 + $0x28] sm:$0xff]
  %v87 = vld [vmem:[%s3 + $0x30] sm:$0xff]
  %v88 = vld [vmem:[%s3 + $0x38] sm:$0xff]
  %v89 = vld [vmem:[%s3 + $0x40] sm:$0xff]
  %v90 = vld [vmem:[%s3 + $0x48] sm:$0xff]
  %v91 = vld [vmem:[%s3 + $0x50] sm:$0xff]
  %v92 = vld [vmem:[%s3 + $0x58] sm:$0xff]
  %v93 = vld [vmem:[%s3 + $0x60] sm:$0xff]
  %v94 = vld [vmem:[%s3 + $0x68] sm:$0xff]
  %v95 = vld [vmem:[%s3 + $0x70] sm:$0xff]
  %v96 = vld [vmem:[%s3 + $0x78] sm:$0xff]
  %v97 = vmax.f32 %v65, %v81
  %v98 = vmax.f32 %v66, %v82
  %v99 = vmax.f32 %v67, %v83
  %v100 = vmax.f32 %v68, %v84
  %v101 = vmax.f32 %v69, %v85
  %v102 = vmax.f32 %v70, %v86
  %v103 = vmax.f32 %v71, %v87
  %v104 = vmax.f32 %v72, %v88
  %v105 = vmax.f32 %v73, %v89
  %v106 = vmax.f32 %v74, %v90
  %v107 = vmax.f32 %v75, %v91
  %v108 = vmax.f32 %v76, %v92
  %v109 = vmax.f32 %v77, %v93
  %v110 = vmax.f32 %v78, %v94
  %v111 = vmax.f32 %v79, %v95
  %v112 = vmax.f32 %v80, %v96
  %v113 = vmax.f32 %v49, %v97
  %v114 = vmax.f32 %v50, %v98
  %v115 = vmax.f32 %v51, %v99
  %v116 = vmax.f32 %v52, %v100
  %v117 = vmax.f32 %v53, %v101
  %v118 = vmax.f32 %v54, %v102
  %v119 = vmax.f32 %v55, %v103
  %v120 = vmax.f32 %v56, %v104
  %v121 = vmax.f32 %v57, %v105
  %v122 = vmax.f32 %v58, %v106
  %v123 = vmax.f32 %v59, %v107
  %v124 = vmax.f32 %v60, %v108
  %v125 = vmax.f32 %v61, %v109
  %v126 = vmax.f32 %v62, %v110
  %v127 = vmax.f32 %v63, %v111
  %v128 = vmax.f32 %v64, %v112
  %129 = vst [vmem:[%s4] sm:$0xff] %v113
  %130 = vst [vmem:[%s4 + $0x8] sm:$0xff] %v114
  %131 = vst [vmem:[%s4 + $0x10] sm:$0xff] %v115
  %132 = vst [vmem:[%s4 + $0x18] sm:$0xff] %v116
  %133 = vst [vmem:[%s4 + $0x20] sm:$0xff] %v117
  %134 = vst [vmem:[%s4 + $0x28] sm:$0xff] %v118
  %135 = vst [vmem:[%s4 + $0x30] sm:$0xff] %v119
  %vm136 = vcmask 531456
  %137 = vst.msk [vmem:[%s4 + $0x38] sm:$0xff] %vm136, %v120
  %138 = vst [vmem:[%s4 + $0x40] sm:$0xff] %v121
  %139 = vst [vmem:[%s4 + $0x48] sm:$0xff] %v122
  %140 = vst [vmem:[%s4 + $0x50] sm:$0xff] %v123
  %141 = vst [vmem:[%s4 + $0x58] sm:$0xff] %v124
  %142 = vst [vmem:[%s4 + $0x60] sm:$0xff] %v125
  %143 = vst [vmem:[%s4 + $0x68] sm:$0xff] %v126
  %144 = vst [vmem:[%s4 + $0x70] sm:$0xff] %v127
  %145 = vst.msk [vmem:[%s4 + $0x78] sm:$0xff] %vm136, %v128
  // Predicated region
  $region18: #{simple_cnn_forward.7} parent=0 // pred_check
    _
  $region19: #{simple_cnn_forward.7} parent=0 // pred_check_branch
    %147 = sbr.rel (0) target = $region21
  $region20: #{simple_cnn_forward.7} parent=0 // pred_region
    _
  $region21: #{simple_cnn_forward.7} parent=0 // pred_fallthru
    _
  // Predicated region
  $region22: #{simple_cnn_forward.7} parent=0 // pred_check
    _
  $region23: #{simple_cnn_forward.7} parent=0 // pred_check_branch
    %149 = sbr.rel (0) target = $region25
  $region24: #{simple_cnn_forward.7} parent=0 // pred_region
    _
  $region25: #{simple_cnn_forward.7} parent=0 // pred_fallthru
    _

// kernel: simple_cnn_forward.8
$region0: #{simple_cnn_forward.8}
  #allocation0 [shape = 'u32[]', space=smem, size = 0x4, offset = 0x4, fixed_abs, tag = 'smem constant byte address 0x4 - core index']
  #allocation1 [shape = 'u32[72,128]{1,0:T(1,128)}', space=vmem, size = 0x9000, scoped, tag = 'internal scratch']
  #allocation2 [shape = 'f32[1,1]{1,0:T(1,128)S(1)}', space=vmem, size = 0x200, scoped, tag = 'scoped memory for simple_cnn_forward.8']
  %s0 = inlined_call_operand.vmem [shape: f32[8,72], index: 0, kind: input, shape index: {}]
  %s1 = inlined_call_operand.vmem [shape: f32[72,1922], index: 1, kind: input, shape index: {}]
  %s2 = inlined_call_operand.vmem [shape: f32[8,1], index: 2, kind: input, shape index: {}]
  %s3 = inlined_call_operand.<no memory space> [shape: f32[1,1], index: 3, kind: input, shape index: {}]
  %s4 = inlined_call_operand.vmem [shape: f32[8,1922], index: 4, kind: output, shape index: {}]
  %s5 = sld [smem:[#allocation0]]
  $region26: #{simple_cnn_forward.8} parent=0
    _
  %s7 = ssub.s32 1, %s5
  %s8 = scalar_select 0, %s7, %s5
  %v9 = vstv %s3
  %10 = vst [vmem:[#allocation2] sm:$0x1] %v9
  // Predicated region
  $region2: #{simple_cnn_forward.8} parent=0 // pred_check
    _
  $region3: #{simple_cnn_forward.8} parent=0 // pred_check_branch
    %12 = sbr.rel (0) target = $region5
  $region4: #{simple_cnn_forward.8} parent=0 // pred_region
    _
  $region5: #{simple_cnn_forward.8} parent=0 // pred_fallthru
    _
  // Predicated region
  $region6: #{simple_cnn_forward.8} parent=0 // pred_check
    _
  $region7: #{simple_cnn_forward.8} parent=0 // pred_check_branch
    %14 = sbr.rel (0) target = $region9
  $region8: #{simple_cnn_forward.8} parent=0 // pred_region
    _
  $region9: #{simple_cnn_forward.8} parent=0 // pred_fallthru
    _
  // Predicated region
  $region10: #{simple_cnn_forward.8} parent=0 // pred_check
    _
  $region11: #{simple_cnn_forward.8} parent=0 // pred_check_branch
    %16 = sbr.rel (0) target = $region13
  $region12: #{simple_cnn_forward.8} parent=0 // pred_region
    _
  $region13: #{simple_cnn_forward.8} parent=0 // pred_fallthru
    _
  // Predicated region
  $region14: #{simple_cnn_forward.8} parent=0 // pred_check
    _
  $region15: #{simple_cnn_forward.8} parent=0 // pred_check_branch
    %18 = sbr.rel (0) target = $region17
  $region16: #{simple_cnn_forward.8} parent=0 // pred_region
    _
  $region17: #{simple_cnn_forward.8} parent=0 // pred_fallthru
    _
  %v19 = vld [vmem:[%s0] sm:$0xff]
  %v20 = vld [vmem:[%s1] sm:$0xff]
  %v21 = vld [vmem:[%s1 + $0x8] sm:$0xff]
  %v22 = vld [vmem:[%s1 + $0x10] sm:$0xff]
  %v23 = vld [vmem:[%s1 + $0x18] sm:$0xff]
  %v24 = vld [vmem:[%s1 + $0x20] sm:$0xff]
  %v25 = vld [vmem:[%s1 + $0x28] sm:$0xff]
  %v26 = vld [vmem:[%s1 + $0x30] sm:$0xff]
  %v27 = vld [vmem:[%s1 + $0x38] sm:$0xff]
  %v28 = vld [vmem:[%s1 + $0x40] sm:$0xff]
  %v29 = vld [vmem:[%s1 + $0x48] sm:$0xff]
  %v30 = vld [vmem:[%s1 + $0x50] sm:$0xff]
  %v31 = vld [vmem:[%s1 + $0x58] sm:$0xff]
  %v32 = vld [vmem:[%s1 + $0x60] sm:$0xff]
  %v33 = vld [vmem:[%s1 + $0x68] sm:$0xff]
  %v34 = vld [vmem:[%s1 + $0x70] sm:$0xff]
  %v35 = vld [vmem:[%s1 + $0x78] sm:$0xff]
  %v36 = vld [vmem:[%s1 + $0x80] sm:$0xff]
  %v37 = vld [vmem:[%s1 + $0x88] sm:$0xff]
  %v38 = vld [vmem:[%s1 + $0x90] sm:$0xff]
  %v39 = vld [vmem:[%s1 + $0x98] sm:$0xff]
  %v40 = vld [vmem:[%s1 + $0xa0] sm:$0xff]
  %v41 = vld [vmem:[%s1 + $0xa8] sm:$0xff]
  %v42 = vld [vmem:[%s1 + $0xb0] sm:$0xff]
  %v43 = vld [vmem:[%s1 + $0xb8] sm:$0xff]
  %v44 = vld [vmem:[%s1 + $0xc0] sm:$0xff]
  %v45 = vld [vmem:[%s1 + $0xc8] sm:$0xff]
  %v46 = vld [vmem:[%s1 + $0xd0] sm:$0xff]
  %v47 = vld [vmem:[%s1 + $0xd8] sm:$0xff]
  %v48 = vld [vmem:[%s1 + $0xe0] sm:$0xff]
  %v49 = vld [vmem:[%s1 + $0xe8] sm:$0xff]
  %v50 = vld [vmem:[%s1 + $0xf0] sm:$0xff]
  %v51 = vld [vmem:[%s1 + $0xf8] sm:$0xff]
  %v52 = vld [vmem:[%s1 + $0x100] sm:$0xff]
  %v53 = vld [vmem:[%s1 + $0x108] sm:$0xff]
  %v54 = vld [vmem:[%s1 + $0x110] sm:$0xff]
  %v55 = vld [vmem:[%s1 + $0x118] sm:$0xff]
  %v56 = vld [vmem:[%s1 + $0x120] sm:$0xff]
  %v57 = vld [vmem:[%s1 + $0x128] sm:$0xff]
  %v58 = vld [vmem:[%s1 + $0x130] sm:$0xff]
  %v59 = vld [vmem:[%s1 + $0x138] sm:$0xff]
  %v60 = vld [vmem:[%s1 + $0x140] sm:$0xff]
  %v61 = vld [vmem:[%s1 + $0x148] sm:$0xff]
  %v62 = vld [vmem:[%s1 + $0x150] sm:$0xff]
  %v63 = vld [vmem:[%s1 + $0x158] sm:$0xff]
  %v64 = vld [vmem:[%s1 + $0x160] sm:$0xff]
  %v65 = vld [vmem:[%s1 + $0x168] sm:$0xff]
  %v66 = vld [vmem:[%s1 + $0x170] sm:$0xff]
  %v67 = vld [vmem:[%s1 + $0x178] sm:$0xff]
  %v68 = vld [vmem:[%s1 + $0x180] sm:$0xff]
  %v69 = vld [vmem:[%s1 + $0x188] sm:$0xff]
  %v70 = vld [vmem:[%s1 + $0x190] sm:$0xff]
  %v71 = vld [vmem:[%s1 + $0x198] sm:$0xff]
  %v72 = vld [vmem:[%s1 + $0x1a0] sm:$0xff]
  %v73 = vld [vmem:[%s1 + $0x1a8] sm:$0xff]
  %v74 = vld [vmem:[%s1 + $0x1b0] sm:$0xff]
  %v75 = vld [vmem:[%s1 + $0x1b8] sm:$0xff]
  %v76 = vld [vmem:[%s1 + $0x1c0] sm:$0xff]
  %v77 = vld [vmem:[%s1 + $0x1c8] sm:$0xff]
  %v78 = vld [vmem:[%s1 + $0x1d0] sm:$0xff]
  %v79 = vld [vmem:[%s1 + $0x1d8] sm:$0xff]
  %v80 = vld [vmem:[%s1 + $0x1e0] sm:$0xff]
  %v81 = vld [vmem:[%s1 + $0x1e8] sm:$0xff]
  %v82 = vld [vmem:[%s1 + $0x1f0] sm:$0xff]
  %v83 = vld [vmem:[%s1 + $0x1f8] sm:$0xff]
  %v84 = vld [vmem:[%s1 + $0x200] sm:$0xff]
  %v85 = vld [vmem:[%s1 + $0x208] sm:$0xff]
  %v86 = vld [vmem:[%s1 + $0x210] sm:$0xff]
  %v87 = vld [vmem:[%s1 + $0x218] sm:$0xff]
  %v88 = vld [vmem:[%s1 + $0x220] sm:$0xff]
  %v89 = vld [vmem:[%s1 + $0x228] sm:$0xff]
  %v90 = vld [vmem:[%s1 + $0x230] sm:$0xff]
  %v91 = vld [vmem:[%s1 + $0x238] sm:$0xff]
  %v92 = vld [vmem:[%s1 + $0x240] sm:$0xff]
  %v93 = vld [vmem:[%s1 + $0x248] sm:$0xff]
  %v94 = vld [vmem:[%s1 + $0x250] sm:$0xff]
  %v95 = vld [vmem:[%s1 + $0x258] sm:$0xff]
  %v96 = vld [vmem:[%s1 + $0x260] sm:$0xff]
  %v97 = vld [vmem:[%s1 + $0x268] sm:$0xff]
  %v98 = vld [vmem:[%s1 + $0x270] sm:$0xff]
  %v99 = vld [vmem:[%s1 + $0x278] sm:$0xff]
  %v100 = vld [vmem:[%s1 + $0x280] sm:$0xff]
  %v101 = vld [vmem:[%s1 + $0x288] sm:$0xff]
  %v102 = vld [vmem:[%s1 + $0x290] sm:$0xff]
  %v103 = vld [vmem:[%s1 + $0x298] sm:$0xff]
  %v104 = vld [vmem:[%s1 + $0x2a0] sm:$0xff]
  %v105 = vld [vmem:[%s1 + $0x2a8] sm:$0xff]
  %v106 = vld [vmem:[%s1 + $0x2b0] sm:$0xff]
  %v107 = vld [vmem:[%s1 + $0x2b8] sm:$0xff]
  %v108 = vld [vmem:[%s1 + $0x2c0] sm:$0xff]
  %v109 = vld [vmem:[%s1 + $0x2c8] sm:$0xff]
  %v110 = vld [vmem:[%s1 + $0x2d0] sm:$0xff]
  %v111 = vld [vmem:[%s1 + $0x2d8] sm:$0xff]
  %v112 = vld [vmem:[%s1 + $0x2e0] sm:$0xff]
  %v113 = vld [vmem:[%s1 + $0x2e8] sm:$0xff]
  %v114 = vld [vmem:[%s1 + $0x2f0] sm:$0xff]
  %v115 = vld [vmem:[%s1 + $0x2f8] sm:$0xff]
  %v116 = vld [vmem:[%s1 + $0x300] sm:$0xff]
  %v117 = vld [vmem:[%s1 + $0x308] sm:$0xff]
  %v118 = vld [vmem:[%s1 + $0x310] sm:$0xff]
  %v119 = vld [vmem:[%s1 + $0x318] sm:$0xff]
  %v120 = vld [vmem:[%s1 + $0x320] sm:$0xff]
  %v121 = vld [vmem:[%s1 + $0x328] sm:$0xff]
  %v122 = vld [vmem:[%s1 + $0x330] sm:$0xff]
  %v123 = vld [vmem:[%s1 + $0x338] sm:$0xff]
  %v124 = vld [vmem:[%s1 + $0x340] sm:$0xff]
  %v125 = vld [vmem:[%s1 + $0x348] sm:$0xff]
  %v126 = vld [vmem:[%s1 + $0x350] sm:$0xff]
  %v127 = vld [vmem:[%s1 + $0x358] sm:$0xff]
  %v128 = vld [vmem:[%s1 + $0x360] sm:$0xff]
  %v129 = vld [vmem:[%s1 + $0x368] sm:$0xff]
  %v130 = vld [vmem:[%s1 + $0x370] sm:$0xff]
  %v131 = vld [vmem:[%s1 + $0x378] sm:$0xff]
  %v132 = vld [vmem:[%s1 + $0x380] sm:$0xff]
  %v133 = vld [vmem:[%s1 + $0x388] sm:$0xff]
  %v134 = vld [vmem:[%s1 + $0x390] sm:$0xff]
  %v135 = vld [vmem:[%s1 + $0x398] sm:$0xff]
  %v136 = vld [vmem:[%s1 + $0x3a0] sm:$0xff]
  %v137 = vld [vmem:[%s1 + $0x3a8] sm:$0xff]
  %v138 = vld [vmem:[%s1 + $0x3b0] sm:$0xff]
  %v139 = vld [vmem:[%s1 + $0x3b8] sm:$0xff]
  %v140 = vld [vmem:[%s1 + $0x3c0] sm:$0xff]
  %v141 = vld [vmem:[%s1 + $0x3c8] sm:$0xff]
  %v142 = vld [vmem:[%s1 + $0x3d0] sm:$0xff]
  %v143 = vld [vmem:[%s1 + $0x3d8] sm:$0xff]
  %v144 = vld [vmem:[%s1 + $0x3e0] sm:$0xff]
  %v145 = vld [vmem:[%s1 + $0x3e8] sm:$0xff]
  %v146 = vld [vmem:[%s1 + $0x3f0] sm:$0xff]
  %v147 = vld [vmem:[%s1 + $0x3f8] sm:$0xff]
  %v148 = vld [vmem:[%s1 + $0x400] sm:$0xff]
  %v149 = vld [vmem:[%s1 + $0x408] sm:$0xff]
  %v150 = vld [vmem:[%s1 + $0x410] sm:$0xff]
  %v151 = vld [vmem:[%s1 + $0x418] sm:$0xff]
  %v152 = vld [vmem:[%s1 + $0x420] sm:$0xff]
  %v153 = vld [vmem:[%s1 + $0x428] sm:$0xff]
  %v154 = vld [vmem:[%s1 + $0x430] sm:$0xff]
  %v155 = vld [vmem:[%s1 + $0x438] sm:$0xff]
  %v156 = vld [vmem:[%s1 + $0x440] sm:$0xff]
  %v157 = vld [vmem:[%s1 + $0x448] sm:$0xff]
  %v158 = vld [vmem:[%s1 + $0x450] sm:$0xff]
  %v159 = vld [vmem:[%s1 + $0x458] sm:$0xff]
  %v160 = vld [vmem:[%s1 + $0x460] sm:$0xff]
  %v161 = vld [vmem:[%s1 + $0x468] sm:$0xff]
  %v162 = vld [vmem:[%s1 + $0x470] sm:$0xff]
  %v163 = vld [vmem:[%s1 + $0x478] sm:$0xff]
  %v164 = vld [vmem:[%s2] sm:$0xff]
  %166 = vset.pattern.permute.xlu0 0
  %167 = vperm.xlu0 %166, %v164
  %v168 = vpop.permute.xlu0 %167
  %vm170 = vcmask 588800
  %v172 = vsel %vm170, %v19, 0
  %174 = vmatpush.msra.mxu0 0.0
  %175 = vmatpush.msra.mxu0 0.0
  %176 = vmatpush.msra.mxu0 0.0
  %177 = vmatpush.msra.mxu0 0.0
  %178 = vmatpush.msra.mxu0 0.0
  %179 = vmatpush.msra.mxu0 0.0
  %180 = vmatpush.msra.mxu0 0.0
  %181 = vmatpush.msra.mxu0 %v148
  %182 = vmatpush.msra.mxu0 %v132
  %183 = vmatpush.msra.mxu0 %v116
  %184 = vmatpush.msra.mxu0 %v100
  %185 = vmatpush.msra.mxu0 %v84
  %186 = vmatpush.msra.mxu0 %v68
  %187 = vmatpush.msra.mxu0 %v52
  %188 = vmatpush.msra.mxu0 %v36
  %189 = vmatpush.msra.mxu0 %v20
  %190 = vmatmul.f32.gmra.mxu0 %v172
  %v191 = vpop.f32.mrf.mxu0
  %v192 = vadd.f32 %v168, %v191
  %193 = vdwg.mxu0
  %194 = vmatpush.msra.mxu0 0.0
  %195 = vmatpush.msra.mxu0 0.0
  %196 = vmatpush.msra.mxu0 0.0
  %197 = vmatpush.msra.mxu0 0.0
  %198 = vmatpush.msra.mxu0 0.0
  %199 = vmatpush.msra.mxu0 0.0
  %200 = vmatpush.msra.mxu0 0.0
  %201 = vmatpush.msra.mxu0 %v149
  %202 = vmatpush.msra.mxu0 %v133
  %203 = vmatpush.msra.mxu0 %v117
  %204 = vmatpush.msra.mxu0 %v101
  %205 = vmatpush.msra.mxu0 %v85
  %206 = vmatpush.msra.mxu0 %v69
  %207 = vmatpush.msra.mxu0 %v53
  %208 = vmatpush.msra.mxu0 %v37
  %209 = vmatpush.msra.mxu0 %v21
  %210 = vmatmul.f32.gmra.mxu0 %v172
  %v211 = vpop.f32.mrf.mxu0
  %v212 = vadd.f32 %v168, %v211
  %213 = vdwg.mxu0
  %214 = vmatpush.msra.mxu0 0.0
  %215 = vmatpush.msra.mxu0 0.0
  %216 = vmatpush.msra.mxu0 0.0
  %217 = vmatpush.msra.mxu0 0.0
  %218 = vmatpush.msra.mxu0 0.0
  %219 = vmatpush.msra.mxu0 0.0
  %220 = vmatpush.msra.mxu0 0.0
  %221 = vmatpush.msra.mxu0 %v150
  %222 = vmatpush.msra.mxu0 %v134
  %223 = vmatpush.msra.mxu0 %v118
  %224 = vmatpush.msra.mxu0 %v102
  %225 = vmatpush.msra.mxu0 %v86
  %226 = vmatpush.msra.mxu0 %v70
  %227 = vmatpush.msra.mxu0 %v54
  %228 = vmatpush.msra.mxu0 %v38
  %229 = vmatpush.msra.mxu0 %v22
  %230 = vmatmul.f32.gmra.mxu0 %v172
  %v231 = vpop.f32.mrf.mxu0
  %v232 = vadd.f32 %v168, %v231
  %233 = vdwg.mxu0
  %234 = vmatpush.msra.mxu0 0.0
  %235 = vmatpush.msra.mxu0 0.0
  %236 = vmatpush.msra.mxu0 0.0
  %237 = vmatpush.msra.mxu0 0.0
  %238 = vmatpush.msra.mxu0 0.0
  %239 = vmatpush.msra.mxu0 0.0
  %240 = vmatpush.msra.mxu0 0.0
  %241 = vmatpush.msra.mxu0 %v151
  %242 = vmatpush.msra.mxu0 %v135
  %243 = vmatpush.msra.mxu0 %v119
  %244 = vmatpush.msra.mxu0 %v103
  %245 = vmatpush.msra.mxu0 %v87
  %246 = vmatpush.msra.mxu0 %v71
  %247 = vmatpush.msra.mxu0 %v55
  %248 = vmatpush.msra.mxu0 %v39
  %249 = vmatpush.msra.mxu0 %v23
  %250 = vmatmul.f32.gmra.mxu0 %v172
  %v251 = vpop.f32.mrf.mxu0
  %v252 = vadd.f32 %v168, %v251
  %253 = vdwg.mxu0
  %254 = vmatpush.msra.mxu0 0.0
  %255 = vmatpush.msra.mxu0 0.0
  %256 = vmatpush.msra.mxu0 0.0
  %257 = vmatpush.msra.mxu0 0.0
  %258 = vmatpush.msra.mxu0 0.0
  %259 = vmatpush.msra.mxu0 0.0
  %260 = vmatpush.msra.mxu0 0.0
  %261 = vmatpush.msra.mxu0 %v152
  %262 = vmatpush.msra.mxu0 %v136
  %263 = vmatpush.msra.mxu0 %v120
  %264 = vmatpush.msra.mxu0 %v104
  %265 = vmatpush.msra.mxu0 %v88
  %266 = vmatpush.msra.mxu0 %v72
  %267 = vmatpush.msra.mxu0 %v56
  %268 = vmatpush.msra.mxu0 %v40
  %269 = vmatpush.msra.mxu0 %v24
  %270 = vmatmul.f32.gmra.mxu0 %v172
  %v271 = vpop.f32.mrf.mxu0
  %v272 = vadd.f32 %v168, %v271
  %273 = vdwg.mxu0
  %274 = vmatpush.msra.mxu0 0.0
  %275 = vmatpush.msra.mxu0 0.0
  %276 = vmatpush.msra.mxu0 0.0
  %277 = vmatpush.msra.mxu0 0.0
  %278 = vmatpush.msra.mxu0 0.0
  %279 = vmatpush.msra.mxu0 0.0
  %280 = vmatpush.msra.mxu0 0.0
  %281 = vmatpush.msra.mxu0 %v153
  %282 = vmatpush.msra.mxu0 %v137
  %283 = vmatpush.msra.mxu0 %v121
  %284 = vmatpush.msra.mxu0 %v105
  %285 = vmatpush.msra.mxu0 %v89
  %286 = vmatpush.msra.mxu0 %v73
  %287 = vmatpush.msra.mxu0 %v57
  %288 = vmatpush.msra.mxu0 %v41
  %289 = vmatpush.msra.mxu0 %v25
  %290 = vmatmul.f32.gmra.mxu0 %v172
  %v291 = vpop.f32.mrf.mxu0
  %v292 = vadd.f32 %v168, %v291
  %293 = vdwg.mxu0
  %294 = vmatpush.msra.mxu0 0.0
  %295 = vmatpush.msra.mxu0 0.0
  %296 = vmatpush.msra.mxu0 0.0
  %297 = vmatpush.msra.mxu0 0.0
  %298 = vmatpush.msra.mxu0 0.0
  %299 = vmatpush.msra.mxu0 0.0
  %300 = vmatpush.msra.mxu0 0.0
  %301 = vmatpush.msra.mxu0 %v154
  %302 = vmatpush.msra.mxu0 %v138
  %303 = vmatpush.msra.mxu0 %v122
  %304 = vmatpush.msra.mxu0 %v106
  %305 = vmatpush.msra.mxu0 %v90
  %306 = vmatpush.msra.mxu0 %v74
  %307 = vmatpush.msra.mxu0 %v58
  %308 = vmatpush.msra.mxu0 %v42
  %309 = vmatpush.msra.mxu0 %v26
  %310 = vmatmul.f32.gmra.mxu0 %v172
  %v311 = vpop.f32.mrf.mxu0
  %v312 = vadd.f32 %v168, %v311
  %313 = vdwg.mxu0
  %314 = vmatpush.msra.mxu0 0.0
  %315 = vmatpush.msra.mxu0 0.0
  %316 = vmatpush.msra.mxu0 0.0
  %317 = vmatpush.msra.mxu0 0.0
  %318 = vmatpush.msra.mxu0 0.0
  %319 = vmatpush.msra.mxu0 0.0
  %320 = vmatpush.msra.mxu0 0.0
  %321 = vmatpush.msra.mxu0 %v155
  %322 = vmatpush.msra.mxu0 %v139
  %323 = vmatpush.msra.mxu0 %v123
  %324 = vmatpush.msra.mxu0 %v107
  %325 = vmatpush.msra.mxu0 %v91
  %326 = vmatpush.msra.mxu0 %v75
  %327 = vmatpush.msra.mxu0 %v59
  %328 = vmatpush.msra.mxu0 %v43
  %329 = vmatpush.msra.mxu0 %v27
  %330 = vmatmul.f32.gmra.mxu0 %v172
  %v331 = vpop.f32.mrf.mxu0
  %v332 = vadd.f32 %v168, %v331
  %333 = vdwg.mxu0
  %334 = vmatpush.msra.mxu0 0.0
  %335 = vmatpush.msra.mxu0 0.0
  %336 = vmatpush.msra.mxu0 0.0
  %337 = vmatpush.msra.mxu0 0.0
  %338 = vmatpush.msra.mxu0 0.0
  %339 = vmatpush.msra.mxu0 0.0
  %340 = vmatpush.msra.mxu0 0.0
  %341 = vmatpush.msra.mxu0 %v156
  %342 = vmatpush.msra.mxu0 %v140
  %343 = vmatpush.msra.mxu0 %v124
  %344 = vmatpush.msra.mxu0 %v108
  %345 = vmatpush.msra.mxu0 %v92
  %346 = vmatpush.msra.mxu0 %v76
  %347 = vmatpush.msra.mxu0 %v60
  %348 = vmatpush.msra.mxu0 %v44
  %349 = vmatpush.msra.mxu0 %v28
  %350 = vmatmul.f32.gmra.mxu0 %v172
  %v351 = vpop.f32.mrf.mxu0
  %v352 = vadd.f32 %v168, %v351
  %353 = vdwg.mxu0
  %354 = vmatpush.msra.mxu0 0.0
  %355 = vmatpush.msra.mxu0 0.0
  %356 = vmatpush.msra.mxu0 0.0
  %357 = vmatpush.msra.mxu0 0.0
  %358 = vmatpush.msra.mxu0 0.0
  %359 = vmatpush.msra.mxu0 0.0
  %360 = vmatpush.msra.mxu0 0.0
  %361 = vmatpush.msra.mxu0 %v157
  %362 = vmatpush.msra.mxu0 %v141
  %363 = vmatpush.msra.mxu0 %v125
  %364 = vmatpush.msra.mxu0 %v109
  %365 = vmatpush.msra.mxu0 %v93
  %366 = vmatpush.msra.mxu0 %v77
  %367 = vmatpush.msra.mxu0 %v61
  %368 = vmatpush.msra.mxu0 %v45
  %369 = vmatpush.msra.mxu0 %v29
  %370 = vmatmul.f32.gmra.mxu0 %v172
  %v371 = vpop.f32.mrf.mxu0
  %v372 = vadd.f32 %v168, %v371
  %373 = vdwg.mxu0
  %374 = vmatpush.msra.mxu0 0.0
  %375 = vmatpush.msra.mxu0 0.0
  %376 = vmatpush.msra.mxu0 0.0
  %377 = vmatpush.msra.mxu0 0.0
  %378 = vmatpush.msra.mxu0 0.0
  %379 = vmatpush.msra.mxu0 0.0
  %380 = vmatpush.msra.mxu0 0.0
  %381 = vmatpush.msra.mxu0 %v158
  %382 = vmatpush.msra.mxu0 %v142
  %383 = vmatpush.msra.mxu0 %v126
  %384 = vmatpush.msra.mxu0 %v110
  %385 = vmatpush.msra.mxu0 %v94
  %386 = vmatpush.msra.mxu0 %v78
  %387 = vmatpush.msra.mxu0 %v62
  %388 = vmatpush.msra.mxu0 %v46
  %389 = vmatpush.msra.mxu0 %v30
  %390 = vmatmul.f32.gmra.mxu0 %v172
  %v391 = vpop.f32.mrf.mxu0
  %v392 = vadd.f32 %v168, %v391
  %393 = vdwg.mxu0
  %394 = vmatpush.msra.mxu0 0.0
  %395 = vmatpush.msra.mxu0 0.0
  %396 = vmatpush.msra.mxu0 0.0
  %397 = vmatpush.msra.mxu0 0.0
  %398 = vmatpush.msra.mxu0 0.0
  %399 = vmatpush.msra.mxu0 0.0
  %400 = vmatpush.msra.mxu0 0.0
  %401 = vmatpush.msra.mxu0 %v159
  %402 = vmatpush.msra.mxu0 %v143
  %403 = vmatpush.msra.mxu0 %v127
  %404 = vmatpush.msra.mxu0 %v111
  %405 = vmatpush.msra.mxu0 %v95
  %406 = vmatpush.msra.mxu0 %v79
  %407 = vmatpush.msra.mxu0 %v63
  %408 = vmatpush.msra.mxu0 %v47
  %409 = vmatpush.msra.mxu0 %v31
  %410 = vmatmul.f32.gmra.mxu0 %v172
  %v411 = vpop.f32.mrf.mxu0
  %v412 = vadd.f32 %v168, %v411
  %413 = vdwg.mxu0
  %414 = vmatpush.msra.mxu0 0.0
  %415 = vmatpush.msra.mxu0 0.0
  %416 = vmatpush.msra.mxu0 0.0
  %417 = vmatpush.msra.mxu0 0.0
  %418 = vmatpush.msra.mxu0 0.0
  %419 = vmatpush.msra.mxu0 0.0
  %420 = vmatpush.msra.mxu0 0.0
  %421 = vmatpush.msra.mxu0 %v160
  %422 = vmatpush.msra.mxu0 %v144
  %423 = vmatpush.msra.mxu0 %v128
  %424 = vmatpush.msra.mxu0 %v112
  %425 = vmatpush.msra.mxu0 %v96
  %426 = vmatpush.msra.mxu0 %v80
  %427 = vmatpush.msra.mxu0 %v64
  %428 = vmatpush.msra.mxu0 %v48
  %429 = vmatpush.msra.mxu0 %v32
  %430 = vmatmul.f32.gmra.mxu0 %v172
  %v431 = vpop.f32.mrf.mxu0
  %v432 = vadd.f32 %v168, %v431
  %433 = vdwg.mxu0
  %434 = vmatpush.msra.mxu0 0.0
  %435 = vmatpush.msra.mxu0 0.0
  %436 = vmatpush.msra.mxu0 0.0
  %437 = vmatpush.msra.mxu0 0.0
  %438 = vmatpush.msra.mxu0 0.0
  %439 = vmatpush.msra.mxu0 0.0
  %440 = vmatpush.msra.mxu0 0.0
  %441 = vmatpush.msra.mxu0 %v161
  %442 = vmatpush.msra.mxu0 %v145
  %443 = vmatpush.msra.mxu0 %v129
  %444 = vmatpush.msra.mxu0 %v113
  %445 = vmatpush.msra.mxu0 %v97
  %446 = vmatpush.msra.mxu0 %v81
  %447 = vmatpush.msra.mxu0 %v65
  %448 = vmatpush.msra.mxu0 %v49
  %449 = vmatpush.msra.mxu0 %v33
  %450 = vmatmul.f32.gmra.mxu0 %v172
  %v451 = vpop.f32.mrf.mxu0
  %v452 = vadd.f32 %v168, %v451
  %453 = vdwg.mxu0
  %454 = vmatpush.msra.mxu0 0.0
  %455 = vmatpush.msra.mxu0 0.0
  %456 = vmatpush.msra.mxu0 0.0
  %457 = vmatpush.msra.mxu0 0.0
  %458 = vmatpush.msra.mxu0 0.0
  %459 = vmatpush.msra.mxu0 0.0
  %460 = vmatpush.msra.mxu0 0.0
  %461 = vmatpush.msra.mxu0 %v162
  %462 = vmatpush.msra.mxu0 %v146
  %463 = vmatpush.msra.mxu0 %v130
  %464 = vmatpush.msra.mxu0 %v114
  %465 = vmatpush.msra.mxu0 %v98
  %466 = vmatpush.msra.mxu0 %v82
  %467 = vmatpush.msra.mxu0 %v66
  %468 = vmatpush.msra.mxu0 %v50
  %469 = vmatpush.msra.mxu0 %v34
  %470 = vmatmul.f32.gmra.mxu0 %v172
  %v471 = vpop.f32.mrf.mxu0
  %v472 = vadd.f32 %v168, %v471
  %473 = vdwg.mxu0
  %474 = vmatpush.msra.mxu0 0.0
  %475 = vmatpush.msra.mxu0 0.0
  %476 = vmatpush.msra.mxu0 0.0
  %477 = vmatpush.msra.mxu0 0.0
  %478 = vmatpush.msra.mxu0 0.0
  %479 = vmatpush.msra.mxu0 0.0
  %480 = vmatpush.msra.mxu0 0.0
  %481 = vmatpush.msra.mxu0 %v163
  %482 = vmatpush.msra.mxu0 %v147
  %483 = vmatpush.msra.mxu0 %v131
  %484 = vmatpush.msra.mxu0 %v115
  %485 = vmatpush.msra.mxu0 %v99
  %486 = vmatpush.msra.mxu0 %v83
  %487 = vmatpush.msra.mxu0 %v67
  %488 = vmatpush.msra.mxu0 %v51
  %489 = vmatpush.msra.mxu0 %v35
  %490 = vmatmul.f32.gmra.mxu0 %v172
  %v491 = vpop.f32.mrf.mxu0
  %v492 = vadd.f32 %v168, %v491
  %493 = vdwg.mxu0
  %vm494 = vcmp.gt.f32.partialorder %v192, 0.0
  %vm495 = vcmp.gt.f32.partialorder %v212, 0.0
  %vm496 = vcmp.gt.f32.partialorder %v232, 0.0
  %vm497 = vcmp.gt.f32.partialorder %v252, 0.0
  %vm498 = vcmp.gt.f32.partialorder %v272, 0.0
  %vm499 = vcmp.gt.f32.partialorder %v292, 0.0
  %vm500 = vcmp.gt.f32.partialorder %v312, 0.0
  %vm501 = vcmp.gt.f32.partialorder %v332, 0.0
  %vm502 = vcmp.gt.f32.partialorder %v352, 0.0
  %vm503 = vcmp.gt.f32.partialorder %v372, 0.0
  %vm504 = vcmp.gt.f32.partialorder %v392, 0.0
  %vm505 = vcmp.gt.f32.partialorder %v412, 0.0
  %vm506 = vcmp.gt.f32.partialorder %v432, 0.0
  %vm507 = vcmp.gt.f32.partialorder %v452, 0.0
  %vm508 = vcmp.gt.f32.partialorder %v472, 0.0
  %vm509 = vcmp.gt.f32.partialorder %v492, 0.0
  %v510 = vld [vmem:[#allocation2] sm:$0x1]
  %v512 = vperm.slane %v510, 0
  %513 = vset.pattern.permute.xlu0 0
  %514 = vperm.xlu0 %513, %v512
  %v515 = vpop.permute.xlu0 %514
  %v517 = vmul.f32 %v515, %v192
  %v518 = vmul.f32 %v515, %v212
  %v519 = vmul.f32 %v515, %v232
  %v520 = vmul.f32 %v515, %v252
  %v521 = vmul.f32 %v515, %v272
  %v522 = vmul.f32 %v515, %v292
  %v523 = vmul.f32 %v515, %v312
  %v524 = vmul.f32 %v515, %v332
  %v525 = vmul.f32 %v515, %v352
  %v526 = vmul.f32 %v515, %v372
  %v527 = vmul.f32 %v515, %v392
  %v528 = vmul.f32 %v515, %v412
  %v529 = vmul.f32 %v515, %v432
  %v530 = vmul.f32 %v515, %v452
  %v531 = vmul.f32 %v515, %v472
  %v532 = vmul.f32 %v515, %v492
  %v533 = vsel %vm494, %v192, %v517
  %v534 = vsel %vm495, %v212, %v518
  %v535 = vsel %vm496, %v232, %v519
  %v536 = vsel %vm497, %v252, %v520
  %v537 = vsel %vm498, %v272, %v521
  %v538 = vsel %vm499, %v292, %v522
  %v539 = vsel %vm500, %v312, %v523
  %v540 = vsel %vm501, %v332, %v524
  %v541 = vsel %vm502, %v352, %v525
  %v542 = vsel %vm503, %v372, %v526
  %v543 = vsel %vm504, %v392, %v527
  %v544 = vsel %vm505, %v412, %v528
  %v545 = vsel %vm506, %v432, %v529
  %v546 = vsel %vm507, %v452, %v530
  %v547 = vsel %vm508, %v472, %v531
  %v548 = vsel %vm509, %v492, %v532
  %549 = vst [vmem:[%s4] sm:$0xff] %v533
  %550 = vst [vmem:[%s4 + $0x8] sm:$0xff] %v534
  %551 = vst [vmem:[%s4 + $0x10] sm:$0xff] %v535
  %552 = vst [vmem:[%s4 + $0x18] sm:$0xff] %v536
  %553 = vst [vmem:[%s4 + $0x20] sm:$0xff] %v537
  %554 = vst [vmem:[%s4 + $0x28] sm:$0xff] %v538
  %555 = vst [vmem:[%s4 + $0x30] sm:$0xff] %v539
  %556 = vst [vmem:[%s4 + $0x38] sm:$0xff] %v540
  %557 = vst [vmem:[%s4 + $0x40] sm:$0xff] %v541
  %558 = vst [vmem:[%s4 + $0x48] sm:$0xff] %v542
  %559 = vst [vmem:[%s4 + $0x50] sm:$0xff] %v543
  %560 = vst [vmem:[%s4 + $0x58] sm:$0xff] %v544
  %561 = vst [vmem:[%s4 + $0x60] sm:$0xff] %v545
  %562 = vst [vmem:[%s4 + $0x68] sm:$0xff] %v546
  %563 = vst [vmem:[%s4 + $0x70] sm:$0xff] %v547
  %vm564 = vcmask 15360
  %565 = vst.msk [vmem:[%s4 + $0x78] sm:$0xff] %vm564, %v548
  // Predicated region
  $region18: #{simple_cnn_forward.8} parent=0 // pred_check
    _
  $region19: #{simple_cnn_forward.8} parent=0 // pred_check_branch
    %567 = sbr.rel (0) target = $region21
  $region20: #{simple_cnn_forward.8} parent=0 // pred_region
    _
  $region21: #{simple_cnn_forward.8} parent=0 // pred_fallthru
    _
  // Predicated region
  $region22: #{simple_cnn_forward.8} parent=0 // pred_check
    _
  $region23: #{simple_cnn_forward.8} parent=0 // pred_check_branch
    %569 = sbr.rel (0) target = $region25
  $region24: #{simple_cnn_forward.8} parent=0 // pred_region
    _
  $region25: #{simple_cnn_forward.8} parent=0 // pred_fallthru
    _

// kernel: simple_cnn_forward.9
$region0: #{simple_cnn_forward.9}
  #allocation0 [shape = 'u32[]', space=smem, size = 0x4, offset = 0x4, fixed_abs, tag = 'smem constant byte address 0x4 - core index']
  #allocation1 [shape = 'u32[72,128]{1,0:T(1,128)}', space=vmem, size = 0x9000, scoped, tag = 'internal scratch']
  %s0 = inlined_call_operand.vmem [shape: f32[16,256], index: 0, kind: input, shape index: {}]
  %s1 = inlined_call_operand.vmem [shape: f32[16,256], index: 1, kind: input, shape index: {}]
  %s2 = inlined_call_operand.vmem [shape: f32[16,256], index: 2, kind: input, shape index: {}]
  %s3 = inlined_call_operand.vmem [shape: f32[16,256], index: 3, kind: input, shape index: {}]
  %s4 = inlined_call_operand.vmem [shape: f32[16,256], index: 4, kind: output, shape index: {}]
  %s5 = sld [smem:[#allocation0]]
  $region26: #{simple_cnn_forward.9} parent=0
    _
  %s7 = ssub.s32 1, %s5
  %s8 = scalar_select 0, %s7, %s5
  // Predicated region
  $region2: #{simple_cnn_forward.9} parent=0 // pred_check
    _
  $region3: #{simple_cnn_forward.9} parent=0 // pred_check_branch
    %10 = sbr.rel (0) target = $region5
  $region4: #{simple_cnn_forward.9} parent=0 // pred_region
    _
  $region5: #{simple_cnn_forward.9} parent=0 // pred_fallthru
    _
  // Predicated region
  $region6: #{simple_cnn_forward.9} parent=0 // pred_check
    _
  $region7: #{simple_cnn_forward.9} parent=0 // pred_check_branch
    %12 = sbr.rel (0) target = $region9
  $region8: #{simple_cnn_forward.9} parent=0 // pred_region
    _
  $region9: #{simple_cnn_forward.9} parent=0 // pred_fallthru
    _
  // Predicated region
  $region10: #{simple_cnn_forward.9} parent=0 // pred_check
    _
  $region11: #{simple_cnn_forward.9} parent=0 // pred_check_branch
    %14 = sbr.rel (0) target = $region13
  $region12: #{simple_cnn_forward.9} parent=0 // pred_region
    _
  $region13: #{simple_cnn_forward.9} parent=0 // pred_fallthru
    _
  // Predicated region
  $region14: #{simple_cnn_forward.9} parent=0 // pred_check
    _
  $region15: #{simple_cnn_forward.9} parent=0 // pred_check_branch
    %16 = sbr.rel (0) target = $region17
  $region16: #{simple_cnn_forward.9} parent=0 // pred_region
    _
  $region17: #{simple_cnn_forward.9} parent=0 // pred_fallthru
    _
  %v17 = vld [vmem:[%s0] sm:$0xff]
  %v18 = vld [vmem:[%s0 + $0x8] sm:$0xff]
  %v19 = vld [vmem:[%s0 + $0x10] sm:$0xff]
  %v20 = vld [vmem:[%s0 + $0x18] sm:$0xff]
  %v21 = vld [vmem:[%s1] sm:$0xff]
  %v22 = vld [vmem:[%s1 + $0x8] sm:$0xff]
  %v23 = vld [vmem:[%s1 + $0x10] sm:$0xff]
  %v24 = vld [vmem:[%s1 + $0x18] sm:$0xff]
  %v25 = vmax.f32 %v17, %v21
  %v26 = vmax.f32 %v18, %v22
  %v27 = vmax.f32 %v19, %v23
  %v28 = vmax.f32 %v20, %v24
  %v29 = vld [vmem:[%s2] sm:$0xff]
  %v30 = vld [vmem:[%s2 + $0x8] sm:$0xff]
  %v31 = vld [vmem:[%s2 + $0x10] sm:$0xff]
  %v32 = vld [vmem:[%s2 + $0x18] sm:$0xff]
  %v33 = vld [vmem:[%s3] sm:$0xff]
  %v34 = vld [vmem:[%s3 + $0x8] sm:$0xff]
  %v35 = vld [vmem:[%s3 + $0x10] sm:$0xff]
  %v36 = vld [vmem:[%s3 + $0x18] sm:$0xff]
  %v37 = vmax.f32 %v29, %v33
  %v38 = vmax.f32 %v30, %v34
  %v39 = vmax.f32 %v31, %v35
  %v40 = vmax.f32 %v32, %v36
  %v41 = vmax.f32 %v25, %v37
  %v42 = vmax.f32 %v26, %v38
  %v43 = vmax.f32 %v27, %v39
  %v44 = vmax.f32 %v28, %v40
  %45 = vst [vmem:[%s4] sm:$0xff] %v41
  %46 = vst [vmem:[%s4 + $0x8] sm:$0xff] %v42
  %47 = vst [vmem:[%s4 + $0x10] sm:$0xff] %v43
  %48 = vst [vmem:[%s4 + $0x18] sm:$0xff] %v44
  // Predicated region
  $region18: #{simple_cnn_forward.9} parent=0 // pred_check
    _
  $region19: #{simple_cnn_forward.9} parent=0 // pred_check_branch
    %50 = sbr.rel (0) target = $region21
  $region20: #{simple_cnn_forward.9} parent=0 // pred_region
    _
  $region21: #{simple_cnn_forward.9} parent=0 // pred_fallthru
    _
  // Predicated region
  $region22: #{simple_cnn_forward.9} parent=0 // pred_check
    _
  $region23: #{simple_cnn_forward.9} parent=0 // pred_check_branch
    %52 = sbr.rel (0) target = $region25
  $region24: #{simple_cnn_forward.9} parent=0 // pred_region
    _
  $region25: #{simple_cnn_forward.9} parent=0 // pred_fallthru
    _

// kernel: simple_cnn_forward.10
$region0: #{simple_cnn_forward.10}
  #allocation0 [shape = 'u32[]', space=smem, size = 0x4, offset = 0x4, fixed_abs, tag = 'smem constant byte address 0x4 - core index']
  #allocation1 [shape = 'u32[72,128]{1,0:T(1,128)}', space=vmem, size = 0x9000, scoped, tag = 'internal scratch']
  #allocation2 [shape = 'f32[1,1]{1,0:T(1,128)S(1)}', space=vmem, size = 0x200, scoped, tag = 'scoped memory for simple_cnn_forward.10']
  %s0 = inlined_call_operand.vmem [shape: f32[8,72], index: 0, kind: input, shape index: {}]
  %s1 = inlined_call_operand.vmem [shape: f32[72,512], index: 1, kind: input, shape index: {}]
  %s2 = inlined_call_operand.vmem [shape: f32[8,1], index: 2, kind: input, shape index: {}]
  %s3 = inlined_call_operand.<no memory space> [shape: f32[1,1], index: 3, kind: input, shape index: {}]
  %s4 = inlined_call_operand.vmem [shape: f32[8,512], index: 4, kind: output, shape index: {}]
  %s5 = sld [smem:[#allocation0]]
  $region26: #{simple_cnn_forward.10} parent=0
    _
  %s7 = ssub.s32 1, %s5
  %s8 = scalar_select 0, %s7, %s5
  %v9 = vstv %s3
  %10 = vst [vmem:[#allocation2] sm:$0x1] %v9
  // Predicated region
  $region2: #{simple_cnn_forward.10} parent=0 // pred_check
    _
  $region3: #{simple_cnn_forward.10} parent=0 // pred_check_branch
    %12 = sbr.rel (0) target = $region5
  $region4: #{simple_cnn_forward.10} parent=0 // pred_region
    _
  $region5: #{simple_cnn_forward.10} parent=0 // pred_fallthru
    _
  // Predicated region
  $region6: #{simple_cnn_forward.10} parent=0 // pred_check
    _
  $region7: #{simple_cnn_forward.10} parent=0 // pred_check_branch
    %14 = sbr.rel (0) target = $region9
  $region8: #{simple_cnn_forward.10} parent=0 // pred_region
    _
  $region9: #{simple_cnn_forward.10} parent=0 // pred_fallthru
    _
  // Predicated region
  $region10: #{simple_cnn_forward.10} parent=0 // pred_check
    _
  $region11: #{simple_cnn_forward.10} parent=0 // pred_check_branch
    %16 = sbr.rel (0) target = $region13
  $region12: #{simple_cnn_forward.10} parent=0 // pred_region
    _
  $region13: #{simple_cnn_forward.10} parent=0 // pred_fallthru
    _
  // Predicated region
  $region14: #{simple_cnn_forward.10} parent=0 // pred_check
    _
  $region15: #{simple_cnn_forward.10} parent=0 // pred_check_branch
    %18 = sbr.rel (0) target = $region17
  $region16: #{simple_cnn_forward.10} parent=0 // pred_region
    _
  $region17: #{simple_cnn_forward.10} parent=0 // pred_fallthru
    _
  %v19 = vld [vmem:[%s0] sm:$0xff]
  %v20 = vld [vmem:[%s1] sm:$0xff]
  %v21 = vld [vmem:[%s1 + $0x8] sm:$0xff]
  %v22 = vld [vmem:[%s1 + $0x10] sm:$0xff]
  %v23 = vld [vmem:[%s1 + $0x18] sm:$0xff]
  %v24 = vld [vmem:[%s1 + $0x20] sm:$0xff]
  %v25 = vld [vmem:[%s1 + $0x28] sm:$0xff]
  %v26 = vld [vmem:[%s1 + $0x30] sm:$0xff]
  %v27 = vld [vmem:[%s1 + $0x38] sm:$0xff]
  %v28 = vld [vmem:[%s1 + $0x40] sm:$0xff]
  %v29 = vld [vmem:[%s1 + $0x48] sm:$0xff]
  %v30 = vld [vmem:[%s1 + $0x50] sm:$0xff]
  %v31 = vld [vmem:[%s1 + $0x58] sm:$0xff]
  %v32 = vld [vmem:[%s1 + $0x60] sm:$0xff]
  %v33 = vld [vmem:[%s1 + $0x68] sm:$0xff]
  %v34 = vld [vmem:[%s1 + $0x70] sm:$0xff]
  %v35 = vld [vmem:[%s1 + $0x78] sm:$0xff]
  %v36 = vld [vmem:[%s1 + $0x80] sm:$0xff]
  %v37 = vld [vmem:[%s1 + $0x88] sm:$0xff]
  %v38 = vld [vmem:[%s1 + $0x90] sm:$0xff]
  %v39 = vld [vmem:[%s1 + $0x98] sm:$0xff]
  %v40 = vld [vmem:[%s1 + $0xa0] sm:$0xff]
  %v41 = vld [vmem:[%s1 + $0xa8] sm:$0xff]
  %v42 = vld [vmem:[%s1 + $0xb0] sm:$0xff]
  %v43 = vld [vmem:[%s1 + $0xb8] sm:$0xff]
  %v44 = vld [vmem:[%s1 + $0xc0] sm:$0xff]
  %v45 = vld [vmem:[%s1 + $0xc8] sm:$0xff]
  %v46 = vld [vmem:[%s1 + $0xd0] sm:$0xff]
  %v47 = vld [vmem:[%s1 + $0xd8] sm:$0xff]
  %v48 = vld [vmem:[%s1 + $0xe0] sm:$0xff]
  %v49 = vld [vmem:[%s1 + $0xe8] sm:$0xff]
  %v50 = vld [vmem:[%s1 + $0xf0] sm:$0xff]
  %v51 = vld [vmem:[%s1 + $0xf8] sm:$0xff]
  %v52 = vld [vmem:[%s1 + $0x100] sm:$0xff]
  %v53 = vld [vmem:[%s1 + $0x108] sm:$0xff]
  %v54 = vld [vmem:[%s1 + $0x110] sm:$0xff]
  %v55 = vld [vmem:[%s1 + $0x118] sm:$0xff]
  %v56 = vld [vmem:[%s2] sm:$0xff]
  %58 = vset.pattern.permute.xlu0 0
  %59 = vperm.xlu0 %58, %v56
  %v60 = vpop.permute.xlu0 %59
  %vm62 = vcmask 588800
  %v64 = vsel %vm62, %v19, 0
  %66 = vmatpush.msra.mxu0 0.0
  %67 = vmatpush.msra.mxu0 0.0
  %68 = vmatpush.msra.mxu0 0.0
  %69 = vmatpush.msra.mxu0 0.0
  %70 = vmatpush.msra.mxu0 0.0
  %71 = vmatpush.msra.mxu0 0.0
  %72 = vmatpush.msra.mxu0 0.0
  %73 = vmatpush.msra.mxu0 %v52
  %74 = vmatpush.msra.mxu0 %v48
  %75 = vmatpush.msra.mxu0 %v44
  %76 = vmatpush.msra.mxu0 %v40
  %77 = vmatpush.msra.mxu0 %v36
  %78 = vmatpush.msra.mxu0 %v32
  %79 = vmatpush.msra.mxu0 %v28
  %80 = vmatpush.msra.mxu0 %v24
  %81 = vmatpush.msra.mxu0 %v20
  %82 = vmatmul.f32.gmra.mxu0 %v64
  %v83 = vpop.f32.mrf.mxu0
  %v84 = vadd.f32 %v60, %v83
  %85 = vdwg.mxu0
  %86 = vmatpush.msra.mxu0 0.0
  %87 = vmatpush.msra.mxu0 0.0
  %88 = vmatpush.msra.mxu0 0.0
  %89 = vmatpush.msra.mxu0 0.0
  %90 = vmatpush.msra.mxu0 0.0
  %91 = vmatpush.msra.mxu0 0.0
  %92 = vmatpush.msra.mxu0 0.0
  %93 = vmatpush.msra.mxu0 %v53
  %94 = vmatpush.msra.mxu0 %v49
  %95 = vmatpush.msra.mxu0 %v45
  %96 = vmatpush.msra.mxu0 %v41
  %97 = vmatpush.msra.mxu0 %v37
  %98 = vmatpush.msra.mxu0 %v33
  %99 = vmatpush.msra.mxu0 %v29
  %100 = vmatpush.msra.mxu0 %v25
  %101 = vmatpush.msra.mxu0 %v21
  %102 = vmatmul.f32.gmra.mxu0 %v64
  %v103 = vpop.f32.mrf.mxu0
  %v104 = vadd.f32 %v60, %v103
  %105 = vdwg.mxu0
  %106 = vmatpush.msra.mxu0 0.0
  %107 = vmatpush.msra.mxu0 0.0
  %108 = vmatpush.msra.mxu0 0.0
  %109 = vmatpush.msra.mxu0 0.0
  %110 = vmatpush.msra.mxu0 0.0
  %111 = vmatpush.msra.mxu0 0.0
  %112 = vmatpush.msra.mxu0 0.0
  %113 = vmatpush.msra.mxu0 %v54
  %114 = vmatpush.msra.mxu0 %v50
  %115 = vmatpush.msra.mxu0 %v46
  %116 = vmatpush.msra.mxu0 %v42
  %117 = vmatpush.msra.mxu0 %v38
  %118 = vmatpush.msra.mxu0 %v34
  %119 = vmatpush.msra.mxu0 %v30
  %120 = vmatpush.msra.mxu0 %v26
  %121 = vmatpush.msra.mxu0 %v22
  %122 = vmatmul.f32.gmra.mxu0 %v64
  %v123 = vpop.f32.mrf.mxu0
  %v124 = vadd.f32 %v60, %v123
  %125 = vdwg.mxu0
  %126 = vmatpush.msra.mxu0 0.0
  %127 = vmatpush.msra.mxu0 0.0
  %128 = vmatpush.msra.mxu0 0.0
  %129 = vmatpush.msra.mxu0 0.0
  %130 = vmatpush.msra.mxu0 0.0
  %131 = vmatpush.msra.mxu0 0.0
  %132 = vmatpush.msra.mxu0 0.0
  %133 = vmatpush.msra.mxu0 %v55
  %134 = vmatpush.msra.mxu0 %v51
  %135 = vmatpush.msra.mxu0 %v47
  %136 = vmatpush.msra.mxu0 %v43
  %137 = vmatpush.msra.mxu0 %v39
  %138 = vmatpush.msra.mxu0 %v35
  %139 = vmatpush.msra.mxu0 %v31
  %140 = vmatpush.msra.mxu0 %v27
  %141 = vmatpush.msra.mxu0 %v23
  %142 = vmatmul.f32.gmra.mxu0 %v64
  %v143 = vpop.f32.mrf.mxu0
  %v144 = vadd.f32 %v60, %v143
  %145 = vdwg.mxu0
  %vm146 = vcmp.gt.f32.partialorder %v84, 0.0
  %vm147 = vcmp.gt.f32.partialorder %v104, 0.0
  %vm148 = vcmp.gt.f32.partialorder %v124, 0.0
  %vm149 = vcmp.gt.f32.partialorder %v144, 0.0
  %v150 = vld [vmem:[#allocation2] sm:$0x1]
  %v152 = vperm.slane %v150, 0
  %153 = vset.pattern.permute.xlu0 0
  %154 = vperm.xlu0 %153, %v152
  %v155 = vpop.permute.xlu0 %154
  %v157 = vmul.f32 %v155, %v84
  %v158 = vmul.f32 %v155, %v104
  %v159 = vmul.f32 %v155, %v124
  %v160 = vmul.f32 %v155, %v144
  %v161 = vsel %vm146, %v84, %v157
  %v162 = vsel %vm147, %v104, %v158
  %v163 = vsel %vm148, %v124, %v159
  %v164 = vsel %vm149, %v144, %v160
  %165 = vst [vmem:[%s4] sm:$0xff] %v161
  %166 = vst [vmem:[%s4 + $0x8] sm:$0xff] %v162
  %167 = vst [vmem:[%s4 + $0x10] sm:$0xff] %v163
  %168 = vst [vmem:[%s4 + $0x18] sm:$0xff] %v164
  // Predicated region
  $region18: #{simple_cnn_forward.10} parent=0 // pred_check
    _
  $region19: #{simple_cnn_forward.10} parent=0 // pred_check_branch
    %170 = sbr.rel (0) target = $region21
  $region20: #{simple_cnn_forward.10} parent=0 // pred_region
    _
  $region21: #{simple_cnn_forward.10} parent=0 // pred_fallthru
    _
  // Predicated region
  $region22: #{simple_cnn_forward.10} parent=0 // pred_check
    _
  $region23: #{simple_cnn_forward.10} parent=0 // pred_check_branch
    %172 = sbr.rel (0) target = $region25
  $region24: #{simple_cnn_forward.10} parent=0 // pred_region
    _
  $region25: #{simple_cnn_forward.10} parent=0 // pred_fallthru
    _

// kernel: simple_cnn_forward.11
$region0: #{simple_cnn_forward.11}
  #allocation0 [shape = 'u32[]', space=smem, size = 0x4, offset = 0x4, fixed_abs, tag = 'smem constant byte address 0x4 - core index']
  #allocation1 [shape = 'u32[72,128]{1,0:T(1,128)}', space=vmem, size = 0x9000, scoped, tag = 'internal scratch']
  %s0 = inlined_call_operand.vmem [shape: f32[2,2048], index: 0, kind: input, shape index: {}]
  %s1 = inlined_call_operand.vmem [shape: bf16[2048,1024], index: 1, kind: input, shape index: {}]
  %s2 = inlined_call_operand.vmem [shape: f32[1,1024], index: 2, kind: input, shape index: {}]
  %s3 = inlined_call_operand.vmem [shape: f32[1024,4], index: 3, kind: input, shape index: {}]
  %s4 = inlined_call_operand.vmem [shape: f32[1,4], index: 4, kind: input, shape index: {}]
  %s5 = inlined_call_operand.hbm [shape: f32[2,4], index: 5, kind: output, shape index: {}]
  %s6 = sld [smem:[#allocation0]]
  $region30: #{simple_cnn_forward.11} parent=0
    _
  %s8 = ssub.s32 1, %s6
  %s9 = scalar_select 0, %s8, %s6
  $region1: #{simple_cnn_forward.11} parent=0
    #allocation2 [shape = 'u8[1024]{0}', space=vmem, size = 0x400, scoped, tag = 'output window, operand 0, single buffered']
    #allocation3 [shape = 's32[1]{0}', space=sflag, size = 0x4, scoped, tag = 'scoped memory for simple_cnn_forward.11']
    %10 = vsyncpa [#allocation3], 0
    // Predicated region
    $region2: #{simple_cnn_forward.11} parent=1 // pred_check
      _
    $region3: #{simple_cnn_forward.11} parent=1 // pred_check_branch
      %12 = sbr.rel (0) target = $region5
    $region4: #{simple_cnn_forward.11} parent=1 // pred_region
      _
    $region5: #{simple_cnn_forward.11} parent=1 // pred_fallthru
      _
    // Predicated region
    $region6: #{simple_cnn_forward.11} parent=1 // pred_check
      _
    $region7: #{simple_cnn_forward.11} parent=1 // pred_check_branch
      %14 = sbr.rel (0) target = $region9
    $region8: #{simple_cnn_forward.11} parent=1 // pred_region
      _
    $region9: #{simple_cnn_forward.11} parent=1 // pred_fallthru
      _
    // Predicated region
    $region10: #{simple_cnn_forward.11} parent=1 // pred_check
      _
    $region11: #{simple_cnn_forward.11} parent=1 // pred_check_branch
      %16 = sbr.rel (0) target = $region13
    $region12: #{simple_cnn_forward.11} parent=1 // pred_region
      _
    $region13: #{simple_cnn_forward.11} parent=1 // pred_fallthru
      _
    // Predicated region
    $region14: #{simple_cnn_forward.11} parent=1 // pred_check
      _
    $region15: #{simple_cnn_forward.11} parent=1 // pred_check_branch
      %18 = sbr.rel (0) target = $region17
    $region16: #{simple_cnn_forward.11} parent=1 // pred_region
      _
    $region17: #{simple_cnn_forward.11} parent=1 // pred_fallthru
      _
    // Predicated region
    $region18: #{simple_cnn_forward.11} parent=1 // pred_check
      _
    $region19: #{simple_cnn_forward.11} parent=1 // pred_check_branch
      %20 = sbr.rel (0) target = $region21
    $region20: #{simple_cnn_forward.11} parent=1 // pred_region
      _
    $region21: #{simple_cnn_forward.11} parent=1 // pred_fallthru
      _
    %v21 = vld [vmem:[%s0] sm:$0xff]
    %v22 = vld [vmem:[%s0 + $0x8] sm:$0xff]
    %v23 = vld [vmem:[%s0 + $0x10] sm:$0xff]
    %v24 = vld [vmem:[%s0 + $0x18] sm:$0xff]
    %29 = vst [vmem:[#allocation1] ss:$4 sm:$0xff] %v21
    %s30 = scalar_lea.vmem [#allocation1], 32
    %31 = vst [vmem:[%s30] ss:$4 sm:$0xff] %v22
    %v32 = vld.sshfl [vmem:[#allocation1] sm:$0xff pattern:$0x73625140]
    %v33 = vld.sshfl [vmem:[#allocation1 + $0x8] sm:$0xff pattern:$0x73625140]
    %v34 = vld.sshfl [vmem:[#allocation1 + $0x10] sm:$0xff pattern:$0x73625140]
    %v35 = vld.sshfl [vmem:[#allocation1 + $0x18] sm:$0xff pattern:$0x73625140]
    %v36 = vld.sshfl [vmem:[#allocation1 + $0x20] sm:$0xff pattern:$0x73625140]
    %v37 = vld.sshfl [vmem:[#allocation1 + $0x28] sm:$0xff pattern:$0x73625140]
    %v38 = vld.sshfl [vmem:[#allocation1 + $0x30] sm:$0xff pattern:$0x73625140]
    %v39 = vld.sshfl [vmem:[#allocation1 + $0x38] sm:$0xff pattern:$0x73625140]
    %40 = vst [vmem:[#allocation1] ss:$4 sm:$0xff] %v23
    %41 = vst [vmem:[%s30] ss:$4 sm:$0xff] %v24
    %v42 = vld.sshfl [vmem:[#allocation1] sm:$0xff pattern:$0x73625140]
    %v43 = vld.sshfl [vmem:[#allocation1 + $0x8] sm:$0xff pattern:$0x73625140]
    %v44 = vld.sshfl [vmem:[#allocation1 + $0x10] sm:$0xff pattern:$0x73625140]
    %v45 = vld.sshfl [vmem:[#allocation1 + $0x18] sm:$0xff pattern:$0x73625140]
    %v46 = vld.sshfl [vmem:[#allocation1 + $0x20] sm:$0xff pattern:$0x73625140]
    %v47 = vld.sshfl [vmem:[#allocation1 + $0x28] sm:$0xff pattern:$0x73625140]
    %v48 = vld.sshfl [vmem:[#allocation1 + $0x30] sm:$0xff pattern:$0x73625140]
    %v49 = vld.sshfl [vmem:[#allocation1 + $0x38] sm:$0xff pattern:$0x73625140]
    %v66 = vpack.c.bf16 %v32, %v32
    %v67 = vpack.c.bf16 %v33, %v33
    %v68 = vpack.c.bf16 %v34, %v34
    %v69 = vpack.c.bf16 %v35, %v35
    %v70 = vpack.c.bf16 %v36, %v36
    %v71 = vpack.c.bf16 %v37, %v37
    %v72 = vpack.c.bf16 %v38, %v38
    %v73 = vpack.c.bf16 %v39, %v39
    %v74 = vpack.c.bf16 %v42, %v42
    %v75 = vpack.c.bf16 %v43, %v43
    %v76 = vpack.c.bf16 %v44, %v44
    %v77 = vpack.c.bf16 %v45, %v45
    %v78 = vpack.c.bf16 %v46, %v46
    %v79 = vpack.c.bf16 %v47, %v47
    %v80 = vpack.c.bf16 %v48, %v48
    %v81 = vpack.c.bf16 %v49, %v49
    %v82 = vld [vmem:[%s1] sm:$0xff]
    %v83 = vld [vmem:[%s1 + $0x8] sm:$0xff]
    %v84 = vld [vmem:[%s1 + $0x10] sm:$0xff]
    %v85 = vld [vmem:[%s1 + $0x18] sm:$0xff]
    %v86 = vld [vmem:[%s1 + $0x20] sm:$0xff]
    %v87 = vld [vmem:[%s1 + $0x28] sm:$0xff]
    %v88 = vld [vmem:[%s1 + $0x30] sm:$0xff]
    %v89 = vld [vmem:[%s1 + $0x38] sm:$0xff]
    %v90 = vld [vmem:[%s1 + $0x40] sm:$0xff]
    %v91 = vld [vmem:[%s1 + $0x48] sm:$0xff]
    %v92 = vld [vmem:[%s1 + $0x50] sm:$0xff]
    %v93 = vld [vmem:[%s1 + $0x58] sm:$0xff]
    %v94 = vld [vmem:[%s1 + $0x60] sm:$0xff]
    %v95 = vld [vmem:[%s1 + $0x68] sm:$0xff]
    %v96 = vld [vmem:[%s1 + $0x70] sm:$0xff]
    %v97 = vld [vmem:[%s1 + $0x78] sm:$0xff]
    %v98 = vld [vmem:[%s1 + $0x80] sm:$0xff]
    %v99 = vld [vmem:[%s1 + $0x88] sm:$0xff]
    %v100 = vld [vmem:[%s1 + $0x90] sm:$0xff]
    %v101 = vld [vmem:[%s1 + $0x98] sm:$0xff]
    %v102 = vld [vmem:[%s1 + $0xa0] sm:$0xff]
    %v103 = vld [vmem:[%s1 + $0xa8] sm:$0xff]
    %v104 = vld [vmem:[%s1 + $0xb0] sm:$0xff]
    %v105 = vld [vmem:[%s1 + $0xb8] sm:$0xff]
    %v106 = vld [vmem:[%s1 + $0xc0] sm:$0xff]
    %v107 = vld [vmem:[%s1 + $0xc8] sm:$0xff]
    %v108 = vld [vmem:[%s1 + $0xd0] sm:$0xff]
    %v109 = vld [vmem:[%s1 + $0xd8] sm:$0xff]
    %v110 = vld [vmem:[%s1 + $0xe0] sm:$0xff]
    %v111 = vld [vmem:[%s1 + $0xe8] sm:$0xff]
    %v112 = vld [vmem:[%s1 + $0xf0] sm:$0xff]
    %v113 = vld [vmem:[%s1 + $0xf8] sm:$0xff]
    %v114 = vld [vmem:[%s1 + $0x100] sm:$0xff]
    %v115 = vld [vmem:[%s1 + $0x108] sm:$0xff]
    %v116 = vld [vmem:[%s1 + $0x110] sm:$0xff]
    %v117 = vld [vmem:[%s1 + $0x118] sm:$0xff]
    %v118 = vld [vmem:[%s1 + $0x120] sm:$0xff]
    %v119 = vld [vmem:[%s1 + $0x128] sm:$0xff]
    %v120 = vld [vmem:[%s1 + $0x130] sm:$0xff]
    %v121 = vld [vmem:[%s1 + $0x138] sm:$0xff]
    %v122 = vld [vmem:[%s1 + $0x140] sm:$0xff]
    %v123 = vld [vmem:[%s1 + $0x148] sm:$0xff]
    %v124 = vld [vmem:[%s1 + $0x150] sm:$0xff]
    %v125 = vld [vmem:[%s1 + $0x158] sm:$0xff]
    %v126 = vld [vmem:[%s1 + $0x160] sm:$0xff]
    %v127 = vld [vmem:[%s1 + $0x168] sm:$0xff]
    %v128 = vld [vmem:[%s1 + $0x170] sm:$0xff]
    %v129 = vld [vmem:[%s1 + $0x178] sm:$0xff]
    %v130 = vld [vmem:[%s1 + $0x180] sm:$0xff]
    %v131 = vld [vmem:[%s1 + $0x188] sm:$0xff]
    %v132 = vld [vmem:[%s1 + $0x190] sm:$0xff]
    %v133 = vld [vmem:[%s1 + $0x198] sm:$0xff]
    %v134 = vld [vmem:[%s1 + $0x1a0] sm:$0xff]
    %v135 = vld [vmem:[%s1 + $0x1a8] sm:$0xff]
    %v136 = vld [vmem:[%s1 + $0x1b0] sm:$0xff]
    %v137 = vld [vmem:[%s1 + $0x1b8] sm:$0xff]
    %v138 = vld [vmem:[%s1 + $0x1c0] sm:$0xff]
    %v139 = vld [vmem:[%s1 + $0x1c8] sm:$0xff]
    %v140 = vld [vmem:[%s1 + $0x1d0] sm:$0xff]
    %v141 = vld [vmem:[%s1 + $0x1d8] sm:$0xff]
    %v142 = vld [vmem:[%s1 + $0x1e0] sm:$0xff]
    %v143 = vld [vmem:[%s1 + $0x1e8] sm:$0xff]
    %v144 = vld [vmem:[%s1 + $0x1f0] sm:$0xff]
    %v145 = vld [vmem:[%s1 + $0x1f8] sm:$0xff]
    %v146 = vld [vmem:[%s1 + $0x200] sm:$0xff]
    %v147 = vld [vmem:[%s1 + $0x208] sm:$0xff]
    %v148 = vld [vmem:[%s1 + $0x210] sm:$0xff]
    %v149 = vld [vmem:[%s1 + $0x218] sm:$0xff]
    %v150 = vld [vmem:[%s1 + $0x220] sm:$0xff]
    %v151 = vld [vmem:[%s1 + $0x228] sm:$0xff]
    %v152 = vld [vmem:[%s1 + $0x230] sm:$0xff]
    %v153 = vld [vmem:[%s1 + $0x238] sm:$0xff]
    %v154 = vld [vmem:[%s1 + $0x240] sm:$0xff]
    %v155 = vld [vmem:[%s1 + $0x248] sm:$0xff]
    %v156 = vld [vmem:[%s1 + $0x250] sm:$0xff]
    %v157 = vld [vmem:[%s1 + $0x258] sm:$0xff]
    %v158 = vld [vmem:[%s1 + $0x260] sm:$0xff]
    %v159 = vld [vmem:[%s1 + $0x268] sm:$0xff]
    %v160 = vld [vmem:[%s1 + $0x270] sm:$0xff]
    %v161 = vld [vmem:[%s1 + $0x278] sm:$0xff]
    %v162 = vld [vmem:[%s1 + $0x280] sm:$0xff]
    %v163 = vld [vmem:[%s1 + $0x288] sm:$0xff]
    %v164 = vld [vmem:[%s1 + $0x290] sm:$0xff]
    %v165 = vld [vmem:[%s1 + $0x298] sm:$0xff]
    %v166 = vld [vmem:[%s1 + $0x2a0] sm:$0xff]
    %v167 = vld [vmem:[%s1 + $0x2a8] sm:$0xff]
    %v168 = vld [vmem:[%s1 + $0x2b0] sm:$0xff]
    %v169 = vld [vmem:[%s1 + $0x2b8] sm:$0xff]
    %v170 = vld [vmem:[%s1 + $0x2c0] sm:$0xff]
    %v171 = vld [vmem:[%s1 + $0x2c8] sm:$0xff]
    %v172 = vld [vmem:[%s1 + $0x2d0] sm:$0xff]
    %v173 = vld [vmem:[%s1 + $0x2d8] sm:$0xff]
    %v174 = vld [vmem:[%s1 + $0x2e0] sm:$0xff]
    %v175 = vld [vmem:[%s1 + $0x2e8] sm:$0xff]
    %v176 = vld [vmem:[%s1 + $0x2f0] sm:$0xff]
    %v177 = vld [vmem:[%s1 + $0x2f8] sm:$0xff]
    %v178 = vld [vmem:[%s1 + $0x300] sm:$0xff]
    %v179 = vld [vmem:[%s1 + $0x308] sm:$0xff]
    %v180 = vld [vmem:[%s1 + $0x310] sm:$0xff]
    %v181 = vld [vmem:[%s1 + $0x318] sm:$0xff]
    %v182 = vld [vmem:[%s1 + $0x320] sm:$0xff]
    %v183 = vld [vmem:[%s1 + $0x328] sm:$0xff]
    %v184 = vld [vmem:[%s1 + $0x330] sm:$0xff]
    %v185 = vld [vmem:[%s1 + $0x338] sm:$0xff]
    %v186 = vld [vmem:[%s1 + $0x340] sm:$0xff]
    %v187 = vld [vmem:[%s1 + $0x348] sm:$0xff]
    %v188 = vld [vmem:[%s1 + $0x350] sm:$0xff]
    %v189 = vld [vmem:[%s1 + $0x358] sm:$0xff]
    %v190 = vld [vmem:[%s1 + $0x360] sm:$0xff]
    %v191 = vld [vmem:[%s1 + $0x368] sm:$0xff]
    %v192 = vld [vmem:[%s1 + $0x370] sm:$0xff]
    %v193 = vld [vmem:[%s1 + $0x378] sm:$0xff]
    %v194 = vld [vmem:[%s1 + $0x380] sm:$0xff]
    %v195 = vld [vmem:[%s1 + $0x388] sm:$0xff]
    %v196 = vld [vmem:[%s1 + $0x390] sm:$0xff]
    %v197 = vld [vmem:[%s1 + $0x398] sm:$0xff]
    %v198 = vld [vmem:[%s1 + $0x3a0] sm:$0xff]
    %v199 = vld [vmem:[%s1 + $0x3a8] sm:$0xff]
    %v200 = vld [vmem:[%s1 + $0x3b0] sm:$0xff]
    %v201 = vld [vmem:[%s1 + $0x3b8] sm:$0xff]
    %v202 = vld [vmem:[%s1 + $0x3c0] sm:$0xff]
    %v203 = vld [vmem:[%s1 + $0x3c8] sm:$0xff]
    %v204 = vld [vmem:[%s1 + $0x3d0] sm:$0xff]
    %v205 = vld [vmem:[%s1 + $0x3d8] sm:$0xff]
    %v206 = vld [vmem:[%s1 + $0x3e0] sm:$0xff]
    %v207 = vld [vmem:[%s1 + $0x3e8] sm:$0xff]
    %v208 = vld [vmem:[%s1 + $0x3f0] sm:$0xff]
    %v209 = vld [vmem:[%s1 + $0x3f8] sm:$0xff]
    %v210 = vld [vmem:[%s1 + $0x400] sm:$0xff]
    %v211 = vld [vmem:[%s1 + $0x408] sm:$0xff]
    %v212 = vld [vmem:[%s1 + $0x410] sm:$0xff]
    %v213 = vld [vmem:[%s1 + $0x418] sm:$0xff]
    %v214 = vld [vmem:[%s1 + $0x420] sm:$0xff]
    %v215 = vld [vmem:[%s1 + $0x428] sm:$0xff]
    %v216 = vld [vmem:[%s1 + $0x430] sm:$0xff]
    %v217 = vld [vmem:[%s1 + $0x438] sm:$0xff]
    %v218 = vld [vmem:[%s1 + $0x440] sm:$0xff]
    %v219 = vld [vmem:[%s1 + $0x448] sm:$0xff]
    %v220 = vld [vmem:[%s1 + $0x450] sm:$0xff]
    %v221 = vld [vmem:[%s1 + $0x458] sm:$0xff]
    %v222 = vld [vmem:[%s1 + $0x460] sm:$0xff]
    %v223 = vld [vmem:[%s1 + $0x468] sm:$0xff]
    %v224 = vld [vmem:[%s1 + $0x470] sm:$0xff]
    %v225 = vld [vmem:[%s1 + $0x478] sm:$0xff]
    %v226 = vld [vmem:[%s1 + $0x480] sm:$0xff]
    %v227 = vld [vmem:[%s1 + $0x488] sm:$0xff]
    %v228 = vld [vmem:[%s1 + $0x490] sm:$0xff]
    %v229 = vld [vmem:[%s1 + $0x498] sm:$0xff]
    %v230 = vld [vmem:[%s1 + $0x4a0] sm:$0xff]
    %v231 = vld [vmem:[%s1 + $0x4a8] sm:$0xff]
    %v232 = vld [vmem:[%s1 + $0x4b0] sm:$0xff]
    %v233 = vld [vmem:[%s1 + $0x4b8] sm:$0xff]
    %v234 = vld [vmem:[%s1 + $0x4c0] sm:$0xff]
    %v235 = vld [vmem:[%s1 + $0x4c8] sm:$0xff]
    %v236 = vld [vmem:[%s1 + $0x4d0] sm:$0xff]
    %v237 = vld [vmem:[%s1 + $0x4d8] sm:$0xff]
    %v238 = vld [vmem:[%s1 + $0x4e0] sm:$0xff]
    %v239 = vld [vmem:[%s1 + $0x4e8] sm:$0xff]
    %v240 = vld [vmem:[%s1 + $0x4f0] sm:$0xff]
    %v241 = vld [vmem:[%s1 + $0x4f8] sm:$0xff]
    %v242 = vld [vmem:[%s1 + $0x500] sm:$0xff]
    %v243 = vld [vmem:[%s1 + $0x508] sm:$0xff]
    %v244 = vld [vmem:[%s1 + $0x510] sm:$0xff]
    %v245 = vld [vmem:[%s1 + $0x518] sm:$0xff]
    %v246 = vld [vmem:[%s1 + $0x520] sm:$0xff]
    %v247 = vld [vmem:[%s1 + $0x528] sm:$0xff]
    %v248 = vld [vmem:[%s1 + $0x530] sm:$0xff]
    %v249 = vld [vmem:[%s1 + $0x538] sm:$0xff]
    %v250 = vld [vmem:[%s1 + $0x540] sm:$0xff]
    %v251 = vld [vmem:[%s1 + $0x548] sm:$0xff]
    %v252 = vld [vmem:[%s1 + $0x550] sm:$0xff]
    %v253 = vld [vmem:[%s1 + $0x558] sm:$0xff]
    %v254 = vld [vmem:[%s1 + $0x560] sm:$0xff]
    %v255 = vld [vmem:[%s1 + $0x568] sm:$0xff]
    %v256 = vld [vmem:[%s1 + $0x570] sm:$0xff]
    %v257 = vld [vmem:[%s1 + $0x578] sm:$0xff]
    %v258 = vld [vmem:[%s1 + $0x580] sm:$0xff]
    %v259 = vld [vmem:[%s1 + $0x588] sm:$0xff]
    %v260 = vld [vmem:[%s1 + $0x590] sm:$0xff]
    %v261 = vld [vmem:[%s1 + $0x598] sm:$0xff]
    %v262 = vld [vmem:[%s1 + $0x5a0] sm:$0xff]
    %v263 = vld [vmem:[%s1 + $0x5a8] sm:$0xff]
    %v264 = vld [vmem:[%s1 + $0x5b0] sm:$0xff]
    %v265 = vld [vmem:[%s1 + $0x5b8] sm:$0xff]
    %v266 = vld [vmem:[%s1 + $0x5c0] sm:$0xff]
    %v267 = vld [vmem:[%s1 + $0x5c8] sm:$0xff]
    %v268 = vld [vmem:[%s1 + $0x5d0] sm:$0xff]
    %v269 = vld [vmem:[%s1 + $0x5d8] sm:$0xff]
    %v270 = vld [vmem:[%s1 + $0x5e0] sm:$0xff]
    %v271 = vld [vmem:[%s1 + $0x5e8] sm:$0xff]
    %v272 = vld [vmem:[%s1 + $0x5f0] sm:$0xff]
    %v273 = vld [vmem:[%s1 + $0x5f8] sm:$0xff]
    %v274 = vld [vmem:[%s1 + $0x600] sm:$0xff]
    %v275 = vld [vmem:[%s1 + $0x608] sm:$0xff]
    %v276 = vld [vmem:[%s1 + $0x610] sm:$0xff]
    %v277 = vld [vmem:[%s1 + $0x618] sm:$0xff]
    %v278 = vld [vmem:[%s1 + $0x620] sm:$0xff]
    %v279 = vld [vmem:[%s1 + $0x628] sm:$0xff]
    %v280 = vld [vmem:[%s1 + $0x630] sm:$0xff]
    %v281 = vld [vmem:[%s1 + $0x638] sm:$0xff]
    %v282 = vld [vmem:[%s1 + $0x640] sm:$0xff]
    %v283 = vld [vmem:[%s1 + $0x648] sm:$0xff]
    %v284 = vld [vmem:[%s1 + $0x650] sm:$0xff]
    %v285 = vld [vmem:[%s1 + $0x658] sm:$0xff]
    %v286 = vld [vmem:[%s1 + $0x660] sm:$0xff]
    %v287 = vld [vmem:[%s1 + $0x668] sm:$0xff]
    %v288 = vld [vmem:[%s1 + $0x670] sm:$0xff]
    %v289 = vld [vmem:[%s1 + $0x678] sm:$0xff]
    %v290 = vld [vmem:[%s1 + $0x680] sm:$0xff]
    %v291 = vld [vmem:[%s1 + $0x688] sm:$0xff]
    %v292 = vld [vmem:[%s1 + $0x690] sm:$0xff]
    %v293 = vld [vmem:[%s1 + $0x698] sm:$0xff]
    %v294 = vld [vmem:[%s1 + $0x6a0] sm:$0xff]
    %v295 = vld [vmem:[%s1 + $0x6a8] sm:$0xff]
    %v296 = vld [vmem:[%s1 + $0x6b0] sm:$0xff]
    %v297 = vld [vmem:[%s1 + $0x6b8] sm:$0xff]
    %v298 = vld [vmem:[%s1 + $0x6c0] sm:$0xff]
    %v299 = vld [vmem:[%s1 + $0x6c8] sm:$0xff]
    %v300 = vld [vmem:[%s1 + $0x6d0] sm:$0xff]
    %v301 = vld [vmem:[%s1 + $0x6d8] sm:$0xff]
    %v302 = vld [vmem:[%s1 + $0x6e0] sm:$0xff]
    %v303 = vld [vmem:[%s1 + $0x6e8] sm:$0xff]
    %v304 = vld [vmem:[%s1 + $0x6f0] sm:$0xff]
    %v305 = vld [vmem:[%s1 + $0x6f8] sm:$0xff]
    %v306 = vld [vmem:[%s1 + $0x700] sm:$0xff]
    %v307 = vld [vmem:[%s1 + $0x708] sm:$0xff]
    %v308 = vld [vmem:[%s1 + $0x710] sm:$0xff]
    %v309 = vld [vmem:[%s1 + $0x718] sm:$0xff]
    %v310 = vld [vmem:[%s1 + $0x720] sm:$0xff]
    %v311 = vld [vmem:[%s1 + $0x728] sm:$0xff]
    %v312 = vld [vmem:[%s1 + $0x730] sm:$0xff]
    %v313 = vld [vmem:[%s1 + $0x738] sm:$0xff]
    %v314 = vld [vmem:[%s1 + $0x740] sm:$0xff]
    %v315 = vld [vmem:[%s1 + $0x748] sm:$0xff]
    %v316 = vld [vmem:[%s1 + $0x750] sm:$0xff]
    %v317 = vld [vmem:[%s1 + $0x758] sm:$0xff]
    %v318 = vld [vmem:[%s1 + $0x760] sm:$0xff]
    %v319 = vld [vmem:[%s1 + $0x768] sm:$0xff]
    %v320 = vld [vmem:[%s1 + $0x770] sm:$0xff]
    %v321 = vld [vmem:[%s1 + $0x778] sm:$0xff]
    %v322 = vld [vmem:[%s1 + $0x780] sm:$0xff]
    %v323 = vld [vmem:[%s1 + $0x788] sm:$0xff]
    %v324 = vld [vmem:[%s1 + $0x790] sm:$0xff]
    %v325 = vld [vmem:[%s1 + $0x798] sm:$0xff]
    %v326 = vld [vmem:[%s1 + $0x7a0] sm:$0xff]
    %v327 = vld [vmem:[%s1 + $0x7a8] sm:$0xff]
    %v328 = vld [vmem:[%s1 + $0x7b0] sm:$0xff]
    %v329 = vld [vmem:[%s1 + $0x7b8] sm:$0xff]
    %v330 = vld [vmem:[%s1 + $0x7c0] sm:$0xff]
    %v331 = vld [vmem:[%s1 + $0x7c8] sm:$0xff]
    %v332 = vld [vmem:[%s1 + $0x7d0] sm:$0xff]
    %v333 = vld [vmem:[%s1 + $0x7d8] sm:$0xff]
    %v334 = vld [vmem:[%s1 + $0x7e0] sm:$0xff]
    %v335 = vld [vmem:[%s1 + $0x7e8] sm:$0xff]
    %v336 = vld [vmem:[%s1 + $0x7f0] sm:$0xff]
    %v337 = vld [vmem:[%s1 + $0x7f8] sm:$0xff]
    %v338 = vld [vmem:[%s1 + $0x800] sm:$0xff]
    %v339 = vld [vmem:[%s1 + $0x808] sm:$0xff]
    %v340 = vld [vmem:[%s1 + $0x810] sm:$0xff]
    %v341 = vld [vmem:[%s1 + $0x818] sm:$0xff]
    %v342 = vld [vmem:[%s1 + $0x820] sm:$0xff]
    %v343 = vld [vmem:[%s1 + $0x828] sm:$0xff]
    %v344 = vld [vmem:[%s1 + $0x830] sm:$0xff]
    %v345 = vld [vmem:[%s1 + $0x838] sm:$0xff]
    %v346 = vld [vmem:[%s1 + $0x840] sm:$0xff]
    %v347 = vld [vmem:[%s1 + $0x848] sm:$0xff]
    %v348 = vld [vmem:[%s1 + $0x850] sm:$0xff]
    %v349 = vld [vmem:[%s1 + $0x858] sm:$0xff]
    %v350 = vld [vmem:[%s1 + $0x860] sm:$0xff]
    %v351 = vld [vmem:[%s1 + $0x868] sm:$0xff]
    %v352 = vld [vmem:[%s1 + $0x870] sm:$0xff]
    %v353 = vld [vmem:[%s1 + $0x878] sm:$0xff]
    %v354 = vld [vmem:[%s1 + $0x880] sm:$0xff]
    %v355 = vld [vmem:[%s1 + $0x888] sm:$0xff]
    %v356 = vld [vmem:[%s1 + $0x890] sm:$0xff]
    %v357 = vld [vmem:[%s1 + $0x898] sm:$0xff]
    %v358 = vld [vmem:[%s1 + $0x8a0] sm:$0xff]
    %v359 = vld [vmem:[%s1 + $0x8a8] sm:$0xff]
    %v360 = vld [vmem:[%s1 + $0x8b0] sm:$0xff]
    %v361 = vld [vmem:[%s1 + $0x8b8] sm:$0xff]
    %v362 = vld [vmem:[%s1 + $0x8c0] sm:$0xff]
    %v363 = vld [vmem:[%s1 + $0x8c8] sm:$0xff]
    %v364 = vld [vmem:[%s1 + $0x8d0] sm:$0xff]
    %v365 = vld [vmem:[%s1 + $0x8d8] sm:$0xff]
    %v366 = vld [vmem:[%s1 + $0x8e0] sm:$0xff]
    %v367 = vld [vmem:[%s1 + $0x8e8] sm:$0xff]
    %v368 = vld [vmem:[%s1 + $0x8f0] sm:$0xff]
    %v369 = vld [vmem:[%s1 + $0x8f8] sm:$0xff]
    %v370 = vld [vmem:[%s1 + $0x900] sm:$0xff]
    %v371 = vld [vmem:[%s1 + $0x908] sm:$0xff]
    %v372 = vld [vmem:[%s1 + $0x910] sm:$0xff]
    %v373 = vld [vmem:[%s1 + $0x918] sm:$0xff]
    %v374 = vld [vmem:[%s1 + $0x920] sm:$0xff]
    %v375 = vld [vmem:[%s1 + $0x928] sm:$0xff]
    %v376 = vld [vmem:[%s1 + $0x930] sm:$0xff]
    %v377 = vld [vmem:[%s1 + $0x938] sm:$0xff]
    %v378 = vld [vmem:[%s1 + $0x940] sm:$0xff]
    %v379 = vld [vmem:[%s1 + $0x948] sm:$0xff]
    %v380 = vld [vmem:[%s1 + $0x950] sm:$0xff]
    %v381 = vld [vmem:[%s1 + $0x958] sm:$0xff]
    %v382 = vld [vmem:[%s1 + $0x960] sm:$0xff]
    %v383 = vld [vmem:[%s1 + $0x968] sm:$0xff]
    %v384 = vld [vmem:[%s1 + $0x970] sm:$0xff]
    %v385 = vld [vmem:[%s1 + $0x978] sm:$0xff]
    %v386 = vld [vmem:[%s1 + $0x980] sm:$0xff]
    %v387 = vld [vmem:[%s1 + $0x988] sm:$0xff]
    %v388 = vld [vmem:[%s1 + $0x990] sm:$0xff]
    %v389 = vld [vmem:[%s1 + $0x998] sm:$0xff]
    %v390 = vld [vmem:[%s1 + $0x9a0] sm:$0xff]
    %v391 = vld [vmem:[%s1 + $0x9a8] sm:$0xff]
    %v392 = vld [vmem:[%s1 + $0x9b0] sm:$0xff]
    %v393 = vld [vmem:[%s1 + $0x9b8] sm:$0xff]
    %v394 = vld [vmem:[%s1 + $0x9c0] sm:$0xff]
    %v395 = vld [vmem:[%s1 + $0x9c8] sm:$0xff]
    %v396 = vld [vmem:[%s1 + $0x9d0] sm:$0xff]
    %v397 = vld [vmem:[%s1 + $0x9d8] sm:$0xff]
    %v398 = vld [vmem:[%s1 + $0x9e0] sm:$0xff]
    %v399 = vld [vmem:[%s1 + $0x9e8] sm:$0xff]
    %v400 = vld [vmem:[%s1 + $0x9f0] sm:$0xff]
    %v401 = vld [vmem:[%s1 + $0x9f8] sm:$0xff]
    %v402 = vld [vmem:[%s1 + $0xa00] sm:$0xff]
    %v403 = vld [vmem:[%s1 + $0xa08] sm:$0xff]
    %v404 = vld [vmem:[%s1 + $0xa10] sm:$0xff]
    %v405 = vld [vmem:[%s1 + $0xa18] sm:$0xff]
    %v406 = vld [vmem:[%s1 + $0xa20] sm:$0xff]
    %v407 = vld [vmem:[%s1 + $0xa28] sm:$0xff]
    %v408 = vld [vmem:[%s1 + $0xa30] sm:$0xff]
    %v409 = vld [vmem:[%s1 + $0xa38] sm:$0xff]
    %v410 = vld [vmem:[%s1 + $0xa40] sm:$0xff]
    %v411 = vld [vmem:[%s1 + $0xa48] sm:$0xff]
    %v412 = vld [vmem:[%s1 + $0xa50] sm:$0xff]
    %v413 = vld [vmem:[%s1 + $0xa58] sm:$0xff]
    %v414 = vld [vmem:[%s1 + $0xa60] sm:$0xff]
    %v415 = vld [vmem:[%s1 + $0xa68] sm:$0xff]
    %v416 = vld [vmem:[%s1 + $0xa70] sm:$0xff]
    %v417 = vld [vmem:[%s1 + $0xa78] sm:$0xff]
    %v418 = vld [vmem:[%s1 + $0xa80] sm:$0xff]
    %v419 = vld [vmem:[%s1 + $0xa88] sm:$0xff]
    %v420 = vld [vmem:[%s1 + $0xa90] sm:$0xff]
    %v421 = vld [vmem:[%s1 + $0xa98] sm:$0xff]
    %v422 = vld [vmem:[%s1 + $0xaa0] sm:$0xff]
    %v423 = vld [vmem:[%s1 + $0xaa8] sm:$0xff]
    %v424 = vld [vmem:[%s1 + $0xab0] sm:$0xff]
    %v425 = vld [vmem:[%s1 + $0xab8] sm:$0xff]
    %v426 = vld [vmem:[%s1 + $0xac0] sm:$0xff]
    %v427 = vld [vmem:[%s1 + $0xac8] sm:$0xff]
    %v428 = vld [vmem:[%s1 + $0xad0] sm:$0xff]
    %v429 = vld [vmem:[%s1 + $0xad8] sm:$0xff]
    %v430 = vld [vmem:[%s1 + $0xae0] sm:$0xff]
    %v431 = vld [vmem:[%s1 + $0xae8] sm:$0xff]
    %v432 = vld [vmem:[%s1 + $0xaf0] sm:$0xff]
    %v433 = vld [vmem:[%s1 + $0xaf8] sm:$0xff]
    %v434 = vld [vmem:[%s1 + $0xb00] sm:$0xff]
    %v435 = vld [vmem:[%s1 + $0xb08] sm:$0xff]
    %v436 = vld [vmem:[%s1 + $0xb10] sm:$0xff]
    %v437 = vld [vmem:[%s1 + $0xb18] sm:$0xff]
    %v438 = vld [vmem:[%s1 + $0xb20] sm:$0xff]
    %v439 = vld [vmem:[%s1 + $0xb28] sm:$0xff]
    %v440 = vld [vmem:[%s1 + $0xb30] sm:$0xff]
    %v441 = vld [vmem:[%s1 + $0xb38] sm:$0xff]
    %v442 = vld [vmem:[%s1 + $0xb40] sm:$0xff]
    %v443 = vld [vmem:[%s1 + $0xb48] sm:$0xff]
    %v444 = vld [vmem:[%s1 + $0xb50] sm:$0xff]
    %v445 = vld [vmem:[%s1 + $0xb58] sm:$0xff]
    %v446 = vld [vmem:[%s1 + $0xb60] sm:$0xff]
    %v447 = vld [vmem:[%s1 + $0xb68] sm:$0xff]
    %v448 = vld [vmem:[%s1 + $0xb70] sm:$0xff]
    %v449 = vld [vmem:[%s1 + $0xb78] sm:$0xff]
    %v450 = vld [vmem:[%s1 + $0xb80] sm:$0xff]
    %v451 = vld [vmem:[%s1 + $0xb88] sm:$0xff]
    %v452 = vld [vmem:[%s1 + $0xb90] sm:$0xff]
    %v453 = vld [vmem:[%s1 + $0xb98] sm:$0xff]
    %v454 = vld [vmem:[%s1 + $0xba0] sm:$0xff]
    %v455 = vld [vmem:[%s1 + $0xba8] sm:$0xff]
    %v456 = vld [vmem:[%s1 + $0xbb0] sm:$0xff]
    %v457 = vld [vmem:[%s1 + $0xbb8] sm:$0xff]
    %v458 = vld [vmem:[%s1 + $0xbc0] sm:$0xff]
    %v459 = vld [vmem:[%s1 + $0xbc8] sm:$0xff]
    %v460 = vld [vmem:[%s1 + $0xbd0] sm:$0xff]
    %v461 = vld [vmem:[%s1 + $0xbd8] sm:$0xff]
    %v462 = vld [vmem:[%s1 + $0xbe0] sm:$0xff]
    %v463 = vld [vmem:[%s1 + $0xbe8] sm:$0xff]
    %v464 = vld [vmem:[%s1 + $0xbf0] sm:$0xff]
    %v465 = vld [vmem:[%s1 + $0xbf8] sm:$0xff]
    %v466 = vld [vmem:[%s1 + $0xc00] sm:$0xff]
    %v467 = vld [vmem:[%s1 + $0xc08] sm:$0xff]
    %v468 = vld [vmem:[%s1 + $0xc10] sm:$0xff]
    %v469 = vld [vmem:[%s1 + $0xc18] sm:$0xff]
    %v470 = vld [vmem:[%s1 + $0xc20] sm:$0xff]
    %v471 = vld [vmem:[%s1 + $0xc28] sm:$0xff]
    %v472 = vld [vmem:[%s1 + $0xc30] sm:$0xff]
    %v473 = vld [vmem:[%s1 + $0xc38] sm:$0xff]
    %v474 = vld [vmem:[%s1 + $0xc40] sm:$0xff]
    %v475 = vld [vmem:[%s1 + $0xc48] sm:$0xff]
    %v476 = vld [vmem:[%s1 + $0xc50] sm:$0xff]
    %v477 = vld [vmem:[%s1 + $0xc58] sm:$0xff]
    %v478 = vld [vmem:[%s1 + $0xc60] sm:$0xff]
    %v479 = vld [vmem:[%s1 + $0xc68] sm:$0xff]
    %v480 = vld [vmem:[%s1 + $0xc70] sm:$0xff]
    %v481 = vld [vmem:[%s1 + $0xc78] sm:$0xff]
    %v482 = vld [vmem:[%s1 + $0xc80] sm:$0xff]
    %v483 = vld [vmem:[%s1 + $0xc88] sm:$0xff]
    %v484 = vld [vmem:[%s1 + $0xc90] sm:$0xff]
    %v485 = vld [vmem:[%s1 + $0xc98] sm:$0xff]
    %v486 = vld [vmem:[%s1 + $0xca0] sm:$0xff]
    %v487 = vld [vmem:[%s1 + $0xca8] sm:$0xff]
    %v488 = vld [vmem:[%s1 + $0xcb0] sm:$0xff]
    %v489 = vld [vmem:[%s1 + $0xcb8] sm:$0xff]
    %v490 = vld [vmem:[%s1 + $0xcc0] sm:$0xff]
    %v491 = vld [vmem:[%s1 + $0xcc8] sm:$0xff]
    %v492 = vld [vmem:[%s1 + $0xcd0] sm:$0xff]
    %v493 = vld [vmem:[%s1 + $0xcd8] sm:$0xff]
    %v494 = vld [vmem:[%s1 + $0xce0] sm:$0xff]
    %v495 = vld [vmem:[%s1 + $0xce8] sm:$0xff]
    %v496 = vld [vmem:[%s1 + $0xcf0] sm:$0xff]
    %v497 = vld [vmem:[%s1 + $0xcf8] sm:$0xff]
    %v498 = vld [vmem:[%s1 + $0xd00] sm:$0xff]
    %v499 = vld [vmem:[%s1 + $0xd08] sm:$0xff]
    %v500 = vld [vmem:[%s1 + $0xd10] sm:$0xff]
    %v501 = vld [vmem:[%s1 + $0xd18] sm:$0xff]
    %v502 = vld [vmem:[%s1 + $0xd20] sm:$0xff]
    %v503 = vld [vmem:[%s1 + $0xd28] sm:$0xff]
    %v504 = vld [vmem:[%s1 + $0xd30] sm:$0xff]
    %v505 = vld [vmem:[%s1 + $0xd38] sm:$0xff]
    %v506 = vld [vmem:[%s1 + $0xd40] sm:$0xff]
    %v507 = vld [vmem:[%s1 + $0xd48] sm:$0xff]
    %v508 = vld [vmem:[%s1 + $0xd50] sm:$0xff]
    %v509 = vld [vmem:[%s1 + $0xd58] sm:$0xff]
    %v510 = vld [vmem:[%s1 + $0xd60] sm:$0xff]
    %v511 = vld [vmem:[%s1 + $0xd68] sm:$0xff]
    %v512 = vld [vmem:[%s1 + $0xd70] sm:$0xff]
    %v513 = vld [vmem:[%s1 + $0xd78] sm:$0xff]
    %v514 = vld [vmem:[%s1 + $0xd80] sm:$0xff]
    %v515 = vld [vmem:[%s1 + $0xd88] sm:$0xff]
    %v516 = vld [vmem:[%s1 + $0xd90] sm:$0xff]
    %v517 = vld [vmem:[%s1 + $0xd98] sm:$0xff]
    %v518 = vld [vmem:[%s1 + $0xda0] sm:$0xff]
    %v519 = vld [vmem:[%s1 + $0xda8] sm:$0xff]
    %v520 = vld [vmem:[%s1 + $0xdb0] sm:$0xff]
    %v521 = vld [vmem:[%s1 + $0xdb8] sm:$0xff]
    %v522 = vld [vmem:[%s1 + $0xdc0] sm:$0xff]
    %v523 = vld [vmem:[%s1 + $0xdc8] sm:$0xff]
    %v524 = vld [vmem:[%s1 + $0xdd0] sm:$0xff]
    %v525 = vld [vmem:[%s1 + $0xdd8] sm:$0xff]
    %v526 = vld [vmem:[%s1 + $0xde0] sm:$0xff]
    %v527 = vld [vmem:[%s1 + $0xde8] sm:$0xff]
    %v528 = vld [vmem:[%s1 + $0xdf0] sm:$0xff]
    %v529 = vld [vmem:[%s1 + $0xdf8] sm:$0xff]
    %v530 = vld [vmem:[%s1 + $0xe00] sm:$0xff]
    %v531 = vld [vmem:[%s1 + $0xe08] sm:$0xff]
    %v532 = vld [vmem:[%s1 + $0xe10] sm:$0xff]
    %v533 = vld [vmem:[%s1 + $0xe18] sm:$0xff]
    %v534 = vld [vmem:[%s1 + $0xe20] sm:$0xff]
    %v535 = vld [vmem:[%s1 + $0xe28] sm:$0xff]
    %v536 = vld [vmem:[%s1 + $0xe30] sm:$0xff]
    %v537 = vld [vmem:[%s1 + $0xe38] sm:$0xff]
    %v538 = vld [vmem:[%s1 + $0xe40] sm:$0xff]
    %v539 = vld [vmem:[%s1 + $0xe48] sm:$0xff]
    %v540 = vld [vmem:[%s1 + $0xe50] sm:$0xff]
    %v541 = vld [vmem:[%s1 + $0xe58] sm:$0xff]
    %v542 = vld [vmem:[%s1 + $0xe60] sm:$0xff]
    %v543 = vld [vmem:[%s1 + $0xe68] sm:$0xff]
    %v544 = vld [vmem:[%s1 + $0xe70] sm:$0xff]
    %v545 = vld [vmem:[%s1 + $0xe78] sm:$0xff]
    %v546 = vld [vmem:[%s1 + $0xe80] sm:$0xff]
    %v547 = vld [vmem:[%s1 + $0xe88] sm:$0xff]
    %v548 = vld [vmem:[%s1 + $0xe90] sm:$0xff]
    %v549 = vld [vmem:[%s1 + $0xe98] sm:$0xff]
    %v550 = vld [vmem:[%s1 + $0xea0] sm:$0xff]
    %v551 = vld [vmem:[%s1 + $0xea8] sm:$0xff]
    %v552 = vld [vmem:[%s1 + $0xeb0] sm:$0xff]
    %v553 = vld [vmem:[%s1 + $0xeb8] sm:$0xff]
    %v554 = vld [vmem:[%s1 + $0xec0] sm:$0xff]
    %v555 = vld [vmem:[%s1 + $0xec8] sm:$0xff]
    %v556 = vld [vmem:[%s1 + $0xed0] sm:$0xff]
    %v557 = vld [vmem:[%s1 + $0xed8] sm:$0xff]
    %v558 = vld [vmem:[%s1 + $0xee0] sm:$0xff]
    %v559 = vld [vmem:[%s1 + $0xee8] sm:$0xff]
    %v560 = vld [vmem:[%s1 + $0xef0] sm:$0xff]
    %v561 = vld [vmem:[%s1 + $0xef8] sm:$0xff]
    %v562 = vld [vmem:[%s1 + $0xf00] sm:$0xff]
    %v563 = vld [vmem:[%s1 + $0xf08] sm:$0xff]
    %v564 = vld [vmem:[%s1 + $0xf10] sm:$0xff]
    %v565 = vld [vmem:[%s1 + $0xf18] sm:$0xff]
    %v566 = vld [vmem:[%s1 + $0xf20] sm:$0xff]
    %v567 = vld [vmem:[%s1 + $0xf28] sm:$0xff]
    %v568 = vld [vmem:[%s1 + $0xf30] sm:$0xff]
    %v569 = vld [vmem:[%s1 + $0xf38] sm:$0xff]
    %v570 = vld [vmem:[%s1 + $0xf40] sm:$0xff]
    %v571 = vld [vmem:[%s1 + $0xf48] sm:$0xff]
    %v572 = vld [vmem:[%s1 + $0xf50] sm:$0xff]
    %v573 = vld [vmem:[%s1 + $0xf58] sm:$0xff]
    %v574 = vld [vmem:[%s1 + $0xf60] sm:$0xff]
    %v575 = vld [vmem:[%s1 + $0xf68] sm:$0xff]
    %v576 = vld [vmem:[%s1 + $0xf70] sm:$0xff]
    %v577 = vld [vmem:[%s1 + $0xf78] sm:$0xff]
    %v578 = vld [vmem:[%s1 + $0xf80] sm:$0xff]
    %v579 = vld [vmem:[%s1 + $0xf88] sm:$0xff]
    %v580 = vld [vmem:[%s1 + $0xf90] sm:$0xff]
    %v581 = vld [vmem:[%s1 + $0xf98] sm:$0xff]
    %v582 = vld [vmem:[%s1 + $0xfa0] sm:$0xff]
    %v583 = vld [vmem:[%s1 + $0xfa8] sm:$0xff]
    %v584 = vld [vmem:[%s1 + $0xfb0] sm:$0xff]
    %v585 = vld [vmem:[%s1 + $0xfb8] sm:$0xff]
    %v586 = vld [vmem:[%s1 + $0xfc0] sm:$0xff]
    %v587 = vld [vmem:[%s1 + $0xfc8] sm:$0xff]
    %v588 = vld [vmem:[%s1 + $0xfd0] sm:$0xff]
    %v589 = vld [vmem:[%s1 + $0xfd8] sm:$0xff]
    %v590 = vld [vmem:[%s1 + $0xfe0] sm:$0xff]
    %v591 = vld [vmem:[%s1 + $0xfe8] sm:$0xff]
    %v592 = vld [vmem:[%s1 + $0xff0] sm:$0xff]
    %v593 = vld [vmem:[%s1 + $0xff8] sm:$0xff]
    %v594 = vld [vmem:[%s1 + $0x1000] sm:$0xff]
    %v595 = vld [vmem:[%s1 + $0x1008] sm:$0xff]
    %v596 = vld [vmem:[%s1 + $0x1010] sm:$0xff]
    %v597 = vld [vmem:[%s1 + $0x1018] sm:$0xff]
    %v598 = vld [vmem:[%s1 + $0x1020] sm:$0xff]
    %v599 = vld [vmem:[%s1 + $0x1028] sm:$0xff]
    %v600 = vld [vmem:[%s1 + $0x1030] sm:$0xff]
    %v601 = vld [vmem:[%s1 + $0x1038] sm:$0xff]
    %v602 = vld [vmem:[%s1 + $0x1040] sm:$0xff]
    %v603 = vld [vmem:[%s1 + $0x1048] sm:$0xff]
    %v604 = vld [vmem:[%s1 + $0x1050] sm:$0xff]
    %v605 = vld [vmem:[%s1 + $0x1058] sm:$0xff]
    %v606 = vld [vmem:[%s1 + $0x1060] sm:$0xff]
    %v607 = vld [vmem:[%s1 + $0x1068] sm:$0xff]
    %v608 = vld [vmem:[%s1 + $0x1070] sm:$0xff]
    %v609 = vld [vmem:[%s1 + $0x1078] sm:$0xff]
    %v610 = vld [vmem:[%s1 + $0x1080] sm:$0xff]
    %v611 = vld [vmem:[%s1 + $0x1088] sm:$0xff]
    %v612 = vld [vmem:[%s1 + $0x1090] sm:$0xff]
    %v613 = vld [vmem:[%s1 + $0x1098] sm:$0xff]
    %v614 = vld [vmem:[%s1 + $0x10a0] sm:$0xff]
    %v615 = vld [vmem:[%s1 + $0x10a8] sm:$0xff]
    %v616 = vld [vmem:[%s1 + $0x10b0] sm:$0xff]
    %v617 = vld [vmem:[%s1 + $0x10b8] sm:$0xff]
    %v618 = vld [vmem:[%s1 + $0x10c0] sm:$0xff]
    %v619 = vld [vmem:[%s1 + $0x10c8] sm:$0xff]
    %v620 = vld [vmem:[%s1 + $0x10d0] sm:$0xff]
    %v621 = vld [vmem:[%s1 + $0x10d8] sm:$0xff]
    %v622 = vld [vmem:[%s1 + $0x10e0] sm:$0xff]
    %v623 = vld [vmem:[%s1 + $0x10e8] sm:$0xff]
    %v624 = vld [vmem:[%s1 + $0x10f0] sm:$0xff]
    %v625 = vld [vmem:[%s1 + $0x10f8] sm:$0xff]
    %v626 = vld [vmem:[%s1 + $0x1100] sm:$0xff]
    %v627 = vld [vmem:[%s1 + $0x1108] sm:$0xff]
    %v628 = vld [vmem:[%s1 + $0x1110] sm:$0xff]
    %v629 = vld [vmem:[%s1 + $0x1118] sm:$0xff]
    %v630 = vld [vmem:[%s1 + $0x1120] sm:$0xff]
    %v631 = vld [vmem:[%s1 + $0x1128] sm:$0xff]
    %v632 = vld [vmem:[%s1 + $0x1130] sm:$0xff]
    %v633 = vld [vmem:[%s1 + $0x1138] sm:$0xff]
    %v634 = vld [vmem:[%s1 + $0x1140] sm:$0xff]
    %v635 = vld [vmem:[%s1 + $0x1148] sm:$0xff]
    %v636 = vld [vmem:[%s1 + $0x1150] sm:$0xff]
    %v637 = vld [vmem:[%s1 + $0x1158] sm:$0xff]
    %v638 = vld [vmem:[%s1 + $0x1160] sm:$0xff]
    %v639 = vld [vmem:[%s1 + $0x1168] sm:$0xff]
    %v640 = vld [vmem:[%s1 + $0x1170] sm:$0xff]
    %v641 = vld [vmem:[%s1 + $0x1178] sm:$0xff]
    %v642 = vld [vmem:[%s1 + $0x1180] sm:$0xff]
    %v643 = vld [vmem:[%s1 + $0x1188] sm:$0xff]
    %v644 = vld [vmem:[%s1 + $0x1190] sm:$0xff]
    %v645 = vld [vmem:[%s1 + $0x1198] sm:$0xff]
    %v646 = vld [vmem:[%s1 + $0x11a0] sm:$0xff]
    %v647 = vld [vmem:[%s1 + $0x11a8] sm:$0xff]
    %v648 = vld [vmem:[%s1 + $0x11b0] sm:$0xff]
    %v649 = vld [vmem:[%s1 + $0x11b8] sm:$0xff]
    %v650 = vld [vmem:[%s1 + $0x11c0] sm:$0xff]
    %v651 = vld [vmem:[%s1 + $0x11c8] sm:$0xff]
    %v652 = vld [vmem:[%s1 + $0x11d0] sm:$0xff]
    %v653 = vld [vmem:[%s1 + $0x11d8] sm:$0xff]
    %v654 = vld [vmem:[%s1 + $0x11e0] sm:$0xff]
    %v655 = vld [vmem:[%s1 + $0x11e8] sm:$0xff]
    %v656 = vld [vmem:[%s1 + $0x11f0] sm:$0xff]
    %v657 = vld [vmem:[%s1 + $0x11f8] sm:$0xff]
    %v658 = vld [vmem:[%s1 + $0x1200] sm:$0xff]
    %v659 = vld [vmem:[%s1 + $0x1208] sm:$0xff]
    %v660 = vld [vmem:[%s1 + $0x1210] sm:$0xff]
    %v661 = vld [vmem:[%s1 + $0x1218] sm:$0xff]
    %v662 = vld [vmem:[%s1 + $0x1220] sm:$0xff]
    %v663 = vld [vmem:[%s1 + $0x1228] sm:$0xff]
    %v664 = vld [vmem:[%s1 + $0x1230] sm:$0xff]
    %v665 = vld [vmem:[%s1 + $0x1238] sm:$0xff]
    %v666 = vld [vmem:[%s1 + $0x1240] sm:$0xff]
    %v667 = vld [vmem:[%s1 + $0x1248] sm:$0xff]
    %v668 = vld [vmem:[%s1 + $0x1250] sm:$0xff]
    %v669 = vld [vmem:[%s1 + $0x1258] sm:$0xff]
    %v670 = vld [vmem:[%s1 + $0x1260] sm:$0xff]
    %v671 = vld [vmem:[%s1 + $0x1268] sm:$0xff]
    %v672 = vld [vmem:[%s1 + $0x1270] sm:$0xff]
    %v673 = vld [vmem:[%s1 + $0x1278] sm:$0xff]
    %v674 = vld [vmem:[%s1 + $0x1280] sm:$0xff]
    %v675 = vld [vmem:[%s1 + $0x1288] sm:$0xff]
    %v676 = vld [vmem:[%s1 + $0x1290] sm:$0xff]
    %v677 = vld [vmem:[%s1 + $0x1298] sm:$0xff]
    %v678 = vld [vmem:[%s1 + $0x12a0] sm:$0xff]
    %v679 = vld [vmem:[%s1 + $0x12a8] sm:$0xff]
    %v680 = vld [vmem:[%s1 + $0x12b0] sm:$0xff]
    %v681 = vld [vmem:[%s1 + $0x12b8] sm:$0xff]
    %v682 = vld [vmem:[%s1 + $0x12c0] sm:$0xff]
    %v683 = vld [vmem:[%s1 + $0x12c8] sm:$0xff]
    %v684 = vld [vmem:[%s1 + $0x12d0] sm:$0xff]
    %v685 = vld [vmem:[%s1 + $0x12d8] sm:$0xff]
    %v686 = vld [vmem:[%s1 + $0x12e0] sm:$0xff]
    %v687 = vld [vmem:[%s1 + $0x12e8] sm:$0xff]
    %v688 = vld [vmem:[%s1 + $0x12f0] sm:$0xff]
    %v689 = vld [vmem:[%s1 + $0x12f8] sm:$0xff]
    %v690 = vld [vmem:[%s1 + $0x1300] sm:$0xff]
    %v691 = vld [vmem:[%s1 + $0x1308] sm:$0xff]
    %v692 = vld [vmem:[%s1 + $0x1310] sm:$0xff]
    %v693 = vld [vmem:[%s1 + $0x1318] sm:$0xff]
    %v694 = vld [vmem:[%s1 + $0x1320] sm:$0xff]
    %v695 = vld [vmem:[%s1 + $0x1328] sm:$0xff]
    %v696 = vld [vmem:[%s1 + $0x1330] sm:$0xff]
    %v697 = vld [vmem:[%s1 + $0x1338] sm:$0xff]
    %v698 = vld [vmem:[%s1 + $0x1340] sm:$0xff]
    %v699 = vld [vmem:[%s1 + $0x1348] sm:$0xff]
    %v700 = vld [vmem:[%s1 + $0x1350] sm:$0xff]
    %v701 = vld [vmem:[%s1 + $0x1358] sm:$0xff]
    %v702 = vld [vmem:[%s1 + $0x1360] sm:$0xff]
    %v703 = vld [vmem:[%s1 + $0x1368] sm:$0xff]
    %v704 = vld [vmem:[%s1 + $0x1370] sm:$0xff]
    %v705 = vld [vmem:[%s1 + $0x1378] sm:$0xff]
    %v706 = vld [vmem:[%s1 + $0x1380] sm:$0xff]
    %v707 = vld [vmem:[%s1 + $0x1388] sm:$0xff]
    %v708 = vld [vmem:[%s1 + $0x1390] sm:$0xff]
    %v709 = vld [vmem:[%s1 + $0x1398] sm:$0xff]
    %v710 = vld [vmem:[%s1 + $0x13a0] sm:$0xff]
    %v711 = vld [vmem:[%s1 + $0x13a8] sm:$0xff]
    %v712 = vld [vmem:[%s1 + $0x13b0] sm:$0xff]
    %v713 = vld [vmem:[%s1 + $0x13b8] sm:$0xff]
    %v714 = vld [vmem:[%s1 + $0x13c0] sm:$0xff]
    %v715 = vld [vmem:[%s1 + $0x13c8] sm:$0xff]
    %v716 = vld [vmem:[%s1 + $0x13d0] sm:$0xff]
    %v717 = vld [vmem:[%s1 + $0x13d8] sm:$0xff]
    %v718 = vld [vmem:[%s1 + $0x13e0] sm:$0xff]
    %v719 = vld [vmem:[%s1 + $0x13e8] sm:$0xff]
    %v720 = vld [vmem:[%s1 + $0x13f0] sm:$0xff]
    %v721 = vld [vmem:[%s1 + $0x13f8] sm:$0xff]
    %v722 = vld [vmem:[%s1 + $0x1400] sm:$0xff]
    %v723 = vld [vmem:[%s1 + $0x1408] sm:$0xff]
    %v724 = vld [vmem:[%s1 + $0x1410] sm:$0xff]
    %v725 = vld [vmem:[%s1 + $0x1418] sm:$0xff]
    %v726 = vld [vmem:[%s1 + $0x1420] sm:$0xff]
    %v727 = vld [vmem:[%s1 + $0x1428] sm:$0xff]
    %v728 = vld [vmem:[%s1 + $0x1430] sm:$0xff]
    %v729 = vld [vmem:[%s1 + $0x1438] sm:$0xff]
    %v730 = vld [vmem:[%s1 + $0x1440] sm:$0xff]
    %v731 = vld [vmem:[%s1 + $0x1448] sm:$0xff]
    %v732 = vld [vmem:[%s1 + $0x1450] sm:$0xff]
    %v733 = vld [vmem:[%s1 + $0x1458] sm:$0xff]
    %v734 = vld [vmem:[%s1 + $0x1460] sm:$0xff]
    %v735 = vld [vmem:[%s1 + $0x1468] sm:$0xff]
    %v736 = vld [vmem:[%s1 + $0x1470] sm:$0xff]
    %v737 = vld [vmem:[%s1 + $0x1478] sm:$0xff]
    %v738 = vld [vmem:[%s1 + $0x1480] sm:$0xff]
    %v739 = vld [vmem:[%s1 + $0x1488] sm:$0xff]
    %v740 = vld [vmem:[%s1 + $0x1490] sm:$0xff]
    %v741 = vld [vmem:[%s1 + $0x1498] sm:$0xff]
    %v742 = vld [vmem:[%s1 + $0x14a0] sm:$0xff]
    %v743 = vld [vmem:[%s1 + $0x14a8] sm:$0xff]
    %v744 = vld [vmem:[%s1 + $0x14b0] sm:$0xff]
    %v745 = vld [vmem:[%s1 + $0x14b8] sm:$0xff]
    %v746 = vld [vmem:[%s1 + $0x14c0] sm:$0xff]
    %v747 = vld [vmem:[%s1 + $0x14c8] sm:$0xff]
    %v748 = vld [vmem:[%s1 + $0x14d0] sm:$0xff]
    %v749 = vld [vmem:[%s1 + $0x14d8] sm:$0xff]
    %v750 = vld [vmem:[%s1 + $0x14e0] sm:$0xff]
    %v751 = vld [vmem:[%s1 + $0x14e8] sm:$0xff]
    %v752 = vld [vmem:[%s1 + $0x14f0] sm:$0xff]
    %v753 = vld [vmem:[%s1 + $0x14f8] sm:$0xff]
    %v754 = vld [vmem:[%s1 + $0x1500] sm:$0xff]
    %v755 = vld [vmem:[%s1 + $0x1508] sm:$0xff]
    %v756 = vld [vmem:[%s1 + $0x1510] sm:$0xff]
    %v757 = vld [vmem:[%s1 + $0x1518] sm:$0xff]
    %v758 = vld [vmem:[%s1 + $0x1520] sm:$0xff]
    %v759 = vld [vmem:[%s1 + $0x1528] sm:$0xff]
    %v760 = vld [vmem:[%s1 + $0x1530] sm:$0xff]
    %v761 = vld [vmem:[%s1 + $0x1538] sm:$0xff]
    %v762 = vld [vmem:[%s1 + $0x1540] sm:$0xff]
    %v763 = vld [vmem:[%s1 + $0x1548] sm:$0xff]
    %v764 = vld [vmem:[%s1 + $0x1550] sm:$0xff]
    %v765 = vld [vmem:[%s1 + $0x1558] sm:$0xff]
    %v766 = vld [vmem:[%s1 + $0x1560] sm:$0xff]
    %v767 = vld [vmem:[%s1 + $0x1568] sm:$0xff]
    %v768 = vld [vmem:[%s1 + $0x1570] sm:$0xff]
    %v769 = vld [vmem:[%s1 + $0x1578] sm:$0xff]
    %v770 = vld [vmem:[%s1 + $0x1580] sm:$0xff]
    %v771 = vld [vmem:[%s1 + $0x1588] sm:$0xff]
    %v772 = vld [vmem:[%s1 + $0x1590] sm:$0xff]
    %v773 = vld [vmem:[%s1 + $0x1598] sm:$0xff]
    %v774 = vld [vmem:[%s1 + $0x15a0] sm:$0xff]
    %v775 = vld [vmem:[%s1 + $0x15a8] sm:$0xff]
    %v776 = vld [vmem:[%s1 + $0x15b0] sm:$0xff]
    %v777 = vld [vmem:[%s1 + $0x15b8] sm:$0xff]
    %v778 = vld [vmem:[%s1 + $0x15c0] sm:$0xff]
    %v779 = vld [vmem:[%s1 + $0x15c8] sm:$0xff]
    %v780 = vld [vmem:[%s1 + $0x15d0] sm:$0xff]
    %v781 = vld [vmem:[%s1 + $0x15d8] sm:$0xff]
    %v782 = vld [vmem:[%s1 + $0x15e0] sm:$0xff]
    %v783 = vld [vmem:[%s1 + $0x15e8] sm:$0xff]
    %v784 = vld [vmem:[%s1 + $0x15f0] sm:$0xff]
    %v785 = vld [vmem:[%s1 + $0x15f8] sm:$0xff]
    %v786 = vld [vmem:[%s1 + $0x1600] sm:$0xff]
    %v787 = vld [vmem:[%s1 + $0x1608] sm:$0xff]
    %v788 = vld [vmem:[%s1 + $0x1610] sm:$0xff]
    %v789 = vld [vmem:[%s1 + $0x1618] sm:$0xff]
    %v790 = vld [vmem:[%s1 + $0x1620] sm:$0xff]
    %v791 = vld [vmem:[%s1 + $0x1628] sm:$0xff]
    %v792 = vld [vmem:[%s1 + $0x1630] sm:$0xff]
    %v793 = vld [vmem:[%s1 + $0x1638] sm:$0xff]
    %v794 = vld [vmem:[%s1 + $0x1640] sm:$0xff]
    %v795 = vld [vmem:[%s1 + $0x1648] sm:$0xff]
    %v796 = vld [vmem:[%s1 + $0x1650] sm:$0xff]
    %v797 = vld [vmem:[%s1 + $0x1658] sm:$0xff]
    %v798 = vld [vmem:[%s1 + $0x1660] sm:$0xff]
    %v799 = vld [vmem:[%s1 + $0x1668] sm:$0xff]
    %v800 = vld [vmem:[%s1 + $0x1670] sm:$0xff]
    %v801 = vld [vmem:[%s1 + $0x1678] sm:$0xff]
    %v802 = vld [vmem:[%s1 + $0x1680] sm:$0xff]
    %v803 = vld [vmem:[%s1 + $0x1688] sm:$0xff]
    %v804 = vld [vmem:[%s1 + $0x1690] sm:$0xff]
    %v805 = vld [vmem:[%s1 + $0x1698] sm:$0xff]
    %v806 = vld [vmem:[%s1 + $0x16a0] sm:$0xff]
    %v807 = vld [vmem:[%s1 + $0x16a8] sm:$0xff]
    %v808 = vld [vmem:[%s1 + $0x16b0] sm:$0xff]
    %v809 = vld [vmem:[%s1 + $0x16b8] sm:$0xff]
    %v810 = vld [vmem:[%s1 + $0x16c0] sm:$0xff]
    %v811 = vld [vmem:[%s1 + $0x16c8] sm:$0xff]
    %v812 = vld [vmem:[%s1 + $0x16d0] sm:$0xff]
    %v813 = vld [vmem:[%s1 + $0x16d8] sm:$0xff]
    %v814 = vld [vmem:[%s1 + $0x16e0] sm:$0xff]
    %v815 = vld [vmem:[%s1 + $0x16e8] sm:$0xff]
    %v816 = vld [vmem:[%s1 + $0x16f0] sm:$0xff]
    %v817 = vld [vmem:[%s1 + $0x16f8] sm:$0xff]
    %v818 = vld [vmem:[%s1 + $0x1700] sm:$0xff]
    %v819 = vld [vmem:[%s1 + $0x1708] sm:$0xff]
    %v820 = vld [vmem:[%s1 + $0x1710] sm:$0xff]
    %v821 = vld [vmem:[%s1 + $0x1718] sm:$0xff]
    %v822 = vld [vmem:[%s1 + $0x1720] sm:$0xff]
    %v823 = vld [vmem:[%s1 + $0x1728] sm:$0xff]
    %v824 = vld [vmem:[%s1 + $0x1730] sm:$0xff]
    %v825 = vld [vmem:[%s1 + $0x1738] sm:$0xff]
    %v826 = vld [vmem:[%s1 + $0x1740] sm:$0xff]
    %v827 = vld [vmem:[%s1 + $0x1748] sm:$0xff]
    %v828 = vld [vmem:[%s1 + $0x1750] sm:$0xff]
    %v829 = vld [vmem:[%s1 + $0x1758] sm:$0xff]
    %v830 = vld [vmem:[%s1 + $0x1760] sm:$0xff]
    %v831 = vld [vmem:[%s1 + $0x1768] sm:$0xff]
    %v832 = vld [vmem:[%s1 + $0x1770] sm:$0xff]
    %v833 = vld [vmem:[%s1 + $0x1778] sm:$0xff]
    %v834 = vld [vmem:[%s1 + $0x1780] sm:$0xff]
    %v835 = vld [vmem:[%s1 + $0x1788] sm:$0xff]
    %v836 = vld [vmem:[%s1 + $0x1790] sm:$0xff]
    %v837 = vld [vmem:[%s1 + $0x1798] sm:$0xff]
    %v838 = vld [vmem:[%s1 + $0x17a0] sm:$0xff]
    %v839 = vld [vmem:[%s1 + $0x17a8] sm:$0xff]
    %v840 = vld [vmem:[%s1 + $0x17b0] sm:$0xff]
    %v841 = vld [vmem:[%s1 + $0x17b8] sm:$0xff]
    %v842 = vld [vmem:[%s1 + $0x17c0] sm:$0xff]
    %v843 = vld [vmem:[%s1 + $0x17c8] sm:$0xff]
    %v844 = vld [vmem:[%s1 + $0x17d0] sm:$0xff]
    %v845 = vld [vmem:[%s1 + $0x17d8] sm:$0xff]
    %v846 = vld [vmem:[%s1 + $0x17e0] sm:$0xff]
    %v847 = vld [vmem:[%s1 + $0x17e8] sm:$0xff]
    %v848 = vld [vmem:[%s1 + $0x17f0] sm:$0xff]
    %v849 = vld [vmem:[%s1 + $0x17f8] sm:$0xff]
    %v850 = vld [vmem:[%s1 + $0x1800] sm:$0xff]
    %v851 = vld [vmem:[%s1 + $0x1808] sm:$0xff]
    %v852 = vld [vmem:[%s1 + $0x1810] sm:$0xff]
    %v853 = vld [vmem:[%s1 + $0x1818] sm:$0xff]
    %v854 = vld [vmem:[%s1 + $0x1820] sm:$0xff]
    %v855 = vld [vmem:[%s1 + $0x1828] sm:$0xff]
    %v856 = vld [vmem:[%s1 + $0x1830] sm:$0xff]
    %v857 = vld [vmem:[%s1 + $0x1838] sm:$0xff]
    %v858 = vld [vmem:[%s1 + $0x1840] sm:$0xff]
    %v859 = vld [vmem:[%s1 + $0x1848] sm:$0xff]
    %v860 = vld [vmem:[%s1 + $0x1850] sm:$0xff]
    %v861 = vld [vmem:[%s1 + $0x1858] sm:$0xff]
    %v862 = vld [vmem:[%s1 + $0x1860] sm:$0xff]
    %v863 = vld [vmem:[%s1 + $0x1868] sm:$0xff]
    %v864 = vld [vmem:[%s1 + $0x1870] sm:$0xff]
    %v865 = vld [vmem:[%s1 + $0x1878] sm:$0xff]
    %v866 = vld [vmem:[%s1 + $0x1880] sm:$0xff]
    %v867 = vld [vmem:[%s1 + $0x1888] sm:$0xff]
    %v868 = vld [vmem:[%s1 + $0x1890] sm:$0xff]
    %v869 = vld [vmem:[%s1 + $0x1898] sm:$0xff]
    %v870 = vld [vmem:[%s1 + $0x18a0] sm:$0xff]
    %v871 = vld [vmem:[%s1 + $0x18a8] sm:$0xff]
    %v872 = vld [vmem:[%s1 + $0x18b0] sm:$0xff]
    %v873 = vld [vmem:[%s1 + $0x18b8] sm:$0xff]
    %v874 = vld [vmem:[%s1 + $0x18c0] sm:$0xff]
    %v875 = vld [vmem:[%s1 + $0x18c8] sm:$0xff]
    %v876 = vld [vmem:[%s1 + $0x18d0] sm:$0xff]
    %v877 = vld [vmem:[%s1 + $0x18d8] sm:$0xff]
    %v878 = vld [vmem:[%s1 + $0x18e0] sm:$0xff]
    %v879 = vld [vmem:[%s1 + $0x18e8] sm:$0xff]
    %v880 = vld [vmem:[%s1 + $0x18f0] sm:$0xff]
    %v881 = vld [vmem:[%s1 + $0x18f8] sm:$0xff]
    %v882 = vld [vmem:[%s1 + $0x1900] sm:$0xff]
    %v883 = vld [vmem:[%s1 + $0x1908] sm:$0xff]
    %v884 = vld [vmem:[%s1 + $0x1910] sm:$0xff]
    %v885 = vld [vmem:[%s1 + $0x1918] sm:$0xff]
    %v886 = vld [vmem:[%s1 + $0x1920] sm:$0xff]
    %v887 = vld [vmem:[%s1 + $0x1928] sm:$0xff]
    %v888 = vld [vmem:[%s1 + $0x1930] sm:$0xff]
    %v889 = vld [vmem:[%s1 + $0x1938] sm:$0xff]
    %v890 = vld [vmem:[%s1 + $0x1940] sm:$0xff]
    %v891 = vld [vmem:[%s1 + $0x1948] sm:$0xff]
    %v892 = vld [vmem:[%s1 + $0x1950] sm:$0xff]
    %v893 = vld [vmem:[%s1 + $0x1958] sm:$0xff]
    %v894 = vld [vmem:[%s1 + $0x1960] sm:$0xff]
    %v895 = vld [vmem:[%s1 + $0x1968] sm:$0xff]
    %v896 = vld [vmem:[%s1 + $0x1970] sm:$0xff]
    %v897 = vld [vmem:[%s1 + $0x1978] sm:$0xff]
    %v898 = vld [vmem:[%s1 + $0x1980] sm:$0xff]
    %v899 = vld [vmem:[%s1 + $0x1988] sm:$0xff]
    %v900 = vld [vmem:[%s1 + $0x1990] sm:$0xff]
    %v901 = vld [vmem:[%s1 + $0x1998] sm:$0xff]
    %v902 = vld [vmem:[%s1 + $0x19a0] sm:$0xff]
    %v903 = vld [vmem:[%s1 + $0x19a8] sm:$0xff]
    %v904 = vld [vmem:[%s1 + $0x19b0] sm:$0xff]
    %v905 = vld [vmem:[%s1 + $0x19b8] sm:$0xff]
    %v906 = vld [vmem:[%s1 + $0x19c0] sm:$0xff]
    %v907 = vld [vmem:[%s1 + $0x19c8] sm:$0xff]
    %v908 = vld [vmem:[%s1 + $0x19d0] sm:$0xff]
    %v909 = vld [vmem:[%s1 + $0x19d8] sm:$0xff]
    %v910 = vld [vmem:[%s1 + $0x19e0] sm:$0xff]
    %v911 = vld [vmem:[%s1 + $0x19e8] sm:$0xff]
    %v912 = vld [vmem:[%s1 + $0x19f0] sm:$0xff]
    %v913 = vld [vmem:[%s1 + $0x19f8] sm:$0xff]
    %v914 = vld [vmem:[%s1 + $0x1a00] sm:$0xff]
    %v915 = vld [vmem:[%s1 + $0x1a08] sm:$0xff]
    %v916 = vld [vmem:[%s1 + $0x1a10] sm:$0xff]
    %v917 = vld [vmem:[%s1 + $0x1a18] sm:$0xff]
    %v918 = vld [vmem:[%s1 + $0x1a20] sm:$0xff]
    %v919 = vld [vmem:[%s1 + $0x1a28] sm:$0xff]
    %v920 = vld [vmem:[%s1 + $0x1a30] sm:$0xff]
    %v921 = vld [vmem:[%s1 + $0x1a38] sm:$0xff]
    %v922 = vld [vmem:[%s1 + $0x1a40] sm:$0xff]
    %v923 = vld [vmem:[%s1 + $0x1a48] sm:$0xff]
    %v924 = vld [vmem:[%s1 + $0x1a50] sm:$0xff]
    %v925 = vld [vmem:[%s1 + $0x1a58] sm:$0xff]
    %v926 = vld [vmem:[%s1 + $0x1a60] sm:$0xff]
    %v927 = vld [vmem:[%s1 + $0x1a68] sm:$0xff]
    %v928 = vld [vmem:[%s1 + $0x1a70] sm:$0xff]
    %v929 = vld [vmem:[%s1 + $0x1a78] sm:$0xff]
    %v930 = vld [vmem:[%s1 + $0x1a80] sm:$0xff]
    %v931 = vld [vmem:[%s1 + $0x1a88] sm:$0xff]
    %v932 = vld [vmem:[%s1 + $0x1a90] sm:$0xff]
    %v933 = vld [vmem:[%s1 + $0x1a98] sm:$0xff]
    %v934 = vld [vmem:[%s1 + $0x1aa0] sm:$0xff]
    %v935 = vld [vmem:[%s1 + $0x1aa8] sm:$0xff]
    %v936 = vld [vmem:[%s1 + $0x1ab0] sm:$0xff]
    %v937 = vld [vmem:[%s1 + $0x1ab8] sm:$0xff]
    %v938 = vld [vmem:[%s1 + $0x1ac0] sm:$0xff]
    %v939 = vld [vmem:[%s1 + $0x1ac8] sm:$0xff]
    %v940 = vld [vmem:[%s1 + $0x1ad0] sm:$0xff]
    %v941 = vld [vmem:[%s1 + $0x1ad8] sm:$0xff]
    %v942 = vld [vmem:[%s1 + $0x1ae0] sm:$0xff]
    %v943 = vld [vmem:[%s1 + $0x1ae8] sm:$0xff]
    %v944 = vld [vmem:[%s1 + $0x1af0] sm:$0xff]
    %v945 = vld [vmem:[%s1 + $0x1af8] sm:$0xff]
    %v946 = vld [vmem:[%s1 + $0x1b00] sm:$0xff]
    %v947 = vld [vmem:[%s1 + $0x1b08] sm:$0xff]
    %v948 = vld [vmem:[%s1 + $0x1b10] sm:$0xff]
    %v949 = vld [vmem:[%s1 + $0x1b18] sm:$0xff]
    %v950 = vld [vmem:[%s1 + $0x1b20] sm:$0xff]
    %v951 = vld [vmem:[%s1 + $0x1b28] sm:$0xff]
    %v952 = vld [vmem:[%s1 + $0x1b30] sm:$0xff]
    %v953 = vld [vmem:[%s1 + $0x1b38] sm:$0xff]
    %v954 = vld [vmem:[%s1 + $0x1b40] sm:$0xff]
    %v955 = vld [vmem:[%s1 + $0x1b48] sm:$0xff]
    %v956 = vld [vmem:[%s1 + $0x1b50] sm:$0xff]
    %v957 = vld [vmem:[%s1 + $0x1b58] sm:$0xff]
    %v958 = vld [vmem:[%s1 + $0x1b60] sm:$0xff]
    %v959 = vld [vmem:[%s1 + $0x1b68] sm:$0xff]
    %v960 = vld [vmem:[%s1 + $0x1b70] sm:$0xff]
    %v961 = vld [vmem:[%s1 + $0x1b78] sm:$0xff]
    %v962 = vld [vmem:[%s1 + $0x1b80] sm:$0xff]
    %v963 = vld [vmem:[%s1 + $0x1b88] sm:$0xff]
    %v964 = vld [vmem:[%s1 + $0x1b90] sm:$0xff]
    %v965 = vld [vmem:[%s1 + $0x1b98] sm:$0xff]
    %v966 = vld [vmem:[%s1 + $0x1ba0] sm:$0xff]
    %v967 = vld [vmem:[%s1 + $0x1ba8] sm:$0xff]
    %v968 = vld [vmem:[%s1 + $0x1bb0] sm:$0xff]
    %v969 = vld [vmem:[%s1 + $0x1bb8] sm:$0xff]
    %v970 = vld [vmem:[%s1 + $0x1bc0] sm:$0xff]
    %v971 = vld [vmem:[%s1 + $0x1bc8] sm:$0xff]
    %v972 = vld [vmem:[%s1 + $0x1bd0] sm:$0xff]
    %v973 = vld [vmem:[%s1 + $0x1bd8] sm:$0xff]
    %v974 = vld [vmem:[%s1 + $0x1be0] sm:$0xff]
    %v975 = vld [vmem:[%s1 + $0x1be8] sm:$0xff]
    %v976 = vld [vmem:[%s1 + $0x1bf0] sm:$0xff]
    %v977 = vld [vmem:[%s1 + $0x1bf8] sm:$0xff]
    %v978 = vld [vmem:[%s1 + $0x1c00] sm:$0xff]
    %v979 = vld [vmem:[%s1 + $0x1c08] sm:$0xff]
    %v980 = vld [vmem:[%s1 + $0x1c10] sm:$0xff]
    %v981 = vld [vmem:[%s1 + $0x1c18] sm:$0xff]
    %v982 = vld [vmem:[%s1 + $0x1c20] sm:$0xff]
    %v983 = vld [vmem:[%s1 + $0x1c28] sm:$0xff]
    %v984 = vld [vmem:[%s1 + $0x1c30] sm:$0xff]
    %v985 = vld [vmem:[%s1 + $0x1c38] sm:$0xff]
    %v986 = vld [vmem:[%s1 + $0x1c40] sm:$0xff]
    %v987 = vld [vmem:[%s1 + $0x1c48] sm:$0xff]
    %v988 = vld [vmem:[%s1 + $0x1c50] sm:$0xff]
    %v989 = vld [vmem:[%s1 + $0x1c58] sm:$0xff]
    %v990 = vld [vmem:[%s1 + $0x1c60] sm:$0xff]
    %v991 = vld [vmem:[%s1 + $0x1c68] sm:$0xff]
    %v992 = vld [vmem:[%s1 + $0x1c70] sm:$0xff]
    %v993 = vld [vmem:[%s1 + $0x1c78] sm:$0xff]
    %v994 = vld [vmem:[%s1 + $0x1c80] sm:$0xff]
    %v995 = vld [vmem:[%s1 + $0x1c88] sm:$0xff]
    %v996 = vld [vmem:[%s1 + $0x1c90] sm:$0xff]
    %v997 = vld [vmem:[%s1 + $0x1c98] sm:$0xff]
    %v998 = vld [vmem:[%s1 + $0x1ca0] sm:$0xff]
    %v999 = vld [vmem:[%s1 + $0x1ca8] sm:$0xff]
    %v1000 = vld [vmem:[%s1 + $0x1cb0] sm:$0xff]
    %v1001 = vld [vmem:[%s1 + $0x1cb8] sm:$0xff]
    %v1002 = vld [vmem:[%s1 + $0x1cc0] sm:$0xff]
    %v1003 = vld [vmem:[%s1 + $0x1cc8] sm:$0xff]
    %v1004 = vld [vmem:[%s1 + $0x1cd0] sm:$0xff]
    %v1005 = vld [vmem:[%s1 + $0x1cd8] sm:$0xff]
    %v1006 = vld [vmem:[%s1 + $0x1ce0] sm:$0xff]
    %v1007 = vld [vmem:[%s1 + $0x1ce8] sm:$0xff]
    %v1008 = vld [vmem:[%s1 + $0x1cf0] sm:$0xff]
    %v1009 = vld [vmem:[%s1 + $0x1cf8] sm:$0xff]
    %v1010 = vld [vmem:[%s1 + $0x1d00] sm:$0xff]
    %v1011 = vld [vmem:[%s1 + $0x1d08] sm:$0xff]
    %v1012 = vld [vmem:[%s1 + $0x1d10] sm:$0xff]
    %v1013 = vld [vmem:[%s1 + $0x1d18] sm:$0xff]
    %v1014 = vld [vmem:[%s1 + $0x1d20] sm:$0xff]
    %v1015 = vld [vmem:[%s1 + $0x1d28] sm:$0xff]
    %v1016 = vld [vmem:[%s1 + $0x1d30] sm:$0xff]
    %v1017 = vld [vmem:[%s1 + $0x1d38] sm:$0xff]
    %v1018 = vld [vmem:[%s1 + $0x1d40] sm:$0xff]
    %v1019 = vld [vmem:[%s1 + $0x1d48] sm:$0xff]
    %v1020 = vld [vmem:[%s1 + $0x1d50] sm:$0xff]
    %v1021 = vld [vmem:[%s1 + $0x1d58] sm:$0xff]
    %v1022 = vld [vmem:[%s1 + $0x1d60] sm:$0xff]
    %v1023 = vld [vmem:[%s1 + $0x1d68] sm:$0xff]
    %v1024 = vld [vmem:[%s1 + $0x1d70] sm:$0xff]
    %v1025 = vld [vmem:[%s1 + $0x1d78] sm:$0xff]
    %v1026 = vld [vmem:[%s1 + $0x1d80] sm:$0xff]
    %v1027 = vld [vmem:[%s1 + $0x1d88] sm:$0xff]
    %v1028 = vld [vmem:[%s1 + $0x1d90] sm:$0xff]
    %v1029 = vld [vmem:[%s1 + $0x1d98] sm:$0xff]
    %v1030 = vld [vmem:[%s1 + $0x1da0] sm:$0xff]
    %v1031 = vld [vmem:[%s1 + $0x1da8] sm:$0xff]
    %v1032 = vld [vmem:[%s1 + $0x1db0] sm:$0xff]
    %v1033 = vld [vmem:[%s1 + $0x1db8] sm:$0xff]
    %v1034 = vld [vmem:[%s1 + $0x1dc0] sm:$0xff]
    %v1035 = vld [vmem:[%s1 + $0x1dc8] sm:$0xff]
    %v1036 = vld [vmem:[%s1 + $0x1dd0] sm:$0xff]
    %v1037 = vld [vmem:[%s1 + $0x1dd8] sm:$0xff]
    %v1038 = vld [vmem:[%s1 + $0x1de0] sm:$0xff]
    %v1039 = vld [vmem:[%s1 + $0x1de8] sm:$0xff]
    %v1040 = vld [vmem:[%s1 + $0x1df0] sm:$0xff]
    %v1041 = vld [vmem:[%s1 + $0x1df8] sm:$0xff]
    %v1042 = vld [vmem:[%s1 + $0x1e00] sm:$0xff]
    %v1043 = vld [vmem:[%s1 + $0x1e08] sm:$0xff]
    %v1044 = vld [vmem:[%s1 + $0x1e10] sm:$0xff]
    %v1045 = vld [vmem:[%s1 + $0x1e18] sm:$0xff]
    %v1046 = vld [vmem:[%s1 + $0x1e20] sm:$0xff]
    %v1047 = vld [vmem:[%s1 + $0x1e28] sm:$0xff]
    %v1048 = vld [vmem:[%s1 + $0x1e30] sm:$0xff]
    %v1049 = vld [vmem:[%s1 + $0x1e38] sm:$0xff]
    %v1050 = vld [vmem:[%s1 + $0x1e40] sm:$0xff]
    %v1051 = vld [vmem:[%s1 + $0x1e48] sm:$0xff]
    %v1052 = vld [vmem:[%s1 + $0x1e50] sm:$0xff]
    %v1053 = vld [vmem:[%s1 + $0x1e58] sm:$0xff]
    %v1054 = vld [vmem:[%s1 + $0x1e60] sm:$0xff]
    %v1055 = vld [vmem:[%s1 + $0x1e68] sm:$0xff]
    %v1056 = vld [vmem:[%s1 + $0x1e70] sm:$0xff]
    %v1057 = vld [vmem:[%s1 + $0x1e78] sm:$0xff]
    %v1058 = vld [vmem:[%s1 + $0x1e80] sm:$0xff]
    %v1059 = vld [vmem:[%s1 + $0x1e88] sm:$0xff]
    %v1060 = vld [vmem:[%s1 + $0x1e90] sm:$0xff]
    %v1061 = vld [vmem:[%s1 + $0x1e98] sm:$0xff]
    %v1062 = vld [vmem:[%s1 + $0x1ea0] sm:$0xff]
    %v1063 = vld [vmem:[%s1 + $0x1ea8] sm:$0xff]
    %v1064 = vld [vmem:[%s1 + $0x1eb0] sm:$0xff]
    %v1065 = vld [vmem:[%s1 + $0x1eb8] sm:$0xff]
    %v1066 = vld [vmem:[%s1 + $0x1ec0] sm:$0xff]
    %v1067 = vld [vmem:[%s1 + $0x1ec8] sm:$0xff]
    %v1068 = vld [vmem:[%s1 + $0x1ed0] sm:$0xff]
    %v1069 = vld [vmem:[%s1 + $0x1ed8] sm:$0xff]
    %v1070 = vld [vmem:[%s1 + $0x1ee0] sm:$0xff]
    %v1071 = vld [vmem:[%s1 + $0x1ee8] sm:$0xff]
    %v1072 = vld [vmem:[%s1 + $0x1ef0] sm:$0xff]
    %v1073 = vld [vmem:[%s1 + $0x1ef8] sm:$0xff]
    %v1074 = vld [vmem:[%s1 + $0x1f00] sm:$0xff]
    %v1075 = vld [vmem:[%s1 + $0x1f08] sm:$0xff]
    %v1076 = vld [vmem:[%s1 + $0x1f10] sm:$0xff]
    %v1077 = vld [vmem:[%s1 + $0x1f18] sm:$0xff]
    %v1078 = vld [vmem:[%s1 + $0x1f20] sm:$0xff]
    %v1079 = vld [vmem:[%s1 + $0x1f28] sm:$0xff]
    %v1080 = vld [vmem:[%s1 + $0x1f30] sm:$0xff]
    %v1081 = vld [vmem:[%s1 + $0x1f38] sm:$0xff]
    %v1082 = vld [vmem:[%s1 + $0x1f40] sm:$0xff]
    %v1083 = vld [vmem:[%s1 + $0x1f48] sm:$0xff]
    %v1084 = vld [vmem:[%s1 + $0x1f50] sm:$0xff]
    %v1085 = vld [vmem:[%s1 + $0x1f58] sm:$0xff]
    %v1086 = vld [vmem:[%s1 + $0x1f60] sm:$0xff]
    %v1087 = vld [vmem:[%s1 + $0x1f68] sm:$0xff]
    %v1088 = vld [vmem:[%s1 + $0x1f70] sm:$0xff]
    %v1089 = vld [vmem:[%s1 + $0x1f78] sm:$0xff]
    %v1090 = vld [vmem:[%s1 + $0x1f80] sm:$0xff]
    %v1091 = vld [vmem:[%s1 + $0x1f88] sm:$0xff]
    %v1092 = vld [vmem:[%s1 + $0x1f90] sm:$0xff]
    %v1093 = vld [vmem:[%s1 + $0x1f98] sm:$0xff]
    %v1094 = vld [vmem:[%s1 + $0x1fa0] sm:$0xff]
    %v1095 = vld [vmem:[%s1 + $0x1fa8] sm:$0xff]
    %v1096 = vld [vmem:[%s1 + $0x1fb0] sm:$0xff]
    %v1097 = vld [vmem:[%s1 + $0x1fb8] sm:$0xff]
    %v1098 = vld [vmem:[%s1 + $0x1fc0] sm:$0xff]
    %v1099 = vld [vmem:[%s1 + $0x1fc8] sm:$0xff]
    %v1100 = vld [vmem:[%s1 + $0x1fd0] sm:$0xff]
    %v1101 = vld [vmem:[%s1 + $0x1fd8] sm:$0xff]
    %v1102 = vld [vmem:[%s1 + $0x1fe0] sm:$0xff]
    %v1103 = vld [vmem:[%s1 + $0x1fe8] sm:$0xff]
    %v1104 = vld [vmem:[%s1 + $0x1ff0] sm:$0xff]
    %v1105 = vld [vmem:[%s1 + $0x1ff8] sm:$0xff]
    %v1106 = vld [vmem:[%s2] sm:$0xff]
    %v1108 = vperm.slane %v1106, 0
    %v1109 = vperm.slane %v1106, 1
    %v1110 = vperm.slane %v1106, 2
    %v1111 = vperm.slane %v1106, 3
    %v1112 = vperm.slane %v1106, 4
    %v1113 = vperm.slane %v1106, 5
    %v1114 = vperm.slane %v1106, 6
    %v1115 = vperm.slane %v1106, 7
    %v2148 = vunpack.c.l.b16 %v82
    %v2149 = vunpack.c.h.b16 %v82
    %v2150 = vunpack.c.l.b16 %v83
    %v2151 = vunpack.c.h.b16 %v83
    %v2152 = vunpack.c.l.b16 %v84
    %v2153 = vunpack.c.h.b16 %v84
    %v2154 = vunpack.c.l.b16 %v85
    %v2155 = vunpack.c.h.b16 %v85
    %v2156 = vunpack.c.l.b16 %v86
    %v2157 = vunpack.c.h.b16 %v86
    %v2158 = vunpack.c.l.b16 %v87
    %v2159 = vunpack.c.h.b16 %v87
    %v2160 = vunpack.c.l.b16 %v88
    %v2161 = vunpack.c.h.b16 %v88
    %v2162 = vunpack.c.l.b16 %v89
    %v2163 = vunpack.c.h.b16 %v89
    %v2164 = vunpack.c.l.b16 %v90
    %v2165 = vunpack.c.h.b16 %v90
    %v2166 = vunpack.c.l.b16 %v91
    %v2167 = vunpack.c.h.b16 %v91
    %v2168 = vunpack.c.l.b16 %v92
    %v2169 = vunpack.c.h.b16 %v92
    %v2170 = vunpack.c.l.b16 %v93
    %v2171 = vunpack.c.h.b16 %v93
    %v2172 = vunpack.c.l.b16 %v94
    %v2173 = vunpack.c.h.b16 %v94
    %v2174 = vunpack.c.l.b16 %v95
    %v2175 = vunpack.c.h.b16 %v95
    %v2176 = vunpack.c.l.b16 %v96
    %v2177 = vunpack.c.h.b16 %v96
    %v2178 = vunpack.c.l.b16 %v97
    %v2179 = vunpack.c.h.b16 %v97
    %v2180 = vunpack.c.l.b16 %v98
    %v2181 = vunpack.c.h.b16 %v98
    %v2182 = vunpack.c.l.b16 %v99
    %v2183 = vunpack.c.h.b16 %v99
    %v2184 = vunpack.c.l.b16 %v100
    %v2185 = vunpack.c.h.b16 %v100
    %v2186 = vunpack.c.l.b16 %v101
    %v2187 = vunpack.c.h.b16 %v101
    %v2188 = vunpack.c.l.b16 %v102
    %v2189 = vunpack.c.h.b16 %v102
    %v2190 = vunpack.c.l.b16 %v103
    %v2191 = vunpack.c.h.b16 %v103
    %v2192 = vunpack.c.l.b16 %v104
    %v2193 = vunpack.c.h.b16 %v104
    %v2194 = vunpack.c.l.b16 %v105
    %v2195 = vunpack.c.h.b16 %v105
    %v2196 = vunpack.c.l.b16 %v106
    %v2197 = vunpack.c.h.b16 %v106
    %v2198 = vunpack.c.l.b16 %v107
    %v2199 = vunpack.c.h.b16 %v107
    %v2200 = vunpack.c.l.b16 %v108
    %v2201 = vunpack.c.h.b16 %v108
    %v2202 = vunpack.c.l.b16 %v109
    %v2203 = vunpack.c.h.b16 %v109
    %v2204 = vunpack.c.l.b16 %v110
    %v2205 = vunpack.c.h.b16 %v110
    %v2206 = vunpack.c.l.b16 %v111
    %v2207 = vunpack.c.h.b16 %v111
    %v2208 = vunpack.c.l.b16 %v112
    %v2209 = vunpack.c.h.b16 %v112
    %v2210 = vunpack.c.l.b16 %v113
    %v2211 = vunpack.c.h.b16 %v113
    %v2212 = vunpack.c.l.b16 %v114
    %v2213 = vunpack.c.h.b16 %v114
    %v2214 = vunpack.c.l.b16 %v115
    %v2215 = vunpack.c.h.b16 %v115
    %v2216 = vunpack.c.l.b16 %v116
    %v2217 = vunpack.c.h.b16 %v116
    %v2218 = vunpack.c.l.b16 %v117
    %v2219 = vunpack.c.h.b16 %v117
    %v2220 = vunpack.c.l.b16 %v118
    %v2221 = vunpack.c.h.b16 %v118
    %v2222 = vunpack.c.l.b16 %v119
    %v2223 = vunpack.c.h.b16 %v119
    %v2224 = vunpack.c.l.b16 %v120
    %v2225 = vunpack.c.h.b16 %v120
    %v2226 = vunpack.c.l.b16 %v121
    %v2227 = vunpack.c.h.b16 %v121
    %v2228 = vunpack.c.l.b16 %v122
    %v2229 = vunpack.c.h.b16 %v122
    %v2230 = vunpack.c.l.b16 %v123
    %v2231 = vunpack.c.h.b16 %v123
    %v2232 = vunpack.c.l.b16 %v124
    %v2233 = vunpack.c.h.b16 %v124
    %v2234 = vunpack.c.l.b16 %v125
    %v2235 = vunpack.c.h.b16 %v125
    %v2236 = vunpack.c.l.b16 %v126
    %v2237 = vunpack.c.h.b16 %v126
    %v2238 = vunpack.c.l.b16 %v127
    %v2239 = vunpack.c.h.b16 %v127
    %v2240 = vunpack.c.l.b16 %v128
    %v2241 = vunpack.c.h.b16 %v128
    %v2242 = vunpack.c.l.b16 %v129
    %v2243 = vunpack.c.h.b16 %v129
    %v2244 = vunpack.c.l.b16 %v130
    %v2245 = vunpack.c.h.b16 %v130
    %v2246 = vunpack.c.l.b16 %v131
    %v2247 = vunpack.c.h.b16 %v131
    %v2248 = vunpack.c.l.b16 %v132
    %v2249 = vunpack.c.h.b16 %v132
    %v2250 = vunpack.c.l.b16 %v133
    %v2251 = vunpack.c.h.b16 %v133
    %v2252 = vunpack.c.l.b16 %v134
    %v2253 = vunpack.c.h.b16 %v134
    %v2254 = vunpack.c.l.b16 %v135
    %v2255 = vunpack.c.h.b16 %v135
    %v2256 = vunpack.c.l.b16 %v136
    %v2257 = vunpack.c.h.b16 %v136
    %v2258 = vunpack.c.l.b16 %v137
    %v2259 = vunpack.c.h.b16 %v137
    %v2260 = vunpack.c.l.b16 %v138
    %v2261 = vunpack.c.h.b16 %v138
    %v2262 = vunpack.c.l.b16 %v139
    %v2263 = vunpack.c.h.b16 %v139
    %v2264 = vunpack.c.l.b16 %v140
    %v2265 = vunpack.c.h.b16 %v140
    %v2266 = vunpack.c.l.b16 %v141
    %v2267 = vunpack.c.h.b16 %v141
    %v2268 = vunpack.c.l.b16 %v142
    %v2269 = vunpack.c.h.b16 %v142
    %v2270 = vunpack.c.l.b16 %v143
    %v2271 = vunpack.c.h.b16 %v143
    %v2272 = vunpack.c.l.b16 %v144
    %v2273 = vunpack.c.h.b16 %v144
    %v2274 = vunpack.c.l.b16 %v145
    %v2275 = vunpack.c.h.b16 %v145
    %v2276 = vunpack.c.l.b16 %v146
    %v2277 = vunpack.c.h.b16 %v146
    %v2278 = vunpack.c.l.b16 %v147
    %v2279 = vunpack.c.h.b16 %v147
    %v2280 = vunpack.c.l.b16 %v148
    %v2281 = vunpack.c.h.b16 %v148
    %v2282 = vunpack.c.l.b16 %v149
    %v2283 = vunpack.c.h.b16 %v149
    %v2284 = vunpack.c.l.b16 %v150
    %v2285 = vunpack.c.h.b16 %v150
    %v2286 = vunpack.c.l.b16 %v151
    %v2287 = vunpack.c.h.b16 %v151
    %v2288 = vunpack.c.l.b16 %v152
    %v2289 = vunpack.c.h.b16 %v152
    %v2290 = vunpack.c.l.b16 %v153
    %v2291 = vunpack.c.h.b16 %v153
    %v2292 = vunpack.c.l.b16 %v154
    %v2293 = vunpack.c.h.b16 %v154
    %v2294 = vunpack.c.l.b16 %v155
    %v2295 = vunpack.c.h.b16 %v155
    %v2296 = vunpack.c.l.b16 %v156
    %v2297 = vunpack.c.h.b16 %v156
    %v2298 = vunpack.c.l.b16 %v157
    %v2299 = vunpack.c.h.b16 %v157
    %v2300 = vunpack.c.l.b16 %v158
    %v2301 = vunpack.c.h.b16 %v158
    %v2302 = vunpack.c.l.b16 %v159
    %v2303 = vunpack.c.h.b16 %v159
    %v2304 = vunpack.c.l.b16 %v160
    %v2305 = vunpack.c.h.b16 %v160
    %v2306 = vunpack.c.l.b16 %v161
    %v2307 = vunpack.c.h.b16 %v161
    %v2308 = vunpack.c.l.b16 %v162
    %v2309 = vunpack.c.h.b16 %v162
    %v2310 = vunpack.c.l.b16 %v163
    %v2311 = vunpack.c.h.b16 %v163
    %v2312 = vunpack.c.l.b16 %v164
    %v2313 = vunpack.c.h.b16 %v164
    %v2314 = vunpack.c.l.b16 %v165
    %v2315 = vunpack.c.h.b16 %v165
    %v2316 = vunpack.c.l.b16 %v166
    %v2317 = vunpack.c.h.b16 %v166
    %v2318 = vunpack.c.l.b16 %v167
    %v2319 = vunpack.c.h.b16 %v167
    %v2320 = vunpack.c.l.b16 %v168
    %v2321 = vunpack.c.h.b16 %v168
    %v2322 = vunpack.c.l.b16 %v169
    %v2323 = vunpack.c.h.b16 %v169
    %v2324 = vunpack.c.l.b16 %v170
    %v2325 = vunpack.c.h.b16 %v170
    %v2326 = vunpack.c.l.b16 %v171
    %v2327 = vunpack.c.h.b16 %v171
    %v2328 = vunpack.c.l.b16 %v172
    %v2329 = vunpack.c.h.b16 %v172
    %v2330 = vunpack.c.l.b16 %v173
    %v2331 = vunpack.c.h.b16 %v173
    %v2332 = vunpack.c.l.b16 %v174
    %v2333 = vunpack.c.h.b16 %v174
    %v2334 = vunpack.c.l.b16 %v175
    %v2335 = vunpack.c.h.b16 %v175
    %v2336 = vunpack.c.l.b16 %v176
    %v2337 = vunpack.c.h.b16 %v176
    %v2338 = vunpack.c.l.b16 %v177
    %v2339 = vunpack.c.h.b16 %v177
    %v2340 = vunpack.c.l.b16 %v178
    %v2341 = vunpack.c.h.b16 %v178
    %v2342 = vunpack.c.l.b16 %v179
    %v2343 = vunpack.c.h.b16 %v179
    %v2344 = vunpack.c.l.b16 %v180
    %v2345 = vunpack.c.h.b16 %v180
    %v2346 = vunpack.c.l.b16 %v181
    %v2347 = vunpack.c.h.b16 %v181
    %v2348 = vunpack.c.l.b16 %v182
    %v2349 = vunpack.c.h.b16 %v182
    %v2350 = vunpack.c.l.b16 %v183
    %v2351 = vunpack.c.h.b16 %v183
    %v2352 = vunpack.c.l.b16 %v184
    %v2353 = vunpack.c.h.b16 %v184
    %v2354 = vunpack.c.l.b16 %v185
    %v2355 = vunpack.c.h.b16 %v185
    %v2356 = vunpack.c.l.b16 %v186
    %v2357 = vunpack.c.h.b16 %v186
    %v2358 = vunpack.c.l.b16 %v187
    %v2359 = vunpack.c.h.b16 %v187
    %v2360 = vunpack.c.l.b16 %v188
    %v2361 = vunpack.c.h.b16 %v188
    %v2362 = vunpack.c.l.b16 %v189
    %v2363 = vunpack.c.h.b16 %v189
    %v2364 = vunpack.c.l.b16 %v190
    %v2365 = vunpack.c.h.b16 %v190
    %v2366 = vunpack.c.l.b16 %v191
    %v2367 = vunpack.c.h.b16 %v191
    %v2368 = vunpack.c.l.b16 %v192
    %v2369 = vunpack.c.h.b16 %v192
    %v2370 = vunpack.c.l.b16 %v193
    %v2371 = vunpack.c.h.b16 %v193
    %v2372 = vunpack.c.l.b16 %v194
    %v2373 = vunpack.c.h.b16 %v194
    %v2374 = vunpack.c.l.b16 %v195
    %v2375 = vunpack.c.h.b16 %v195
    %v2376 = vunpack.c.l.b16 %v196
    %v2377 = vunpack.c.h.b16 %v196
    %v2378 = vunpack.c.l.b16 %v197
    %v2379 = vunpack.c.h.b16 %v197
    %v2380 = vunpack.c.l.b16 %v198
    %v2381 = vunpack.c.h.b16 %v198
    %v2382 = vunpack.c.l.b16 %v199
    %v2383 = vunpack.c.h.b16 %v199
    %v2384 = vunpack.c.l.b16 %v200
    %v2385 = vunpack.c.h.b16 %v200
    %v2386 = vunpack.c.l.b16 %v201
    %v2387 = vunpack.c.h.b16 %v201
    %v2388 = vunpack.c.l.b16 %v202
    %v2389 = vunpack.c.h.b16 %v202
    %v2390 = vunpack.c.l.b16 %v203
    %v2391 = vunpack.c.h.b16 %v203
    %v2392 = vunpack.c.l.b16 %v204
    %v2393 = vunpack.c.h.b16 %v204
    %v2394 = vunpack.c.l.b16 %v205
    %v2395 = vunpack.c.h.b16 %v205
    %v2396 = vunpack.c.l.b16 %v206
    %v2397 = vunpack.c.h.b16 %v206
    %v2398 = vunpack.c.l.b16 %v207
    %v2399 = vunpack.c.h.b16 %v207
    %v2400 = vunpack.c.l.b16 %v208
    %v2401 = vunpack.c.h.b16 %v208
    %v2402 = vunpack.c.l.b16 %v209
    %v2403 = vunpack.c.h.b16 %v209
    %v2404 = vunpack.c.l.b16 %v210
    %v2405 = vunpack.c.h.b16 %v210
    %v2406 = vunpack.c.l.b16 %v211
    %v2407 = vunpack.c.h.b16 %v211
    %v2408 = vunpack.c.l.b16 %v212
    %v2409 = vunpack.c.h.b16 %v212
    %v2410 = vunpack.c.l.b16 %v213
    %v2411 = vunpack.c.h.b16 %v213
    %v2412 = vunpack.c.l.b16 %v214
    %v2413 = vunpack.c.h.b16 %v214
    %v2414 = vunpack.c.l.b16 %v215
    %v2415 = vunpack.c.h.b16 %v215
    %v2416 = vunpack.c.l.b16 %v216
    %v2417 = vunpack.c.h.b16 %v216
    %v2418 = vunpack.c.l.b16 %v217
    %v2419 = vunpack.c.h.b16 %v217
    %v2420 = vunpack.c.l.b16 %v218
    %v2421 = vunpack.c.h.b16 %v218
    %v2422 = vunpack.c.l.b16 %v219
    %v2423 = vunpack.c.h.b16 %v219
    %v2424 = vunpack.c.l.b16 %v220
    %v2425 = vunpack.c.h.b16 %v220
    %v2426 = vunpack.c.l.b16 %v221
    %v2427 = vunpack.c.h.b16 %v221
    %v2428 = vunpack.c.l.b16 %v222
    %v2429 = vunpack.c.h.b16 %v222
    %v2430 = vunpack.c.l.b16 %v223
    %v2431 = vunpack.c.h.b16 %v223
    %v2432 = vunpack.c.l.b16 %v224
    %v2433 = vunpack.c.h.b16 %v224
    %v2434 = vunpack.c.l.b16 %v225
    %v2435 = vunpack.c.h.b16 %v225
    %v2436 = vunpack.c.l.b16 %v226
    %v2437 = vunpack.c.h.b16 %v226
    %v2438 = vunpack.c.l.b16 %v227
    %v2439 = vunpack.c.h.b16 %v227
    %v2440 = vunpack.c.l.b16 %v228
    %v2441 = vunpack.c.h.b16 %v228
    %v2442 = vunpack.c.l.b16 %v229
    %v2443 = vunpack.c.h.b16 %v229
    %v2444 = vunpack.c.l.b16 %v230
    %v2445 = vunpack.c.h.b16 %v230
    %v2446 = vunpack.c.l.b16 %v231
    %v2447 = vunpack.c.h.b16 %v231
    %v2448 = vunpack.c.l.b16 %v232
    %v2449 = vunpack.c.h.b16 %v232
    %v2450 = vunpack.c.l.b16 %v233
    %v2451 = vunpack.c.h.b16 %v233
    %v2452 = vunpack.c.l.b16 %v234
    %v2453 = vunpack.c.h.b16 %v234
    %v2454 = vunpack.c.l.b16 %v235
    %v2455 = vunpack.c.h.b16 %v235
    %v2456 = vunpack.c.l.b16 %v236
    %v2457 = vunpack.c.h.b16 %v236
    %v2458 = vunpack.c.l.b16 %v237
    %v2459 = vunpack.c.h.b16 %v237
    %v2460 = vunpack.c.l.b16 %v238
    %v2461 = vunpack.c.h.b16 %v238
    %v2462 = vunpack.c.l.b16 %v239
    %v2463 = vunpack.c.h.b16 %v239
    %v2464 = vunpack.c.l.b16 %v240
    %v2465 = vunpack.c.h.b16 %v240
    %v2466 = vunpack.c.l.b16 %v241
    %v2467 = vunpack.c.h.b16 %v241
    %v2468 = vunpack.c.l.b16 %v242
    %v2469 = vunpack.c.h.b16 %v242
    %v2470 = vunpack.c.l.b16 %v243
    %v2471 = vunpack.c.h.b16 %v243
    %v2472 = vunpack.c.l.b16 %v244
    %v2473 = vunpack.c.h.b16 %v244
    %v2474 = vunpack.c.l.b16 %v245
    %v2475 = vunpack.c.h.b16 %v245
    %v2476 = vunpack.c.l.b16 %v246
    %v2477 = vunpack.c.h.b16 %v246
    %v2478 = vunpack.c.l.b16 %v247
    %v2479 = vunpack.c.h.b16 %v247
    %v2480 = vunpack.c.l.b16 %v248
    %v2481 = vunpack.c.h.b16 %v248
    %v2482 = vunpack.c.l.b16 %v249
    %v2483 = vunpack.c.h.b16 %v249
    %v2484 = vunpack.c.l.b16 %v250
    %v2485 = vunpack.c.h.b16 %v250
    %v2486 = vunpack.c.l.b16 %v251
    %v2487 = vunpack.c.h.b16 %v251
    %v2488 = vunpack.c.l.b16 %v252
    %v2489 = vunpack.c.h.b16 %v252
    %v2490 = vunpack.c.l.b16 %v253
    %v2491 = vunpack.c.h.b16 %v253
    %v2492 = vunpack.c.l.b16 %v254
    %v2493 = vunpack.c.h.b16 %v254
    %v2494 = vunpack.c.l.b16 %v255
    %v2495 = vunpack.c.h.b16 %v255
    %v2496 = vunpack.c.l.b16 %v256
    %v2497 = vunpack.c.h.b16 %v256
    %v2498 = vunpack.c.l.b16 %v257
    %v2499 = vunpack.c.h.b16 %v257
    %v2500 = vunpack.c.l.b16 %v258
    %v2501 = vunpack.c.h.b16 %v258
    %v2502 = vunpack.c.l.b16 %v259
    %v2503 = vunpack.c.h.b16 %v259
    %v2504 = vunpack.c.l.b16 %v260
    %v2505 = vunpack.c.h.b16 %v260
    %v2506 = vunpack.c.l.b16 %v261
    %v2507 = vunpack.c.h.b16 %v261
    %v2508 = vunpack.c.l.b16 %v262
    %v2509 = vunpack.c.h.b16 %v262
    %v2510 = vunpack.c.l.b16 %v263
    %v2511 = vunpack.c.h.b16 %v263
    %v2512 = vunpack.c.l.b16 %v264
    %v2513 = vunpack.c.h.b16 %v264
    %v2514 = vunpack.c.l.b16 %v265
    %v2515 = vunpack.c.h.b16 %v265
    %v2516 = vunpack.c.l.b16 %v266
    %v2517 = vunpack.c.h.b16 %v266
    %v2518 = vunpack.c.l.b16 %v267
    %v2519 = vunpack.c.h.b16 %v267
    %v2520 = vunpack.c.l.b16 %v268
    %v2521 = vunpack.c.h.b16 %v268
    %v2522 = vunpack.c.l.b16 %v269
    %v2523 = vunpack.c.h.b16 %v269
    %v2524 = vunpack.c.l.b16 %v270
    %v2525 = vunpack.c.h.b16 %v270
    %v2526 = vunpack.c.l.b16 %v271
    %v2527 = vunpack.c.h.b16 %v271
    %v2528 = vunpack.c.l.b16 %v272
    %v2529 = vunpack.c.h.b16 %v272
    %v2530 = vunpack.c.l.b16 %v273
    %v2531 = vunpack.c.h.b16 %v273
    %v2532 = vunpack.c.l.b16 %v274
    %v2533 = vunpack.c.h.b16 %v274
    %v2534 = vunpack.c.l.b16 %v275
    %v2535 = vunpack.c.h.b16 %v275
    %v2536 = vunpack.c.l.b16 %v276
    %v2537 = vunpack.c.h.b16 %v276
    %v2538 = vunpack.c.l.b16 %v277
    %v2539 = vunpack.c.h.b16 %v277
    %v2540 = vunpack.c.l.b16 %v278
    %v2541 = vunpack.c.h.b16 %v278
    %v2542 = vunpack.c.l.b16 %v279
    %v2543 = vunpack.c.h.b16 %v279
    %v2544 = vunpack.c.l.b16 %v280
    %v2545 = vunpack.c.h.b16 %v280
    %v2546 = vunpack.c.l.b16 %v281
    %v2547 = vunpack.c.h.b16 %v281
    %v2548 = vunpack.c.l.b16 %v282
    %v2549 = vunpack.c.h.b16 %v282
    %v2550 = vunpack.c.l.b16 %v283
    %v2551 = vunpack.c.h.b16 %v283
    %v2552 = vunpack.c.l.b16 %v284
    %v2553 = vunpack.c.h.b16 %v284
    %v2554 = vunpack.c.l.b16 %v285
    %v2555 = vunpack.c.h.b16 %v285
    %v2556 = vunpack.c.l.b16 %v286
    %v2557 = vunpack.c.h.b16 %v286
    %v2558 = vunpack.c.l.b16 %v287
    %v2559 = vunpack.c.h.b16 %v287
    %v2560 = vunpack.c.l.b16 %v288
    %v2561 = vunpack.c.h.b16 %v288
    %v2562 = vunpack.c.l.b16 %v289
    %v2563 = vunpack.c.h.b16 %v289
    %v2564 = vunpack.c.l.b16 %v290
    %v2565 = vunpack.c.h.b16 %v290
    %v2566 = vunpack.c.l.b16 %v291
    %v2567 = vunpack.c.h.b16 %v291
    %v2568 = vunpack.c.l.b16 %v292
    %v2569 = vunpack.c.h.b16 %v292
    %v2570 = vunpack.c.l.b16 %v293
    %v2571 = vunpack.c.h.b16 %v293
    %v2572 = vunpack.c.l.b16 %v294
    %v2573 = vunpack.c.h.b16 %v294
    %v2574 = vunpack.c.l.b16 %v295
    %v2575 = vunpack.c.h.b16 %v295
    %v2576 = vunpack.c.l.b16 %v296
    %v2577 = vunpack.c.h.b16 %v296
    %v2578 = vunpack.c.l.b16 %v297
    %v2579 = vunpack.c.h.b16 %v297
    %v2580 = vunpack.c.l.b16 %v298
    %v2581 = vunpack.c.h.b16 %v298
    %v2582 = vunpack.c.l.b16 %v299
    %v2583 = vunpack.c.h.b16 %v299
    %v2584 = vunpack.c.l.b16 %v300
    %v2585 = vunpack.c.h.b16 %v300
    %v2586 = vunpack.c.l.b16 %v301
    %v2587 = vunpack.c.h.b16 %v301
    %v2588 = vunpack.c.l.b16 %v302
    %v2589 = vunpack.c.h.b16 %v302
    %v2590 = vunpack.c.l.b16 %v303
    %v2591 = vunpack.c.h.b16 %v303
    %v2592 = vunpack.c.l.b16 %v304
    %v2593 = vunpack.c.h.b16 %v304
    %v2594 = vunpack.c.l.b16 %v305
    %v2595 = vunpack.c.h.b16 %v305
    %v2596 = vunpack.c.l.b16 %v306
    %v2597 = vunpack.c.h.b16 %v306
    %v2598 = vunpack.c.l.b16 %v307
    %v2599 = vunpack.c.h.b16 %v307
    %v2600 = vunpack.c.l.b16 %v308
    %v2601 = vunpack.c.h.b16 %v308
    %v2602 = vunpack.c.l.b16 %v309
    %v2603 = vunpack.c.h.b16 %v309
    %v2604 = vunpack.c.l.b16 %v310
    %v2605 = vunpack.c.h.b16 %v310
    %v2606 = vunpack.c.l.b16 %v311
    %v2607 = vunpack.c.h.b16 %v311
    %v2608 = vunpack.c.l.b16 %v312
    %v2609 = vunpack.c.h.b16 %v312
    %v2610 = vunpack.c.l.b16 %v313
    %v2611 = vunpack.c.h.b16 %v313
    %v2612 = vunpack.c.l.b16 %v314
    %v2613 = vunpack.c.h.b16 %v314
    %v2614 = vunpack.c.l.b16 %v315
    %v2615 = vunpack.c.h.b16 %v315
    %v2616 = vunpack.c.l.b16 %v316
    %v2617 = vunpack.c.h.b16 %v316
    %v2618 = vunpack.c.l.b16 %v317
    %v2619 = vunpack.c.h.b16 %v317
    %v2620 = vunpack.c.l.b16 %v318
    %v2621 = vunpack.c.h.b16 %v318
    %v2622 = vunpack.c.l.b16 %v319
    %v2623 = vunpack.c.h.b16 %v319
    %v2624 = vunpack.c.l.b16 %v320
    %v2625 = vunpack.c.h.b16 %v320
    %v2626 = vunpack.c.l.b16 %v321
    %v2627 = vunpack.c.h.b16 %v321
    %v2628 = vunpack.c.l.b16 %v322
    %v2629 = vunpack.c.h.b16 %v322
    %v2630 = vunpack.c.l.b16 %v323
    %v2631 = vunpack.c.h.b16 %v323
    %v2632 = vunpack.c.l.b16 %v324
    %v2633 = vunpack.c.h.b16 %v324
    %v2634 = vunpack.c.l.b16 %v325
    %v2635 = vunpack.c.h.b16 %v325
    %v2636 = vunpack.c.l.b16 %v326
    %v2637 = vunpack.c.h.b16 %v326
    %v2638 = vunpack.c.l.b16 %v327
    %v2639 = vunpack.c.h.b16 %v327
    %v2640 = vunpack.c.l.b16 %v328
    %v2641 = vunpack.c.h.b16 %v328
    %v2642 = vunpack.c.l.b16 %v329
    %v2643 = vunpack.c.h.b16 %v329
    %v2644 = vunpack.c.l.b16 %v330
    %v2645 = vunpack.c.h.b16 %v330
    %v2646 = vunpack.c.l.b16 %v331
    %v2647 = vunpack.c.h.b16 %v331
    %v2648 = vunpack.c.l.b16 %v332
    %v2649 = vunpack.c.h.b16 %v332
    %v2650 = vunpack.c.l.b16 %v333
    %v2651 = vunpack.c.h.b16 %v333
    %v2652 = vunpack.c.l.b16 %v334
    %v2653 = vunpack.c.h.b16 %v334
    %v2654 = vunpack.c.l.b16 %v335
    %v2655 = vunpack.c.h.b16 %v335
    %v2656 = vunpack.c.l.b16 %v336
    %v2657 = vunpack.c.h.b16 %v336
    %v2658 = vunpack.c.l.b16 %v337
    %v2659 = vunpack.c.h.b16 %v337
    %v2660 = vunpack.c.l.b16 %v338
    %v2661 = vunpack.c.h.b16 %v338
    %v2662 = vunpack.c.l.b16 %v339
    %v2663 = vunpack.c.h.b16 %v339
    %v2664 = vunpack.c.l.b16 %v340
    %v2665 = vunpack.c.h.b16 %v340
    %v2666 = vunpack.c.l.b16 %v341
    %v2667 = vunpack.c.h.b16 %v341
    %v2668 = vunpack.c.l.b16 %v342
    %v2669 = vunpack.c.h.b16 %v342
    %v2670 = vunpack.c.l.b16 %v343
    %v2671 = vunpack.c.h.b16 %v343
    %v2672 = vunpack.c.l.b16 %v344
    %v2673 = vunpack.c.h.b16 %v344
    %v2674 = vunpack.c.l.b16 %v345
    %v2675 = vunpack.c.h.b16 %v345
    %v2676 = vunpack.c.l.b16 %v346
    %v2677 = vunpack.c.h.b16 %v346
    %v2678 = vunpack.c.l.b16 %v347
    %v2679 = vunpack.c.h.b16 %v347
    %v2680 = vunpack.c.l.b16 %v348
    %v2681 = vunpack.c.h.b16 %v348
    %v2682 = vunpack.c.l.b16 %v349
    %v2683 = vunpack.c.h.b16 %v349
    %v2684 = vunpack.c.l.b16 %v350
    %v2685 = vunpack.c.h.b16 %v350
    %v2686 = vunpack.c.l.b16 %v351
    %v2687 = vunpack.c.h.b16 %v351
    %v2688 = vunpack.c.l.b16 %v352
    %v2689 = vunpack.c.h.b16 %v352
    %v2690 = vunpack.c.l.b16 %v353
    %v2691 = vunpack.c.h.b16 %v353
    %v2692 = vunpack.c.l.b16 %v354
    %v2693 = vunpack.c.h.b16 %v354
    %v2694 = vunpack.c.l.b16 %v355
    %v2695 = vunpack.c.h.b16 %v355
    %v2696 = vunpack.c.l.b16 %v356
    %v2697 = vunpack.c.h.b16 %v356
    %v2698 = vunpack.c.l.b16 %v357
    %v2699 = vunpack.c.h.b16 %v357
    %v2700 = vunpack.c.l.b16 %v358
    %v2701 = vunpack.c.h.b16 %v358
    %v2702 = vunpack.c.l.b16 %v359
    %v2703 = vunpack.c.h.b16 %v359
    %v2704 = vunpack.c.l.b16 %v360
    %v2705 = vunpack.c.h.b16 %v360
    %v2706 = vunpack.c.l.b16 %v361
    %v2707 = vunpack.c.h.b16 %v361
    %v2708 = vunpack.c.l.b16 %v362
    %v2709 = vunpack.c.h.b16 %v362
    %v2710 = vunpack.c.l.b16 %v363
    %v2711 = vunpack.c.h.b16 %v363
    %v2712 = vunpack.c.l.b16 %v364
    %v2713 = vunpack.c.h.b16 %v364
    %v2714 = vunpack.c.l.b16 %v365
    %v2715 = vunpack.c.h.b16 %v365
    %v2716 = vunpack.c.l.b16 %v366
    %v2717 = vunpack.c.h.b16 %v366
    %v2718 = vunpack.c.l.b16 %v367
    %v2719 = vunpack.c.h.b16 %v367
    %v2720 = vunpack.c.l.b16 %v368
    %v2721 = vunpack.c.h.b16 %v368
    %v2722 = vunpack.c.l.b16 %v369
    %v2723 = vunpack.c.h.b16 %v369
    %v2724 = vunpack.c.l.b16 %v370
    %v2725 = vunpack.c.h.b16 %v370
    %v2726 = vunpack.c.l.b16 %v371
    %v2727 = vunpack.c.h.b16 %v371
    %v2728 = vunpack.c.l.b16 %v372
    %v2729 = vunpack.c.h.b16 %v372
    %v2730 = vunpack.c.l.b16 %v373
    %v2731 = vunpack.c.h.b16 %v373
    %v2732 = vunpack.c.l.b16 %v374
    %v2733 = vunpack.c.h.b16 %v374
    %v2734 = vunpack.c.l.b16 %v375
    %v2735 = vunpack.c.h.b16 %v375
    %v2736 = vunpack.c.l.b16 %v376
    %v2737 = vunpack.c.h.b16 %v376
    %v2738 = vunpack.c.l.b16 %v377
    %v2739 = vunpack.c.h.b16 %v377
    %v2740 = vunpack.c.l.b16 %v378
    %v2741 = vunpack.c.h.b16 %v378
    %v2742 = vunpack.c.l.b16 %v379
    %v2743 = vunpack.c.h.b16 %v379
    %v2744 = vunpack.c.l.b16 %v380
    %v2745 = vunpack.c.h.b16 %v380
    %v2746 = vunpack.c.l.b16 %v381
    %v2747 = vunpack.c.h.b16 %v381
    %v2748 = vunpack.c.l.b16 %v382
    %v2749 = vunpack.c.h.b16 %v382
    %v2750 = vunpack.c.l.b16 %v383
    %v2751 = vunpack.c.h.b16 %v383
    %v2752 = vunpack.c.l.b16 %v384
    %v2753 = vunpack.c.h.b16 %v384
    %v2754 = vunpack.c.l.b16 %v385
    %v2755 = vunpack.c.h.b16 %v385
    %v2756 = vunpack.c.l.b16 %v386
    %v2757 = vunpack.c.h.b16 %v386
    %v2758 = vunpack.c.l.b16 %v387
    %v2759 = vunpack.c.h.b16 %v387
    %v2760 = vunpack.c.l.b16 %v388
    %v2761 = vunpack.c.h.b16 %v388
    %v2762 = vunpack.c.l.b16 %v389
    %v2763 = vunpack.c.h.b16 %v389
    %v2764 = vunpack.c.l.b16 %v390
    %v2765 = vunpack.c.h.b16 %v390
    %v2766 = vunpack.c.l.b16 %v391
    %v2767 = vunpack.c.h.b16 %v391
    %v2768 = vunpack.c.l.b16 %v392
    %v2769 = vunpack.c.h.b16 %v392
    %v2770 = vunpack.c.l.b16 %v393
    %v2771 = vunpack.c.h.b16 %v393
    %v2772 = vunpack.c.l.b16 %v394
    %v2773 = vunpack.c.h.b16 %v394
    %v2774 = vunpack.c.l.b16 %v395
    %v2775 = vunpack.c.h.b16 %v395
    %v2776 = vunpack.c.l.b16 %v396
    %v2777 = vunpack.c.h.b16 %v396
    %v2778 = vunpack.c.l.b16 %v397
    %v2779 = vunpack.c.h.b16 %v397
    %v2780 = vunpack.c.l.b16 %v398
    %v2781 = vunpack.c.h.b16 %v398
    %v2782 = vunpack.c.l.b16 %v399
    %v2783 = vunpack.c.h.b16 %v399
    %v2784 = vunpack.c.l.b16 %v400
    %v2785 = vunpack.c.h.b16 %v400
    %v2786 = vunpack.c.l.b16 %v401
    %v2787 = vunpack.c.h.b16 %v401
    %v2788 = vunpack.c.l.b16 %v402
    %v2789 = vunpack.c.h.b16 %v402
    %v2790 = vunpack.c.l.b16 %v403
    %v2791 = vunpack.c.h.b16 %v403
    %v2792 = vunpack.c.l.b16 %v404
    %v2793 = vunpack.c.h.b16 %v404
    %v2794 = vunpack.c.l.b16 %v405
    %v2795 = vunpack.c.h.b16 %v405
    %v2796 = vunpack.c.l.b16 %v406
    %v2797 = vunpack.c.h.b16 %v406
    %v2798 = vunpack.c.l.b16 %v407
    %v2799 = vunpack.c.h.b16 %v407
    %v2800 = vunpack.c.l.b16 %v408
    %v2801 = vunpack.c.h.b16 %v408
    %v2802 = vunpack.c.l.b16 %v409
    %v2803 = vunpack.c.h.b16 %v409
    %v2804 = vunpack.c.l.b16 %v410
    %v2805 = vunpack.c.h.b16 %v410
    %v2806 = vunpack.c.l.b16 %v411
    %v2807 = vunpack.c.h.b16 %v411
    %v2808 = vunpack.c.l.b16 %v412
    %v2809 = vunpack.c.h.b16 %v412
    %v2810 = vunpack.c.l.b16 %v413
    %v2811 = vunpack.c.h.b16 %v413
    %v2812 = vunpack.c.l.b16 %v414
    %v2813 = vunpack.c.h.b16 %v414
    %v2814 = vunpack.c.l.b16 %v415
    %v2815 = vunpack.c.h.b16 %v415
    %v2816 = vunpack.c.l.b16 %v416
    %v2817 = vunpack.c.h.b16 %v416
    %v2818 = vunpack.c.l.b16 %v417
    %v2819 = vunpack.c.h.b16 %v417
    %v2820 = vunpack.c.l.b16 %v418
    %v2821 = vunpack.c.h.b16 %v418
    %v2822 = vunpack.c.l.b16 %v419
    %v2823 = vunpack.c.h.b16 %v419
    %v2824 = vunpack.c.l.b16 %v420
    %v2825 = vunpack.c.h.b16 %v420
    %v2826 = vunpack.c.l.b16 %v421
    %v2827 = vunpack.c.h.b16 %v421
    %v2828 = vunpack.c.l.b16 %v422
    %v2829 = vunpack.c.h.b16 %v422
    %v2830 = vunpack.c.l.b16 %v423
    %v2831 = vunpack.c.h.b16 %v423
    %v2832 = vunpack.c.l.b16 %v424
    %v2833 = vunpack.c.h.b16 %v424
    %v2834 = vunpack.c.l.b16 %v425
    %v2835 = vunpack.c.h.b16 %v425
    %v2836 = vunpack.c.l.b16 %v426
    %v2837 = vunpack.c.h.b16 %v426
    %v2838 = vunpack.c.l.b16 %v427
    %v2839 = vunpack.c.h.b16 %v427
    %v2840 = vunpack.c.l.b16 %v428
    %v2841 = vunpack.c.h.b16 %v428
    %v2842 = vunpack.c.l.b16 %v429
    %v2843 = vunpack.c.h.b16 %v429
    %v2844 = vunpack.c.l.b16 %v430
    %v2845 = vunpack.c.h.b16 %v430
    %v2846 = vunpack.c.l.b16 %v431
    %v2847 = vunpack.c.h.b16 %v431
    %v2848 = vunpack.c.l.b16 %v432
    %v2849 = vunpack.c.h.b16 %v432
    %v2850 = vunpack.c.l.b16 %v433
    %v2851 = vunpack.c.h.b16 %v433
    %v2852 = vunpack.c.l.b16 %v434
    %v2853 = vunpack.c.h.b16 %v434
    %v2854 = vunpack.c.l.b16 %v435
    %v2855 = vunpack.c.h.b16 %v435
    %v2856 = vunpack.c.l.b16 %v436
    %v2857 = vunpack.c.h.b16 %v436
    %v2858 = vunpack.c.l.b16 %v437
    %v2859 = vunpack.c.h.b16 %v437
    %v2860 = vunpack.c.l.b16 %v438
    %v2861 = vunpack.c.h.b16 %v438
    %v2862 = vunpack.c.l.b16 %v439
    %v2863 = vunpack.c.h.b16 %v439
    %v2864 = vunpack.c.l.b16 %v440
    %v2865 = vunpack.c.h.b16 %v440
    %v2866 = vunpack.c.l.b16 %v441
    %v2867 = vunpack.c.h.b16 %v441
    %v2868 = vunpack.c.l.b16 %v442
    %v2869 = vunpack.c.h.b16 %v442
    %v2870 = vunpack.c.l.b16 %v443
    %v2871 = vunpack.c.h.b16 %v443
    %v2872 = vunpack.c.l.b16 %v444
    %v2873 = vunpack.c.h.b16 %v444
    %v2874 = vunpack.c.l.b16 %v445
    %v2875 = vunpack.c.h.b16 %v445
    %v2876 = vunpack.c.l.b16 %v446
    %v2877 = vunpack.c.h.b16 %v446
    %v2878 = vunpack.c.l.b16 %v447
    %v2879 = vunpack.c.h.b16 %v447
    %v2880 = vunpack.c.l.b16 %v448
    %v2881 = vunpack.c.h.b16 %v448
    %v2882 = vunpack.c.l.b16 %v449
    %v2883 = vunpack.c.h.b16 %v449
    %v2884 = vunpack.c.l.b16 %v450
    %v2885 = vunpack.c.h.b16 %v450
    %v2886 = vunpack.c.l.b16 %v451
    %v2887 = vunpack.c.h.b16 %v451
    %v2888 = vunpack.c.l.b16 %v452
    %v2889 = vunpack.c.h.b16 %v452
    %v2890 = vunpack.c.l.b16 %v453
    %v2891 = vunpack.c.h.b16 %v453
    %v2892 = vunpack.c.l.b16 %v454
    %v2893 = vunpack.c.h.b16 %v454
    %v2894 = vunpack.c.l.b16 %v455
    %v2895 = vunpack.c.h.b16 %v455
    %v2896 = vunpack.c.l.b16 %v456
    %v2897 = vunpack.c.h.b16 %v456
    %v2898 = vunpack.c.l.b16 %v457
    %v2899 = vunpack.c.h.b16 %v457
    %v2900 = vunpack.c.l.b16 %v458
    %v2901 = vunpack.c.h.b16 %v458
    %v2902 = vunpack.c.l.b16 %v459
    %v2903 = vunpack.c.h.b16 %v459
    %v2904 = vunpack.c.l.b16 %v460
    %v2905 = vunpack.c.h.b16 %v460
    %v2906 = vunpack.c.l.b16 %v461
    %v2907 = vunpack.c.h.b16 %v461
    %v2908 = vunpack.c.l.b16 %v462
    %v2909 = vunpack.c.h.b16 %v462
    %v2910 = vunpack.c.l.b16 %v463
    %v2911 = vunpack.c.h.b16 %v463
    %v2912 = vunpack.c.l.b16 %v464
    %v2913 = vunpack.c.h.b16 %v464
    %v2914 = vunpack.c.l.b16 %v465
    %v2915 = vunpack.c.h.b16 %v465
    %v2916 = vunpack.c.l.b16 %v466
    %v2917 = vunpack.c.h.b16 %v466
    %v2918 = vunpack.c.l.b16 %v467
    %v2919 = vunpack.c.h.b16 %v467
    %v2920 = vunpack.c.l.b16 %v468
    %v2921 = vunpack.c.h.b16 %v468
    %v2922 = vunpack.c.l.b16 %v469
    %v2923 = vunpack.c.h.b16 %v469
    %v2924 = vunpack.c.l.b16 %v470
    %v2925 = vunpack.c.h.b16 %v470
    %v2926 = vunpack.c.l.b16 %v471
    %v2927 = vunpack.c.h.b16 %v471
    %v2928 = vunpack.c.l.b16 %v472
    %v2929 = vunpack.c.h.b16 %v472
    %v2930 = vunpack.c.l.b16 %v473
    %v2931 = vunpack.c.h.b16 %v473
    %v2932 = vunpack.c.l.b16 %v474
    %v2933 = vunpack.c.h.b16 %v474
    %v2934 = vunpack.c.l.b16 %v475
    %v2935 = vunpack.c.h.b16 %v475
    %v2936 = vunpack.c.l.b16 %v476
    %v2937 = vunpack.c.h.b16 %v476
    %v2938 = vunpack.c.l.b16 %v477
    %v2939 = vunpack.c.h.b16 %v477
    %v2940 = vunpack.c.l.b16 %v478
    %v2941 = vunpack.c.h.b16 %v478
    %v2942 = vunpack.c.l.b16 %v479
    %v2943 = vunpack.c.h.b16 %v479
    %v2944 = vunpack.c.l.b16 %v480
    %v2945 = vunpack.c.h.b16 %v480
    %v2946 = vunpack.c.l.b16 %v481
    %v2947 = vunpack.c.h.b16 %v481
    %v2948 = vunpack.c.l.b16 %v482
    %v2949 = vunpack.c.h.b16 %v482
    %v2950 = vunpack.c.l.b16 %v483
    %v2951 = vunpack.c.h.b16 %v483
    %v2952 = vunpack.c.l.b16 %v484
    %v2953 = vunpack.c.h.b16 %v484
    %v2954 = vunpack.c.l.b16 %v485
    %v2955 = vunpack.c.h.b16 %v485
    %v2956 = vunpack.c.l.b16 %v486
    %v2957 = vunpack.c.h.b16 %v486
    %v2958 = vunpack.c.l.b16 %v487
    %v2959 = vunpack.c.h.b16 %v487
    %v2960 = vunpack.c.l.b16 %v488
    %v2961 = vunpack.c.h.b16 %v488
    %v2962 = vunpack.c.l.b16 %v489
    %v2963 = vunpack.c.h.b16 %v489
    %v2964 = vunpack.c.l.b16 %v490
    %v2965 = vunpack.c.h.b16 %v490
    %v2966 = vunpack.c.l.b16 %v491
    %v2967 = vunpack.c.h.b16 %v491
    %v2968 = vunpack.c.l.b16 %v492
    %v2969 = vunpack.c.h.b16 %v492
    %v2970 = vunpack.c.l.b16 %v493
    %v2971 = vunpack.c.h.b16 %v493
    %v2972 = vunpack.c.l.b16 %v494
    %v2973 = vunpack.c.h.b16 %v494
    %v2974 = vunpack.c.l.b16 %v495
    %v2975 = vunpack.c.h.b16 %v495
    %v2976 = vunpack.c.l.b16 %v496
    %v2977 = vunpack.c.h.b16 %v496
    %v2978 = vunpack.c.l.b16 %v497
    %v2979 = vunpack.c.h.b16 %v497
    %v2980 = vunpack.c.l.b16 %v498
    %v2981 = vunpack.c.h.b16 %v498
    %v2982 = vunpack.c.l.b16 %v499
    %v2983 = vunpack.c.h.b16 %v499
    %v2984 = vunpack.c.l.b16 %v500
    %v2985 = vunpack.c.h.b16 %v500
    %v2986 = vunpack.c.l.b16 %v501
    %v2987 = vunpack.c.h.b16 %v501
    %v2988 = vunpack.c.l.b16 %v502
    %v2989 = vunpack.c.h.b16 %v502
    %v2990 = vunpack.c.l.b16 %v503
    %v2991 = vunpack.c.h.b16 %v503
    %v2992 = vunpack.c.l.b16 %v504
    %v2993 = vunpack.c.h.b16 %v504
    %v2994 = vunpack.c.l.b16 %v505
    %v2995 = vunpack.c.h.b16 %v505
    %v2996 = vunpack.c.l.b16 %v506
    %v2997 = vunpack.c.h.b16 %v506
    %v2998 = vunpack.c.l.b16 %v507
    %v2999 = vunpack.c.h.b16 %v507
    %v3000 = vunpack.c.l.b16 %v508
    %v3001 = vunpack.c.h.b16 %v508
    %v3002 = vunpack.c.l.b16 %v509
    %v3003 = vunpack.c.h.b16 %v509
    %v3004 = vunpack.c.l.b16 %v510
    %v3005 = vunpack.c.h.b16 %v510
    %v3006 = vunpack.c.l.b16 %v511
    %v3007 = vunpack.c.h.b16 %v511
    %v3008 = vunpack.c.l.b16 %v512
    %v3009 = vunpack.c.h.b16 %v512
    %v3010 = vunpack.c.l.b16 %v513
    %v3011 = vunpack.c.h.b16 %v513
    %v3012 = vunpack.c.l.b16 %v514
    %v3013 = vunpack.c.h.b16 %v514
    %v3014 = vunpack.c.l.b16 %v515
    %v3015 = vunpack.c.h.b16 %v515
    %v3016 = vunpack.c.l.b16 %v516
    %v3017 = vunpack.c.h.b16 %v516
    %v3018 = vunpack.c.l.b16 %v517
    %v3019 = vunpack.c.h.b16 %v517
    %v3020 = vunpack.c.l.b16 %v518
    %v3021 = vunpack.c.h.b16 %v518
    %v3022 = vunpack.c.l.b16 %v519
    %v3023 = vunpack.c.h.b16 %v519
    %v3024 = vunpack.c.l.b16 %v520
    %v3025 = vunpack.c.h.b16 %v520
    %v3026 = vunpack.c.l.b16 %v521
    %v3027 = vunpack.c.h.b16 %v521
    %v3028 = vunpack.c.l.b16 %v522
    %v3029 = vunpack.c.h.b16 %v522
    %v3030 = vunpack.c.l.b16 %v523
    %v3031 = vunpack.c.h.b16 %v523
    %v3032 = vunpack.c.l.b16 %v524
    %v3033 = vunpack.c.h.b16 %v524
    %v3034 = vunpack.c.l.b16 %v525
    %v3035 = vunpack.c.h.b16 %v525
    %v3036 = vunpack.c.l.b16 %v526
    %v3037 = vunpack.c.h.b16 %v526
    %v3038 = vunpack.c.l.b16 %v527
    %v3039 = vunpack.c.h.b16 %v527
    %v3040 = vunpack.c.l.b16 %v528
    %v3041 = vunpack.c.h.b16 %v528
    %v3042 = vunpack.c.l.b16 %v529
    %v3043 = vunpack.c.h.b16 %v529
    %v3044 = vunpack.c.l.b16 %v530
    %v3045 = vunpack.c.h.b16 %v530
    %v3046 = vunpack.c.l.b16 %v531
    %v3047 = vunpack.c.h.b16 %v531
    %v3048 = vunpack.c.l.b16 %v532
    %v3049 = vunpack.c.h.b16 %v532
    %v3050 = vunpack.c.l.b16 %v533
    %v3051 = vunpack.c.h.b16 %v533
    %v3052 = vunpack.c.l.b16 %v534
    %v3053 = vunpack.c.h.b16 %v534
    %v3054 = vunpack.c.l.b16 %v535
    %v3055 = vunpack.c.h.b16 %v535
    %v3056 = vunpack.c.l.b16 %v536
    %v3057 = vunpack.c.h.b16 %v536
    %v3058 = vunpack.c.l.b16 %v537
    %v3059 = vunpack.c.h.b16 %v537
    %v3060 = vunpack.c.l.b16 %v538
    %v3061 = vunpack.c.h.b16 %v538
    %v3062 = vunpack.c.l.b16 %v539
    %v3063 = vunpack.c.h.b16 %v539
    %v3064 = vunpack.c.l.b16 %v540
    %v3065 = vunpack.c.h.b16 %v540
    %v3066 = vunpack.c.l.b16 %v541
    %v3067 = vunpack.c.h.b16 %v541
    %v3068 = vunpack.c.l.b16 %v542
    %v3069 = vunpack.c.h.b16 %v542
    %v3070 = vunpack.c.l.b16 %v543
    %v3071 = vunpack.c.h.b16 %v543
    %v3072 = vunpack.c.l.b16 %v544
    %v3073 = vunpack.c.h.b16 %v544
    %v3074 = vunpack.c.l.b16 %v545
    %v3075 = vunpack.c.h.b16 %v545
    %v3076 = vunpack.c.l.b16 %v546
    %v3077 = vunpack.c.h.b16 %v546
    %v3078 = vunpack.c.l.b16 %v547
    %v3079 = vunpack.c.h.b16 %v547
    %v3080 = vunpack.c.l.b16 %v548
    %v3081 = vunpack.c.h.b16 %v548
    %v3082 = vunpack.c.l.b16 %v549
    %v3083 = vunpack.c.h.b16 %v549
    %v3084 = vunpack.c.l.b16 %v550
    %v3085 = vunpack.c.h.b16 %v550
    %v3086 = vunpack.c.l.b16 %v551
    %v3087 = vunpack.c.h.b16 %v551
    %v3088 = vunpack.c.l.b16 %v552
    %v3089 = vunpack.c.h.b16 %v552
    %v3090 = vunpack.c.l.b16 %v553
    %v3091 = vunpack.c.h.b16 %v553
    %v3092 = vunpack.c.l.b16 %v554
    %v3093 = vunpack.c.h.b16 %v554
    %v3094 = vunpack.c.l.b16 %v555
    %v3095 = vunpack.c.h.b16 %v555
    %v3096 = vunpack.c.l.b16 %v556
    %v3097 = vunpack.c.h.b16 %v556
    %v3098 = vunpack.c.l.b16 %v557
    %v3099 = vunpack.c.h.b16 %v557
    %v3100 = vunpack.c.l.b16 %v558
    %v3101 = vunpack.c.h.b16 %v558
    %v3102 = vunpack.c.l.b16 %v559
    %v3103 = vunpack.c.h.b16 %v559
    %v3104 = vunpack.c.l.b16 %v560
    %v3105 = vunpack.c.h.b16 %v560
    %v3106 = vunpack.c.l.b16 %v561
    %v3107 = vunpack.c.h.b16 %v561
    %v3108 = vunpack.c.l.b16 %v562
    %v3109 = vunpack.c.h.b16 %v562
    %v3110 = vunpack.c.l.b16 %v563
    %v3111 = vunpack.c.h.b16 %v563
    %v3112 = vunpack.c.l.b16 %v564
    %v3113 = vunpack.c.h.b16 %v564
    %v3114 = vunpack.c.l.b16 %v565
    %v3115 = vunpack.c.h.b16 %v565
    %v3116 = vunpack.c.l.b16 %v566
    %v3117 = vunpack.c.h.b16 %v566
    %v3118 = vunpack.c.l.b16 %v567
    %v3119 = vunpack.c.h.b16 %v567
    %v3120 = vunpack.c.l.b16 %v568
    %v3121 = vunpack.c.h.b16 %v568
    %v3122 = vunpack.c.l.b16 %v569
    %v3123 = vunpack.c.h.b16 %v569
    %v3124 = vunpack.c.l.b16 %v570
    %v3125 = vunpack.c.h.b16 %v570
    %v3126 = vunpack.c.l.b16 %v571
    %v3127 = vunpack.c.h.b16 %v571
    %v3128 = vunpack.c.l.b16 %v572
    %v3129 = vunpack.c.h.b16 %v572
    %v3130 = vunpack.c.l.b16 %v573
    %v3131 = vunpack.c.h.b16 %v573
    %v3132 = vunpack.c.l.b16 %v574
    %v3133 = vunpack.c.h.b16 %v574
    %v3134 = vunpack.c.l.b16 %v575
    %v3135 = vunpack.c.h.b16 %v575
    %v3136 = vunpack.c.l.b16 %v576
    %v3137 = vunpack.c.h.b16 %v576
    %v3138 = vunpack.c.l.b16 %v577
    %v3139 = vunpack.c.h.b16 %v577
    %v3140 = vunpack.c.l.b16 %v578
    %v3141 = vunpack.c.h.b16 %v578
    %v3142 = vunpack.c.l.b16 %v579
    %v3143 = vunpack.c.h.b16 %v579
    %v3144 = vunpack.c.l.b16 %v580
    %v3145 = vunpack.c.h.b16 %v580
    %v3146 = vunpack.c.l.b16 %v581
    %v3147 = vunpack.c.h.b16 %v581
    %v3148 = vunpack.c.l.b16 %v582
    %v3149 = vunpack.c.h.b16 %v582
    %v3150 = vunpack.c.l.b16 %v583
    %v3151 = vunpack.c.h.b16 %v583
    %v3152 = vunpack.c.l.b16 %v584
    %v3153 = vunpack.c.h.b16 %v584
    %v3154 = vunpack.c.l.b16 %v585
    %v3155 = vunpack.c.h.b16 %v585
    %v3156 = vunpack.c.l.b16 %v586
    %v3157 = vunpack.c.h.b16 %v586
    %v3158 = vunpack.c.l.b16 %v587
    %v3159 = vunpack.c.h.b16 %v587
    %v3160 = vunpack.c.l.b16 %v588
    %v3161 = vunpack.c.h.b16 %v588
    %v3162 = vunpack.c.l.b16 %v589
    %v3163 = vunpack.c.h.b16 %v589
    %v3164 = vunpack.c.l.b16 %v590
    %v3165 = vunpack.c.h.b16 %v590
    %v3166 = vunpack.c.l.b16 %v591
    %v3167 = vunpack.c.h.b16 %v591
    %v3168 = vunpack.c.l.b16 %v592
    %v3169 = vunpack.c.h.b16 %v592
    %v3170 = vunpack.c.l.b16 %v593
    %v3171 = vunpack.c.h.b16 %v593
    %v3172 = vunpack.c.l.b16 %v594
    %v3173 = vunpack.c.h.b16 %v594
    %v3174 = vunpack.c.l.b16 %v595
    %v3175 = vunpack.c.h.b16 %v595
    %v3176 = vunpack.c.l.b16 %v596
    %v3177 = vunpack.c.h.b16 %v596
    %v3178 = vunpack.c.l.b16 %v597
    %v3179 = vunpack.c.h.b16 %v597
    %v3180 = vunpack.c.l.b16 %v598
    %v3181 = vunpack.c.h.b16 %v598
    %v3182 = vunpack.c.l.b16 %v599
    %v3183 = vunpack.c.h.b16 %v599
    %v3184 = vunpack.c.l.b16 %v600
    %v3185 = vunpack.c.h.b16 %v600
    %v3186 = vunpack.c.l.b16 %v601
    %v3187 = vunpack.c.h.b16 %v601
    %v3188 = vunpack.c.l.b16 %v602
    %v3189 = vunpack.c.h.b16 %v602
    %v3190 = vunpack.c.l.b16 %v603
    %v3191 = vunpack.c.h.b16 %v603
    %v3192 = vunpack.c.l.b16 %v604
    %v3193 = vunpack.c.h.b16 %v604
    %v3194 = vunpack.c.l.b16 %v605
    %v3195 = vunpack.c.h.b16 %v605
    %v3196 = vunpack.c.l.b16 %v606
    %v3197 = vunpack.c.h.b16 %v606
    %v3198 = vunpack.c.l.b16 %v607
    %v3199 = vunpack.c.h.b16 %v607
    %v3200 = vunpack.c.l.b16 %v608
    %v3201 = vunpack.c.h.b16 %v608
    %v3202 = vunpack.c.l.b16 %v609
    %v3203 = vunpack.c.h.b16 %v609
    %v3204 = vunpack.c.l.b16 %v610
    %v3205 = vunpack.c.h.b16 %v610
    %v3206 = vunpack.c.l.b16 %v611
    %v3207 = vunpack.c.h.b16 %v611
    %v3208 = vunpack.c.l.b16 %v612
    %v3209 = vunpack.c.h.b16 %v612
    %v3210 = vunpack.c.l.b16 %v613
    %v3211 = vunpack.c.h.b16 %v613
    %v3212 = vunpack.c.l.b16 %v614
    %v3213 = vunpack.c.h.b16 %v614
    %v3214 = vunpack.c.l.b16 %v615
    %v3215 = vunpack.c.h.b16 %v615
    %v3216 = vunpack.c.l.b16 %v616
    %v3217 = vunpack.c.h.b16 %v616
    %v3218 = vunpack.c.l.b16 %v617
    %v3219 = vunpack.c.h.b16 %v617
    %v3220 = vunpack.c.l.b16 %v618
    %v3221 = vunpack.c.h.b16 %v618
    %v3222 = vunpack.c.l.b16 %v619
    %v3223 = vunpack.c.h.b16 %v619
    %v3224 = vunpack.c.l.b16 %v620
    %v3225 = vunpack.c.h.b16 %v620
    %v3226 = vunpack.c.l.b16 %v621
    %v3227 = vunpack.c.h.b16 %v621
    %v3228 = vunpack.c.l.b16 %v622
    %v3229 = vunpack.c.h.b16 %v622
    %v3230 = vunpack.c.l.b16 %v623
    %v3231 = vunpack.c.h.b16 %v623
    %v3232 = vunpack.c.l.b16 %v624
    %v3233 = vunpack.c.h.b16 %v624
    %v3234 = vunpack.c.l.b16 %v625
    %v3235 = vunpack.c.h.b16 %v625
    %v3236 = vunpack.c.l.b16 %v626
    %v3237 = vunpack.c.h.b16 %v626
    %v3238 = vunpack.c.l.b16 %v627
    %v3239 = vunpack.c.h.b16 %v627
    %v3240 = vunpack.c.l.b16 %v628
    %v3241 = vunpack.c.h.b16 %v628
    %v3242 = vunpack.c.l.b16 %v629
    %v3243 = vunpack.c.h.b16 %v629
    %v3244 = vunpack.c.l.b16 %v630
    %v3245 = vunpack.c.h.b16 %v630
    %v3246 = vunpack.c.l.b16 %v631
    %v3247 = vunpack.c.h.b16 %v631
    %v3248 = vunpack.c.l.b16 %v632
    %v3249 = vunpack.c.h.b16 %v632
    %v3250 = vunpack.c.l.b16 %v633
    %v3251 = vunpack.c.h.b16 %v633
    %v3252 = vunpack.c.l.b16 %v634
    %v3253 = vunpack.c.h.b16 %v634
    %v3254 = vunpack.c.l.b16 %v635
    %v3255 = vunpack.c.h.b16 %v635
    %v3256 = vunpack.c.l.b16 %v636
    %v3257 = vunpack.c.h.b16 %v636
    %v3258 = vunpack.c.l.b16 %v637
    %v3259 = vunpack.c.h.b16 %v637
    %v3260 = vunpack.c.l.b16 %v638
    %v3261 = vunpack.c.h.b16 %v638
    %v3262 = vunpack.c.l.b16 %v639
    %v3263 = vunpack.c.h.b16 %v639
    %v3264 = vunpack.c.l.b16 %v640
    %v3265 = vunpack.c.h.b16 %v640
    %v3266 = vunpack.c.l.b16 %v641
    %v3267 = vunpack.c.h.b16 %v641
    %v3268 = vunpack.c.l.b16 %v642
    %v3269 = vunpack.c.h.b16 %v642
    %v3270 = vunpack.c.l.b16 %v643
    %v3271 = vunpack.c.h.b16 %v643
    %v3272 = vunpack.c.l.b16 %v644
    %v3273 = vunpack.c.h.b16 %v644
    %v3274 = vunpack.c.l.b16 %v645
    %v3275 = vunpack.c.h.b16 %v645
    %v3276 = vunpack.c.l.b16 %v646
    %v3277 = vunpack.c.h.b16 %v646
    %v3278 = vunpack.c.l.b16 %v647
    %v3279 = vunpack.c.h.b16 %v647
    %v3280 = vunpack.c.l.b16 %v648
    %v3281 = vunpack.c.h.b16 %v648
    %v3282 = vunpack.c.l.b16 %v649
    %v3283 = vunpack.c.h.b16 %v649
    %v3284 = vunpack.c.l.b16 %v650
    %v3285 = vunpack.c.h.b16 %v650
    %v3286 = vunpack.c.l.b16 %v651
    %v3287 = vunpack.c.h.b16 %v651
    %v3288 = vunpack.c.l.b16 %v652
    %v3289 = vunpack.c.h.b16 %v652
    %v3290 = vunpack.c.l.b16 %v653
    %v3291 = vunpack.c.h.b16 %v653
    %v3292 = vunpack.c.l.b16 %v654
    %v3293 = vunpack.c.h.b16 %v654
    %v3294 = vunpack.c.l.b16 %v655
    %v3295 = vunpack.c.h.b16 %v655
    %v3296 = vunpack.c.l.b16 %v656
    %v3297 = vunpack.c.h.b16 %v656
    %v3298 = vunpack.c.l.b16 %v657
    %v3299 = vunpack.c.h.b16 %v657
    %v3300 = vunpack.c.l.b16 %v658
    %v3301 = vunpack.c.h.b16 %v658
    %v3302 = vunpack.c.l.b16 %v659
    %v3303 = vunpack.c.h.b16 %v659
    %v3304 = vunpack.c.l.b16 %v660
    %v3305 = vunpack.c.h.b16 %v660
    %v3306 = vunpack.c.l.b16 %v661
    %v3307 = vunpack.c.h.b16 %v661
    %v3308 = vunpack.c.l.b16 %v662
    %v3309 = vunpack.c.h.b16 %v662
    %v3310 = vunpack.c.l.b16 %v663
    %v3311 = vunpack.c.h.b16 %v663
    %v3312 = vunpack.c.l.b16 %v664
    %v3313 = vunpack.c.h.b16 %v664
    %v3314 = vunpack.c.l.b16 %v665
    %v3315 = vunpack.c.h.b16 %v665
    %v3316 = vunpack.c.l.b16 %v666
    %v3317 = vunpack.c.h.b16 %v666
    %v3318 = vunpack.c.l.b16 %v667
    %v3319 = vunpack.c.h.b16 %v667
    %v3320 = vunpack.c.l.b16 %v668
    %v3321 = vunpack.c.h.b16 %v668
    %v3322 = vunpack.c.l.b16 %v669
    %v3323 = vunpack.c.h.b16 %v669
    %v3324 = vunpack.c.l.b16 %v670
    %v3325 = vunpack.c.h.b16 %v670
    %v3326 = vunpack.c.l.b16 %v671
    %v3327 = vunpack.c.h.b16 %v671
    %v3328 = vunpack.c.l.b16 %v672
    %v3329 = vunpack.c.h.b16 %v672
    %v3330 = vunpack.c.l.b16 %v673
    %v3331 = vunpack.c.h.b16 %v673
    %v3332 = vunpack.c.l.b16 %v674
    %v3333 = vunpack.c.h.b16 %v674
    %v3334 = vunpack.c.l.b16 %v675
    %v3335 = vunpack.c.h.b16 %v675
    %v3336 = vunpack.c.l.b16 %v676
    %v3337 = vunpack.c.h.b16 %v676
    %v3338 = vunpack.c.l.b16 %v677
    %v3339 = vunpack.c.h.b16 %v677
    %v3340 = vunpack.c.l.b16 %v678
    %v3341 = vunpack.c.h.b16 %v678
    %v3342 = vunpack.c.l.b16 %v679
    %v3343 = vunpack.c.h.b16 %v679
    %v3344 = vunpack.c.l.b16 %v680
    %v3345 = vunpack.c.h.b16 %v680
    %v3346 = vunpack.c.l.b16 %v681
    %v3347 = vunpack.c.h.b16 %v681
    %v3348 = vunpack.c.l.b16 %v682
    %v3349 = vunpack.c.h.b16 %v682
    %v3350 = vunpack.c.l.b16 %v683
    %v3351 = vunpack.c.h.b16 %v683
    %v3352 = vunpack.c.l.b16 %v684
    %v3353 = vunpack.c.h.b16 %v684
    %v3354 = vunpack.c.l.b16 %v685
    %v3355 = vunpack.c.h.b16 %v685
    %v3356 = vunpack.c.l.b16 %v686
    %v3357 = vunpack.c.h.b16 %v686
    %v3358 = vunpack.c.l.b16 %v687
    %v3359 = vunpack.c.h.b16 %v687
    %v3360 = vunpack.c.l.b16 %v688
    %v3361 = vunpack.c.h.b16 %v688
    %v3362 = vunpack.c.l.b16 %v689
    %v3363 = vunpack.c.h.b16 %v689
    %v3364 = vunpack.c.l.b16 %v690
    %v3365 = vunpack.c.h.b16 %v690
    %v3366 = vunpack.c.l.b16 %v691
    %v3367 = vunpack.c.h.b16 %v691
    %v3368 = vunpack.c.l.b16 %v692
    %v3369 = vunpack.c.h.b16 %v692
    %v3370 = vunpack.c.l.b16 %v693
    %v3371 = vunpack.c.h.b16 %v693
    %v3372 = vunpack.c.l.b16 %v694
    %v3373 = vunpack.c.h.b16 %v694
    %v3374 = vunpack.c.l.b16 %v695
    %v3375 = vunpack.c.h.b16 %v695
    %v3376 = vunpack.c.l.b16 %v696
    %v3377 = vunpack.c.h.b16 %v696
    %v3378 = vunpack.c.l.b16 %v697
    %v3379 = vunpack.c.h.b16 %v697
    %v3380 = vunpack.c.l.b16 %v698
    %v3381 = vunpack.c.h.b16 %v698
    %v3382 = vunpack.c.l.b16 %v699
    %v3383 = vunpack.c.h.b16 %v699
    %v3384 = vunpack.c.l.b16 %v700
    %v3385 = vunpack.c.h.b16 %v700
    %v3386 = vunpack.c.l.b16 %v701
    %v3387 = vunpack.c.h.b16 %v701
    %v3388 = vunpack.c.l.b16 %v702
    %v3389 = vunpack.c.h.b16 %v702
    %v3390 = vunpack.c.l.b16 %v703
    %v3391 = vunpack.c.h.b16 %v703
    %v3392 = vunpack.c.l.b16 %v704
    %v3393 = vunpack.c.h.b16 %v704
    %v3394 = vunpack.c.l.b16 %v705
    %v3395 = vunpack.c.h.b16 %v705
    %v3396 = vunpack.c.l.b16 %v706
    %v3397 = vunpack.c.h.b16 %v706
    %v3398 = vunpack.c.l.b16 %v707
    %v3399 = vunpack.c.h.b16 %v707
    %v3400 = vunpack.c.l.b16 %v708
    %v3401 = vunpack.c.h.b16 %v708
    %v3402 = vunpack.c.l.b16 %v709
    %v3403 = vunpack.c.h.b16 %v709
    %v3404 = vunpack.c.l.b16 %v710
    %v3405 = vunpack.c.h.b16 %v710
    %v3406 = vunpack.c.l.b16 %v711
    %v3407 = vunpack.c.h.b16 %v711
    %v3408 = vunpack.c.l.b16 %v712
    %v3409 = vunpack.c.h.b16 %v712
    %v3410 = vunpack.c.l.b16 %v713
    %v3411 = vunpack.c.h.b16 %v713
    %v3412 = vunpack.c.l.b16 %v714
    %v3413 = vunpack.c.h.b16 %v714
    %v3414 = vunpack.c.l.b16 %v715
    %v3415 = vunpack.c.h.b16 %v715
    %v3416 = vunpack.c.l.b16 %v716
    %v3417 = vunpack.c.h.b16 %v716
    %v3418 = vunpack.c.l.b16 %v717
    %v3419 = vunpack.c.h.b16 %v717
    %v3420 = vunpack.c.l.b16 %v718
    %v3421 = vunpack.c.h.b16 %v718
    %v3422 = vunpack.c.l.b16 %v719
    %v3423 = vunpack.c.h.b16 %v719
    %v3424 = vunpack.c.l.b16 %v720
    %v3425 = vunpack.c.h.b16 %v720
    %v3426 = vunpack.c.l.b16 %v721
    %v3427 = vunpack.c.h.b16 %v721
    %v3428 = vunpack.c.l.b16 %v722
    %v3429 = vunpack.c.h.b16 %v722
    %v3430 = vunpack.c.l.b16 %v723
    %v3431 = vunpack.c.h.b16 %v723
    %v3432 = vunpack.c.l.b16 %v724
    %v3433 = vunpack.c.h.b16 %v724
    %v3434 = vunpack.c.l.b16 %v725
    %v3435 = vunpack.c.h.b16 %v725
    %v3436 = vunpack.c.l.b16 %v726
    %v3437 = vunpack.c.h.b16 %v726
    %v3438 = vunpack.c.l.b16 %v727
    %v3439 = vunpack.c.h.b16 %v727
    %v3440 = vunpack.c.l.b16 %v728
    %v3441 = vunpack.c.h.b16 %v728
    %v3442 = vunpack.c.l.b16 %v729
    %v3443 = vunpack.c.h.b16 %v729
    %v3444 = vunpack.c.l.b16 %v730
    %v3445 = vunpack.c.h.b16 %v730
    %v3446 = vunpack.c.l.b16 %v731
    %v3447 = vunpack.c.h.b16 %v731
    %v3448 = vunpack.c.l.b16 %v732
    %v3449 = vunpack.c.h.b16 %v732
    %v3450 = vunpack.c.l.b16 %v733
    %v3451 = vunpack.c.h.b16 %v733
    %v3452 = vunpack.c.l.b16 %v734
    %v3453 = vunpack.c.h.b16 %v734
    %v3454 = vunpack.c.l.b16 %v735
    %v3455 = vunpack.c.h.b16 %v735
    %v3456 = vunpack.c.l.b16 %v736
    %v3457 = vunpack.c.h.b16 %v736
    %v3458 = vunpack.c.l.b16 %v737
    %v3459 = vunpack.c.h.b16 %v737
    %v3460 = vunpack.c.l.b16 %v738
    %v3461 = vunpack.c.h.b16 %v738
    %v3462 = vunpack.c.l.b16 %v739
    %v3463 = vunpack.c.h.b16 %v739
    %v3464 = vunpack.c.l.b16 %v740
    %v3465 = vunpack.c.h.b16 %v740
    %v3466 = vunpack.c.l.b16 %v741
    %v3467 = vunpack.c.h.b16 %v741
    %v3468 = vunpack.c.l.b16 %v742
    %v3469 = vunpack.c.h.b16 %v742
    %v3470 = vunpack.c.l.b16 %v743
    %v3471 = vunpack.c.h.b16 %v743
    %v3472 = vunpack.c.l.b16 %v744
    %v3473 = vunpack.c.h.b16 %v744
    %v3474 = vunpack.c.l.b16 %v745
    %v3475 = vunpack.c.h.b16 %v745
    %v3476 = vunpack.c.l.b16 %v746
    %v3477 = vunpack.c.h.b16 %v746
    %v3478 = vunpack.c.l.b16 %v747
    %v3479 = vunpack.c.h.b16 %v747
    %v3480 = vunpack.c.l.b16 %v748
    %v3481 = vunpack.c.h.b16 %v748
    %v3482 = vunpack.c.l.b16 %v749
    %v3483 = vunpack.c.h.b16 %v749
    %v3484 = vunpack.c.l.b16 %v750
    %v3485 = vunpack.c.h.b16 %v750
    %v3486 = vunpack.c.l.b16 %v751
    %v3487 = vunpack.c.h.b16 %v751
    %v3488 = vunpack.c.l.b16 %v752
    %v3489 = vunpack.c.h.b16 %v752
    %v3490 = vunpack.c.l.b16 %v753
    %v3491 = vunpack.c.h.b16 %v753
    %v3492 = vunpack.c.l.b16 %v754
    %v3493 = vunpack.c.h.b16 %v754
    %v3494 = vunpack.c.l.b16 %v755
    %v3495 = vunpack.c.h.b16 %v755
    %v3496 = vunpack.c.l.b16 %v756
    %v3497 = vunpack.c.h.b16 %v756
    %v3498 = vunpack.c.l.b16 %v757
    %v3499 = vunpack.c.h.b16 %v757
    %v3500 = vunpack.c.l.b16 %v758
    %v3501 = vunpack.c.h.b16 %v758
    %v3502 = vunpack.c.l.b16 %v759
    %v3503 = vunpack.c.h.b16 %v759
    %v3504 = vunpack.c.l.b16 %v760
    %v3505 = vunpack.c.h.b16 %v760
    %v3506 = vunpack.c.l.b16 %v761
    %v3507 = vunpack.c.h.b16 %v761
    %v3508 = vunpack.c.l.b16 %v762
    %v3509 = vunpack.c.h.b16 %v762
    %v3510 = vunpack.c.l.b16 %v763
    %v3511 = vunpack.c.h.b16 %v763
    %v3512 = vunpack.c.l.b16 %v764
    %v3513 = vunpack.c.h.b16 %v764
    %v3514 = vunpack.c.l.b16 %v765
    %v3515 = vunpack.c.h.b16 %v765
    %v3516 = vunpack.c.l.b16 %v766
    %v3517 = vunpack.c.h.b16 %v766
    %v3518 = vunpack.c.l.b16 %v767
    %v3519 = vunpack.c.h.b16 %v767
    %v3520 = vunpack.c.l.b16 %v768
    %v3521 = vunpack.c.h.b16 %v768
    %v3522 = vunpack.c.l.b16 %v769
    %v3523 = vunpack.c.h.b16 %v769
    %v3524 = vunpack.c.l.b16 %v770
    %v3525 = vunpack.c.h.b16 %v770
    %v3526 = vunpack.c.l.b16 %v771
    %v3527 = vunpack.c.h.b16 %v771
    %v3528 = vunpack.c.l.b16 %v772
    %v3529 = vunpack.c.h.b16 %v772
    %v3530 = vunpack.c.l.b16 %v773
    %v3531 = vunpack.c.h.b16 %v773
    %v3532 = vunpack.c.l.b16 %v774
    %v3533 = vunpack.c.h.b16 %v774
    %v3534 = vunpack.c.l.b16 %v775
    %v3535 = vunpack.c.h.b16 %v775
    %v3536 = vunpack.c.l.b16 %v776
    %v3537 = vunpack.c.h.b16 %v776
    %v3538 = vunpack.c.l.b16 %v777
    %v3539 = vunpack.c.h.b16 %v777
    %v3540 = vunpack.c.l.b16 %v778
    %v3541 = vunpack.c.h.b16 %v778
    %v3542 = vunpack.c.l.b16 %v779
    %v3543 = vunpack.c.h.b16 %v779
    %v3544 = vunpack.c.l.b16 %v780
    %v3545 = vunpack.c.h.b16 %v780
    %v3546 = vunpack.c.l.b16 %v781
    %v3547 = vunpack.c.h.b16 %v781
    %v3548 = vunpack.c.l.b16 %v782
    %v3549 = vunpack.c.h.b16 %v782
    %v3550 = vunpack.c.l.b16 %v783
    %v3551 = vunpack.c.h.b16 %v783
    %v3552 = vunpack.c.l.b16 %v784
    %v3553 = vunpack.c.h.b16 %v784
    %v3554 = vunpack.c.l.b16 %v785
    %v3555 = vunpack.c.h.b16 %v785
    %v3556 = vunpack.c.l.b16 %v786
    %v3557 = vunpack.c.h.b16 %v786
    %v3558 = vunpack.c.l.b16 %v787
    %v3559 = vunpack.c.h.b16 %v787
    %v3560 = vunpack.c.l.b16 %v788
    %v3561 = vunpack.c.h.b16 %v788
    %v3562 = vunpack.c.l.b16 %v789
    %v3563 = vunpack.c.h.b16 %v789
    %v3564 = vunpack.c.l.b16 %v790
    %v3565 = vunpack.c.h.b16 %v790
    %v3566 = vunpack.c.l.b16 %v791
    %v3567 = vunpack.c.h.b16 %v791
    %v3568 = vunpack.c.l.b16 %v792
    %v3569 = vunpack.c.h.b16 %v792
    %v3570 = vunpack.c.l.b16 %v793
    %v3571 = vunpack.c.h.b16 %v793
    %v3572 = vunpack.c.l.b16 %v794
    %v3573 = vunpack.c.h.b16 %v794
    %v3574 = vunpack.c.l.b16 %v795
    %v3575 = vunpack.c.h.b16 %v795
    %v3576 = vunpack.c.l.b16 %v796
    %v3577 = vunpack.c.h.b16 %v796
    %v3578 = vunpack.c.l.b16 %v797
    %v3579 = vunpack.c.h.b16 %v797
    %v3580 = vunpack.c.l.b16 %v798
    %v3581 = vunpack.c.h.b16 %v798
    %v3582 = vunpack.c.l.b16 %v799
    %v3583 = vunpack.c.h.b16 %v799
    %v3584 = vunpack.c.l.b16 %v800
    %v3585 = vunpack.c.h.b16 %v800
    %v3586 = vunpack.c.l.b16 %v801
    %v3587 = vunpack.c.h.b16 %v801
    %v3588 = vunpack.c.l.b16 %v802
    %v3589 = vunpack.c.h.b16 %v802
    %v3590 = vunpack.c.l.b16 %v803
    %v3591 = vunpack.c.h.b16 %v803
    %v3592 = vunpack.c.l.b16 %v804
    %v3593 = vunpack.c.h.b16 %v804
    %v3594 = vunpack.c.l.b16 %v805
    %v3595 = vunpack.c.h.b16 %v805
    %v3596 = vunpack.c.l.b16 %v806
    %v3597 = vunpack.c.h.b16 %v806
    %v3598 = vunpack.c.l.b16 %v807
    %v3599 = vunpack.c.h.b16 %v807
    %v3600 = vunpack.c.l.b16 %v808
    %v3601 = vunpack.c.h.b16 %v808
    %v3602 = vunpack.c.l.b16 %v809
    %v3603 = vunpack.c.h.b16 %v809
    %v3604 = vunpack.c.l.b16 %v810
    %v3605 = vunpack.c.h.b16 %v810
    %v3606 = vunpack.c.l.b16 %v811
    %v3607 = vunpack.c.h.b16 %v811
    %v3608 = vunpack.c.l.b16 %v812
    %v3609 = vunpack.c.h.b16 %v812
    %v3610 = vunpack.c.l.b16 %v813
    %v3611 = vunpack.c.h.b16 %v813
    %v3612 = vunpack.c.l.b16 %v814
    %v3613 = vunpack.c.h.b16 %v814
    %v3614 = vunpack.c.l.b16 %v815
    %v3615 = vunpack.c.h.b16 %v815
    %v3616 = vunpack.c.l.b16 %v816
    %v3617 = vunpack.c.h.b16 %v816
    %v3618 = vunpack.c.l.b16 %v817
    %v3619 = vunpack.c.h.b16 %v817
    %v3620 = vunpack.c.l.b16 %v818
    %v3621 = vunpack.c.h.b16 %v818
    %v3622 = vunpack.c.l.b16 %v819
    %v3623 = vunpack.c.h.b16 %v819
    %v3624 = vunpack.c.l.b16 %v820
    %v3625 = vunpack.c.h.b16 %v820
    %v3626 = vunpack.c.l.b16 %v821
    %v3627 = vunpack.c.h.b16 %v821
    %v3628 = vunpack.c.l.b16 %v822
    %v3629 = vunpack.c.h.b16 %v822
    %v3630 = vunpack.c.l.b16 %v823
    %v3631 = vunpack.c.h.b16 %v823
    %v3632 = vunpack.c.l.b16 %v824
    %v3633 = vunpack.c.h.b16 %v824
    %v3634 = vunpack.c.l.b16 %v825
    %v3635 = vunpack.c.h.b16 %v825
    %v3636 = vunpack.c.l.b16 %v826
    %v3637 = vunpack.c.h.b16 %v826
    %v3638 = vunpack.c.l.b16 %v827
    %v3639 = vunpack.c.h.b16 %v827
    %v3640 = vunpack.c.l.b16 %v828
    %v3641 = vunpack.c.h.b16 %v828
    %v3642 = vunpack.c.l.b16 %v829
    %v3643 = vunpack.c.h.b16 %v829
    %v3644 = vunpack.c.l.b16 %v830
    %v3645 = vunpack.c.h.b16 %v830
    %v3646 = vunpack.c.l.b16 %v831
    %v3647 = vunpack.c.h.b16 %v831
    %v3648 = vunpack.c.l.b16 %v832
    %v3649 = vunpack.c.h.b16 %v832
    %v3650 = vunpack.c.l.b16 %v833
    %v3651 = vunpack.c.h.b16 %v833
    %v3652 = vunpack.c.l.b16 %v834
    %v3653 = vunpack.c.h.b16 %v834
    %v3654 = vunpack.c.l.b16 %v835
    %v3655 = vunpack.c.h.b16 %v835
    %v3656 = vunpack.c.l.b16 %v836
    %v3657 = vunpack.c.h.b16 %v836
    %v3658 = vunpack.c.l.b16 %v837
    %v3659 = vunpack.c.h.b16 %v837
    %v3660 = vunpack.c.l.b16 %v838
    %v3661 = vunpack.c.h.b16 %v838
    %v3662 = vunpack.c.l.b16 %v839
    %v3663 = vunpack.c.h.b16 %v839
    %v3664 = vunpack.c.l.b16 %v840
    %v3665 = vunpack.c.h.b16 %v840
    %v3666 = vunpack.c.l.b16 %v841
    %v3667 = vunpack.c.h.b16 %v841
    %v3668 = vunpack.c.l.b16 %v842
    %v3669 = vunpack.c.h.b16 %v842
    %v3670 = vunpack.c.l.b16 %v843
    %v3671 = vunpack.c.h.b16 %v843
    %v3672 = vunpack.c.l.b16 %v844
    %v3673 = vunpack.c.h.b16 %v844
    %v3674 = vunpack.c.l.b16 %v845
    %v3675 = vunpack.c.h.b16 %v845
    %v3676 = vunpack.c.l.b16 %v846
    %v3677 = vunpack.c.h.b16 %v846
    %v3678 = vunpack.c.l.b16 %v847
    %v3679 = vunpack.c.h.b16 %v847
    %v3680 = vunpack.c.l.b16 %v848
    %v3681 = vunpack.c.h.b16 %v848
    %v3682 = vunpack.c.l.b16 %v849
    %v3683 = vunpack.c.h.b16 %v849
    %v3684 = vunpack.c.l.b16 %v850
    %v3685 = vunpack.c.h.b16 %v850
    %v3686 = vunpack.c.l.b16 %v851
    %v3687 = vunpack.c.h.b16 %v851
    %v3688 = vunpack.c.l.b16 %v852
    %v3689 = vunpack.c.h.b16 %v852
    %v3690 = vunpack.c.l.b16 %v853
    %v3691 = vunpack.c.h.b16 %v853
    %v3692 = vunpack.c.l.b16 %v854
    %v3693 = vunpack.c.h.b16 %v854
    %v3694 = vunpack.c.l.b16 %v855
    %v3695 = vunpack.c.h.b16 %v855
    %v3696 = vunpack.c.l.b16 %v856
    %v3697 = vunpack.c.h.b16 %v856
    %v3698 = vunpack.c.l.b16 %v857
    %v3699 = vunpack.c.h.b16 %v857
    %v3700 = vunpack.c.l.b16 %v858
    %v3701 = vunpack.c.h.b16 %v858
    %v3702 = vunpack.c.l.b16 %v859
    %v3703 = vunpack.c.h.b16 %v859
    %v3704 = vunpack.c.l.b16 %v860
    %v3705 = vunpack.c.h.b16 %v860
    %v3706 = vunpack.c.l.b16 %v861
    %v3707 = vunpack.c.h.b16 %v861
    %v3708 = vunpack.c.l.b16 %v862
    %v3709 = vunpack.c.h.b16 %v862
    %v3710 = vunpack.c.l.b16 %v863
    %v3711 = vunpack.c.h.b16 %v863
    %v3712 = vunpack.c.l.b16 %v864
    %v3713 = vunpack.c.h.b16 %v864
    %v3714 = vunpack.c.l.b16 %v865
    %v3715 = vunpack.c.h.b16 %v865
    %v3716 = vunpack.c.l.b16 %v866
    %v3717 = vunpack.c.h.b16 %v866
    %v3718 = vunpack.c.l.b16 %v867
    %v3719 = vunpack.c.h.b16 %v867
    %v3720 = vunpack.c.l.b16 %v868
    %v3721 = vunpack.c.h.b16 %v868
    %v3722 = vunpack.c.l.b16 %v869
    %v3723 = vunpack.c.h.b16 %v869
    %v3724 = vunpack.c.l.b16 %v870
    %v3725 = vunpack.c.h.b16 %v870
    %v3726 = vunpack.c.l.b16 %v871
    %v3727 = vunpack.c.h.b16 %v871
    %v3728 = vunpack.c.l.b16 %v872
    %v3729 = vunpack.c.h.b16 %v872
    %v3730 = vunpack.c.l.b16 %v873
    %v3731 = vunpack.c.h.b16 %v873
    %v3732 = vunpack.c.l.b16 %v874
    %v3733 = vunpack.c.h.b16 %v874
    %v3734 = vunpack.c.l.b16 %v875
    %v3735 = vunpack.c.h.b16 %v875
    %v3736 = vunpack.c.l.b16 %v876
    %v3737 = vunpack.c.h.b16 %v876
    %v3738 = vunpack.c.l.b16 %v877
    %v3739 = vunpack.c.h.b16 %v877
    %v3740 = vunpack.c.l.b16 %v878
    %v3741 = vunpack.c.h.b16 %v878
    %v3742 = vunpack.c.l.b16 %v879
    %v3743 = vunpack.c.h.b16 %v879
    %v3744 = vunpack.c.l.b16 %v880
    %v3745 = vunpack.c.h.b16 %v880
    %v3746 = vunpack.c.l.b16 %v881
    %v3747 = vunpack.c.h.b16 %v881
    %v3748 = vunpack.c.l.b16 %v882
    %v3749 = vunpack.c.h.b16 %v882
    %v3750 = vunpack.c.l.b16 %v883
    %v3751 = vunpack.c.h.b16 %v883
    %v3752 = vunpack.c.l.b16 %v884
    %v3753 = vunpack.c.h.b16 %v884
    %v3754 = vunpack.c.l.b16 %v885
    %v3755 = vunpack.c.h.b16 %v885
    %v3756 = vunpack.c.l.b16 %v886
    %v3757 = vunpack.c.h.b16 %v886
    %v3758 = vunpack.c.l.b16 %v887
    %v3759 = vunpack.c.h.b16 %v887
    %v3760 = vunpack.c.l.b16 %v888
    %v3761 = vunpack.c.h.b16 %v888
    %v3762 = vunpack.c.l.b16 %v889
    %v3763 = vunpack.c.h.b16 %v889
    %v3764 = vunpack.c.l.b16 %v890
    %v3765 = vunpack.c.h.b16 %v890
    %v3766 = vunpack.c.l.b16 %v891
    %v3767 = vunpack.c.h.b16 %v891
    %v3768 = vunpack.c.l.b16 %v892
    %v3769 = vunpack.c.h.b16 %v892
    %v3770 = vunpack.c.l.b16 %v893
    %v3771 = vunpack.c.h.b16 %v893
    %v3772 = vunpack.c.l.b16 %v894
    %v3773 = vunpack.c.h.b16 %v894
    %v3774 = vunpack.c.l.b16 %v895
    %v3775 = vunpack.c.h.b16 %v895
    %v3776 = vunpack.c.l.b16 %v896
    %v3777 = vunpack.c.h.b16 %v896
    %v3778 = vunpack.c.l.b16 %v897
    %v3779 = vunpack.c.h.b16 %v897
    %v3780 = vunpack.c.l.b16 %v898
    %v3781 = vunpack.c.h.b16 %v898
    %v3782 = vunpack.c.l.b16 %v899
    %v3783 = vunpack.c.h.b16 %v899
    %v3784 = vunpack.c.l.b16 %v900
    %v3785 = vunpack.c.h.b16 %v900
    %v3786 = vunpack.c.l.b16 %v901
    %v3787 = vunpack.c.h.b16 %v901
    %v3788 = vunpack.c.l.b16 %v902
    %v3789 = vunpack.c.h.b16 %v902
    %v3790 = vunpack.c.l.b16 %v903
    %v3791 = vunpack.c.h.b16 %v903
    %v3792 = vunpack.c.l.b16 %v904
    %v3793 = vunpack.c.h.b16 %v904
    %v3794 = vunpack.c.l.b16 %v905
    %v3795 = vunpack.c.h.b16 %v905
    %v3796 = vunpack.c.l.b16 %v906
    %v3797 = vunpack.c.h.b16 %v906
    %v3798 = vunpack.c.l.b16 %v907
    %v3799 = vunpack.c.h.b16 %v907
    %v3800 = vunpack.c.l.b16 %v908
    %v3801 = vunpack.c.h.b16 %v908
    %v3802 = vunpack.c.l.b16 %v909
    %v3803 = vunpack.c.h.b16 %v909
    %v3804 = vunpack.c.l.b16 %v910
    %v3805 = vunpack.c.h.b16 %v910
    %v3806 = vunpack.c.l.b16 %v911
    %v3807 = vunpack.c.h.b16 %v911
    %v3808 = vunpack.c.l.b16 %v912
    %v3809 = vunpack.c.h.b16 %v912
    %v3810 = vunpack.c.l.b16 %v913
    %v3811 = vunpack.c.h.b16 %v913
    %v3812 = vunpack.c.l.b16 %v914
    %v3813 = vunpack.c.h.b16 %v914
    %v3814 = vunpack.c.l.b16 %v915
    %v3815 = vunpack.c.h.b16 %v915
    %v3816 = vunpack.c.l.b16 %v916
    %v3817 = vunpack.c.h.b16 %v916
    %v3818 = vunpack.c.l.b16 %v917
    %v3819 = vunpack.c.h.b16 %v917
    %v3820 = vunpack.c.l.b16 %v918
    %v3821 = vunpack.c.h.b16 %v918
    %v3822 = vunpack.c.l.b16 %v919
    %v3823 = vunpack.c.h.b16 %v919
    %v3824 = vunpack.c.l.b16 %v920
    %v3825 = vunpack.c.h.b16 %v920
    %v3826 = vunpack.c.l.b16 %v921
    %v3827 = vunpack.c.h.b16 %v921
    %v3828 = vunpack.c.l.b16 %v922
    %v3829 = vunpack.c.h.b16 %v922
    %v3830 = vunpack.c.l.b16 %v923
    %v3831 = vunpack.c.h.b16 %v923
    %v3832 = vunpack.c.l.b16 %v924
    %v3833 = vunpack.c.h.b16 %v924
    %v3834 = vunpack.c.l.b16 %v925
    %v3835 = vunpack.c.h.b16 %v925
    %v3836 = vunpack.c.l.b16 %v926
    %v3837 = vunpack.c.h.b16 %v926
    %v3838 = vunpack.c.l.b16 %v927
    %v3839 = vunpack.c.h.b16 %v927
    %v3840 = vunpack.c.l.b16 %v928
    %v3841 = vunpack.c.h.b16 %v928
    %v3842 = vunpack.c.l.b16 %v929
    %v3843 = vunpack.c.h.b16 %v929
    %v3844 = vunpack.c.l.b16 %v930
    %v3845 = vunpack.c.h.b16 %v930
    %v3846 = vunpack.c.l.b16 %v931
    %v3847 = vunpack.c.h.b16 %v931
    %v3848 = vunpack.c.l.b16 %v932
    %v3849 = vunpack.c.h.b16 %v932
    %v3850 = vunpack.c.l.b16 %v933
    %v3851 = vunpack.c.h.b16 %v933
    %v3852 = vunpack.c.l.b16 %v934
    %v3853 = vunpack.c.h.b16 %v934
    %v3854 = vunpack.c.l.b16 %v935
    %v3855 = vunpack.c.h.b16 %v935
    %v3856 = vunpack.c.l.b16 %v936
    %v3857 = vunpack.c.h.b16 %v936
    %v3858 = vunpack.c.l.b16 %v937
    %v3859 = vunpack.c.h.b16 %v937
    %v3860 = vunpack.c.l.b16 %v938
    %v3861 = vunpack.c.h.b16 %v938
    %v3862 = vunpack.c.l.b16 %v939
    %v3863 = vunpack.c.h.b16 %v939
    %v3864 = vunpack.c.l.b16 %v940
    %v3865 = vunpack.c.h.b16 %v940
    %v3866 = vunpack.c.l.b16 %v941
    %v3867 = vunpack.c.h.b16 %v941
    %v3868 = vunpack.c.l.b16 %v942
    %v3869 = vunpack.c.h.b16 %v942
    %v3870 = vunpack.c.l.b16 %v943
    %v3871 = vunpack.c.h.b16 %v943
    %v3872 = vunpack.c.l.b16 %v944
    %v3873 = vunpack.c.h.b16 %v944
    %v3874 = vunpack.c.l.b16 %v945
    %v3875 = vunpack.c.h.b16 %v945
    %v3876 = vunpack.c.l.b16 %v946
    %v3877 = vunpack.c.h.b16 %v946
    %v3878 = vunpack.c.l.b16 %v947
    %v3879 = vunpack.c.h.b16 %v947
    %v3880 = vunpack.c.l.b16 %v948
    %v3881 = vunpack.c.h.b16 %v948
    %v3882 = vunpack.c.l.b16 %v949
    %v3883 = vunpack.c.h.b16 %v949
    %v3884 = vunpack.c.l.b16 %v950
    %v3885 = vunpack.c.h.b16 %v950
    %v3886 = vunpack.c.l.b16 %v951
    %v3887 = vunpack.c.h.b16 %v951
    %v3888 = vunpack.c.l.b16 %v952
    %v3889 = vunpack.c.h.b16 %v952
    %v3890 = vunpack.c.l.b16 %v953
    %v3891 = vunpack.c.h.b16 %v953
    %v3892 = vunpack.c.l.b16 %v954
    %v3893 = vunpack.c.h.b16 %v954
    %v3894 = vunpack.c.l.b16 %v955
    %v3895 = vunpack.c.h.b16 %v955
    %v3896 = vunpack.c.l.b16 %v956
    %v3897 = vunpack.c.h.b16 %v956
    %v3898 = vunpack.c.l.b16 %v957
    %v3899 = vunpack.c.h.b16 %v957
    %v3900 = vunpack.c.l.b16 %v958
    %v3901 = vunpack.c.h.b16 %v958
    %v3902 = vunpack.c.l.b16 %v959
    %v3903 = vunpack.c.h.b16 %v959
    %v3904 = vunpack.c.l.b16 %v960
    %v3905 = vunpack.c.h.b16 %v960
    %v3906 = vunpack.c.l.b16 %v961
    %v3907 = vunpack.c.h.b16 %v961
    %v3908 = vunpack.c.l.b16 %v962
    %v3909 = vunpack.c.h.b16 %v962
    %v3910 = vunpack.c.l.b16 %v963
    %v3911 = vunpack.c.h.b16 %v963
    %v3912 = vunpack.c.l.b16 %v964
    %v3913 = vunpack.c.h.b16 %v964
    %v3914 = vunpack.c.l.b16 %v965
    %v3915 = vunpack.c.h.b16 %v965
    %v3916 = vunpack.c.l.b16 %v966
    %v3917 = vunpack.c.h.b16 %v966
    %v3918 = vunpack.c.l.b16 %v967
    %v3919 = vunpack.c.h.b16 %v967
    %v3920 = vunpack.c.l.b16 %v968
    %v3921 = vunpack.c.h.b16 %v968
    %v3922 = vunpack.c.l.b16 %v969
    %v3923 = vunpack.c.h.b16 %v969
    %v3924 = vunpack.c.l.b16 %v970
    %v3925 = vunpack.c.h.b16 %v970
    %v3926 = vunpack.c.l.b16 %v971
    %v3927 = vunpack.c.h.b16 %v971
    %v3928 = vunpack.c.l.b16 %v972
    %v3929 = vunpack.c.h.b16 %v972
    %v3930 = vunpack.c.l.b16 %v973
    %v3931 = vunpack.c.h.b16 %v973
    %v3932 = vunpack.c.l.b16 %v974
    %v3933 = vunpack.c.h.b16 %v974
    %v3934 = vunpack.c.l.b16 %v975
    %v3935 = vunpack.c.h.b16 %v975
    %v3936 = vunpack.c.l.b16 %v976
    %v3937 = vunpack.c.h.b16 %v976
    %v3938 = vunpack.c.l.b16 %v977
    %v3939 = vunpack.c.h.b16 %v977
    %v3940 = vunpack.c.l.b16 %v978
    %v3941 = vunpack.c.h.b16 %v978
    %v3942 = vunpack.c.l.b16 %v979
    %v3943 = vunpack.c.h.b16 %v979
    %v3944 = vunpack.c.l.b16 %v980
    %v3945 = vunpack.c.h.b16 %v980
    %v3946 = vunpack.c.l.b16 %v981
    %v3947 = vunpack.c.h.b16 %v981
    %v3948 = vunpack.c.l.b16 %v982
    %v3949 = vunpack.c.h.b16 %v982
    %v3950 = vunpack.c.l.b16 %v983
    %v3951 = vunpack.c.h.b16 %v983
    %v3952 = vunpack.c.l.b16 %v984
    %v3953 = vunpack.c.h.b16 %v984
    %v3954 = vunpack.c.l.b16 %v985
    %v3955 = vunpack.c.h.b16 %v985
    %v3956 = vunpack.c.l.b16 %v986
    %v3957 = vunpack.c.h.b16 %v986
    %v3958 = vunpack.c.l.b16 %v987
    %v3959 = vunpack.c.h.b16 %v987
    %v3960 = vunpack.c.l.b16 %v988
    %v3961 = vunpack.c.h.b16 %v988
    %v3962 = vunpack.c.l.b16 %v989
    %v3963 = vunpack.c.h.b16 %v989
    %v3964 = vunpack.c.l.b16 %v990
    %v3965 = vunpack.c.h.b16 %v990
    %v3966 = vunpack.c.l.b16 %v991
    %v3967 = vunpack.c.h.b16 %v991
    %v3968 = vunpack.c.l.b16 %v992
    %v3969 = vunpack.c.h.b16 %v992
    %v3970 = vunpack.c.l.b16 %v993
    %v3971 = vunpack.c.h.b16 %v993
    %v3972 = vunpack.c.l.b16 %v994
    %v3973 = vunpack.c.h.b16 %v994
    %v3974 = vunpack.c.l.b16 %v995
    %v3975 = vunpack.c.h.b16 %v995
    %v3976 = vunpack.c.l.b16 %v996
    %v3977 = vunpack.c.h.b16 %v996
    %v3978 = vunpack.c.l.b16 %v997
    %v3979 = vunpack.c.h.b16 %v997
    %v3980 = vunpack.c.l.b16 %v998
    %v3981 = vunpack.c.h.b16 %v998
    %v3982 = vunpack.c.l.b16 %v999
    %v3983 = vunpack.c.h.b16 %v999
    %v3984 = vunpack.c.l.b16 %v1000
    %v3985 = vunpack.c.h.b16 %v1000
    %v3986 = vunpack.c.l.b16 %v1001
    %v3987 = vunpack.c.h.b16 %v1001
    %v3988 = vunpack.c.l.b16 %v1002
    %v3989 = vunpack.c.h.b16 %v1002
    %v3990 = vunpack.c.l.b16 %v1003
    %v3991 = vunpack.c.h.b16 %v1003
    %v3992 = vunpack.c.l.b16 %v1004
    %v3993 = vunpack.c.h.b16 %v1004
    %v3994 = vunpack.c.l.b16 %v1005
    %v3995 = vunpack.c.h.b16 %v1005
    %v3996 = vunpack.c.l.b16 %v1006
    %v3997 = vunpack.c.h.b16 %v1006
    %v3998 = vunpack.c.l.b16 %v1007
    %v3999 = vunpack.c.h.b16 %v1007
    %v4000 = vunpack.c.l.b16 %v1008
    %v4001 = vunpack.c.h.b16 %v1008
    %v4002 = vunpack.c.l.b16 %v1009
    %v4003 = vunpack.c.h.b16 %v1009
    %v4004 = vunpack.c.l.b16 %v1010
    %v4005 = vunpack.c.h.b16 %v1010
    %v4006 = vunpack.c.l.b16 %v1011
    %v4007 = vunpack.c.h.b16 %v1011
    %v4008 = vunpack.c.l.b16 %v1012
    %v4009 = vunpack.c.h.b16 %v1012
    %v4010 = vunpack.c.l.b16 %v1013
    %v4011 = vunpack.c.h.b16 %v1013
    %v4012 = vunpack.c.l.b16 %v1014
    %v4013 = vunpack.c.h.b16 %v1014
    %v4014 = vunpack.c.l.b16 %v1015
    %v4015 = vunpack.c.h.b16 %v1015
    %v4016 = vunpack.c.l.b16 %v1016
    %v4017 = vunpack.c.h.b16 %v1016
    %v4018 = vunpack.c.l.b16 %v1017
    %v4019 = vunpack.c.h.b16 %v1017
    %v4020 = vunpack.c.l.b16 %v1018
    %v4021 = vunpack.c.h.b16 %v1018
    %v4022 = vunpack.c.l.b16 %v1019
    %v4023 = vunpack.c.h.b16 %v1019
    %v4024 = vunpack.c.l.b16 %v1020
    %v4025 = vunpack.c.h.b16 %v1020
    %v4026 = vunpack.c.l.b16 %v1021
    %v4027 = vunpack.c.h.b16 %v1021
    %v4028 = vunpack.c.l.b16 %v1022
    %v4029 = vunpack.c.h.b16 %v1022
    %v4030 = vunpack.c.l.b16 %v1023
    %v4031 = vunpack.c.h.b16 %v1023
    %v4032 = vunpack.c.l.b16 %v1024
    %v4033 = vunpack.c.h.b16 %v1024
    %v4034 = vunpack.c.l.b16 %v1025
    %v4035 = vunpack.c.h.b16 %v1025
    %v4036 = vunpack.c.l.b16 %v1026
    %v4037 = vunpack.c.h.b16 %v1026
    %v4038 = vunpack.c.l.b16 %v1027
    %v4039 = vunpack.c.h.b16 %v1027
    %v4040 = vunpack.c.l.b16 %v1028
    %v4041 = vunpack.c.h.b16 %v1028
    %v4042 = vunpack.c.l.b16 %v1029
    %v4043 = vunpack.c.h.b16 %v1029
    %v4044 = vunpack.c.l.b16 %v1030
    %v4045 = vunpack.c.h.b16 %v1030
    %v4046 = vunpack.c.l.b16 %v1031
    %v4047 = vunpack.c.h.b16 %v1031
    %v4048 = vunpack.c.l.b16 %v1032
    %v4049 = vunpack.c.h.b16 %v1032
    %v4050 = vunpack.c.l.b16 %v1033
    %v4051 = vunpack.c.h.b16 %v1033
    %v4052 = vunpack.c.l.b16 %v1034
    %v4053 = vunpack.c.h.b16 %v1034
    %v4054 = vunpack.c.l.b16 %v1035
    %v4055 = vunpack.c.h.b16 %v1035
    %v4056 = vunpack.c.l.b16 %v1036
    %v4057 = vunpack.c.h.b16 %v1036
    %v4058 = vunpack.c.l.b16 %v1037
    %v4059 = vunpack.c.h.b16 %v1037
    %v4060 = vunpack.c.l.b16 %v1038
    %v4061 = vunpack.c.h.b16 %v1038
    %v4062 = vunpack.c.l.b16 %v1039
    %v4063 = vunpack.c.h.b16 %v1039
    %v4064 = vunpack.c.l.b16 %v1040
    %v4065 = vunpack.c.h.b16 %v1040
    %v4066 = vunpack.c.l.b16 %v1041
    %v4067 = vunpack.c.h.b16 %v1041
    %v4068 = vunpack.c.l.b16 %v1042
    %v4069 = vunpack.c.h.b16 %v1042
    %v4070 = vunpack.c.l.b16 %v1043
    %v4071 = vunpack.c.h.b16 %v1043
    %v4072 = vunpack.c.l.b16 %v1044
    %v4073 = vunpack.c.h.b16 %v1044
    %v4074 = vunpack.c.l.b16 %v1045
    %v4075 = vunpack.c.h.b16 %v1045
    %v4076 = vunpack.c.l.b16 %v1046
    %v4077 = vunpack.c.h.b16 %v1046
    %v4078 = vunpack.c.l.b16 %v1047
    %v4079 = vunpack.c.h.b16 %v1047
    %v4080 = vunpack.c.l.b16 %v1048
    %v4081 = vunpack.c.h.b16 %v1048
    %v4082 = vunpack.c.l.b16 %v1049
    %v4083 = vunpack.c.h.b16 %v1049
    %v4084 = vunpack.c.l.b16 %v1050
    %v4085 = vunpack.c.h.b16 %v1050
    %v4086 = vunpack.c.l.b16 %v1051
    %v4087 = vunpack.c.h.b16 %v1051
    %v4088 = vunpack.c.l.b16 %v1052
    %v4089 = vunpack.c.h.b16 %v1052
    %v4090 = vunpack.c.l.b16 %v1053
    %v4091 = vunpack.c.h.b16 %v1053
    %v4092 = vunpack.c.l.b16 %v1054
    %v4093 = vunpack.c.h.b16 %v1054
    %v4094 = vunpack.c.l.b16 %v1055
    %v4095 = vunpack.c.h.b16 %v1055
    %v4096 = vunpack.c.l.b16 %v1056
    %v4097 = vunpack.c.h.b16 %v1056
    %v4098 = vunpack.c.l.b16 %v1057
    %v4099 = vunpack.c.h.b16 %v1057
    %v4100 = vunpack.c.l.b16 %v1058
    %v4101 = vunpack.c.h.b16 %v1058
    %v4102 = vunpack.c.l.b16 %v1059
    %v4103 = vunpack.c.h.b16 %v1059
    %v4104 = vunpack.c.l.b16 %v1060
    %v4105 = vunpack.c.h.b16 %v1060
    %v4106 = vunpack.c.l.b16 %v1061
    %v4107 = vunpack.c.h.b16 %v1061
    %v4108 = vunpack.c.l.b16 %v1062
    %v4109 = vunpack.c.h.b16 %v1062
    %v4110 = vunpack.c.l.b16 %v1063
    %v4111 = vunpack.c.h.b16 %v1063
    %v4112 = vunpack.c.l.b16 %v1064
    %v4113 = vunpack.c.h.b16 %v1064
    %v4114 = vunpack.c.l.b16 %v1065
    %v4115 = vunpack.c.h.b16 %v1065
    %v4116 = vunpack.c.l.b16 %v1066
    %v4117 = vunpack.c.h.b16 %v1066
    %v4118 = vunpack.c.l.b16 %v1067
    %v4119 = vunpack.c.h.b16 %v1067
    %v4120 = vunpack.c.l.b16 %v1068
    %v4121 = vunpack.c.h.b16 %v1068
    %v4122 = vunpack.c.l.b16 %v1069
    %v4123 = vunpack.c.h.b16 %v1069
    %v4124 = vunpack.c.l.b16 %v1070
    %v4125 = vunpack.c.h.b16 %v1070
    %v4126 = vunpack.c.l.b16 %v1071
    %v4127 = vunpack.c.h.b16 %v1071
    %v4128 = vunpack.c.l.b16 %v1072
    %v4129 = vunpack.c.h.b16 %v1072
    %v4130 = vunpack.c.l.b16 %v1073
    %v4131 = vunpack.c.h.b16 %v1073
    %v4132 = vunpack.c.l.b16 %v1074
    %v4133 = vunpack.c.h.b16 %v1074
    %v4134 = vunpack.c.l.b16 %v1075
    %v4135 = vunpack.c.h.b16 %v1075
    %v4136 = vunpack.c.l.b16 %v1076
    %v4137 = vunpack.c.h.b16 %v1076
    %v4138 = vunpack.c.l.b16 %v1077
    %v4139 = vunpack.c.h.b16 %v1077
    %v4140 = vunpack.c.l.b16 %v1078
    %v4141 = vunpack.c.h.b16 %v1078
    %v4142 = vunpack.c.l.b16 %v1079
    %v4143 = vunpack.c.h.b16 %v1079
    %v4144 = vunpack.c.l.b16 %v1080
    %v4145 = vunpack.c.h.b16 %v1080
    %v4146 = vunpack.c.l.b16 %v1081
    %v4147 = vunpack.c.h.b16 %v1081
    %v4148 = vunpack.c.l.b16 %v1082
    %v4149 = vunpack.c.h.b16 %v1082
    %v4150 = vunpack.c.l.b16 %v1083
    %v4151 = vunpack.c.h.b16 %v1083
    %v4152 = vunpack.c.l.b16 %v1084
    %v4153 = vunpack.c.h.b16 %v1084
    %v4154 = vunpack.c.l.b16 %v1085
    %v4155 = vunpack.c.h.b16 %v1085
    %v4156 = vunpack.c.l.b16 %v1086
    %v4157 = vunpack.c.h.b16 %v1086
    %v4158 = vunpack.c.l.b16 %v1087
    %v4159 = vunpack.c.h.b16 %v1087
    %v4160 = vunpack.c.l.b16 %v1088
    %v4161 = vunpack.c.h.b16 %v1088
    %v4162 = vunpack.c.l.b16 %v1089
    %v4163 = vunpack.c.h.b16 %v1089
    %v4164 = vunpack.c.l.b16 %v1090
    %v4165 = vunpack.c.h.b16 %v1090
    %v4166 = vunpack.c.l.b16 %v1091
    %v4167 = vunpack.c.h.b16 %v1091
    %v4168 = vunpack.c.l.b16 %v1092
    %v4169 = vunpack.c.h.b16 %v1092
    %v4170 = vunpack.c.l.b16 %v1093
    %v4171 = vunpack.c.h.b16 %v1093
    %v4172 = vunpack.c.l.b16 %v1094
    %v4173 = vunpack.c.h.b16 %v1094
    %v4174 = vunpack.c.l.b16 %v1095
    %v4175 = vunpack.c.h.b16 %v1095
    %v4176 = vunpack.c.l.b16 %v1096
    %v4177 = vunpack.c.h.b16 %v1096
    %v4178 = vunpack.c.l.b16 %v1097
    %v4179 = vunpack.c.h.b16 %v1097
    %v4180 = vunpack.c.l.b16 %v1098
    %v4181 = vunpack.c.h.b16 %v1098
    %v4182 = vunpack.c.l.b16 %v1099
    %v4183 = vunpack.c.h.b16 %v1099
    %v4184 = vunpack.c.l.b16 %v1100
    %v4185 = vunpack.c.h.b16 %v1100
    %v4186 = vunpack.c.l.b16 %v1101
    %v4187 = vunpack.c.h.b16 %v1101
    %v4188 = vunpack.c.l.b16 %v1102
    %v4189 = vunpack.c.h.b16 %v1102
    %v4190 = vunpack.c.l.b16 %v1103
    %v4191 = vunpack.c.h.b16 %v1103
    %v4192 = vunpack.c.l.b16 %v1104
    %v4193 = vunpack.c.h.b16 %v1104
    %v4194 = vunpack.c.l.b16 %v1105
    %v4195 = vunpack.c.h.b16 %v1105
    %v4196 = vpack.c.b16 %v2156, %v2148
    %v4197 = vpack.c.b16 %v2157, %v2149
    %v4198 = vpack.c.b16 %v2158, %v2150
    %v4199 = vpack.c.b16 %v2159, %v2151
    %v4200 = vpack.c.b16 %v2160, %v2152
    %v4201 = vpack.c.b16 %v2161, %v2153
    %v4202 = vpack.c.b16 %v2162, %v2154
    %v4203 = vpack.c.b16 %v2163, %v2155
    %v4204 = vpack.c.b16 %v2172, %v2164
    %v4205 = vpack.c.b16 %v2173, %v2165
    %v4206 = vpack.c.b16 %v2174, %v2166
    %v4207 = vpack.c.b16 %v2175, %v2167
    %v4208 = vpack.c.b16 %v2176, %v2168
    %v4209 = vpack.c.b16 %v2177, %v2169
    %v4210 = vpack.c.b16 %v2178, %v2170
    %v4211 = vpack.c.b16 %v2179, %v2171
    %v4212 = vpack.c.b16 %v2188, %v2180
    %v4213 = vpack.c.b16 %v2189, %v2181
    %v4214 = vpack.c.b16 %v2190, %v2182
    %v4215 = vpack.c.b16 %v2191, %v2183
    %v4216 = vpack.c.b16 %v2192, %v2184
    %v4217 = vpack.c.b16 %v2193, %v2185
    %v4218 = vpack.c.b16 %v2194, %v2186
    %v4219 = vpack.c.b16 %v2195, %v2187
    %v4220 = vpack.c.b16 %v2204, %v2196
    %v4221 = vpack.c.b16 %v2205, %v2197
    %v4222 = vpack.c.b16 %v2206, %v2198
    %v4223 = vpack.c.b16 %v2207, %v2199
    %v4224 = vpack.c.b16 %v2208, %v2200
    %v4225 = vpack.c.b16 %v2209, %v2201
    %v4226 = vpack.c.b16 %v2210, %v2202
    %v4227 = vpack.c.b16 %v2211, %v2203
    %v4228 = vpack.c.b16 %v2220, %v2212
    %v4229 = vpack.c.b16 %v2221, %v2213
    %v4230 = vpack.c.b16 %v2222, %v2214
    %v4231 = vpack.c.b16 %v2223, %v2215
    %v4232 = vpack.c.b16 %v2224, %v2216
    %v4233 = vpack.c.b16 %v2225, %v2217
    %v4234 = vpack.c.b16 %v2226, %v2218
    %v4235 = vpack.c.b16 %v2227, %v2219
    %v4236 = vpack.c.b16 %v2236, %v2228
    %v4237 = vpack.c.b16 %v2237, %v2229
    %v4238 = vpack.c.b16 %v2238, %v2230
    %v4239 = vpack.c.b16 %v2239, %v2231
    %v4240 = vpack.c.b16 %v2240, %v2232
    %v4241 = vpack.c.b16 %v2241, %v2233
    %v4242 = vpack.c.b16 %v2242, %v2234
    %v4243 = vpack.c.b16 %v2243, %v2235
    %v4244 = vpack.c.b16 %v2252, %v2244
    %v4245 = vpack.c.b16 %v2253, %v2245
    %v4246 = vpack.c.b16 %v2254, %v2246
    %v4247 = vpack.c.b16 %v2255, %v2247
    %v4248 = vpack.c.b16 %v2256, %v2248
    %v4249 = vpack.c.b16 %v2257, %v2249
    %v4250 = vpack.c.b16 %v2258, %v2250
    %v4251 = vpack.c.b16 %v2259, %v2251
    %v4252 = vpack.c.b16 %v2268, %v2260
    %v4253 = vpack.c.b16 %v2269, %v2261
    %v4254 = vpack.c.b16 %v2270, %v2262
    %v4255 = vpack.c.b16 %v2271, %v2263
    %v4256 = vpack.c.b16 %v2272, %v2264
    %v4257 = vpack.c.b16 %v2273, %v2265
    %v4258 = vpack.c.b16 %v2274, %v2266
    %v4259 = vpack.c.b16 %v2275, %v2267
    %v4260 = vpack.c.b16 %v2284, %v2276
    %v4261 = vpack.c.b16 %v2285, %v2277
    %v4262 = vpack.c.b16 %v2286, %v2278
    %v4263 = vpack.c.b16 %v2287, %v2279
    %v4264 = vpack.c.b16 %v2288, %v2280
    %v4265 = vpack.c.b16 %v2289, %v2281
    %v4266 = vpack.c.b16 %v2290, %v2282
    %v4267 = vpack.c.b16 %v2291, %v2283
    %v4268 = vpack.c.b16 %v2300, %v2292
    %v4269 = vpack.c.b16 %v2301, %v2293
    %v4270 = vpack.c.b16 %v2302, %v2294
    %v4271 = vpack.c.b16 %v2303, %v2295
    %v4272 = vpack.c.b16 %v2304, %v2296
    %v4273 = vpack.c.b16 %v2305, %v2297
    %v4274 = vpack.c.b16 %v2306, %v2298
    %v4275 = vpack.c.b16 %v2307, %v2299
    %v4276 = vpack.c.b16 %v2316, %v2308
    %v4277 = vpack.c.b16 %v2317, %v2309
    %v4278 = vpack.c.b16 %v2318, %v2310
    %v4279 = vpack.c.b16 %v2319, %v2311
    %v4280 = vpack.c.b16 %v2320, %v2312
    %v4281 = vpack.c.b16 %v2321, %v2313
    %v4282 = vpack.c.b16 %v2322, %v2314
    %v4283 = vpack.c.b16 %v2323, %v2315
    %v4284 = vpack.c.b16 %v2332, %v2324
    %v4285 = vpack.c.b16 %v2333, %v2325
    %v4286 = vpack.c.b16 %v2334, %v2326
    %v4287 = vpack.c.b16 %v2335, %v2327
    %v4288 = vpack.c.b16 %v2336, %v2328
    %v4289 = vpack.c.b16 %v2337, %v2329
    %v4290 = vpack.c.b16 %v2338, %v2330
    %v4291 = vpack.c.b16 %v2339, %v2331
    %v4292 = vpack.c.b16 %v2348, %v2340
    %v4293 = vpack.c.b16 %v2349, %v2341
    %v4294 = vpack.c.b16 %v2350, %v2342
    %v4295 = vpack.c.b16 %v2351, %v2343
    %v4296 = vpack.c.b16 %v2352, %v2344
    %v4297 = vpack.c.b16 %v2353, %v2345
    %v4298 = vpack.c.b16 %v2354, %v2346
    %v4299 = vpack.c.b16 %v2355, %v2347
    %v4300 = vpack.c.b16 %v2364, %v2356
    %v4301 = vpack.c.b16 %v2365, %v2357
    %v4302 = vpack.c.b16 %v2366, %v2358
    %v4303 = vpack.c.b16 %v2367, %v2359
    %v4304 = vpack.c.b16 %v2368, %v2360
    %v4305 = vpack.c.b16 %v2369, %v2361
    %v4306 = vpack.c.b16 %v2370, %v2362
    %v4307 = vpack.c.b16 %v2371, %v2363
    %v4308 = vpack.c.b16 %v2380, %v2372
    %v4309 = vpack.c.b16 %v2381, %v2373
    %v4310 = vpack.c.b16 %v2382, %v2374
    %v4311 = vpack.c.b16 %v2383, %v2375
    %v4312 = vpack.c.b16 %v2384, %v2376
    %v4313 = vpack.c.b16 %v2385, %v2377
    %v4314 = vpack.c.b16 %v2386, %v2378
    %v4315 = vpack.c.b16 %v2387, %v2379
    %v4316 = vpack.c.b16 %v2396, %v2388
    %v4317 = vpack.c.b16 %v2397, %v2389
    %v4318 = vpack.c.b16 %v2398, %v2390
    %v4319 = vpack.c.b16 %v2399, %v2391
    %v4320 = vpack.c.b16 %v2400, %v2392
    %v4321 = vpack.c.b16 %v2401, %v2393
    %v4322 = vpack.c.b16 %v2402, %v2394
    %v4323 = vpack.c.b16 %v2403, %v2395
    %v4324 = vpack.c.b16 %v2412, %v2404
    %v4325 = vpack.c.b16 %v2413, %v2405
    %v4326 = vpack.c.b16 %v2414, %v2406
    %v4327 = vpack.c.b16 %v2415, %v2407
    %v4328 = vpack.c.b16 %v2416, %v2408
    %v4329 = vpack.c.b16 %v2417, %v2409
    %v4330 = vpack.c.b16 %v2418, %v2410
    %v4331 = vpack.c.b16 %v2419, %v2411
    %v4332 = vpack.c.b16 %v2428, %v2420
    %v4333 = vpack.c.b16 %v2429, %v2421
    %v4334 = vpack.c.b16 %v2430, %v2422
    %v4335 = vpack.c.b16 %v2431, %v2423
    %v4336 = vpack.c.b16 %v2432, %v2424
    %v4337 = vpack.c.b16 %v2433, %v2425
    %v4338 = vpack.c.b16 %v2434, %v2426
    %v4339 = vpack.c.b16 %v2435, %v2427
    %v4340 = vpack.c.b16 %v2444, %v2436
    %v4341 = vpack.c.b16 %v2445, %v2437
    %v4342 = vpack.c.b16 %v2446, %v2438
    %v4343 = vpack.c.b16 %v2447, %v2439
    %v4344 = vpack.c.b16 %v2448, %v2440
    %v4345 = vpack.c.b16 %v2449, %v2441
    %v4346 = vpack.c.b16 %v2450, %v2442
    %v4347 = vpack.c.b16 %v2451, %v2443
    %v4348 = vpack.c.b16 %v2460, %v2452
    %v4349 = vpack.c.b16 %v2461, %v2453
    %v4350 = vpack.c.b16 %v2462, %v2454
    %v4351 = vpack.c.b16 %v2463, %v2455
    %v4352 = vpack.c.b16 %v2464, %v2456
    %v4353 = vpack.c.b16 %v2465, %v2457
    %v4354 = vpack.c.b16 %v2466, %v2458
    %v4355 = vpack.c.b16 %v2467, %v2459
    %v4356 = vpack.c.b16 %v2476, %v2468
    %v4357 = vpack.c.b16 %v2477, %v2469
    %v4358 = vpack.c.b16 %v2478, %v2470
    %v4359 = vpack.c.b16 %v2479, %v2471
    %v4360 = vpack.c.b16 %v2480, %v2472
    %v4361 = vpack.c.b16 %v2481, %v2473
    %v4362 = vpack.c.b16 %v2482, %v2474
    %v4363 = vpack.c.b16 %v2483, %v2475
    %v4364 = vpack.c.b16 %v2492, %v2484
    %v4365 = vpack.c.b16 %v2493, %v2485
    %v4366 = vpack.c.b16 %v2494, %v2486
    %v4367 = vpack.c.b16 %v2495, %v2487
    %v4368 = vpack.c.b16 %v2496, %v2488
    %v4369 = vpack.c.b16 %v2497, %v2489
    %v4370 = vpack.c.b16 %v2498, %v2490
    %v4371 = vpack.c.b16 %v2499, %v2491
    %v4372 = vpack.c.b16 %v2508, %v2500
    %v4373 = vpack.c.b16 %v2509, %v2501
    %v4374 = vpack.c.b16 %v2510, %v2502
    %v4375 = vpack.c.b16 %v2511, %v2503
    %v4376 = vpack.c.b16 %v2512, %v2504
    %v4377 = vpack.c.b16 %v2513, %v2505
    %v4378 = vpack.c.b16 %v2514, %v2506
    %v4379 = vpack.c.b16 %v2515, %v2507
    %v4380 = vpack.c.b16 %v2524, %v2516
    %v4381 = vpack.c.b16 %v2525, %v2517
    %v4382 = vpack.c.b16 %v2526, %v2518
    %v4383 = vpack.c.b16 %v2527, %v2519
    %v4384 = vpack.c.b16 %v2528, %v2520
    %v4385 = vpack.c.b16 %v2529, %v2521
    %v4386 = vpack.c.b16 %v2530, %v2522
    %v4387 = vpack.c.b16 %v2531, %v2523
    %v4388 = vpack.c.b16 %v2540, %v2532
    %v4389 = vpack.c.b16 %v2541, %v2533
    %v4390 = vpack.c.b16 %v2542, %v2534
    %v4391 = vpack.c.b16 %v2543, %v2535
    %v4392 = vpack.c.b16 %v2544, %v2536
    %v4393 = vpack.c.b16 %v2545, %v2537
    %v4394 = vpack.c.b16 %v2546, %v2538
    %v4395 = vpack.c.b16 %v2547, %v2539
    %v4396 = vpack.c.b16 %v2556, %v2548
    %v4397 = vpack.c.b16 %v2557, %v2549
    %v4398 = vpack.c.b16 %v2558, %v2550
    %v4399 = vpack.c.b16 %v2559, %v2551
    %v4400 = vpack.c.b16 %v2560, %v2552
    %v4401 = vpack.c.b16 %v2561, %v2553
    %v4402 = vpack.c.b16 %v2562, %v2554
    %v4403 = vpack.c.b16 %v2563, %v2555
    %v4404 = vpack.c.b16 %v2572, %v2564
    %v4405 = vpack.c.b16 %v2573, %v2565
    %v4406 = vpack.c.b16 %v2574, %v2566
    %v4407 = vpack.c.b16 %v2575, %v2567
    %v4408 = vpack.c.b16 %v2576, %v2568
    %v4409 = vpack.c.b16 %v2577, %v2569
    %v4410 = vpack.c.b16 %v2578, %v2570
    %v4411 = vpack.c.b16 %v2579, %v2571
    %v4412 = vpack.c.b16 %v2588, %v2580
    %v4413 = vpack.c.b16 %v2589, %v2581
    %v4414 = vpack.c.b16 %v2590, %v2582
    %v4415 = vpack.c.b16 %v2591, %v2583
    %v4416 = vpack.c.b16 %v2592, %v2584
    %v4417 = vpack.c.b16 %v2593, %v2585
    %v4418 = vpack.c.b16 %v2594, %v2586
    %v4419 = vpack.c.b16 %v2595, %v2587
    %v4420 = vpack.c.b16 %v2604, %v2596
    %v4421 = vpack.c.b16 %v2605, %v2597
    %v4422 = vpack.c.b16 %v2606, %v2598
    %v4423 = vpack.c.b16 %v2607, %v2599
    %v4424 = vpack.c.b16 %v2608, %v2600
    %v4425 = vpack.c.b16 %v2609, %v2601
    %v4426 = vpack.c.b16 %v2610, %v2602
    %v4427 = vpack.c.b16 %v2611, %v2603
    %v4428 = vpack.c.b16 %v2620, %v2612
    %v4429 = vpack.c.b16 %v2621, %v2613
    %v4430 = vpack.c.b16 %v2622, %v2614
    %v4431 = vpack.c.b16 %v2623, %v2615
    %v4432 = vpack.c.b16 %v2624, %v2616
    %v4433 = vpack.c.b16 %v2625, %v2617
    %v4434 = vpack.c.b16 %v2626, %v2618
    %v4435 = vpack.c.b16 %v2627, %v2619
    %v4436 = vpack.c.b16 %v2636, %v2628
    %v4437 = vpack.c.b16 %v2637, %v2629
    %v4438 = vpack.c.b16 %v2638, %v2630
    %v4439 = vpack.c.b16 %v2639, %v2631
    %v4440 = vpack.c.b16 %v2640, %v2632
    %v4441 = vpack.c.b16 %v2641, %v2633
    %v4442 = vpack.c.b16 %v2642, %v2634
    %v4443 = vpack.c.b16 %v2643, %v2635
    %v4444 = vpack.c.b16 %v2652, %v2644
    %v4445 = vpack.c.b16 %v2653, %v2645
    %v4446 = vpack.c.b16 %v2654, %v2646
    %v4447 = vpack.c.b16 %v2655, %v2647
    %v4448 = vpack.c.b16 %v2656, %v2648
    %v4449 = vpack.c.b16 %v2657, %v2649
    %v4450 = vpack.c.b16 %v2658, %v2650
    %v4451 = vpack.c.b16 %v2659, %v2651
    %v4452 = vpack.c.b16 %v2668, %v2660
    %v4453 = vpack.c.b16 %v2669, %v2661
    %v4454 = vpack.c.b16 %v2670, %v2662
    %v4455 = vpack.c.b16 %v2671, %v2663
    %v4456 = vpack.c.b16 %v2672, %v2664
    %v4457 = vpack.c.b16 %v2673, %v2665
    %v4458 = vpack.c.b16 %v2674, %v2666
    %v4459 = vpack.c.b16 %v2675, %v2667
    %v4460 = vpack.c.b16 %v2684, %v2676
    %v4461 = vpack.c.b16 %v2685, %v2677
    %v4462 = vpack.c.b16 %v2686, %v2678
    %v4463 = vpack.c.b16 %v2687, %v2679
    %v4464 = vpack.c.b16 %v2688, %v2680
    %v4465 = vpack.c.b16 %v2689, %v2681
    %v4466 = vpack.c.b16 %v2690, %v2682
    %v4467 = vpack.c.b16 %v2691, %v2683
    %v4468 = vpack.c.b16 %v2700, %v2692
    %v4469 = vpack.c.b16 %v2701, %v2693
    %v4470 = vpack.c.b16 %v2702, %v2694
    %v4471 = vpack.c.b16 %v2703, %v2695
    %v4472 = vpack.c.b16 %v2704, %v2696
    %v4473 = vpack.c.b16 %v2705, %v2697
    %v4474 = vpack.c.b16 %v2706, %v2698
    %v4475 = vpack.c.b16 %v2707, %v2699
    %v4476 = vpack.c.b16 %v2716, %v2708
    %v4477 = vpack.c.b16 %v2717, %v2709
    %v4478 = vpack.c.b16 %v2718, %v2710
    %v4479 = vpack.c.b16 %v2719, %v2711
    %v4480 = vpack.c.b16 %v2720, %v2712
    %v4481 = vpack.c.b16 %v2721, %v2713
    %v4482 = vpack.c.b16 %v2722, %v2714
    %v4483 = vpack.c.b16 %v2723, %v2715
    %v4484 = vpack.c.b16 %v2732, %v2724
    %v4485 = vpack.c.b16 %v2733, %v2725
    %v4486 = vpack.c.b16 %v2734, %v2726
    %v4487 = vpack.c.b16 %v2735, %v2727
    %v4488 = vpack.c.b16 %v2736, %v2728
    %v4489 = vpack.c.b16 %v2737, %v2729
    %v4490 = vpack.c.b16 %v2738, %v2730
    %v4491 = vpack.c.b16 %v2739, %v2731
    %v4492 = vpack.c.b16 %v2748, %v2740
    %v4493 = vpack.c.b16 %v2749, %v2741
    %v4494 = vpack.c.b16 %v2750, %v2742
    %v4495 = vpack.c.b16 %v2751, %v2743
    %v4496 = vpack.c.b16 %v2752, %v2744
    %v4497 = vpack.c.b16 %v2753, %v2745
    %v4498 = vpack.c.b16 %v2754, %v2746
    %v4499 = vpack.c.b16 %v2755, %v2747
    %v4500 = vpack.c.b16 %v2764, %v2756
    %v4501 = vpack.c.b16 %v2765, %v2757
    %v4502 = vpack.c.b16 %v2766, %v2758
    %v4503 = vpack.c.b16 %v2767, %v2759
    %v4504 = vpack.c.b16 %v2768, %v2760
    %v4505 = vpack.c.b16 %v2769, %v2761
    %v4506 = vpack.c.b16 %v2770, %v2762
    %v4507 = vpack.c.b16 %v2771, %v2763
    %v4508 = vpack.c.b16 %v2780, %v2772
    %v4509 = vpack.c.b16 %v2781, %v2773
    %v4510 = vpack.c.b16 %v2782, %v2774
    %v4511 = vpack.c.b16 %v2783, %v2775
    %v4512 = vpack.c.b16 %v2784, %v2776
    %v4513 = vpack.c.b16 %v2785, %v2777
    %v4514 = vpack.c.b16 %v2786, %v2778
    %v4515 = vpack.c.b16 %v2787, %v2779
    %v4516 = vpack.c.b16 %v2796, %v2788
    %v4517 = vpack.c.b16 %v2797, %v2789
    %v4518 = vpack.c.b16 %v2798, %v2790
    %v4519 = vpack.c.b16 %v2799, %v2791
    %v4520 = vpack.c.b16 %v2800, %v2792
    %v4521 = vpack.c.b16 %v2801, %v2793
    %v4522 = vpack.c.b16 %v2802, %v2794
    %v4523 = vpack.c.b16 %v2803, %v2795
    %v4524 = vpack.c.b16 %v2812, %v2804
    %v4525 = vpack.c.b16 %v2813, %v2805
    %v4526 = vpack.c.b16 %v2814, %v2806
    %v4527 = vpack.c.b16 %v2815, %v2807
    %v4528 = vpack.c.b16 %v2816, %v2808
    %v4529 = vpack.c.b16 %v2817, %v2809
    %v4530 = vpack.c.b16 %v2818, %v2810
    %v4531 = vpack.c.b16 %v2819, %v2811
    %v4532 = vpack.c.b16 %v2828, %v2820
    %v4533 = vpack.c.b16 %v2829, %v2821
    %v4534 = vpack.c.b16 %v2830, %v2822
    %v4535 = vpack.c.b16 %v2831, %v2823
    %v4536 = vpack.c.b16 %v2832, %v2824
    %v4537 = vpack.c.b16 %v2833, %v2825
    %v4538 = vpack.c.b16 %v2834, %v2826
    %v4539 = vpack.c.b16 %v2835, %v2827
    %v4540 = vpack.c.b16 %v2844, %v2836
    %v4541 = vpack.c.b16 %v2845, %v2837
    %v4542 = vpack.c.b16 %v2846, %v2838
    %v4543 = vpack.c.b16 %v2847, %v2839
    %v4544 = vpack.c.b16 %v2848, %v2840
    %v4545 = vpack.c.b16 %v2849, %v2841
    %v4546 = vpack.c.b16 %v2850, %v2842
    %v4547 = vpack.c.b16 %v2851, %v2843
    %v4548 = vpack.c.b16 %v2860, %v2852
    %v4549 = vpack.c.b16 %v2861, %v2853
    %v4550 = vpack.c.b16 %v2862, %v2854
    %v4551 = vpack.c.b16 %v2863, %v2855
    %v4552 = vpack.c.b16 %v2864, %v2856
    %v4553 = vpack.c.b16 %v2865, %v2857
    %v4554 = vpack.c.b16 %v2866, %v2858
    %v4555 = vpack.c.b16 %v2867, %v2859
    %v4556 = vpack.c.b16 %v2876, %v2868
    %v4557 = vpack.c.b16 %v2877, %v2869
    %v4558 = vpack.c.b16 %v2878, %v2870
    %v4559 = vpack.c.b16 %v2879, %v2871
    %v4560 = vpack.c.b16 %v2880, %v2872
    %v4561 = vpack.c.b16 %v2881, %v2873
    %v4562 = vpack.c.b16 %v2882, %v2874
    %v4563 = vpack.c.b16 %v2883, %v2875
    %v4564 = vpack.c.b16 %v2892, %v2884
    %v4565 = vpack.c.b16 %v2893, %v2885
    %v4566 = vpack.c.b16 %v2894, %v2886
    %v4567 = vpack.c.b16 %v2895, %v2887
    %v4568 = vpack.c.b16 %v2896, %v2888
    %v4569 = vpack.c.b16 %v2897, %v2889
    %v4570 = vpack.c.b16 %v2898, %v2890
    %v4571 = vpack.c.b16 %v2899, %v2891
    %v4572 = vpack.c.b16 %v2908, %v2900
    %v4573 = vpack.c.b16 %v2909, %v2901
    %v4574 = vpack.c.b16 %v2910, %v2902
    %v4575 = vpack.c.b16 %v2911, %v2903
    %v4576 = vpack.c.b16 %v2912, %v2904
    %v4577 = vpack.c.b16 %v2913, %v2905
    %v4578 = vpack.c.b16 %v2914, %v2906
    %v4579 = vpack.c.b16 %v2915, %v2907
    %v4580 = vpack.c.b16 %v2924, %v2916
    %v4581 = vpack.c.b16 %v2925, %v2917
    %v4582 = vpack.c.b16 %v2926, %v2918
    %v4583 = vpack.c.b16 %v2927, %v2919
    %v4584 = vpack.c.b16 %v2928, %v2920
    %v4585 = vpack.c.b16 %v2929, %v2921
    %v4586 = vpack.c.b16 %v2930, %v2922
    %v4587 = vpack.c.b16 %v2931, %v2923
    %v4588 = vpack.c.b16 %v2940, %v2932
    %v4589 = vpack.c.b16 %v2941, %v2933
    %v4590 = vpack.c.b16 %v2942, %v2934
    %v4591 = vpack.c.b16 %v2943, %v2935
    %v4592 = vpack.c.b16 %v2944, %v2936
    %v4593 = vpack.c.b16 %v2945, %v2937
    %v4594 = vpack.c.b16 %v2946, %v2938
    %v4595 = vpack.c.b16 %v2947, %v2939
    %v4596 = vpack.c.b16 %v2956, %v2948
    %v4597 = vpack.c.b16 %v2957, %v2949
    %v4598 = vpack.c.b16 %v2958, %v2950
    %v4599 = vpack.c.b16 %v2959, %v2951
    %v4600 = vpack.c.b16 %v2960, %v2952
    %v4601 = vpack.c.b16 %v2961, %v2953
    %v4602 = vpack.c.b16 %v2962, %v2954
    %v4603 = vpack.c.b16 %v2963, %v2955
    %v4604 = vpack.c.b16 %v2972, %v2964
    %v4605 = vpack.c.b16 %v2973, %v2965
    %v4606 = vpack.c.b16 %v2974, %v2966
    %v4607 = vpack.c.b16 %v2975, %v2967
    %v4608 = vpack.c.b16 %v2976, %v2968
    %v4609 = vpack.c.b16 %v2977, %v2969
    %v4610 = vpack.c.b16 %v2978, %v2970
    %v4611 = vpack.c.b16 %v2979, %v2971
    %v4612 = vpack.c.b16 %v2988, %v2980
    %v4613 = vpack.c.b16 %v2989, %v2981
    %v4614 = vpack.c.b16 %v2990, %v2982
    %v4615 = vpack.c.b16 %v2991, %v2983
    %v4616 = vpack.c.b16 %v2992, %v2984
    %v4617 = vpack.c.b16 %v2993, %v2985
    %v4618 = vpack.c.b16 %v2994, %v2986
    %v4619 = vpack.c.b16 %v2995, %v2987
    %v4620 = vpack.c.b16 %v3004, %v2996
    %v4621 = vpack.c.b16 %v3005, %v2997
    %v4622 = vpack.c.b16 %v3006, %v2998
    %v4623 = vpack.c.b16 %v3007, %v2999
    %v4624 = vpack.c.b16 %v3008, %v3000
    %v4625 = vpack.c.b16 %v3009, %v3001
    %v4626 = vpack.c.b16 %v3010, %v3002
    %v4627 = vpack.c.b16 %v3011, %v3003
    %v4628 = vpack.c.b16 %v3020, %v3012
    %v4629 = vpack.c.b16 %v3021, %v3013
    %v4630 = vpack.c.b16 %v3022, %v3014
    %v4631 = vpack.c.b16 %v3023, %v3015
    %v4632 = vpack.c.b16 %v3024, %v3016
    %v4633 = vpack.c.b16 %v3025, %v3017
    %v4634 = vpack.c.b16 %v3026, %v3018
    %v4635 = vpack.c.b16 %v3027, %v3019
    %v4636 = vpack.c.b16 %v3036, %v3028
    %v4637 = vpack.c.b16 %v3037, %v3029
    %v4638 = vpack.c.b16 %v3038, %v3030
    %v4639 = vpack.c.b16 %v3039, %v3031
    %v4640 = vpack.c.b16 %v3040, %v3032
    %v4641 = vpack.c.b16 %v3041, %v3033
    %v4642 = vpack.c.b16 %v3042, %v3034
    %v4643 = vpack.c.b16 %v3043, %v3035
    %v4644 = vpack.c.b16 %v3052, %v3044
    %v4645 = vpack.c.b16 %v3053, %v3045
    %v4646 = vpack.c.b16 %v3054, %v3046
    %v4647 = vpack.c.b16 %v3055, %v3047
    %v4648 = vpack.c.b16 %v3056, %v3048
    %v4649 = vpack.c.b16 %v3057, %v3049
    %v4650 = vpack.c.b16 %v3058, %v3050
    %v4651 = vpack.c.b16 %v3059, %v3051
    %v4652 = vpack.c.b16 %v3068, %v3060
    %v4653 = vpack.c.b16 %v3069, %v3061
    %v4654 = vpack.c.b16 %v3070, %v3062
    %v4655 = vpack.c.b16 %v3071, %v3063
    %v4656 = vpack.c.b16 %v3072, %v3064
    %v4657 = vpack.c.b16 %v3073, %v3065
    %v4658 = vpack.c.b16 %v3074, %v3066
    %v4659 = vpack.c.b16 %v3075, %v3067
    %v4660 = vpack.c.b16 %v3084, %v3076
    %v4661 = vpack.c.b16 %v3085, %v3077
    %v4662 = vpack.c.b16 %v3086, %v3078
    %v4663 = vpack.c.b16 %v3087, %v3079
    %v4664 = vpack.c.b16 %v3088, %v3080
    %v4665 = vpack.c.b16 %v3089, %v3081
    %v4666 = vpack.c.b16 %v3090, %v3082
    %v4667 = vpack.c.b16 %v3091, %v3083
    %v4668 = vpack.c.b16 %v3100, %v3092
    %v4669 = vpack.c.b16 %v3101, %v3093
    %v4670 = vpack.c.b16 %v3102, %v3094
    %v4671 = vpack.c.b16 %v3103, %v3095
    %v4672 = vpack.c.b16 %v3104, %v3096
    %v4673 = vpack.c.b16 %v3105, %v3097
    %v4674 = vpack.c.b16 %v3106, %v3098
    %v4675 = vpack.c.b16 %v3107, %v3099
    %v4676 = vpack.c.b16 %v3116, %v3108
    %v4677 = vpack.c.b16 %v3117, %v3109
    %v4678 = vpack.c.b16 %v3118, %v3110
    %v4679 = vpack.c.b16 %v3119, %v3111
    %v4680 = vpack.c.b16 %v3120, %v3112
    %v4681 = vpack.c.b16 %v3121, %v3113
    %v4682 = vpack.c.b16 %v3122, %v3114
    %v4683 = vpack.c.b16 %v3123, %v3115
    %v4684 = vpack.c.b16 %v3132, %v3124
    %v4685 = vpack.c.b16 %v3133, %v3125
    %v4686 = vpack.c.b16 %v3134, %v3126
    %v4687 = vpack.c.b16 %v3135, %v3127
    %v4688 = vpack.c.b16 %v3136, %v3128
    %v4689 = vpack.c.b16 %v3137, %v3129
    %v4690 = vpack.c.b16 %v3138, %v3130
    %v4691 = vpack.c.b16 %v3139, %v3131
    %v4692 = vpack.c.b16 %v3148, %v3140
    %v4693 = vpack.c.b16 %v3149, %v3141
    %v4694 = vpack.c.b16 %v3150, %v3142
    %v4695 = vpack.c.b16 %v3151, %v3143
    %v4696 = vpack.c.b16 %v3152, %v3144
    %v4697 = vpack.c.b16 %v3153, %v3145
    %v4698 = vpack.c.b16 %v3154, %v3146
    %v4699 = vpack.c.b16 %v3155, %v3147
    %v4700 = vpack.c.b16 %v3164, %v3156
    %v4701 = vpack.c.b16 %v3165, %v3157
    %v4702 = vpack.c.b16 %v3166, %v3158
    %v4703 = vpack.c.b16 %v3167, %v3159
    %v4704 = vpack.c.b16 %v3168, %v3160
    %v4705 = vpack.c.b16 %v3169, %v3161
    %v4706 = vpack.c.b16 %v3170, %v3162
    %v4707 = vpack.c.b16 %v3171, %v3163
    %v4708 = vpack.c.b16 %v3180, %v3172
    %v4709 = vpack.c.b16 %v3181, %v3173
    %v4710 = vpack.c.b16 %v3182, %v3174
    %v4711 = vpack.c.b16 %v3183, %v3175
    %v4712 = vpack.c.b16 %v3184, %v3176
    %v4713 = vpack.c.b16 %v3185, %v3177
    %v4714 = vpack.c.b16 %v3186, %v3178
    %v4715 = vpack.c.b16 %v3187, %v3179
    %v4716 = vpack.c.b16 %v3196, %v3188
    %v4717 = vpack.c.b16 %v3197, %v3189
    %v4718 = vpack.c.b16 %v3198, %v3190
    %v4719 = vpack.c.b16 %v3199, %v3191
    %v4720 = vpack.c.b16 %v3200, %v3192
    %v4721 = vpack.c.b16 %v3201, %v3193
    %v4722 = vpack.c.b16 %v3202, %v3194
    %v4723 = vpack.c.b16 %v3203, %v3195
    %v4724 = vpack.c.b16 %v3212, %v3204
    %v4725 = vpack.c.b16 %v3213, %v3205
    %v4726 = vpack.c.b16 %v3214, %v3206
    %v4727 = vpack.c.b16 %v3215, %v3207
    %v4728 = vpack.c.b16 %v3216, %v3208
    %v4729 = vpack.c.b16 %v3217, %v3209
    %v4730 = vpack.c.b16 %v3218, %v3210
    %v4731 = vpack.c.b16 %v3219, %v3211
    %v4732 = vpack.c.b16 %v3228, %v3220
    %v4733 = vpack.c.b16 %v3229, %v3221
    %v4734 = vpack.c.b16 %v3230, %v3222
    %v4735 = vpack.c.b16 %v3231, %v3223
    %v4736 = vpack.c.b16 %v3232, %v3224
    %v4737 = vpack.c.b16 %v3233, %v3225
    %v4738 = vpack.c.b16 %v3234, %v3226
    %v4739 = vpack.c.b16 %v3235, %v3227
    %v4740 = vpack.c.b16 %v3244, %v3236
    %v4741 = vpack.c.b16 %v3245, %v3237
    %v4742 = vpack.c.b16 %v3246, %v3238
    %v4743 = vpack.c.b16 %v3247, %v3239
    %v4744 = vpack.c.b16 %v3248, %v3240
    %v4745 = vpack.c.b16 %v3249, %v3241
    %v4746 = vpack.c.b16 %v3250, %v3242
    %v4747 = vpack.c.b16 %v3251, %v3243
    %v4748 = vpack.c.b16 %v3260, %v3252
    %v4749 = vpack.c.b16 %v3261, %v3253
    %v4750 = vpack.c.b16 %v3262, %v3254
    %v4751 = vpack.c.b16 %v3263, %v3255
    %v4752 = vpack.c.b16 %v3264, %v3256
    %v4753 = vpack.c.b16 %v3265, %v3257
    %v4754 = vpack.c.b16 %v3266, %v3258
    %v4755 = vpack.c.b16 %v3267, %v3259
    %v4756 = vpack.c.b16 %v3276, %v3268
    %v4757 = vpack.c.b16 %v3277, %v3269
    %v4758 = vpack.c.b16 %v3278, %v3270
    %v4759 = vpack.c.b16 %v3279, %v3271
    %v4760 = vpack.c.b16 %v3280, %v3272
    %v4761 = vpack.c.b16 %v3281, %v3273
    %v4762 = vpack.c.b16 %v3282, %v3274
    %v4763 = vpack.c.b16 %v3283, %v3275
    %v4764 = vpack.c.b16 %v3292, %v3284
    %v4765 = vpack.c.b16 %v3293, %v3285
    %v4766 = vpack.c.b16 %v3294, %v3286
    %v4767 = vpack.c.b16 %v3295, %v3287
    %v4768 = vpack.c.b16 %v3296, %v3288
    %v4769 = vpack.c.b16 %v3297, %v3289
    %v4770 = vpack.c.b16 %v3298, %v3290
    %v4771 = vpack.c.b16 %v3299, %v3291
    %v4772 = vpack.c.b16 %v3308, %v3300
    %v4773 = vpack.c.b16 %v3309, %v3301
    %v4774 = vpack.c.b16 %v3310, %v3302
    %v4775 = vpack.c.b16 %v3311, %v3303
    %v4776 = vpack.c.b16 %v3312, %v3304
    %v4777 = vpack.c.b16 %v3313, %v3305
    %v4778 = vpack.c.b16 %v3314, %v3306
    %v4779 = vpack.c.b16 %v3315, %v3307
    %v4780 = vpack.c.b16 %v3324, %v3316
    %v4781 = vpack.c.b16 %v3325, %v3317
    %v4782 = vpack.c.b16 %v3326, %v3318
    %v4783 = vpack.c.b16 %v3327, %v3319
    %v4784 = vpack.c.b16 %v3328, %v3320
    %v4785 = vpack.c.b16 %v3329, %v3321
    %v4786 = vpack.c.b16 %v3330, %v3322
    %v4787 = vpack.c.b16 %v3331, %v3323
    %v4788 = vpack.c.b16 %v3340, %v3332
    %v4789 = vpack.c.b16 %v3341, %v3333
    %v4790 = vpack.c.b16 %v3342, %v3334
    %v4791 = vpack.c.b16 %v3343, %v3335
    %v4792 = vpack.c.b16 %v3344, %v3336
    %v4793 = vpack.c.b16 %v3345, %v3337
    %v4794 = vpack.c.b16 %v3346, %v3338
    %v4795 = vpack.c.b16 %v3347, %v3339
    %v4796 = vpack.c.b16 %v3356, %v3348
    %v4797 = vpack.c.b16 %v3357, %v3349
    %v4798 = vpack.c.b16 %v3358, %v3350
    %v4799 = vpack.c.b16 %v3359, %v3351
    %v4800 = vpack.c.b16 %v3360, %v3352
    %v4801 = vpack.c.b16 %v3361, %v3353
    %v4802 = vpack.c.b16 %v3362, %v3354
    %v4803 = vpack.c.b16 %v3363, %v3355
    %v4804 = vpack.c.b16 %v3372, %v3364
    %v4805 = vpack.c.b16 %v3373, %v3365
    %v4806 = vpack.c.b16 %v3374, %v3366
    %v4807 = vpack.c.b16 %v3375, %v3367
    %v4808 = vpack.c.b16 %v3376, %v3368
    %v4809 = vpack.c.b16 %v3377, %v3369
    %v4810 = vpack.c.b16 %v3378, %v3370
    %v4811 = vpack.c.b16 %v3379, %v3371
    %v4812 = vpack.c.b16 %v3388, %v3380
    %v4813 = vpack.c.b16 %v3389, %v3381
    %v4814 = vpack.c.b16 %v3390, %v3382
    %v4815 = vpack.c.b16 %v3391, %v3383
    %v4816 = vpack.c.b16 %v3392, %v3384
    %v4817 = vpack.c.b16 %v3393, %v3385
    %v4818 = vpack.c.b16 %v3394, %v3386
    %v4819 = vpack.c.b16 %v3395, %v3387
    %v4820 = vpack.c.b16 %v3404, %v3396
    %v4821 = vpack.c.b16 %v3405, %v3397
    %v4822 = vpack.c.b16 %v3406, %v3398
    %v4823 = vpack.c.b16 %v3407, %v3399
    %v4824 = vpack.c.b16 %v3408, %v3400
    %v4825 = vpack.c.b16 %v3409, %v3401
    %v4826 = vpack.c.b16 %v3410, %v3402
    %v4827 = vpack.c.b16 %v3411, %v3403
    %v4828 = vpack.c.b16 %v3420, %v3412
    %v4829 = vpack.c.b16 %v3421, %v3413
    %v4830 = vpack.c.b16 %v3422, %v3414
    %v4831 = vpack.c.b16 %v3423, %v3415
    %v4832 = vpack.c.b16 %v3424, %v3416
    %v4833 = vpack.c.b16 %v3425, %v3417
    %v4834 = vpack.c.b16 %v3426, %v3418
    %v4835 = vpack.c.b16 %v3427, %v3419
    %v4836 = vpack.c.b16 %v3436, %v3428
    %v4837 = vpack.c.b16 %v3437, %v3429
    %v4838 = vpack.c.b16 %v3438, %v3430
    %v4839 = vpack.c.b16 %v3439, %v3431
    %v4840 = vpack.c.b16 %v3440, %v3432
    %v4841 = vpack.c.b16 %v3441, %v3433
    %v4842 = vpack.c.b16 %v3442, %v3434
    %v4843 = vpack.c.b16 %v3443, %v3435
    %v4844 = vpack.c.b16 %v3452, %v3444
    %v4845 = vpack.c.b16 %v3453, %v3445
    %v4846 = vpack.c.b16 %v3454, %v3446
    %v4847 = vpack.c.b16 %v3455, %v3447
    %v4848 = vpack.c.b16 %v3456, %v3448
    %v4849 = vpack.c.b16 %v3457, %v3449
    %v4850 = vpack.c.b16 %v3458, %v3450
    %v4851 = vpack.c.b16 %v3459, %v3451
    %v4852 = vpack.c.b16 %v3468, %v3460
    %v4853 = vpack.c.b16 %v3469, %v3461
    %v4854 = vpack.c.b16 %v3470, %v3462
    %v4855 = vpack.c.b16 %v3471, %v3463
    %v4856 = vpack.c.b16 %v3472, %v3464
    %v4857 = vpack.c.b16 %v3473, %v3465
    %v4858 = vpack.c.b16 %v3474, %v3466
    %v4859 = vpack.c.b16 %v3475, %v3467
    %v4860 = vpack.c.b16 %v3484, %v3476
    %v4861 = vpack.c.b16 %v3485, %v3477
    %v4862 = vpack.c.b16 %v3486, %v3478
    %v4863 = vpack.c.b16 %v3487, %v3479
    %v4864 = vpack.c.b16 %v3488, %v3480
    %v4865 = vpack.c.b16 %v3489, %v3481
    %v4866 = vpack.c.b16 %v3490, %v3482
    %v4867 = vpack.c.b16 %v3491, %v3483
    %v4868 = vpack.c.b16 %v3500, %v3492
    %v4869 = vpack.c.b16 %v3501, %v3493
    %v4870 = vpack.c.b16 %v3502, %v3494
    %v4871 = vpack.c.b16 %v3503, %v3495
    %v4872 = vpack.c.b16 %v3504, %v3496
    %v4873 = vpack.c.b16 %v3505, %v3497
    %v4874 = vpack.c.b16 %v3506, %v3498
    %v4875 = vpack.c.b16 %v3507, %v3499
    %v4876 = vpack.c.b16 %v3516, %v3508
    %v4877 = vpack.c.b16 %v3517, %v3509
    %v4878 = vpack.c.b16 %v3518, %v3510
    %v4879 = vpack.c.b16 %v3519, %v3511
    %v4880 = vpack.c.b16 %v3520, %v3512
    %v4881 = vpack.c.b16 %v3521, %v3513
    %v4882 = vpack.c.b16 %v3522, %v3514
    %v4883 = vpack.c.b16 %v3523, %v3515
    %v4884 = vpack.c.b16 %v3532, %v3524
    %v4885 = vpack.c.b16 %v3533, %v3525
    %v4886 = vpack.c.b16 %v3534, %v3526
    %v4887 = vpack.c.b16 %v3535, %v3527
    %v4888 = vpack.c.b16 %v3536, %v3528
    %v4889 = vpack.c.b16 %v3537, %v3529
    %v4890 = vpack.c.b16 %v3538, %v3530
    %v4891 = vpack.c.b16 %v3539, %v3531
    %v4892 = vpack.c.b16 %v3548, %v3540
    %v4893 = vpack.c.b16 %v3549, %v3541
    %v4894 = vpack.c.b16 %v3550, %v3542
    %v4895 = vpack.c.b16 %v3551, %v3543
    %v4896 = vpack.c.b16 %v3552, %v3544
    %v4897 = vpack.c.b16 %v3553, %v3545
    %v4898 = vpack.c.b16 %v3554, %v3546
    %v4899 = vpack.c.b16 %v3555, %v3547
    %v4900 = vpack.c.b16 %v3564, %v3556
    %v4901 = vpack.c.b16 %v3565, %v3557
    %v4902 = vpack.c.b16 %v3566, %v3558
    %v4903 = vpack.c.b16 %v3567, %v3559
    %v4904 = vpack.c.b16 %v3568, %v3560
    %v4905 = vpack.c.b16 %v3569, %v3561
    %v4906 = vpack.c.b16 %v3570, %v3562
    %v4907 = vpack.c.b16 %v3571, %v3563
    %v4908 = vpack.c.b16 %v3580, %v3572
    %v4909 = vpack.c.b16 %v3581, %v3573
    %v4910 = vpack.c.b16 %v3582, %v3574
    %v4911 = vpack.c.b16 %v3583, %v3575
    %v4912 = vpack.c.b16 %v3584, %v3576
    %v4913 = vpack.c.b16 %v3585, %v3577
    %v4914 = vpack.c.b16 %v3586, %v3578
    %v4915 = vpack.c.b16 %v3587, %v3579
    %v4916 = vpack.c.b16 %v3596, %v3588
    %v4917 = vpack.c.b16 %v3597, %v3589
    %v4918 = vpack.c.b16 %v3598, %v3590
    %v4919 = vpack.c.b16 %v3599, %v3591
    %v4920 = vpack.c.b16 %v3600, %v3592
    %v4921 = vpack.c.b16 %v3601, %v3593
    %v4922 = vpack.c.b16 %v3602, %v3594
    %v4923 = vpack.c.b16 %v3603, %v3595
    %v4924 = vpack.c.b16 %v3612, %v3604
    %v4925 = vpack.c.b16 %v3613, %v3605
    %v4926 = vpack.c.b16 %v3614, %v3606
    %v4927 = vpack.c.b16 %v3615, %v3607
    %v4928 = vpack.c.b16 %v3616, %v3608
    %v4929 = vpack.c.b16 %v3617, %v3609
    %v4930 = vpack.c.b16 %v3618, %v3610
    %v4931 = vpack.c.b16 %v3619, %v3611
    %v4932 = vpack.c.b16 %v3628, %v3620
    %v4933 = vpack.c.b16 %v3629, %v3621
    %v4934 = vpack.c.b16 %v3630, %v3622
    %v4935 = vpack.c.b16 %v3631, %v3623
    %v4936 = vpack.c.b16 %v3632, %v3624
    %v4937 = vpack.c.b16 %v3633, %v3625
    %v4938 = vpack.c.b16 %v3634, %v3626
    %v4939 = vpack.c.b16 %v3635, %v3627
    %v4940 = vpack.c.b16 %v3644, %v3636
    %v4941 = vpack.c.b16 %v3645, %v3637
    %v4942 = vpack.c.b16 %v3646, %v3638
    %v4943 = vpack.c.b16 %v3647, %v3639
    %v4944 = vpack.c.b16 %v3648, %v3640
    %v4945 = vpack.c.b16 %v3649, %v3641
    %v4946 = vpack.c.b16 %v3650, %v3642
    %v4947 = vpack.c.b16 %v3651, %v3643
    %v4948 = vpack.c.b16 %v3660, %v3652
    %v4949 = vpack.c.b16 %v3661, %v3653
    %v4950 = vpack.c.b16 %v3662, %v3654
    %v4951 = vpack.c.b16 %v3663, %v3655
    %v4952 = vpack.c.b16 %v3664, %v3656
    %v4953 = vpack.c.b16 %v3665, %v3657
    %v4954 = vpack.c.b16 %v3666, %v3658
    %v4955 = vpack.c.b16 %v3667, %v3659
    %v4956 = vpack.c.b16 %v3676, %v3668
    %v4957 = vpack.c.b16 %v3677, %v3669
    %v4958 = vpack.c.b16 %v3678, %v3670
    %v4959 = vpack.c.b16 %v3679, %v3671
    %v4960 = vpack.c.b16 %v3680, %v3672
    %v4961 = vpack.c.b16 %v3681, %v3673
    %v4962 = vpack.c.b16 %v3682, %v3674
    %v4963 = vpack.c.b16 %v3683, %v3675
    %v4964 = vpack.c.b16 %v3692, %v3684
    %v4965 = vpack.c.b16 %v3693, %v3685
    %v4966 = vpack.c.b16 %v3694, %v3686
    %v4967 = vpack.c.b16 %v3695, %v3687
    %v4968 = vpack.c.b16 %v3696, %v3688
    %v4969 = vpack.c.b16 %v3697, %v3689
    %v4970 = vpack.c.b16 %v3698, %v3690
    %v4971 = vpack.c.b16 %v3699, %v3691
    %v4972 = vpack.c.b16 %v3708, %v3700
    %v4973 = vpack.c.b16 %v3709, %v3701
    %v4974 = vpack.c.b16 %v3710, %v3702
    %v4975 = vpack.c.b16 %v3711, %v3703
    %v4976 = vpack.c.b16 %v3712, %v3704
    %v4977 = vpack.c.b16 %v3713, %v3705
    %v4978 = vpack.c.b16 %v3714, %v3706
    %v4979 = vpack.c.b16 %v3715, %v3707
    %v4980 = vpack.c.b16 %v3724, %v3716
    %v4981 = vpack.c.b16 %v3725, %v3717
    %v4982 = vpack.c.b16 %v3726, %v3718
    %v4983 = vpack.c.b16 %v3727, %v3719
    %v4984 = vpack.c.b16 %v3728, %v3720
    %v4985 = vpack.c.b16 %v3729, %v3721
    %v4986 = vpack.c.b16 %v3730, %v3722
    %v4987 = vpack.c.b16 %v3731, %v3723
    %v4988 = vpack.c.b16 %v3740, %v3732
    %v4989 = vpack.c.b16 %v3741, %v3733
    %v4990 = vpack.c.b16 %v3742, %v3734
    %v4991 = vpack.c.b16 %v3743, %v3735
    %v4992 = vpack.c.b16 %v3744, %v3736
    %v4993 = vpack.c.b16 %v3745, %v3737
    %v4994 = vpack.c.b16 %v3746, %v3738
    %v4995 = vpack.c.b16 %v3747, %v3739
    %v4996 = vpack.c.b16 %v3756, %v3748
    %v4997 = vpack.c.b16 %v3757, %v3749
    %v4998 = vpack.c.b16 %v3758, %v3750
    %v4999 = vpack.c.b16 %v3759, %v3751
    %v5000 = vpack.c.b16 %v3760, %v3752
    %v5001 = vpack.c.b16 %v3761, %v3753
    %v5002 = vpack.c.b16 %v3762, %v3754
    %v5003 = vpack.c.b16 %v3763, %v3755
    %v5004 = vpack.c.b16 %v3772, %v3764
    %v5005 = vpack.c.b16 %v3773, %v3765
    %v5006 = vpack.c.b16 %v3774, %v3766
    %v5007 = vpack.c.b16 %v3775, %v3767
    %v5008 = vpack.c.b16 %v3776, %v3768
    %v5009 = vpack.c.b16 %v3777, %v3769
    %v5010 = vpack.c.b16 %v3778, %v3770
    %v5011 = vpack.c.b16 %v3779, %v3771
    %v5012 = vpack.c.b16 %v3788, %v3780
    %v5013 = vpack.c.b16 %v3789, %v3781
    %v5014 = vpack.c.b16 %v3790, %v3782
    %v5015 = vpack.c.b16 %v3791, %v3783
    %v5016 = vpack.c.b16 %v3792, %v3784
    %v5017 = vpack.c.b16 %v3793, %v3785
    %v5018 = vpack.c.b16 %v3794, %v3786
    %v5019 = vpack.c.b16 %v3795, %v3787
    %v5020 = vpack.c.b16 %v3804, %v3796
    %v5021 = vpack.c.b16 %v3805, %v3797
    %v5022 = vpack.c.b16 %v3806, %v3798
    %v5023 = vpack.c.b16 %v3807, %v3799
    %v5024 = vpack.c.b16 %v3808, %v3800
    %v5025 = vpack.c.b16 %v3809, %v3801
    %v5026 = vpack.c.b16 %v3810, %v3802
    %v5027 = vpack.c.b16 %v3811, %v3803
    %v5028 = vpack.c.b16 %v3820, %v3812
    %v5029 = vpack.c.b16 %v3821, %v3813
    %v5030 = vpack.c.b16 %v3822, %v3814
    %v5031 = vpack.c.b16 %v3823, %v3815
    %v5032 = vpack.c.b16 %v3824, %v3816
    %v5033 = vpack.c.b16 %v3825, %v3817
    %v5034 = vpack.c.b16 %v3826, %v3818
    %v5035 = vpack.c.b16 %v3827, %v3819
    %v5036 = vpack.c.b16 %v3836, %v3828
    %v5037 = vpack.c.b16 %v3837, %v3829
    %v5038 = vpack.c.b16 %v3838, %v3830
    %v5039 = vpack.c.b16 %v3839, %v3831
    %v5040 = vpack.c.b16 %v3840, %v3832
    %v5041 = vpack.c.b16 %v3841, %v3833
    %v5042 = vpack.c.b16 %v3842, %v3834
    %v5043 = vpack.c.b16 %v3843, %v3835
    %v5044 = vpack.c.b16 %v3852, %v3844
    %v5045 = vpack.c.b16 %v3853, %v3845
    %v5046 = vpack.c.b16 %v3854, %v3846
    %v5047 = vpack.c.b16 %v3855, %v3847
    %v5048 = vpack.c.b16 %v3856, %v3848
    %v5049 = vpack.c.b16 %v3857, %v3849
    %v5050 = vpack.c.b16 %v3858, %v3850
    %v5051 = vpack.c.b16 %v3859, %v3851
    %v5052 = vpack.c.b16 %v3868, %v3860
    %v5053 = vpack.c.b16 %v3869, %v3861
    %v5054 = vpack.c.b16 %v3870, %v3862
    %v5055 = vpack.c.b16 %v3871, %v3863
    %v5056 = vpack.c.b16 %v3872, %v3864
    %v5057 = vpack.c.b16 %v3873, %v3865
    %v5058 = vpack.c.b16 %v3874, %v3866
    %v5059 = vpack.c.b16 %v3875, %v3867
    %v5060 = vpack.c.b16 %v3884, %v3876
    %v5061 = vpack.c.b16 %v3885, %v3877
    %v5062 = vpack.c.b16 %v3886, %v3878
    %v5063 = vpack.c.b16 %v3887, %v3879
    %v5064 = vpack.c.b16 %v3888, %v3880
    %v5065 = vpack.c.b16 %v3889, %v3881
    %v5066 = vpack.c.b16 %v3890, %v3882
    %v5067 = vpack.c.b16 %v3891, %v3883
    %v5068 = vpack.c.b16 %v3900, %v3892
    %v5069 = vpack.c.b16 %v3901, %v3893
    %v5070 = vpack.c.b16 %v3902, %v3894
    %v5071 = vpack.c.b16 %v3903, %v3895
    %v5072 = vpack.c.b16 %v3904, %v3896
    %v5073 = vpack.c.b16 %v3905, %v3897
    %v5074 = vpack.c.b16 %v3906, %v3898
    %v5075 = vpack.c.b16 %v3907, %v3899
    %v5076 = vpack.c.b16 %v3916, %v3908
    %v5077 = vpack.c.b16 %v3917, %v3909
    %v5078 = vpack.c.b16 %v3918, %v3910
    %v5079 = vpack.c.b16 %v3919, %v3911
    %v5080 = vpack.c.b16 %v3920, %v3912
    %v5081 = vpack.c.b16 %v3921, %v3913
    %v5082 = vpack.c.b16 %v3922, %v3914
    %v5083 = vpack.c.b16 %v3923, %v3915
    %v5084 = vpack.c.b16 %v3932, %v3924
    %v5085 = vpack.c.b16 %v3933, %v3925
    %v5086 = vpack.c.b16 %v3934, %v3926
    %v5087 = vpack.c.b16 %v3935, %v3927
    %v5088 = vpack.c.b16 %v3936, %v3928
    %v5089 = vpack.c.b16 %v3937, %v3929
    %v5090 = vpack.c.b16 %v3938, %v3930
    %v5091 = vpack.c.b16 %v3939, %v3931
    %v5092 = vpack.c.b16 %v3948, %v3940
    %v5093 = vpack.c.b16 %v3949, %v3941
    %v5094 = vpack.c.b16 %v3950, %v3942
    %v5095 = vpack.c.b16 %v3951, %v3943
    %v5096 = vpack.c.b16 %v3952, %v3944
    %v5097 = vpack.c.b16 %v3953, %v3945
    %v5098 = vpack.c.b16 %v3954, %v3946
    %v5099 = vpack.c.b16 %v3955, %v3947
    %v5100 = vpack.c.b16 %v3964, %v3956
    %v5101 = vpack.c.b16 %v3965, %v3957
    %v5102 = vpack.c.b16 %v3966, %v3958
    %v5103 = vpack.c.b16 %v3967, %v3959
    %v5104 = vpack.c.b16 %v3968, %v3960
    %v5105 = vpack.c.b16 %v3969, %v3961
    %v5106 = vpack.c.b16 %v3970, %v3962
    %v5107 = vpack.c.b16 %v3971, %v3963
    %v5108 = vpack.c.b16 %v3980, %v3972
    %v5109 = vpack.c.b16 %v3981, %v3973
    %v5110 = vpack.c.b16 %v3982, %v3974
    %v5111 = vpack.c.b16 %v3983, %v3975
    %v5112 = vpack.c.b16 %v3984, %v3976
    %v5113 = vpack.c.b16 %v3985, %v3977
    %v5114 = vpack.c.b16 %v3986, %v3978
    %v5115 = vpack.c.b16 %v3987, %v3979
    %v5116 = vpack.c.b16 %v3996, %v3988
    %v5117 = vpack.c.b16 %v3997, %v3989
    %v5118 = vpack.c.b16 %v3998, %v3990
    %v5119 = vpack.c.b16 %v3999, %v3991
    %v5120 = vpack.c.b16 %v4000, %v3992
    %v5121 = vpack.c.b16 %v4001, %v3993
    %v5122 = vpack.c.b16 %v4002, %v3994
    %v5123 = vpack.c.b16 %v4003, %v3995
    %v5124 = vpack.c.b16 %v4012, %v4004
    %v5125 = vpack.c.b16 %v4013, %v4005
    %v5126 = vpack.c.b16 %v4014, %v4006
    %v5127 = vpack.c.b16 %v4015, %v4007
    %v5128 = vpack.c.b16 %v4016, %v4008
    %v5129 = vpack.c.b16 %v4017, %v4009
    %v5130 = vpack.c.b16 %v4018, %v4010
    %v5131 = vpack.c.b16 %v4019, %v4011
    %v5132 = vpack.c.b16 %v4028, %v4020
    %v5133 = vpack.c.b16 %v4029, %v4021
    %v5134 = vpack.c.b16 %v4030, %v4022
    %v5135 = vpack.c.b16 %v4031, %v4023
    %v5136 = vpack.c.b16 %v4032, %v4024
    %v5137 = vpack.c.b16 %v4033, %v4025
    %v5138 = vpack.c.b16 %v4034, %v4026
    %v5139 = vpack.c.b16 %v4035, %v4027
    %v5140 = vpack.c.b16 %v4044, %v4036
    %v5141 = vpack.c.b16 %v4045, %v4037
    %v5142 = vpack.c.b16 %v4046, %v4038
    %v5143 = vpack.c.b16 %v4047, %v4039
    %v5144 = vpack.c.b16 %v4048, %v4040
    %v5145 = vpack.c.b16 %v4049, %v4041
    %v5146 = vpack.c.b16 %v4050, %v4042
    %v5147 = vpack.c.b16 %v4051, %v4043
    %v5148 = vpack.c.b16 %v4060, %v4052
    %v5149 = vpack.c.b16 %v4061, %v4053
    %v5150 = vpack.c.b16 %v4062, %v4054
    %v5151 = vpack.c.b16 %v4063, %v4055
    %v5152 = vpack.c.b16 %v4064, %v4056
    %v5153 = vpack.c.b16 %v4065, %v4057
    %v5154 = vpack.c.b16 %v4066, %v4058
    %v5155 = vpack.c.b16 %v4067, %v4059
    %v5156 = vpack.c.b16 %v4076, %v4068
    %v5157 = vpack.c.b16 %v4077, %v4069
    %v5158 = vpack.c.b16 %v4078, %v4070
    %v5159 = vpack.c.b16 %v4079, %v4071
    %v5160 = vpack.c.b16 %v4080, %v4072
    %v5161 = vpack.c.b16 %v4081, %v4073
    %v5162 = vpack.c.b16 %v4082, %v4074
    %v5163 = vpack.c.b16 %v4083, %v4075
    %v5164 = vpack.c.b16 %v4092, %v4084
    %v5165 = vpack.c.b16 %v4093, %v4085
    %v5166 = vpack.c.b16 %v4094, %v4086
    %v5167 = vpack.c.b16 %v4095, %v4087
    %v5168 = vpack.c.b16 %v4096, %v4088
    %v5169 = vpack.c.b16 %v4097, %v4089
    %v5170 = vpack.c.b16 %v4098, %v4090
    %v5171 = vpack.c.b16 %v4099, %v4091
    %v5172 = vpack.c.b16 %v4108, %v4100
    %v5173 = vpack.c.b16 %v4109, %v4101
    %v5174 = vpack.c.b16 %v4110, %v4102
    %v5175 = vpack.c.b16 %v4111, %v4103
    %v5176 = vpack.c.b16 %v4112, %v4104
    %v5177 = vpack.c.b16 %v4113, %v4105
    %v5178 = vpack.c.b16 %v4114, %v4106
    %v5179 = vpack.c.b16 %v4115, %v4107
    %v5180 = vpack.c.b16 %v4124, %v4116
    %v5181 = vpack.c.b16 %v4125, %v4117
    %v5182 = vpack.c.b16 %v4126, %v4118
    %v5183 = vpack.c.b16 %v4127, %v4119
    %v5184 = vpack.c.b16 %v4128, %v4120
    %v5185 = vpack.c.b16 %v4129, %v4121
    %v5186 = vpack.c.b16 %v4130, %v4122
    %v5187 = vpack.c.b16 %v4131, %v4123
    %v5188 = vpack.c.b16 %v4140, %v4132
    %v5189 = vpack.c.b16 %v4141, %v4133
    %v5190 = vpack.c.b16 %v4142, %v4134
    %v5191 = vpack.c.b16 %v4143, %v4135
    %v5192 = vpack.c.b16 %v4144, %v4136
    %v5193 = vpack.c.b16 %v4145, %v4137
    %v5194 = vpack.c.b16 %v4146, %v4138
    %v5195 = vpack.c.b16 %v4147, %v4139
    %v5196 = vpack.c.b16 %v4156, %v4148
    %v5197 = vpack.c.b16 %v4157, %v4149
    %v5198 = vpack.c.b16 %v4158, %v4150
    %v5199 = vpack.c.b16 %v4159, %v4151
    %v5200 = vpack.c.b16 %v4160, %v4152
    %v5201 = vpack.c.b16 %v4161, %v4153
    %v5202 = vpack.c.b16 %v4162, %v4154
    %v5203 = vpack.c.b16 %v4163, %v4155
    %v5204 = vpack.c.b16 %v4172, %v4164
    %v5205 = vpack.c.b16 %v4173, %v4165
    %v5206 = vpack.c.b16 %v4174, %v4166
    %v5207 = vpack.c.b16 %v4175, %v4167
    %v5208 = vpack.c.b16 %v4176, %v4168
    %v5209 = vpack.c.b16 %v4177, %v4169
    %v5210 = vpack.c.b16 %v4178, %v4170
    %v5211 = vpack.c.b16 %v4179, %v4171
    %v5212 = vpack.c.b16 %v4188, %v4180
    %v5213 = vpack.c.b16 %v4189, %v4181
    %v5214 = vpack.c.b16 %v4190, %v4182
    %v5215 = vpack.c.b16 %v4191, %v4183
    %v5216 = vpack.c.b16 %v4192, %v4184
    %v5217 = vpack.c.b16 %v4193, %v4185
    %v5218 = vpack.c.b16 %v4194, %v4186
    %v5219 = vpack.c.b16 %v4195, %v4187
    %6244 = vmatpush.bf16.msra.mxu0 %v4252
    %6245 = vmatpush.bf16.msra.mxu0 %v4244
    %6246 = vmatpush.bf16.msra.mxu0 %v4236
    %6247 = vmatpush.bf16.msra.mxu0 %v4228
    %6248 = vmatpush.bf16.msra.mxu0 %v4220
    %6249 = vmatpush.bf16.msra.mxu0 %v4212
    %6250 = vmatpush.bf16.msra.mxu0 %v4204
    %6251 = vmatpush.bf16.msra.mxu0 %v4196
    %6252 = vmatmul.bf16.gmra.mxu0 %v66
    %v6253 = vpop.f32.mrf.mxu0
    %v6254 = vadd.f32 %v1108, %v6253
    %v6255 = vpop.f32.mrf.mxu0
    %6256 = vdwg.mxu0
    %6257 = vmatpush.bf16.msra.mxu0 %v4316
    %6258 = vmatpush.bf16.msra.mxu0 %v4308
    %6259 = vmatpush.bf16.msra.mxu0 %v4300
    %6260 = vmatpush.bf16.msra.mxu0 %v4292
    %6261 = vmatpush.bf16.msra.mxu0 %v4284
    %6262 = vmatpush.bf16.msra.mxu0 %v4276
    %6263 = vmatpush.bf16.msra.mxu0 %v4268
    %6264 = vmatpush.bf16.msra.mxu0 %v4260
    %6265 = vmatmul.bf16.gmra.mxu0 %v67
    %v6266 = vpop.f32.mrf.mxu0
    %v6267 = vadd.f32 %v6254, %v6266
    %v6268 = vpop.f32.mrf.mxu0
    %6269 = vdwg.mxu0
    %6270 = vmatpush.bf16.msra.mxu0 %v4380
    %6271 = vmatpush.bf16.msra.mxu0 %v4372
    %6272 = vmatpush.bf16.msra.mxu0 %v4364
    %6273 = vmatpush.bf16.msra.mxu0 %v4356
    %6274 = vmatpush.bf16.msra.mxu0 %v4348
    %6275 = vmatpush.bf16.msra.mxu0 %v4340
    %6276 = vmatpush.bf16.msra.mxu0 %v4332
    %6277 = vmatpush.bf16.msra.mxu0 %v4324
    %6278 = vmatmul.bf16.gmra.mxu0 %v68
    %v6279 = vpop.f32.mrf.mxu0
    %v6280 = vadd.f32 %v6267, %v6279
    %v6281 = vpop.f32.mrf.mxu0
    %6282 = vdwg.mxu0
    %6283 = vmatpush.bf16.msra.mxu0 %v4444
    %6284 = vmatpush.bf16.msra.mxu0 %v4436
    %6285 = vmatpush.bf16.msra.mxu0 %v4428
    %6286 = vmatpush.bf16.msra.mxu0 %v4420
    %6287 = vmatpush.bf16.msra.mxu0 %v4412
    %6288 = vmatpush.bf16.msra.mxu0 %v4404
    %6289 = vmatpush.bf16.msra.mxu0 %v4396
    %6290 = vmatpush.bf16.msra.mxu0 %v4388
    %6291 = vmatmul.bf16.gmra.mxu0 %v69
    %v6292 = vpop.f32.mrf.mxu0
    %v6293 = vadd.f32 %v6280, %v6292
    %v6294 = vpop.f32.mrf.mxu0
    %6295 = vdwg.mxu0
    %6296 = vmatpush.bf16.msra.mxu0 %v4508
    %6297 = vmatpush.bf16.msra.mxu0 %v4500
    %6298 = vmatpush.bf16.msra.mxu0 %v4492
    %6299 = vmatpush.bf16.msra.mxu0 %v4484
    %6300 = vmatpush.bf16.msra.mxu0 %v4476
    %6301 = vmatpush.bf16.msra.mxu0 %v4468
    %6302 = vmatpush.bf16.msra.mxu0 %v4460
    %6303 = vmatpush.bf16.msra.mxu0 %v4452
    %6304 = vmatmul.bf16.gmra.mxu0 %v70
    %v6305 = vpop.f32.mrf.mxu0
    %v6306 = vadd.f32 %v6293, %v6305
    %v6307 = vpop.f32.mrf.mxu0
    %6308 = vdwg.mxu0
    %6309 = vmatpush.bf16.msra.mxu0 %v4572
    %6310 = vmatpush.bf16.msra.mxu0 %v4564
    %6311 = vmatpush.bf16.msra.mxu0 %v4556
    %6312 = vmatpush.bf16.msra.mxu0 %v4548
    %6313 = vmatpush.bf16.msra.mxu0 %v4540
    %6314 = vmatpush.bf16.msra.mxu0 %v4532
    %6315 = vmatpush.bf16.msra.mxu0 %v4524
    %6316 = vmatpush.bf16.msra.mxu0 %v4516
    %6317 = vmatmul.bf16.gmra.mxu0 %v71
    %v6318 = vpop.f32.mrf.mxu0
    %v6319 = vadd.f32 %v6306, %v6318
    %v6320 = vpop.f32.mrf.mxu0
    %6321 = vdwg.mxu0
    %6322 = vmatpush.bf16.msra.mxu0 %v4636
    %6323 = vmatpush.bf16.msra.mxu0 %v4628
    %6324 = vmatpush.bf16.msra.mxu0 %v4620
    %6325 = vmatpush.bf16.msra.mxu0 %v4612
    %6326 = vmatpush.bf16.msra.mxu0 %v4604
    %6327 = vmatpush.bf16.msra.mxu0 %v4596
    %6328 = vmatpush.bf16.msra.mxu0 %v4588
    %6329 = vmatpush.bf16.msra.mxu0 %v4580
    %6330 = vmatmul.bf16.gmra.mxu0 %v72
    %v6331 = vpop.f32.mrf.mxu0
    %v6332 = vadd.f32 %v6319, %v6331
    %v6333 = vpop.f32.mrf.mxu0
    %6334 = vdwg.mxu0
    %6335 = vmatpush.bf16.msra.mxu0 %v4700
    %6336 = vmatpush.bf16.msra.mxu0 %v4692
    %6337 = vmatpush.bf16.msra.mxu0 %v4684
    %6338 = vmatpush.bf16.msra.mxu0 %v4676
    %6339 = vmatpush.bf16.msra.mxu0 %v4668
    %6340 = vmatpush.bf16.msra.mxu0 %v4660
    %6341 = vmatpush.bf16.msra.mxu0 %v4652
    %6342 = vmatpush.bf16.msra.mxu0 %v4644
    %6343 = vmatmul.bf16.gmra.mxu0 %v73
    %v6344 = vpop.f32.mrf.mxu0
    %v6345 = vadd.f32 %v6332, %v6344
    %v6346 = vpop.f32.mrf.mxu0
    %6347 = vdwg.mxu0
    %6348 = vmatpush.bf16.msra.mxu0 %v4764
    %6349 = vmatpush.bf16.msra.mxu0 %v4756
    %6350 = vmatpush.bf16.msra.mxu0 %v4748
    %6351 = vmatpush.bf16.msra.mxu0 %v4740
    %6352 = vmatpush.bf16.msra.mxu0 %v4732
    %6353 = vmatpush.bf16.msra.mxu0 %v4724
    %6354 = vmatpush.bf16.msra.mxu0 %v4716
    %6355 = vmatpush.bf16.msra.mxu0 %v4708
    %6356 = vmatmul.bf16.gmra.mxu0 %v74
    %v6357 = vpop.f32.mrf.mxu0
    %v6358 = vadd.f32 %v6345, %v6357
    %v6359 = vpop.f32.mrf.mxu0
    %6360 = vdwg.mxu0
    %6361 = vmatpush.bf16.msra.mxu0 %v4828
    %6362 = vmatpush.bf16.msra.mxu0 %v4820
    %6363 = vmatpush.bf16.msra.mxu0 %v4812
    %6364 = vmatpush.bf16.msra.mxu0 %v4804
    %6365 = vmatpush.bf16.msra.mxu0 %v4796
    %6366 = vmatpush.bf16.msra.mxu0 %v4788
    %6367 = vmatpush.bf16.msra.mxu0 %v4780
    %6368 = vmatpush.bf16.msra.mxu0 %v4772
    %6369 = vmatmul.bf16.gmra.mxu0 %v75
    %v6370 = vpop.f32.mrf.mxu0
    %v6371 = vadd.f32 %v6358, %v6370
    %v6372 = vpop.f32.mrf.mxu0
    %6373 = vdwg.mxu0
    %6374 = vmatpush.bf16.msra.mxu0 %v4892
    %6375 = vmatpush.bf16.msra.mxu0 %v4884
    %6376 = vmatpush.bf16.msra.mxu0 %v4876
    %6377 = vmatpush.bf16.msra.mxu0 %v4868
    %6378 = vmatpush.bf16.msra.mxu0 %v4860
    %6379 = vmatpush.bf16.msra.mxu0 %v4852
    %6380 = vmatpush.bf16.msra.mxu0 %v4844
    %6381 = vmatpush.bf16.msra.mxu0 %v4836
    %6382 = vmatmul.bf16.gmra.mxu0 %v76
    %v6383 = vpop.f32.mrf.mxu0
    %v6384 = vadd.f32 %v6371, %v6383
    %v6385 = vpop.f32.mrf.mxu0
    %6386 = vdwg.mxu0
    %6387 = vmatpush.bf16.msra.mxu0 %v4956
    %6388 = vmatpush.bf16.msra.mxu0 %v4948
    %6389 = vmatpush.bf16.msra.mxu0 %v4940
    %6390 = vmatpush.bf16.msra.mxu0 %v4932
    %6391 = vmatpush.bf16.msra.mxu0 %v4924
    %6392 = vmatpush.bf16.msra.mxu0 %v4916
    %6393 = vmatpush.bf16.msra.mxu0 %v4908
    %6394 = vmatpush.bf16.msra.mxu0 %v4900
    %6395 = vmatmul.bf16.gmra.mxu0 %v77
    %v6396 = vpop.f32.mrf.mxu0
    %v6397 = vadd.f32 %v6384, %v6396
    %v6398 = vpop.f32.mrf.mxu0
    %6399 = vdwg.mxu0
    %6400 = vmatpush.bf16.msra.mxu0 %v5020
    %6401 = vmatpush.bf16.msra.mxu0 %v5012
    %6402 = vmatpush.bf16.msra.mxu0 %v5004
    %6403 = vmatpush.bf16.msra.mxu0 %v4996
    %6404 = vmatpush.bf16.msra.mxu0 %v4988
    %6405 = vmatpush.bf16.msra.mxu0 %v4980
    %6406 = vmatpush.bf16.msra.mxu0 %v4972
    %6407 = vmatpush.bf16.msra.mxu0 %v4964
    %6408 = vmatmul.bf16.gmra.mxu0 %v78
    %v6409 = vpop.f32.mrf.mxu0
    %v6410 = vadd.f32 %v6397, %v6409
    %v6411 = vpop.f32.mrf.mxu0
    %6412 = vdwg.mxu0
    %6413 = vmatpush.bf16.msra.mxu0 %v5084
    %6414 = vmatpush.bf16.msra.mxu0 %v5076
    %6415 = vmatpush.bf16.msra.mxu0 %v5068
    %6416 = vmatpush.bf16.msra.mxu0 %v5060
    %6417 = vmatpush.bf16.msra.mxu0 %v5052
    %6418 = vmatpush.bf16.msra.mxu0 %v5044
    %6419 = vmatpush.bf16.msra.mxu0 %v5036
    %6420 = vmatpush.bf16.msra.mxu0 %v5028
    %6421 = vmatmul.bf16.gmra.mxu0 %v79
    %v6422 = vpop.f32.mrf.mxu0
    %v6423 = vadd.f32 %v6410, %v6422
    %v6424 = vpop.f32.mrf.mxu0
    %6425 = vdwg.mxu0
    %6426 = vmatpush.bf16.msra.mxu0 %v5148
    %6427 = vmatpush.bf16.msra.mxu0 %v5140
    %6428 = vmatpush.bf16.msra.mxu0 %v5132
    %6429 = vmatpush.bf16.msra.mxu0 %v5124
    %6430 = vmatpush.bf16.msra.mxu0 %v5116
    %6431 = vmatpush.bf16.msra.mxu0 %v5108
    %6432 = vmatpush.bf16.msra.mxu0 %v5100
    %6433 = vmatpush.bf16.msra.mxu0 %v5092
    %6434 = vmatmul.bf16.gmra.mxu0 %v80
    %v6435 = vpop.f32.mrf.mxu0
    %v6436 = vadd.f32 %v6423, %v6435
    %v6437 = vpop.f32.mrf.mxu0
    %6438 = vdwg.mxu0
    %6439 = vmatpush.bf16.msra.mxu0 %v5212
    %6440 = vmatpush.bf16.msra.mxu0 %v5204
    %6441 = vmatpush.bf16.msra.mxu0 %v5196
    %6442 = vmatpush.bf16.msra.mxu0 %v5188
    %6443 = vmatpush.bf16.msra.mxu0 %v5180
    %6444 = vmatpush.bf16.msra.mxu0 %v5172
    %6445 = vmatpush.bf16.msra.mxu0 %v5164
    %6446 = vmatpush.bf16.msra.mxu0 %v5156
    %6447 = vmatmul.bf16.gmra.mxu0 %v81
    %v6448 = vpop.f32.mrf.mxu0
    %v6449 = vadd.f32 %v6436, %v6448
    %v6450 = vpop.f32.mrf.mxu0
    %6451 = vdwg.mxu0
    %6452 = vmatpush.bf16.msra.mxu0 %v4253
    %6453 = vmatpush.bf16.msra.mxu0 %v4245
    %6454 = vmatpush.bf16.msra.mxu0 %v4237
    %6455 = vmatpush.bf16.msra.mxu0 %v4229
    %6456 = vmatpush.bf16.msra.mxu0 %v4221
    %6457 = vmatpush.bf16.msra.mxu0 %v4213
    %6458 = vmatpush.bf16.msra.mxu0 %v4205
    %6459 = vmatpush.bf16.msra.mxu0 %v4197
    %6460 = vmatmul.bf16.gmra.mxu0 %v66
    %v6461 = vpop.f32.mrf.mxu0
    %v6462 = vadd.f32 %v1109, %v6461
    %v6463 = vpop.f32.mrf.mxu0
    %6464 = vdwg.mxu0
    %6465 = vmatpush.bf16.msra.mxu0 %v4317
    %6466 = vmatpush.bf16.msra.mxu0 %v4309
    %6467 = vmatpush.bf16.msra.mxu0 %v4301
    %6468 = vmatpush.bf16.msra.mxu0 %v4293
    %6469 = vmatpush.bf16.msra.mxu0 %v4285
    %6470 = vmatpush.bf16.msra.mxu0 %v4277
    %6471 = vmatpush.bf16.msra.mxu0 %v4269
    %6472 = vmatpush.bf16.msra.mxu0 %v4261
    %6473 = vmatmul.bf16.gmra.mxu0 %v67
    %v6474 = vpop.f32.mrf.mxu0
    %v6475 = vadd.f32 %v6462, %v6474
    %v6476 = vpop.f32.mrf.mxu0
    %6477 = vdwg.mxu0
    %6478 = vmatpush.bf16.msra.mxu0 %v4381
    %6479 = vmatpush.bf16.msra.mxu0 %v4373
    %6480 = vmatpush.bf16.msra.mxu0 %v4365
    %6481 = vmatpush.bf16.msra.mxu0 %v4357
    %6482 = vmatpush.bf16.msra.mxu0 %v4349
    %6483 = vmatpush.bf16.msra.mxu0 %v4341
    %6484 = vmatpush.bf16.msra.mxu0 %v4333
    %6485 = vmatpush.bf16.msra.mxu0 %v4325
    %6486 = vmatmul.bf16.gmra.mxu0 %v68
    %v6487 = vpop.f32.mrf.mxu0
    %v6488 = vadd.f32 %v6475, %v6487
    %v6489 = vpop.f32.mrf.mxu0
    %6490 = vdwg.mxu0
    %6491 = vmatpush.bf16.msra.mxu0 %v4445
    %6492 = vmatpush.bf16.msra.mxu0 %v4437
    %6493 = vmatpush.bf16.msra.mxu0 %v4429
    %6494 = vmatpush.bf16.msra.mxu0 %v4421
    %6495 = vmatpush.bf16.msra.mxu0 %v4413
    %6496 = vmatpush.bf16.msra.mxu0 %v4405
    %6497 = vmatpush.bf16.msra.mxu0 %v4397
    %6498 = vmatpush.bf16.msra.mxu0 %v4389
    %6499 = vmatmul.bf16.gmra.mxu0 %v69
    %v6500 = vpop.f32.mrf.mxu0
    %v6501 = vadd.f32 %v6488, %v6500
    %v6502 = vpop.f32.mrf.mxu0
    %6503 = vdwg.mxu0
    %6504 = vmatpush.bf16.msra.mxu0 %v4509
    %6505 = vmatpush.bf16.msra.mxu0 %v4501
    %6506 = vmatpush.bf16.msra.mxu0 %v4493
    %6507 = vmatpush.bf16.msra.mxu0 %v4485
    %6508 = vmatpush.bf16.msra.mxu0 %v4477
    %6509 = vmatpush.bf16.msra.mxu0 %v4469
    %6510 = vmatpush.bf16.msra.mxu0 %v4461
    %6511 = vmatpush.bf16.msra.mxu0 %v4453
    %6512 = vmatmul.bf16.gmra.mxu0 %v70
    %v6513 = vpop.f32.mrf.mxu0
    %v6514 = vadd.f32 %v6501, %v6513
    %v6515 = vpop.f32.mrf.mxu0
    %6516 = vdwg.mxu0
    %6517 = vmatpush.bf16.msra.mxu0 %v4573
    %6518 = vmatpush.bf16.msra.mxu0 %v4565
    %6519 = vmatpush.bf16.msra.mxu0 %v4557
    %6520 = vmatpush.bf16.msra.mxu0 %v4549
    %6521 = vmatpush.bf16.msra.mxu0 %v4541
    %6522 = vmatpush.bf16.msra.mxu0 %v4533
    %6523 = vmatpush.bf16.msra.mxu0 %v4525
    %6524 = vmatpush.bf16.msra.mxu0 %v4517
    %6525 = vmatmul.bf16.gmra.mxu0 %v71
    %v6526 = vpop.f32.mrf.mxu0
    %v6527 = vadd.f32 %v6514, %v6526
    %v6528 = vpop.f32.mrf.mxu0
    %6529 = vdwg.mxu0
    %6530 = vmatpush.bf16.msra.mxu0 %v4637
    %6531 = vmatpush.bf16.msra.mxu0 %v4629
    %6532 = vmatpush.bf16.msra.mxu0 %v4621
    %6533 = vmatpush.bf16.msra.mxu0 %v4613
    %6534 = vmatpush.bf16.msra.mxu0 %v4605
    %6535 = vmatpush.bf16.msra.mxu0 %v4597
    %6536 = vmatpush.bf16.msra.mxu0 %v4589
    %6537 = vmatpush.bf16.msra.mxu0 %v4581
    %6538 = vmatmul.bf16.gmra.mxu0 %v72
    %v6539 = vpop.f32.mrf.mxu0
    %v6540 = vadd.f32 %v6527, %v6539
    %v6541 = vpop.f32.mrf.mxu0
    %6542 = vdwg.mxu0
    %6543 = vmatpush.bf16.msra.mxu0 %v4701
    %6544 = vmatpush.bf16.msra.mxu0 %v4693
    %6545 = vmatpush.bf16.msra.mxu0 %v4685
    %6546 = vmatpush.bf16.msra.mxu0 %v4677
    %6547 = vmatpush.bf16.msra.mxu0 %v4669
    %6548 = vmatpush.bf16.msra.mxu0 %v4661
    %6549 = vmatpush.bf16.msra.mxu0 %v4653
    %6550 = vmatpush.bf16.msra.mxu0 %v4645
    %6551 = vmatmul.bf16.gmra.mxu0 %v73
    %v6552 = vpop.f32.mrf.mxu0
    %v6553 = vadd.f32 %v6540, %v6552
    %v6554 = vpop.f32.mrf.mxu0
    %6555 = vdwg.mxu0
    %6556 = vmatpush.bf16.msra.mxu0 %v4765
    %6557 = vmatpush.bf16.msra.mxu0 %v4757
    %6558 = vmatpush.bf16.msra.mxu0 %v4749
    %6559 = vmatpush.bf16.msra.mxu0 %v4741
    %6560 = vmatpush.bf16.msra.mxu0 %v4733
    %6561 = vmatpush.bf16.msra.mxu0 %v4725
    %6562 = vmatpush.bf16.msra.mxu0 %v4717
    %6563 = vmatpush.bf16.msra.mxu0 %v4709
    %6564 = vmatmul.bf16.gmra.mxu0 %v74
    %v6565 = vpop.f32.mrf.mxu0
    %v6566 = vadd.f32 %v6553, %v6565
    %v6567 = vpop.f32.mrf.mxu0
    %6568 = vdwg.mxu0
    %6569 = vmatpush.bf16.msra.mxu0 %v4829
    %6570 = vmatpush.bf16.msra.mxu0 %v4821
    %6571 = vmatpush.bf16.msra.mxu0 %v4813
    %6572 = vmatpush.bf16.msra.mxu0 %v4805
    %6573 = vmatpush.bf16.msra.mxu0 %v4797
    %6574 = vmatpush.bf16.msra.mxu0 %v4789
    %6575 = vmatpush.bf16.msra.mxu0 %v4781
    %6576 = vmatpush.bf16.msra.mxu0 %v4773
    %6577 = vmatmul.bf16.gmra.mxu0 %v75
    %v6578 = vpop.f32.mrf.mxu0
    %v6579 = vadd.f32 %v6566, %v6578
    %v6580 = vpop.f32.mrf.mxu0
    %6581 = vdwg.mxu0
    %6582 = vmatpush.bf16.msra.mxu0 %v4893
    %6583 = vmatpush.bf16.msra.mxu0 %v4885
    %6584 = vmatpush.bf16.msra.mxu0 %v4877
    %6585 = vmatpush.bf16.msra.mxu0 %v4869
    %6586 = vmatpush.bf16.msra.mxu0 %v4861
    %6587 = vmatpush.bf16.msra.mxu0 %v4853
    %6588 = vmatpush.bf16.msra.mxu0 %v4845
    %6589 = vmatpush.bf16.msra.mxu0 %v4837
    %6590 = vmatmul.bf16.gmra.mxu0 %v76
    %v6591 = vpop.f32.mrf.mxu0
    %v6592 = vadd.f32 %v6579, %v6591
    %v6593 = vpop.f32.mrf.mxu0
    %6594 = vdwg.mxu0
    %6595 = vmatpush.bf16.msra.mxu0 %v4957
    %6596 = vmatpush.bf16.msra.mxu0 %v4949
    %6597 = vmatpush.bf16.msra.mxu0 %v4941
    %6598 = vmatpush.bf16.msra.mxu0 %v4933
    %6599 = vmatpush.bf16.msra.mxu0 %v4925
    %6600 = vmatpush.bf16.msra.mxu0 %v4917
    %6601 = vmatpush.bf16.msra.mxu0 %v4909
    %6602 = vmatpush.bf16.msra.mxu0 %v4901
    %6603 = vmatmul.bf16.gmra.mxu0 %v77
    %v6604 = vpop.f32.mrf.mxu0
    %v6605 = vadd.f32 %v6592, %v6604
    %v6606 = vpop.f32.mrf.mxu0
    %6607 = vdwg.mxu0
    %6608 = vmatpush.bf16.msra.mxu0 %v5021
    %6609 = vmatpush.bf16.msra.mxu0 %v5013
    %6610 = vmatpush.bf16.msra.mxu0 %v5005
    %6611 = vmatpush.bf16.msra.mxu0 %v4997
    %6612 = vmatpush.bf16.msra.mxu0 %v4989
    %6613 = vmatpush.bf16.msra.mxu0 %v4981
    %6614 = vmatpush.bf16.msra.mxu0 %v4973
    %6615 = vmatpush.bf16.msra.mxu0 %v4965
    %6616 = vmatmul.bf16.gmra.mxu0 %v78
    %v6617 = vpop.f32.mrf.mxu0
    %v6618 = vadd.f32 %v6605, %v6617
    %v6619 = vpop.f32.mrf.mxu0
    %6620 = vdwg.mxu0
    %6621 = vmatpush.bf16.msra.mxu0 %v5085
    %6622 = vmatpush.bf16.msra.mxu0 %v5077
    %6623 = vmatpush.bf16.msra.mxu0 %v5069
    %6624 = vmatpush.bf16.msra.mxu0 %v5061
    %6625 = vmatpush.bf16.msra.mxu0 %v5053
    %6626 = vmatpush.bf16.msra.mxu0 %v5045
    %6627 = vmatpush.bf16.msra.mxu0 %v5037
    %6628 = vmatpush.bf16.msra.mxu0 %v5029
    %6629 = vmatmul.bf16.gmra.mxu0 %v79
    %v6630 = vpop.f32.mrf.mxu0
    %v6631 = vadd.f32 %v6618, %v6630
    %v6632 = vpop.f32.mrf.mxu0
    %6633 = vdwg.mxu0
    %6634 = vmatpush.bf16.msra.mxu0 %v5149
    %6635 = vmatpush.bf16.msra.mxu0 %v5141
    %6636 = vmatpush.bf16.msra.mxu0 %v5133
    %6637 = vmatpush.bf16.msra.mxu0 %v5125
    %6638 = vmatpush.bf16.msra.mxu0 %v5117
    %6639 = vmatpush.bf16.msra.mxu0 %v5109
    %6640 = vmatpush.bf16.msra.mxu0 %v5101
    %6641 = vmatpush.bf16.msra.mxu0 %v5093
    %6642 = vmatmul.bf16.gmra.mxu0 %v80
    %v6643 = vpop.f32.mrf.mxu0
    %v6644 = vadd.f32 %v6631, %v6643
    %v6645 = vpop.f32.mrf.mxu0
    %6646 = vdwg.mxu0
    %6647 = vmatpush.bf16.msra.mxu0 %v5213
    %6648 = vmatpush.bf16.msra.mxu0 %v5205
    %6649 = vmatpush.bf16.msra.mxu0 %v5197
    %6650 = vmatpush.bf16.msra.mxu0 %v5189
    %6651 = vmatpush.bf16.msra.mxu0 %v5181
    %6652 = vmatpush.bf16.msra.mxu0 %v5173
    %6653 = vmatpush.bf16.msra.mxu0 %v5165
    %6654 = vmatpush.bf16.msra.mxu0 %v5157
    %6655 = vmatmul.bf16.gmra.mxu0 %v81
    %v6656 = vpop.f32.mrf.mxu0
    %v6657 = vadd.f32 %v6644, %v6656
    %v6658 = vpop.f32.mrf.mxu0
    %6659 = vdwg.mxu0
    %6660 = vmatpush.bf16.msra.mxu0 %v4254
    %6661 = vmatpush.bf16.msra.mxu0 %v4246
    %6662 = vmatpush.bf16.msra.mxu0 %v4238
    %6663 = vmatpush.bf16.msra.mxu0 %v4230
    %6664 = vmatpush.bf16.msra.mxu0 %v4222
    %6665 = vmatpush.bf16.msra.mxu0 %v4214
    %6666 = vmatpush.bf16.msra.mxu0 %v4206
    %6667 = vmatpush.bf16.msra.mxu0 %v4198
    %6668 = vmatmul.bf16.gmra.mxu0 %v66
    %v6669 = vpop.f32.mrf.mxu0
    %v6670 = vadd.f32 %v1110, %v6669
    %v6671 = vpop.f32.mrf.mxu0
    %6672 = vdwg.mxu0
    %6673 = vmatpush.bf16.msra.mxu0 %v4318
    %6674 = vmatpush.bf16.msra.mxu0 %v4310
    %6675 = vmatpush.bf16.msra.mxu0 %v4302
    %6676 = vmatpush.bf16.msra.mxu0 %v4294
    %6677 = vmatpush.bf16.msra.mxu0 %v4286
    %6678 = vmatpush.bf16.msra.mxu0 %v4278
    %6679 = vmatpush.bf16.msra.mxu0 %v4270
    %6680 = vmatpush.bf16.msra.mxu0 %v4262
    %6681 = vmatmul.bf16.gmra.mxu0 %v67
    %v6682 = vpop.f32.mrf.mxu0
    %v6683 = vadd.f32 %v6670, %v6682
    %v6684 = vpop.f32.mrf.mxu0
    %6685 = vdwg.mxu0
    %6686 = vmatpush.bf16.msra.mxu0 %v4382
    %6687 = vmatpush.bf16.msra.mxu0 %v4374
    %6688 = vmatpush.bf16.msra.mxu0 %v4366
    %6689 = vmatpush.bf16.msra.mxu0 %v4358
    %6690 = vmatpush.bf16.msra.mxu0 %v4350
    %6691 = vmatpush.bf16.msra.mxu0 %v4342
    %6692 = vmatpush.bf16.msra.mxu0 %v4334
    %6693 = vmatpush.bf16.msra.mxu0 %v4326
    %6694 = vmatmul.bf16.gmra.mxu0 %v68
    %v6695 = vpop.f32.mrf.mxu0
    %v6696 = vadd.f32 %v6683, %v6695
    %v6697 = vpop.f32.mrf.mxu0
    %6698 = vdwg.mxu0
    %6699 = vmatpush.bf16.msra.mxu0 %v4446
    %6700 = vmatpush.bf16.msra.mxu0 %v4438
    %6701 = vmatpush.bf16.msra.mxu0 %v4430
    %6702 = vmatpush.bf16.msra.mxu0 %v4422
    %6703 = vmatpush.bf16.msra.mxu0 %v4414
    %6704 = vmatpush.bf16.msra.mxu0 %v4406
    %6705 = vmatpush.bf16.msra.mxu0 %v4398
    %6706 = vmatpush.bf16.msra.mxu0 %v4390
    %6707 = vmatmul.bf16.gmra.mxu0 %v69
    %v6708 = vpop.f32.mrf.mxu0
    %v6709 = vadd.f32 %v6696, %v6708
    %v6710 = vpop.f32.mrf.mxu0
    %6711 = vdwg.mxu0
    %6712 = vmatpush.bf16.msra.mxu0 %v4510
    %6713 = vmatpush.bf16.msra.mxu0 %v4502
    %6714 = vmatpush.bf16.msra.mxu0 %v4494
    %6715 = vmatpush.bf16.msra.mxu0 %v4486
    %6716 = vmatpush.bf16.msra.mxu0 %v4478
    %6717 = vmatpush.bf16.msra.mxu0 %v4470
    %6718 = vmatpush.bf16.msra.mxu0 %v4462
    %6719 = vmatpush.bf16.msra.mxu0 %v4454
    %6720 = vmatmul.bf16.gmra.mxu0 %v70
    %v6721 = vpop.f32.mrf.mxu0
    %v6722 = vadd.f32 %v6709, %v6721
    %v6723 = vpop.f32.mrf.mxu0
    %6724 = vdwg.mxu0
    %6725 = vmatpush.bf16.msra.mxu0 %v4574
    %6726 = vmatpush.bf16.msra.mxu0 %v4566
    %6727 = vmatpush.bf16.msra.mxu0 %v4558
    %6728 = vmatpush.bf16.msra.mxu0 %v4550
    %6729 = vmatpush.bf16.msra.mxu0 %v4542
    %6730 = vmatpush.bf16.msra.mxu0 %v4534
    %6731 = vmatpush.bf16.msra.mxu0 %v4526
    %6732 = vmatpush.bf16.msra.mxu0 %v4518
    %6733 = vmatmul.bf16.gmra.mxu0 %v71
    %v6734 = vpop.f32.mrf.mxu0
    %v6735 = vadd.f32 %v6722, %v6734
    %v6736 = vpop.f32.mrf.mxu0
    %6737 = vdwg.mxu0
    %6738 = vmatpush.bf16.msra.mxu0 %v4638
    %6739 = vmatpush.bf16.msra.mxu0 %v4630
    %6740 = vmatpush.bf16.msra.mxu0 %v4622
    %6741 = vmatpush.bf16.msra.mxu0 %v4614
    %6742 = vmatpush.bf16.msra.mxu0 %v4606
    %6743 = vmatpush.bf16.msra.mxu0 %v4598
    %6744 = vmatpush.bf16.msra.mxu0 %v4590
    %6745 = vmatpush.bf16.msra.mxu0 %v4582
    %6746 = vmatmul.bf16.gmra.mxu0 %v72
    %v6747 = vpop.f32.mrf.mxu0
    %v6748 = vadd.f32 %v6735, %v6747
    %v6749 = vpop.f32.mrf.mxu0
    %6750 = vdwg.mxu0
    %6751 = vmatpush.bf16.msra.mxu0 %v4702
    %6752 = vmatpush.bf16.msra.mxu0 %v4694
    %6753 = vmatpush.bf16.msra.mxu0 %v4686
    %6754 = vmatpush.bf16.msra.mxu0 %v4678
    %6755 = vmatpush.bf16.msra.mxu0 %v4670
    %6756 = vmatpush.bf16.msra.mxu0 %v4662
    %6757 = vmatpush.bf16.msra.mxu0 %v4654
    %6758 = vmatpush.bf16.msra.mxu0 %v4646
    %6759 = vmatmul.bf16.gmra.mxu0 %v73
    %v6760 = vpop.f32.mrf.mxu0
    %v6761 = vadd.f32 %v6748, %v6760
    %v6762 = vpop.f32.mrf.mxu0
    %6763 = vdwg.mxu0
    %6764 = vmatpush.bf16.msra.mxu0 %v4766
    %6765 = vmatpush.bf16.msra.mxu0 %v4758
    %6766 = vmatpush.bf16.msra.mxu0 %v4750
    %6767 = vmatpush.bf16.msra.mxu0 %v4742
    %6768 = vmatpush.bf16.msra.mxu0 %v4734
    %6769 = vmatpush.bf16.msra.mxu0 %v4726
    %6770 = vmatpush.bf16.msra.mxu0 %v4718
    %6771 = vmatpush.bf16.msra.mxu0 %v4710
    %6772 = vmatmul.bf16.gmra.mxu0 %v74
    %v6773 = vpop.f32.mrf.mxu0
    %v6774 = vadd.f32 %v6761, %v6773
    %v6775 = vpop.f32.mrf.mxu0
    %6776 = vdwg.mxu0
    %6777 = vmatpush.bf16.msra.mxu0 %v4830
    %6778 = vmatpush.bf16.msra.mxu0 %v4822
    %6779 = vmatpush.bf16.msra.mxu0 %v4814
    %6780 = vmatpush.bf16.msra.mxu0 %v4806
    %6781 = vmatpush.bf16.msra.mxu0 %v4798
    %6782 = vmatpush.bf16.msra.mxu0 %v4790
    %6783 = vmatpush.bf16.msra.mxu0 %v4782
    %6784 = vmatpush.bf16.msra.mxu0 %v4774
    %6785 = vmatmul.bf16.gmra.mxu0 %v75
    %v6786 = vpop.f32.mrf.mxu0
    %v6787 = vadd.f32 %v6774, %v6786
    %v6788 = vpop.f32.mrf.mxu0
    %6789 = vdwg.mxu0
    %6790 = vmatpush.bf16.msra.mxu0 %v4894
    %6791 = vmatpush.bf16.msra.mxu0 %v4886
    %6792 = vmatpush.bf16.msra.mxu0 %v4878
    %6793 = vmatpush.bf16.msra.mxu0 %v4870
    %6794 = vmatpush.bf16.msra.mxu0 %v4862
    %6795 = vmatpush.bf16.msra.mxu0 %v4854
    %6796 = vmatpush.bf16.msra.mxu0 %v4846
    %6797 = vmatpush.bf16.msra.mxu0 %v4838
    %6798 = vmatmul.bf16.gmra.mxu0 %v76
    %v6799 = vpop.f32.mrf.mxu0
    %v6800 = vadd.f32 %v6787, %v6799
    %v6801 = vpop.f32.mrf.mxu0
    %6802 = vdwg.mxu0
    %6803 = vmatpush.bf16.msra.mxu0 %v4958
    %6804 = vmatpush.bf16.msra.mxu0 %v4950
    %6805 = vmatpush.bf16.msra.mxu0 %v4942
    %6806 = vmatpush.bf16.msra.mxu0 %v4934
    %6807 = vmatpush.bf16.msra.mxu0 %v4926
    %6808 = vmatpush.bf16.msra.mxu0 %v4918
    %6809 = vmatpush.bf16.msra.mxu0 %v4910
    %6810 = vmatpush.bf16.msra.mxu0 %v4902
    %6811 = vmatmul.bf16.gmra.mxu0 %v77
    %v6812 = vpop.f32.mrf.mxu0
    %v6813 = vadd.f32 %v6800, %v6812
    %v6814 = vpop.f32.mrf.mxu0
    %6815 = vdwg.mxu0
    %6816 = vmatpush.bf16.msra.mxu0 %v5022
    %6817 = vmatpush.bf16.msra.mxu0 %v5014
    %6818 = vmatpush.bf16.msra.mxu0 %v5006
    %6819 = vmatpush.bf16.msra.mxu0 %v4998
    %6820 = vmatpush.bf16.msra.mxu0 %v4990
    %6821 = vmatpush.bf16.msra.mxu0 %v4982
    %6822 = vmatpush.bf16.msra.mxu0 %v4974
    %6823 = vmatpush.bf16.msra.mxu0 %v4966
    %6824 = vmatmul.bf16.gmra.mxu0 %v78
    %v6825 = vpop.f32.mrf.mxu0
    %v6826 = vadd.f32 %v6813, %v6825
    %v6827 = vpop.f32.mrf.mxu0
    %6828 = vdwg.mxu0
    %6829 = vmatpush.bf16.msra.mxu0 %v5086
    %6830 = vmatpush.bf16.msra.mxu0 %v5078
    %6831 = vmatpush.bf16.msra.mxu0 %v5070
    %6832 = vmatpush.bf16.msra.mxu0 %v5062
    %6833 = vmatpush.bf16.msra.mxu0 %v5054
    %6834 = vmatpush.bf16.msra.mxu0 %v5046
    %6835 = vmatpush.bf16.msra.mxu0 %v5038
    %6836 = vmatpush.bf16.msra.mxu0 %v5030
    %6837 = vmatmul.bf16.gmra.mxu0 %v79
    %v6838 = vpop.f32.mrf.mxu0
    %v6839 = vadd.f32 %v6826, %v6838
    %v6840 = vpop.f32.mrf.mxu0
    %6841 = vdwg.mxu0
    %6842 = vmatpush.bf16.msra.mxu0 %v5150
    %6843 = vmatpush.bf16.msra.mxu0 %v5142
    %6844 = vmatpush.bf16.msra.mxu0 %v5134
    %6845 = vmatpush.bf16.msra.mxu0 %v5126
    %6846 = vmatpush.bf16.msra.mxu0 %v5118
    %6847 = vmatpush.bf16.msra.mxu0 %v5110
    %6848 = vmatpush.bf16.msra.mxu0 %v5102
    %6849 = vmatpush.bf16.msra.mxu0 %v5094
    %6850 = vmatmul.bf16.gmra.mxu0 %v80
    %v6851 = vpop.f32.mrf.mxu0
    %v6852 = vadd.f32 %v6839, %v6851
    %v6853 = vpop.f32.mrf.mxu0
    %6854 = vdwg.mxu0
    %6855 = vmatpush.bf16.msra.mxu0 %v5214
    %6856 = vmatpush.bf16.msra.mxu0 %v5206
    %6857 = vmatpush.bf16.msra.mxu0 %v5198
    %6858 = vmatpush.bf16.msra.mxu0 %v5190
    %6859 = vmatpush.bf16.msra.mxu0 %v5182
    %6860 = vmatpush.bf16.msra.mxu0 %v5174
    %6861 = vmatpush.bf16.msra.mxu0 %v5166
    %6862 = vmatpush.bf16.msra.mxu0 %v5158
    %6863 = vmatmul.bf16.gmra.mxu0 %v81
    %v6864 = vpop.f32.mrf.mxu0
    %v6865 = vadd.f32 %v6852, %v6864
    %v6866 = vpop.f32.mrf.mxu0
    %6867 = vdwg.mxu0
    %6868 = vmatpush.bf16.msra.mxu0 %v4255
    %6869 = vmatpush.bf16.msra.mxu0 %v4247
    %6870 = vmatpush.bf16.msra.mxu0 %v4239
    %6871 = vmatpush.bf16.msra.mxu0 %v4231
    %6872 = vmatpush.bf16.msra.mxu0 %v4223
    %6873 = vmatpush.bf16.msra.mxu0 %v4215
    %6874 = vmatpush.bf16.msra.mxu0 %v4207
    %6875 = vmatpush.bf16.msra.mxu0 %v4199
    %6876 = vmatmul.bf16.gmra.mxu0 %v66
    %v6877 = vpop.f32.mrf.mxu0
    %v6878 = vadd.f32 %v1111, %v6877
    %v6879 = vpop.f32.mrf.mxu0
    %6880 = vdwg.mxu0
    %6881 = vmatpush.bf16.msra.mxu0 %v4319
    %6882 = vmatpush.bf16.msra.mxu0 %v4311
    %6883 = vmatpush.bf16.msra.mxu0 %v4303
    %6884 = vmatpush.bf16.msra.mxu0 %v4295
    %6885 = vmatpush.bf16.msra.mxu0 %v4287
    %6886 = vmatpush.bf16.msra.mxu0 %v4279
    %6887 = vmatpush.bf16.msra.mxu0 %v4271
    %6888 = vmatpush.bf16.msra.mxu0 %v4263
    %6889 = vmatmul.bf16.gmra.mxu0 %v67
    %v6890 = vpop.f32.mrf.mxu0
    %v6891 = vadd.f32 %v6878, %v6890
    %v6892 = vpop.f32.mrf.mxu0
    %6893 = vdwg.mxu0
    %6894 = vmatpush.bf16.msra.mxu0 %v4383
    %6895 = vmatpush.bf16.msra.mxu0 %v4375
    %6896 = vmatpush.bf16.msra.mxu0 %v4367
    %6897 = vmatpush.bf16.msra.mxu0 %v4359
    %6898 = vmatpush.bf16.msra.mxu0 %v4351
    %6899 = vmatpush.bf16.msra.mxu0 %v4343
    %6900 = vmatpush.bf16.msra.mxu0 %v4335
    %6901 = vmatpush.bf16.msra.mxu0 %v4327
    %6902 = vmatmul.bf16.gmra.mxu0 %v68
    %v6903 = vpop.f32.mrf.mxu0
    %v6904 = vadd.f32 %v6891, %v6903
    %v6905 = vpop.f32.mrf.mxu0
    %6906 = vdwg.mxu0
    %6907 = vmatpush.bf16.msra.mxu0 %v4447
    %6908 = vmatpush.bf16.msra.mxu0 %v4439
    %6909 = vmatpush.bf16.msra.mxu0 %v4431
    %6910 = vmatpush.bf16.msra.mxu0 %v4423
    %6911 = vmatpush.bf16.msra.mxu0 %v4415
    %6912 = vmatpush.bf16.msra.mxu0 %v4407
    %6913 = vmatpush.bf16.msra.mxu0 %v4399
    %6914 = vmatpush.bf16.msra.mxu0 %v4391
    %6915 = vmatmul.bf16.gmra.mxu0 %v69
    %v6916 = vpop.f32.mrf.mxu0
    %v6917 = vadd.f32 %v6904, %v6916
    %v6918 = vpop.f32.mrf.mxu0
    %6919 = vdwg.mxu0
    %6920 = vmatpush.bf16.msra.mxu0 %v4511
    %6921 = vmatpush.bf16.msra.mxu0 %v4503
    %6922 = vmatpush.bf16.msra.mxu0 %v4495
    %6923 = vmatpush.bf16.msra.mxu0 %v4487
    %6924 = vmatpush.bf16.msra.mxu0 %v4479
    %6925 = vmatpush.bf16.msra.mxu0 %v4471
    %6926 = vmatpush.bf16.msra.mxu0 %v4463
    %6927 = vmatpush.bf16.msra.mxu0 %v4455
    %6928 = vmatmul.bf16.gmra.mxu0 %v70
    %v6929 = vpop.f32.mrf.mxu0
    %v6930 = vadd.f32 %v6917, %v6929
    %v6931 = vpop.f32.mrf.mxu0
    %6932 = vdwg.mxu0
    %6933 = vmatpush.bf16.msra.mxu0 %v4575
    %6934 = vmatpush.bf16.msra.mxu0 %v4567
    %6935 = vmatpush.bf16.msra.mxu0 %v4559
    %6936 = vmatpush.bf16.msra.mxu0 %v4551
    %6937 = vmatpush.bf16.msra.mxu0 %v4543
    %6938 = vmatpush.bf16.msra.mxu0 %v4535
    %6939 = vmatpush.bf16.msra.mxu0 %v4527
    %6940 = vmatpush.bf16.msra.mxu0 %v4519
    %6941 = vmatmul.bf16.gmra.mxu0 %v71
    %v6942 = vpop.f32.mrf.mxu0
    %v6943 = vadd.f32 %v6930, %v6942
    %v6944 = vpop.f32.mrf.mxu0
    %6945 = vdwg.mxu0
    %6946 = vmatpush.bf16.msra.mxu0 %v4639
    %6947 = vmatpush.bf16.msra.mxu0 %v4631
    %6948 = vmatpush.bf16.msra.mxu0 %v4623
    %6949 = vmatpush.bf16.msra.mxu0 %v4615
    %6950 = vmatpush.bf16.msra.mxu0 %v4607
    %6951 = vmatpush.bf16.msra.mxu0 %v4599
    %6952 = vmatpush.bf16.msra.mxu0 %v4591
    %6953 = vmatpush.bf16.msra.mxu0 %v4583
    %6954 = vmatmul.bf16.gmra.mxu0 %v72
    %v6955 = vpop.f32.mrf.mxu0
    %v6956 = vadd.f32 %v6943, %v6955
    %v6957 = vpop.f32.mrf.mxu0
    %6958 = vdwg.mxu0
    %6959 = vmatpush.bf16.msra.mxu0 %v4703
    %6960 = vmatpush.bf16.msra.mxu0 %v4695
    %6961 = vmatpush.bf16.msra.mxu0 %v4687
    %6962 = vmatpush.bf16.msra.mxu0 %v4679
    %6963 = vmatpush.bf16.msra.mxu0 %v4671
    %6964 = vmatpush.bf16.msra.mxu0 %v4663
    %6965 = vmatpush.bf16.msra.mxu0 %v4655
    %6966 = vmatpush.bf16.msra.mxu0 %v4647
    %6967 = vmatmul.bf16.gmra.mxu0 %v73
    %v6968 = vpop.f32.mrf.mxu0
    %v6969 = vadd.f32 %v6956, %v6968
    %v6970 = vpop.f32.mrf.mxu0
    %6971 = vdwg.mxu0
    %6972 = vmatpush.bf16.msra.mxu0 %v4767
    %6973 = vmatpush.bf16.msra.mxu0 %v4759
    %6974 = vmatpush.bf16.msra.mxu0 %v4751
    %6975 = vmatpush.bf16.msra.mxu0 %v4743
    %6976 = vmatpush.bf16.msra.mxu0 %v4735
    %6977 = vmatpush.bf16.msra.mxu0 %v4727
    %6978 = vmatpush.bf16.msra.mxu0 %v4719
    %6979 = vmatpush.bf16.msra.mxu0 %v4711
    %6980 = vmatmul.bf16.gmra.mxu0 %v74
    %v6981 = vpop.f32.mrf.mxu0
    %v6982 = vadd.f32 %v6969, %v6981
    %v6983 = vpop.f32.mrf.mxu0
    %6984 = vdwg.mxu0
    %6985 = vmatpush.bf16.msra.mxu0 %v4831
    %6986 = vmatpush.bf16.msra.mxu0 %v4823
    %6987 = vmatpush.bf16.msra.mxu0 %v4815
    %6988 = vmatpush.bf16.msra.mxu0 %v4807
    %6989 = vmatpush.bf16.msra.mxu0 %v4799
    %6990 = vmatpush.bf16.msra.mxu0 %v4791
    %6991 = vmatpush.bf16.msra.mxu0 %v4783
    %6992 = vmatpush.bf16.msra.mxu0 %v4775
    %6993 = vmatmul.bf16.gmra.mxu0 %v75
    %v6994 = vpop.f32.mrf.mxu0
    %v6995 = vadd.f32 %v6982, %v6994
    %v6996 = vpop.f32.mrf.mxu0
    %6997 = vdwg.mxu0
    %6998 = vmatpush.bf16.msra.mxu0 %v4895
    %6999 = vmatpush.bf16.msra.mxu0 %v4887
    %7000 = vmatpush.bf16.msra.mxu0 %v4879
    %7001 = vmatpush.bf16.msra.mxu0 %v4871
    %7002 = vmatpush.bf16.msra.mxu0 %v4863
    %7003 = vmatpush.bf16.msra.mxu0 %v4855
    %7004 = vmatpush.bf16.msra.mxu0 %v4847
    %7005 = vmatpush.bf16.msra.mxu0 %v4839
    %7006 = vmatmul.bf16.gmra.mxu0 %v76
    %v7007 = vpop.f32.mrf.mxu0
    %v7008 = vadd.f32 %v6995, %v7007
    %v7009 = vpop.f32.mrf.mxu0
    %7010 = vdwg.mxu0
    %7011 = vmatpush.bf16.msra.mxu0 %v4959
    %7012 = vmatpush.bf16.msra.mxu0 %v4951
    %7013 = vmatpush.bf16.msra.mxu0 %v4943
    %7014 = vmatpush.bf16.msra.mxu0 %v4935
    %7015 = vmatpush.bf16.msra.mxu0 %v4927
    %7016 = vmatpush.bf16.msra.mxu0 %v4919
    %7017 = vmatpush.bf16.msra.mxu0 %v4911
    %7018 = vmatpush.bf16.msra.mxu0 %v4903
    %7019 = vmatmul.bf16.gmra.mxu0 %v77
    %v7020 = vpop.f32.mrf.mxu0
    %v7021 = vadd.f32 %v7008, %v7020
    %v7022 = vpop.f32.mrf.mxu0
    %7023 = vdwg.mxu0
    %7024 = vmatpush.bf16.msra.mxu0 %v5023
    %7025 = vmatpush.bf16.msra.mxu0 %v5015
    %7026 = vmatpush.bf16.msra.mxu0 %v5007
    %7027 = vmatpush.bf16.msra.mxu0 %v4999
    %7028 = vmatpush.bf16.msra.mxu0 %v4991
    %7029 = vmatpush.bf16.msra.mxu0 %v4983
    %7030 = vmatpush.bf16.msra.mxu0 %v4975
    %7031 = vmatpush.bf16.msra.mxu0 %v4967
    %7032 = vmatmul.bf16.gmra.mxu0 %v78
    %v7033 = vpop.f32.mrf.mxu0
    %v7034 = vadd.f32 %v7021, %v7033
    %v7035 = vpop.f32.mrf.mxu0
    %7036 = vdwg.mxu0
    %7037 = vmatpush.bf16.msra.mxu0 %v5087
    %7038 = vmatpush.bf16.msra.mxu0 %v5079
    %7039 = vmatpush.bf16.msra.mxu0 %v5071
    %7040 = vmatpush.bf16.msra.mxu0 %v5063
    %7041 = vmatpush.bf16.msra.mxu0 %v5055
    %7042 = vmatpush.bf16.msra.mxu0 %v5047
    %7043 = vmatpush.bf16.msra.mxu0 %v5039
    %7044 = vmatpush.bf16.msra.mxu0 %v5031
    %7045 = vmatmul.bf16.gmra.mxu0 %v79
    %v7046 = vpop.f32.mrf.mxu0
    %v7047 = vadd.f32 %v7034, %v7046
    %v7048 = vpop.f32.mrf.mxu0
    %7049 = vdwg.mxu0
    %7050 = vmatpush.bf16.msra.mxu0 %v5151
    %7051 = vmatpush.bf16.msra.mxu0 %v5143
    %7052 = vmatpush.bf16.msra.mxu0 %v5135
    %7053 = vmatpush.bf16.msra.mxu0 %v5127
    %7054 = vmatpush.bf16.msra.mxu0 %v5119
    %7055 = vmatpush.bf16.msra.mxu0 %v5111
    %7056 = vmatpush.bf16.msra.mxu0 %v5103
    %7057 = vmatpush.bf16.msra.mxu0 %v5095
    %7058 = vmatmul.bf16.gmra.mxu0 %v80
    %v7059 = vpop.f32.mrf.mxu0
    %v7060 = vadd.f32 %v7047, %v7059
    %v7061 = vpop.f32.mrf.mxu0
    %7062 = vdwg.mxu0
    %7063 = vmatpush.bf16.msra.mxu0 %v5215
    %7064 = vmatpush.bf16.msra.mxu0 %v5207
    %7065 = vmatpush.bf16.msra.mxu0 %v5199
    %7066 = vmatpush.bf16.msra.mxu0 %v5191
    %7067 = vmatpush.bf16.msra.mxu0 %v5183
    %7068 = vmatpush.bf16.msra.mxu0 %v5175
    %7069 = vmatpush.bf16.msra.mxu0 %v5167
    %7070 = vmatpush.bf16.msra.mxu0 %v5159
    %7071 = vmatmul.bf16.gmra.mxu0 %v81
    %v7072 = vpop.f32.mrf.mxu0
    %v7073 = vadd.f32 %v7060, %v7072
    %v7074 = vpop.f32.mrf.mxu0
    %7075 = vdwg.mxu0
    %7076 = vmatpush.bf16.msra.mxu0 %v4256
    %7077 = vmatpush.bf16.msra.mxu0 %v4248
    %7078 = vmatpush.bf16.msra.mxu0 %v4240
    %7079 = vmatpush.bf16.msra.mxu0 %v4232
    %7080 = vmatpush.bf16.msra.mxu0 %v4224
    %7081 = vmatpush.bf16.msra.mxu0 %v4216
    %7082 = vmatpush.bf16.msra.mxu0 %v4208
    %7083 = vmatpush.bf16.msra.mxu0 %v4200
    %7084 = vmatmul.bf16.gmra.mxu0 %v66
    %v7085 = vpop.f32.mrf.mxu0
    %v7086 = vadd.f32 %v1112, %v7085
    %v7087 = vpop.f32.mrf.mxu0
    %7088 = vdwg.mxu0
    %7089 = vmatpush.bf16.msra.mxu0 %v4320
    %7090 = vmatpush.bf16.msra.mxu0 %v4312
    %7091 = vmatpush.bf16.msra.mxu0 %v4304
    %7092 = vmatpush.bf16.msra.mxu0 %v4296
    %7093 = vmatpush.bf16.msra.mxu0 %v4288
    %7094 = vmatpush.bf16.msra.mxu0 %v4280
    %7095 = vmatpush.bf16.msra.mxu0 %v4272
    %7096 = vmatpush.bf16.msra.mxu0 %v4264
    %7097 = vmatmul.bf16.gmra.mxu0 %v67
    %v7098 = vpop.f32.mrf.mxu0
    %v7099 = vadd.f32 %v7086, %v7098
    %v7100 = vpop.f32.mrf.mxu0
    %7101 = vdwg.mxu0
    %7102 = vmatpush.bf16.msra.mxu0 %v4384
    %7103 = vmatpush.bf16.msra.mxu0 %v4376
    %7104 = vmatpush.bf16.msra.mxu0 %v4368
    %7105 = vmatpush.bf16.msra.mxu0 %v4360
    %7106 = vmatpush.bf16.msra.mxu0 %v4352
    %7107 = vmatpush.bf16.msra.mxu0 %v4344
    %7108 = vmatpush.bf16.msra.mxu0 %v4336
    %7109 = vmatpush.bf16.msra.mxu0 %v4328
    %7110 = vmatmul.bf16.gmra.mxu0 %v68
    %v7111 = vpop.f32.mrf.mxu0
    %v7112 = vadd.f32 %v7099, %v7111
    %v7113 = vpop.f32.mrf.mxu0
    %7114 = vdwg.mxu0
    %7115 = vmatpush.bf16.msra.mxu0 %v4448
    %7116 = vmatpush.bf16.msra.mxu0 %v4440
    %7117 = vmatpush.bf16.msra.mxu0 %v4432
    %7118 = vmatpush.bf16.msra.mxu0 %v4424
    %7119 = vmatpush.bf16.msra.mxu0 %v4416
    %7120 = vmatpush.bf16.msra.mxu0 %v4408
    %7121 = vmatpush.bf16.msra.mxu0 %v4400
    %7122 = vmatpush.bf16.msra.mxu0 %v4392
    %7123 = vmatmul.bf16.gmra.mxu0 %v69
    %v7124 = vpop.f32.mrf.mxu0
    %v7125 = vadd.f32 %v7112, %v7124
    %v7126 = vpop.f32.mrf.mxu0
    %7127 = vdwg.mxu0
    %7128 = vmatpush.bf16.msra.mxu0 %v4512
    %7129 = vmatpush.bf16.msra.mxu0 %v4504
    %7130 = vmatpush.bf16.msra.mxu0 %v4496
    %7131 = vmatpush.bf16.msra.mxu0 %v4488
    %7132 = vmatpush.bf16.msra.mxu0 %v4480
    %7133 = vmatpush.bf16.msra.mxu0 %v4472
    %7134 = vmatpush.bf16.msra.mxu0 %v4464
    %7135 = vmatpush.bf16.msra.mxu0 %v4456
    %7136 = vmatmul.bf16.gmra.mxu0 %v70
    %v7137 = vpop.f32.mrf.mxu0
    %v7138 = vadd.f32 %v7125, %v7137
    %v7139 = vpop.f32.mrf.mxu0
    %7140 = vdwg.mxu0
    %7141 = vmatpush.bf16.msra.mxu0 %v4576
    %7142 = vmatpush.bf16.msra.mxu0 %v4568
    %7143 = vmatpush.bf16.msra.mxu0 %v4560
    %7144 = vmatpush.bf16.msra.mxu0 %v4552
    %7145 = vmatpush.bf16.msra.mxu0 %v4544
    %7146 = vmatpush.bf16.msra.mxu0 %v4536
    %7147 = vmatpush.bf16.msra.mxu0 %v4528
    %7148 = vmatpush.bf16.msra.mxu0 %v4520
    %7149 = vmatmul.bf16.gmra.mxu0 %v71
    %v7150 = vpop.f32.mrf.mxu0
    %v7151 = vadd.f32 %v7138, %v7150
    %v7152 = vpop.f32.mrf.mxu0
    %7153 = vdwg.mxu0
    %7154 = vmatpush.bf16.msra.mxu0 %v4640
    %7155 = vmatpush.bf16.msra.mxu0 %v4632
    %7156 = vmatpush.bf16.msra.mxu0 %v4624
    %7157 = vmatpush.bf16.msra.mxu0 %v4616
    %7158 = vmatpush.bf16.msra.mxu0 %v4608
    %7159 = vmatpush.bf16.msra.mxu0 %v4600
    %7160 = vmatpush.bf16.msra.mxu0 %v4592
    %7161 = vmatpush.bf16.msra.mxu0 %v4584
    %7162 = vmatmul.bf16.gmra.mxu0 %v72
    %v7163 = vpop.f32.mrf.mxu0
    %v7164 = vadd.f32 %v7151, %v7163
    %v7165 = vpop.f32.mrf.mxu0
    %7166 = vdwg.mxu0
    %7167 = vmatpush.bf16.msra.mxu0 %v4704
    %7168 = vmatpush.bf16.msra.mxu0 %v4696
    %7169 = vmatpush.bf16.msra.mxu0 %v4688
    %7170 = vmatpush.bf16.msra.mxu0 %v4680
    %7171 = vmatpush.bf16.msra.mxu0 %v4672
    %7172 = vmatpush.bf16.msra.mxu0 %v4664
    %7173 = vmatpush.bf16.msra.mxu0 %v4656
    %7174 = vmatpush.bf16.msra.mxu0 %v4648
    %7175 = vmatmul.bf16.gmra.mxu0 %v73
    %v7176 = vpop.f32.mrf.mxu0
    %v7177 = vadd.f32 %v7164, %v7176
    %v7178 = vpop.f32.mrf.mxu0
    %7179 = vdwg.mxu0
    %7180 = vmatpush.bf16.msra.mxu0 %v4768
    %7181 = vmatpush.bf16.msra.mxu0 %v4760
    %7182 = vmatpush.bf16.msra.mxu0 %v4752
    %7183 = vmatpush.bf16.msra.mxu0 %v4744
    %7184 = vmatpush.bf16.msra.mxu0 %v4736
    %7185 = vmatpush.bf16.msra.mxu0 %v4728
    %7186 = vmatpush.bf16.msra.mxu0 %v4720
    %7187 = vmatpush.bf16.msra.mxu0 %v4712
    %7188 = vmatmul.bf16.gmra.mxu0 %v74
    %v7189 = vpop.f32.mrf.mxu0
    %v7190 = vadd.f32 %v7177, %v7189
    %v7191 = vpop.f32.mrf.mxu0
    %7192 = vdwg.mxu0
    %7193 = vmatpush.bf16.msra.mxu0 %v4832
    %7194 = vmatpush.bf16.msra.mxu0 %v4824
    %7195 = vmatpush.bf16.msra.mxu0 %v4816
    %7196 = vmatpush.bf16.msra.mxu0 %v4808
    %7197 = vmatpush.bf16.msra.mxu0 %v4800
    %7198 = vmatpush.bf16.msra.mxu0 %v4792
    %7199 = vmatpush.bf16.msra.mxu0 %v4784
    %7200 = vmatpush.bf16.msra.mxu0 %v4776
    %7201 = vmatmul.bf16.gmra.mxu0 %v75
    %v7202 = vpop.f32.mrf.mxu0
    %v7203 = vadd.f32 %v7190, %v7202
    %v7204 = vpop.f32.mrf.mxu0
    %7205 = vdwg.mxu0
    %7206 = vmatpush.bf16.msra.mxu0 %v4896
    %7207 = vmatpush.bf16.msra.mxu0 %v4888
    %7208 = vmatpush.bf16.msra.mxu0 %v4880
    %7209 = vmatpush.bf16.msra.mxu0 %v4872
    %7210 = vmatpush.bf16.msra.mxu0 %v4864
    %7211 = vmatpush.bf16.msra.mxu0 %v4856
    %7212 = vmatpush.bf16.msra.mxu0 %v4848
    %7213 = vmatpush.bf16.msra.mxu0 %v4840
    %7214 = vmatmul.bf16.gmra.mxu0 %v76
    %v7215 = vpop.f32.mrf.mxu0
    %v7216 = vadd.f32 %v7203, %v7215
    %v7217 = vpop.f32.mrf.mxu0
    %7218 = vdwg.mxu0
    %7219 = vmatpush.bf16.msra.mxu0 %v4960
    %7220 = vmatpush.bf16.msra.mxu0 %v4952
    %7221 = vmatpush.bf16.msra.mxu0 %v4944
    %7222 = vmatpush.bf16.msra.mxu0 %v4936
    %7223 = vmatpush.bf16.msra.mxu0 %v4928
    %7224 = vmatpush.bf16.msra.mxu0 %v4920
    %7225 = vmatpush.bf16.msra.mxu0 %v4912
    %7226 = vmatpush.bf16.msra.mxu0 %v4904
    %7227 = vmatmul.bf16.gmra.mxu0 %v77
    %v7228 = vpop.f32.mrf.mxu0
    %v7229 = vadd.f32 %v7216, %v7228
    %v7230 = vpop.f32.mrf.mxu0
    %7231 = vdwg.mxu0
    %7232 = vmatpush.bf16.msra.mxu0 %v5024
    %7233 = vmatpush.bf16.msra.mxu0 %v5016
    %7234 = vmatpush.bf16.msra.mxu0 %v5008
    %7235 = vmatpush.bf16.msra.mxu0 %v5000
    %7236 = vmatpush.bf16.msra.mxu0 %v4992
    %7237 = vmatpush.bf16.msra.mxu0 %v4984
    %7238 = vmatpush.bf16.msra.mxu0 %v4976
    %7239 = vmatpush.bf16.msra.mxu0 %v4968
    %7240 = vmatmul.bf16.gmra.mxu0 %v78
    %v7241 = vpop.f32.mrf.mxu0
    %v7242 = vadd.f32 %v7229, %v7241
    %v7243 = vpop.f32.mrf.mxu0
    %7244 = vdwg.mxu0
    %7245 = vmatpush.bf16.msra.mxu0 %v5088
    %7246 = vmatpush.bf16.msra.mxu0 %v5080
    %7247 = vmatpush.bf16.msra.mxu0 %v5072
    %7248 = vmatpush.bf16.msra.mxu0 %v5064
    %7249 = vmatpush.bf16.msra.mxu0 %v5056
    %7250 = vmatpush.bf16.msra.mxu0 %v5048
    %7251 = vmatpush.bf16.msra.mxu0 %v5040
    %7252 = vmatpush.bf16.msra.mxu0 %v5032
    %7253 = vmatmul.bf16.gmra.mxu0 %v79
    %v7254 = vpop.f32.mrf.mxu0
    %v7255 = vadd.f32 %v7242, %v7254
    %v7256 = vpop.f32.mrf.mxu0
    %7257 = vdwg.mxu0
    %7258 = vmatpush.bf16.msra.mxu0 %v5152
    %7259 = vmatpush.bf16.msra.mxu0 %v5144
    %7260 = vmatpush.bf16.msra.mxu0 %v5136
    %7261 = vmatpush.bf16.msra.mxu0 %v5128
    %7262 = vmatpush.bf16.msra.mxu0 %v5120
    %7263 = vmatpush.bf16.msra.mxu0 %v5112
    %7264 = vmatpush.bf16.msra.mxu0 %v5104
    %7265 = vmatpush.bf16.msra.mxu0 %v5096
    %7266 = vmatmul.bf16.gmra.mxu0 %v80
    %v7267 = vpop.f32.mrf.mxu0
    %v7268 = vadd.f32 %v7255, %v7267
    %v7269 = vpop.f32.mrf.mxu0
    %7270 = vdwg.mxu0
    %7271 = vmatpush.bf16.msra.mxu0 %v5216
    %7272 = vmatpush.bf16.msra.mxu0 %v5208
    %7273 = vmatpush.bf16.msra.mxu0 %v5200
    %7274 = vmatpush.bf16.msra.mxu0 %v5192
    %7275 = vmatpush.bf16.msra.mxu0 %v5184
    %7276 = vmatpush.bf16.msra.mxu0 %v5176
    %7277 = vmatpush.bf16.msra.mxu0 %v5168
    %7278 = vmatpush.bf16.msra.mxu0 %v5160
    %7279 = vmatmul.bf16.gmra.mxu0 %v81
    %v7280 = vpop.f32.mrf.mxu0
    %v7281 = vadd.f32 %v7268, %v7280
    %v7282 = vpop.f32.mrf.mxu0
    %7283 = vdwg.mxu0
    %7284 = vmatpush.bf16.msra.mxu0 %v4257
    %7285 = vmatpush.bf16.msra.mxu0 %v4249
    %7286 = vmatpush.bf16.msra.mxu0 %v4241
    %7287 = vmatpush.bf16.msra.mxu0 %v4233
    %7288 = vmatpush.bf16.msra.mxu0 %v4225
    %7289 = vmatpush.bf16.msra.mxu0 %v4217
    %7290 = vmatpush.bf16.msra.mxu0 %v4209
    %7291 = vmatpush.bf16.msra.mxu0 %v4201
    %7292 = vmatmul.bf16.gmra.mxu0 %v66
    %v7293 = vpop.f32.mrf.mxu0
    %v7294 = vadd.f32 %v1113, %v7293
    %v7295 = vpop.f32.mrf.mxu0
    %7296 = vdwg.mxu0
    %7297 = vmatpush.bf16.msra.mxu0 %v4321
    %7298 = vmatpush.bf16.msra.mxu0 %v4313
    %7299 = vmatpush.bf16.msra.mxu0 %v4305
    %7300 = vmatpush.bf16.msra.mxu0 %v4297
    %7301 = vmatpush.bf16.msra.mxu0 %v4289
    %7302 = vmatpush.bf16.msra.mxu0 %v4281
    %7303 = vmatpush.bf16.msra.mxu0 %v4273
    %7304 = vmatpush.bf16.msra.mxu0 %v4265
    %7305 = vmatmul.bf16.gmra.mxu0 %v67
    %v7306 = vpop.f32.mrf.mxu0
    %v7307 = vadd.f32 %v7294, %v7306
    %v7308 = vpop.f32.mrf.mxu0
    %7309 = vdwg.mxu0
    %7310 = vmatpush.bf16.msra.mxu0 %v4385
    %7311 = vmatpush.bf16.msra.mxu0 %v4377
    %7312 = vmatpush.bf16.msra.mxu0 %v4369
    %7313 = vmatpush.bf16.msra.mxu0 %v4361
    %7314 = vmatpush.bf16.msra.mxu0 %v4353
    %7315 = vmatpush.bf16.msra.mxu0 %v4345
    %7316 = vmatpush.bf16.msra.mxu0 %v4337
    %7317 = vmatpush.bf16.msra.mxu0 %v4329
    %7318 = vmatmul.bf16.gmra.mxu0 %v68
    %v7319 = vpop.f32.mrf.mxu0
    %v7320 = vadd.f32 %v7307, %v7319
    %v7321 = vpop.f32.mrf.mxu0
    %7322 = vdwg.mxu0
    %7323 = vmatpush.bf16.msra.mxu0 %v4449
    %7324 = vmatpush.bf16.msra.mxu0 %v4441
    %7325 = vmatpush.bf16.msra.mxu0 %v4433
    %7326 = vmatpush.bf16.msra.mxu0 %v4425
    %7327 = vmatpush.bf16.msra.mxu0 %v4417
    %7328 = vmatpush.bf16.msra.mxu0 %v4409
    %7329 = vmatpush.bf16.msra.mxu0 %v4401
    %7330 = vmatpush.bf16.msra.mxu0 %v4393
    %7331 = vmatmul.bf16.gmra.mxu0 %v69
    %v7332 = vpop.f32.mrf.mxu0
    %v7333 = vadd.f32 %v7320, %v7332
    %v7334 = vpop.f32.mrf.mxu0
    %7335 = vdwg.mxu0
    %7336 = vmatpush.bf16.msra.mxu0 %v4513
    %7337 = vmatpush.bf16.msra.mxu0 %v4505
    %7338 = vmatpush.bf16.msra.mxu0 %v4497
    %7339 = vmatpush.bf16.msra.mxu0 %v4489
    %7340 = vmatpush.bf16.msra.mxu0 %v4481
    %7341 = vmatpush.bf16.msra.mxu0 %v4473
    %7342 = vmatpush.bf16.msra.mxu0 %v4465
    %7343 = vmatpush.bf16.msra.mxu0 %v4457
    %7344 = vmatmul.bf16.gmra.mxu0 %v70
    %v7345 = vpop.f32.mrf.mxu0
    %v7346 = vadd.f32 %v7333, %v7345
    %v7347 = vpop.f32.mrf.mxu0
    %7348 = vdwg.mxu0
    %7349 = vmatpush.bf16.msra.mxu0 %v4577
    %7350 = vmatpush.bf16.msra.mxu0 %v4569
    %7351 = vmatpush.bf16.msra.mxu0 %v4561
    %7352 = vmatpush.bf16.msra.mxu0 %v4553
    %7353 = vmatpush.bf16.msra.mxu0 %v4545
    %7354 = vmatpush.bf16.msra.mxu0 %v4537
    %7355 = vmatpush.bf16.msra.mxu0 %v4529
    %7356 = vmatpush.bf16.msra.mxu0 %v4521
    %7357 = vmatmul.bf16.gmra.mxu0 %v71
    %v7358 = vpop.f32.mrf.mxu0
    %v7359 = vadd.f32 %v7346, %v7358
    %v7360 = vpop.f32.mrf.mxu0
    %7361 = vdwg.mxu0
    %7362 = vmatpush.bf16.msra.mxu0 %v4641
    %7363 = vmatpush.bf16.msra.mxu0 %v4633
    %7364 = vmatpush.bf16.msra.mxu0 %v4625
    %7365 = vmatpush.bf16.msra.mxu0 %v4617
    %7366 = vmatpush.bf16.msra.mxu0 %v4609
    %7367 = vmatpush.bf16.msra.mxu0 %v4601
    %7368 = vmatpush.bf16.msra.mxu0 %v4593
    %7369 = vmatpush.bf16.msra.mxu0 %v4585
    %7370 = vmatmul.bf16.gmra.mxu0 %v72
    %v7371 = vpop.f32.mrf.mxu0
    %v7372 = vadd.f32 %v7359, %v7371
    %v7373 = vpop.f32.mrf.mxu0
    %7374 = vdwg.mxu0
    %7375 = vmatpush.bf16.msra.mxu0 %v4705
    %7376 = vmatpush.bf16.msra.mxu0 %v4697
    %7377 = vmatpush.bf16.msra.mxu0 %v4689
    %7378 = vmatpush.bf16.msra.mxu0 %v4681
    %7379 = vmatpush.bf16.msra.mxu0 %v4673
    %7380 = vmatpush.bf16.msra.mxu0 %v4665
    %7381 = vmatpush.bf16.msra.mxu0 %v4657
    %7382 = vmatpush.bf16.msra.mxu0 %v4649
    %7383 = vmatmul.bf16.gmra.mxu0 %v73
    %v7384 = vpop.f32.mrf.mxu0
    %v7385 = vadd.f32 %v7372, %v7384
    %v7386 = vpop.f32.mrf.mxu0
    %7387 = vdwg.mxu0
    %7388 = vmatpush.bf16.msra.mxu0 %v4769
    %7389 = vmatpush.bf16.msra.mxu0 %v4761
    %7390 = vmatpush.bf16.msra.mxu0 %v4753
    %7391 = vmatpush.bf16.msra.mxu0 %v4745
    %7392 = vmatpush.bf16.msra.mxu0 %v4737
    %7393 = vmatpush.bf16.msra.mxu0 %v4729
    %7394 = vmatpush.bf16.msra.mxu0 %v4721
    %7395 = vmatpush.bf16.msra.mxu0 %v4713
    %7396 = vmatmul.bf16.gmra.mxu0 %v74
    %v7397 = vpop.f32.mrf.mxu0
    %v7398 = vadd.f32 %v7385, %v7397
    %v7399 = vpop.f32.mrf.mxu0
    %7400 = vdwg.mxu0
    %7401 = vmatpush.bf16.msra.mxu0 %v4833
    %7402 = vmatpush.bf16.msra.mxu0 %v4825
    %7403 = vmatpush.bf16.msra.mxu0 %v4817
    %7404 = vmatpush.bf16.msra.mxu0 %v4809
    %7405 = vmatpush.bf16.msra.mxu0 %v4801
    %7406 = vmatpush.bf16.msra.mxu0 %v4793
    %7407 = vmatpush.bf16.msra.mxu0 %v4785
    %7408 = vmatpush.bf16.msra.mxu0 %v4777
    %7409 = vmatmul.bf16.gmra.mxu0 %v75
    %v7410 = vpop.f32.mrf.mxu0
    %v7411 = vadd.f32 %v7398, %v7410
    %v7412 = vpop.f32.mrf.mxu0
    %7413 = vdwg.mxu0
    %7414 = vmatpush.bf16.msra.mxu0 %v4897
    %7415 = vmatpush.bf16.msra.mxu0 %v4889
    %7416 = vmatpush.bf16.msra.mxu0 %v4881
    %7417 = vmatpush.bf16.msra.mxu0 %v4873
    %7418 = vmatpush.bf16.msra.mxu0 %v4865
    %7419 = vmatpush.bf16.msra.mxu0 %v4857
    %7420 = vmatpush.bf16.msra.mxu0 %v4849
    %7421 = vmatpush.bf16.msra.mxu0 %v4841
    %7422 = vmatmul.bf16.gmra.mxu0 %v76
    %v7423 = vpop.f32.mrf.mxu0
    %v7424 = vadd.f32 %v7411, %v7423
    %v7425 = vpop.f32.mrf.mxu0
    %7426 = vdwg.mxu0
    %7427 = vmatpush.bf16.msra.mxu0 %v4961
    %7428 = vmatpush.bf16.msra.mxu0 %v4953
    %7429 = vmatpush.bf16.msra.mxu0 %v4945
    %7430 = vmatpush.bf16.msra.mxu0 %v4937
    %7431 = vmatpush.bf16.msra.mxu0 %v4929
    %7432 = vmatpush.bf16.msra.mxu0 %v4921
    %7433 = vmatpush.bf16.msra.mxu0 %v4913
    %7434 = vmatpush.bf16.msra.mxu0 %v4905
    %7435 = vmatmul.bf16.gmra.mxu0 %v77
    %v7436 = vpop.f32.mrf.mxu0
    %v7437 = vadd.f32 %v7424, %v7436
    %v7438 = vpop.f32.mrf.mxu0
    %7439 = vdwg.mxu0
    %7440 = vmatpush.bf16.msra.mxu0 %v5025
    %7441 = vmatpush.bf16.msra.mxu0 %v5017
    %7442 = vmatpush.bf16.msra.mxu0 %v5009
    %7443 = vmatpush.bf16.msra.mxu0 %v5001
    %7444 = vmatpush.bf16.msra.mxu0 %v4993
    %7445 = vmatpush.bf16.msra.mxu0 %v4985
    %7446 = vmatpush.bf16.msra.mxu0 %v4977
    %7447 = vmatpush.bf16.msra.mxu0 %v4969
    %7448 = vmatmul.bf16.gmra.mxu0 %v78
    %v7449 = vpop.f32.mrf.mxu0
    %v7450 = vadd.f32 %v7437, %v7449
    %v7451 = vpop.f32.mrf.mxu0
    %7452 = vdwg.mxu0
    %7453 = vmatpush.bf16.msra.mxu0 %v5089
    %7454 = vmatpush.bf16.msra.mxu0 %v5081
    %7455 = vmatpush.bf16.msra.mxu0 %v5073
    %7456 = vmatpush.bf16.msra.mxu0 %v5065
    %7457 = vmatpush.bf16.msra.mxu0 %v5057
    %7458 = vmatpush.bf16.msra.mxu0 %v5049
    %7459 = vmatpush.bf16.msra.mxu0 %v5041
    %7460 = vmatpush.bf16.msra.mxu0 %v5033
    %7461 = vmatmul.bf16.gmra.mxu0 %v79
    %v7462 = vpop.f32.mrf.mxu0
    %v7463 = vadd.f32 %v7450, %v7462
    %v7464 = vpop.f32.mrf.mxu0
    %7465 = vdwg.mxu0
    %7466 = vmatpush.bf16.msra.mxu0 %v5153
    %7467 = vmatpush.bf16.msra.mxu0 %v5145
    %7468 = vmatpush.bf16.msra.mxu0 %v5137
    %7469 = vmatpush.bf16.msra.mxu0 %v5129
    %7470 = vmatpush.bf16.msra.mxu0 %v5121
    %7471 = vmatpush.bf16.msra.mxu0 %v5113
    %7472 = vmatpush.bf16.msra.mxu0 %v5105
    %7473 = vmatpush.bf16.msra.mxu0 %v5097
    %7474 = vmatmul.bf16.gmra.mxu0 %v80
    %v7475 = vpop.f32.mrf.mxu0
    %v7476 = vadd.f32 %v7463, %v7475
    %v7477 = vpop.f32.mrf.mxu0
    %7478 = vdwg.mxu0
    %7479 = vmatpush.bf16.msra.mxu0 %v5217
    %7480 = vmatpush.bf16.msra.mxu0 %v5209
    %7481 = vmatpush.bf16.msra.mxu0 %v5201
    %7482 = vmatpush.bf16.msra.mxu0 %v5193
    %7483 = vmatpush.bf16.msra.mxu0 %v5185
    %7484 = vmatpush.bf16.msra.mxu0 %v5177
    %7485 = vmatpush.bf16.msra.mxu0 %v5169
    %7486 = vmatpush.bf16.msra.mxu0 %v5161
    %7487 = vmatmul.bf16.gmra.mxu0 %v81
    %v7488 = vpop.f32.mrf.mxu0
    %v7489 = vadd.f32 %v7476, %v7488
    %v7490 = vpop.f32.mrf.mxu0
    %7491 = vdwg.mxu0
    %7492 = vmatpush.bf16.msra.mxu0 %v4258
    %7493 = vmatpush.bf16.msra.mxu0 %v4250
    %7494 = vmatpush.bf16.msra.mxu0 %v4242
    %7495 = vmatpush.bf16.msra.mxu0 %v4234
    %7496 = vmatpush.bf16.msra.mxu0 %v4226
    %7497 = vmatpush.bf16.msra.mxu0 %v4218
    %7498 = vmatpush.bf16.msra.mxu0 %v4210
    %7499 = vmatpush.bf16.msra.mxu0 %v4202
    %7500 = vmatmul.bf16.gmra.mxu0 %v66
    %v7501 = vpop.f32.mrf.mxu0
    %v7502 = vadd.f32 %v1114, %v7501
    %v7503 = vpop.f32.mrf.mxu0
    %7504 = vdwg.mxu0
    %7505 = vmatpush.bf16.msra.mxu0 %v4322
    %7506 = vmatpush.bf16.msra.mxu0 %v4314
    %7507 = vmatpush.bf16.msra.mxu0 %v4306
    %7508 = vmatpush.bf16.msra.mxu0 %v4298
    %7509 = vmatpush.bf16.msra.mxu0 %v4290
    %7510 = vmatpush.bf16.msra.mxu0 %v4282
    %7511 = vmatpush.bf16.msra.mxu0 %v4274
    %7512 = vmatpush.bf16.msra.mxu0 %v4266
    %7513 = vmatmul.bf16.gmra.mxu0 %v67
    %v7514 = vpop.f32.mrf.mxu0
    %v7515 = vadd.f32 %v7502, %v7514
    %v7516 = vpop.f32.mrf.mxu0
    %7517 = vdwg.mxu0
    %7518 = vmatpush.bf16.msra.mxu0 %v4386
    %7519 = vmatpush.bf16.msra.mxu0 %v4378
    %7520 = vmatpush.bf16.msra.mxu0 %v4370
    %7521 = vmatpush.bf16.msra.mxu0 %v4362
    %7522 = vmatpush.bf16.msra.mxu0 %v4354
    %7523 = vmatpush.bf16.msra.mxu0 %v4346
    %7524 = vmatpush.bf16.msra.mxu0 %v4338
    %7525 = vmatpush.bf16.msra.mxu0 %v4330
    %7526 = vmatmul.bf16.gmra.mxu0 %v68
    %v7527 = vpop.f32.mrf.mxu0
    %v7528 = vadd.f32 %v7515, %v7527
    %v7529 = vpop.f32.mrf.mxu0
    %7530 = vdwg.mxu0
    %7531 = vmatpush.bf16.msra.mxu0 %v4450
    %7532 = vmatpush.bf16.msra.mxu0 %v4442
    %7533 = vmatpush.bf16.msra.mxu0 %v4434
    %7534 = vmatpush.bf16.msra.mxu0 %v4426
    %7535 = vmatpush.bf16.msra.mxu0 %v4418
    %7536 = vmatpush.bf16.msra.mxu0 %v4410
    %7537 = vmatpush.bf16.msra.mxu0 %v4402
    %7538 = vmatpush.bf16.msra.mxu0 %v4394
    %7539 = vmatmul.bf16.gmra.mxu0 %v69
    %v7540 = vpop.f32.mrf.mxu0
    %v7541 = vadd.f32 %v7528, %v7540
    %v7542 = vpop.f32.mrf.mxu0
    %7543 = vdwg.mxu0
    %7544 = vmatpush.bf16.msra.mxu0 %v4514
    %7545 = vmatpush.bf16.msra.mxu0 %v4506
    %7546 = vmatpush.bf16.msra.mxu0 %v4498
    %7547 = vmatpush.bf16.msra.mxu0 %v4490
    %7548 = vmatpush.bf16.msra.mxu0 %v4482
    %7549 = vmatpush.bf16.msra.mxu0 %v4474
    %7550 = vmatpush.bf16.msra.mxu0 %v4466
    %7551 = vmatpush.bf16.msra.mxu0 %v4458
    %7552 = vmatmul.bf16.gmra.mxu0 %v70
    %v7553 = vpop.f32.mrf.mxu0
    %v7554 = vadd.f32 %v7541, %v7553
    %v7555 = vpop.f32.mrf.mxu0
    %7556 = vdwg.mxu0
    %7557 = vmatpush.bf16.msra.mxu0 %v4578
    %7558 = vmatpush.bf16.msra.mxu0 %v4570
    %7559 = vmatpush.bf16.msra.mxu0 %v4562
    %7560 = vmatpush.bf16.msra.mxu0 %v4554
    %7561 = vmatpush.bf16.msra.mxu0 %v4546
    %7562 = vmatpush.bf16.msra.mxu0 %v4538
    %7563 = vmatpush.bf16.msra.mxu0 %v4530
    %7564 = vmatpush.bf16.msra.mxu0 %v4522
    %7565 = vmatmul.bf16.gmra.mxu0 %v71
    %v7566 = vpop.f32.mrf.mxu0
    %v7567 = vadd.f32 %v7554, %v7566
    %v7568 = vpop.f32.mrf.mxu0
    %7569 = vdwg.mxu0
    %7570 = vmatpush.bf16.msra.mxu0 %v4642
    %7571 = vmatpush.bf16.msra.mxu0 %v4634
    %7572 = vmatpush.bf16.msra.mxu0 %v4626
    %7573 = vmatpush.bf16.msra.mxu0 %v4618
    %7574 = vmatpush.bf16.msra.mxu0 %v4610
    %7575 = vmatpush.bf16.msra.mxu0 %v4602
    %7576 = vmatpush.bf16.msra.mxu0 %v4594
    %7577 = vmatpush.bf16.msra.mxu0 %v4586
    %7578 = vmatmul.bf16.gmra.mxu0 %v72
    %v7579 = vpop.f32.mrf.mxu0
    %v7580 = vadd.f32 %v7567, %v7579
    %v7581 = vpop.f32.mrf.mxu0
    %7582 = vdwg.mxu0
    %7583 = vmatpush.bf16.msra.mxu0 %v4706
    %7584 = vmatpush.bf16.msra.mxu0 %v4698
    %7585 = vmatpush.bf16.msra.mxu0 %v4690
    %7586 = vmatpush.bf16.msra.mxu0 %v4682
    %7587 = vmatpush.bf16.msra.mxu0 %v4674
    %7588 = vmatpush.bf16.msra.mxu0 %v4666
    %7589 = vmatpush.bf16.msra.mxu0 %v4658
    %7590 = vmatpush.bf16.msra.mxu0 %v4650
    %7591 = vmatmul.bf16.gmra.mxu0 %v73
    %v7592 = vpop.f32.mrf.mxu0
    %v7593 = vadd.f32 %v7580, %v7592
    %v7594 = vpop.f32.mrf.mxu0
    %7595 = vdwg.mxu0
    %7596 = vmatpush.bf16.msra.mxu0 %v4770
    %7597 = vmatpush.bf16.msra.mxu0 %v4762
    %7598 = vmatpush.bf16.msra.mxu0 %v4754
    %7599 = vmatpush.bf16.msra.mxu0 %v4746
    %7600 = vmatpush.bf16.msra.mxu0 %v4738
    %7601 = vmatpush.bf16.msra.mxu0 %v4730
    %7602 = vmatpush.bf16.msra.mxu0 %v4722
    %7603 = vmatpush.bf16.msra.mxu0 %v4714
    %7604 = vmatmul.bf16.gmra.mxu0 %v74
    %v7605 = vpop.f32.mrf.mxu0
    %v7606 = vadd.f32 %v7593, %v7605
    %v7607 = vpop.f32.mrf.mxu0
    %7608 = vdwg.mxu0
    %7609 = vmatpush.bf16.msra.mxu0 %v4834
    %7610 = vmatpush.bf16.msra.mxu0 %v4826
    %7611 = vmatpush.bf16.msra.mxu0 %v4818
    %7612 = vmatpush.bf16.msra.mxu0 %v4810
    %7613 = vmatpush.bf16.msra.mxu0 %v4802
    %7614 = vmatpush.bf16.msra.mxu0 %v4794
    %7615 = vmatpush.bf16.msra.mxu0 %v4786
    %7616 = vmatpush.bf16.msra.mxu0 %v4778
    %7617 = vmatmul.bf16.gmra.mxu0 %v75
    %v7618 = vpop.f32.mrf.mxu0
    %v7619 = vadd.f32 %v7606, %v7618
    %v7620 = vpop.f32.mrf.mxu0
    %7621 = vdwg.mxu0
    %7622 = vmatpush.bf16.msra.mxu0 %v4898
    %7623 = vmatpush.bf16.msra.mxu0 %v4890
    %7624 = vmatpush.bf16.msra.mxu0 %v4882
    %7625 = vmatpush.bf16.msra.mxu0 %v4874
    %7626 = vmatpush.bf16.msra.mxu0 %v4866
    %7627 = vmatpush.bf16.msra.mxu0 %v4858
    %7628 = vmatpush.bf16.msra.mxu0 %v4850
    %7629 = vmatpush.bf16.msra.mxu0 %v4842
    %7630 = vmatmul.bf16.gmra.mxu0 %v76
    %v7631 = vpop.f32.mrf.mxu0
    %v7632 = vadd.f32 %v7619, %v7631
    %v7633 = vpop.f32.mrf.mxu0
    %7634 = vdwg.mxu0
    %7635 = vmatpush.bf16.msra.mxu0 %v4962
    %7636 = vmatpush.bf16.msra.mxu0 %v4954
    %7637 = vmatpush.bf16.msra.mxu0 %v4946
    %7638 = vmatpush.bf16.msra.mxu0 %v4938
    %7639 = vmatpush.bf16.msra.mxu0 %v4930
    %7640 = vmatpush.bf16.msra.mxu0 %v4922
    %7641 = vmatpush.bf16.msra.mxu0 %v4914
    %7642 = vmatpush.bf16.msra.mxu0 %v4906
    %7643 = vmatmul.bf16.gmra.mxu0 %v77
    %v7644 = vpop.f32.mrf.mxu0
    %v7645 = vadd.f32 %v7632, %v7644
    %v7646 = vpop.f32.mrf.mxu0
    %7647 = vdwg.mxu0
    %7648 = vmatpush.bf16.msra.mxu0 %v5026
    %7649 = vmatpush.bf16.msra.mxu0 %v5018
    %7650 = vmatpush.bf16.msra.mxu0 %v5010
    %7651 = vmatpush.bf16.msra.mxu0 %v5002
    %7652 = vmatpush.bf16.msra.mxu0 %v4994
    %7653 = vmatpush.bf16.msra.mxu0 %v4986
    %7654 = vmatpush.bf16.msra.mxu0 %v4978
    %7655 = vmatpush.bf16.msra.mxu0 %v4970
    %7656 = vmatmul.bf16.gmra.mxu0 %v78
    %v7657 = vpop.f32.mrf.mxu0
    %v7658 = vadd.f32 %v7645, %v7657
    %v7659 = vpop.f32.mrf.mxu0
    %7660 = vdwg.mxu0
    %7661 = vmatpush.bf16.msra.mxu0 %v5090
    %7662 = vmatpush.bf16.msra.mxu0 %v5082
    %7663 = vmatpush.bf16.msra.mxu0 %v5074
    %7664 = vmatpush.bf16.msra.mxu0 %v5066
    %7665 = vmatpush.bf16.msra.mxu0 %v5058
    %7666 = vmatpush.bf16.msra.mxu0 %v5050
    %7667 = vmatpush.bf16.msra.mxu0 %v5042
    %7668 = vmatpush.bf16.msra.mxu0 %v5034
    %7669 = vmatmul.bf16.gmra.mxu0 %v79
    %v7670 = vpop.f32.mrf.mxu0
    %v7671 = vadd.f32 %v7658, %v7670
    %v7672 = vpop.f32.mrf.mxu0
    %7673 = vdwg.mxu0
    %7674 = vmatpush.bf16.msra.mxu0 %v5154
    %7675 = vmatpush.bf16.msra.mxu0 %v5146
    %7676 = vmatpush.bf16.msra.mxu0 %v5138
    %7677 = vmatpush.bf16.msra.mxu0 %v5130
    %7678 = vmatpush.bf16.msra.mxu0 %v5122
    %7679 = vmatpush.bf16.msra.mxu0 %v5114
    %7680 = vmatpush.bf16.msra.mxu0 %v5106
    %7681 = vmatpush.bf16.msra.mxu0 %v5098
    %7682 = vmatmul.bf16.gmra.mxu0 %v80
    %v7683 = vpop.f32.mrf.mxu0
    %v7684 = vadd.f32 %v7671, %v7683
    %v7685 = vpop.f32.mrf.mxu0
    %7686 = vdwg.mxu0
    %7687 = vmatpush.bf16.msra.mxu0 %v5218
    %7688 = vmatpush.bf16.msra.mxu0 %v5210
    %7689 = vmatpush.bf16.msra.mxu0 %v5202
    %7690 = vmatpush.bf16.msra.mxu0 %v5194
    %7691 = vmatpush.bf16.msra.mxu0 %v5186
    %7692 = vmatpush.bf16.msra.mxu0 %v5178
    %7693 = vmatpush.bf16.msra.mxu0 %v5170
    %7694 = vmatpush.bf16.msra.mxu0 %v5162
    %7695 = vmatmul.bf16.gmra.mxu0 %v81
    %v7696 = vpop.f32.mrf.mxu0
    %v7697 = vadd.f32 %v7684, %v7696
    %v7698 = vpop.f32.mrf.mxu0
    %7699 = vdwg.mxu0
    %7700 = vmatpush.bf16.msra.mxu0 %v4259
    %7701 = vmatpush.bf16.msra.mxu0 %v4251
    %7702 = vmatpush.bf16.msra.mxu0 %v4243
    %7703 = vmatpush.bf16.msra.mxu0 %v4235
    %7704 = vmatpush.bf16.msra.mxu0 %v4227
    %7705 = vmatpush.bf16.msra.mxu0 %v4219
    %7706 = vmatpush.bf16.msra.mxu0 %v4211
    %7707 = vmatpush.bf16.msra.mxu0 %v4203
    %7708 = vmatmul.bf16.gmra.mxu0 %v66
    %v7709 = vpop.f32.mrf.mxu0
    %v7710 = vadd.f32 %v1115, %v7709
    %v7711 = vpop.f32.mrf.mxu0
    %7712 = vdwg.mxu0
    %7713 = vmatpush.bf16.msra.mxu0 %v4323
    %7714 = vmatpush.bf16.msra.mxu0 %v4315
    %7715 = vmatpush.bf16.msra.mxu0 %v4307
    %7716 = vmatpush.bf16.msra.mxu0 %v4299
    %7717 = vmatpush.bf16.msra.mxu0 %v4291
    %7718 = vmatpush.bf16.msra.mxu0 %v4283
    %7719 = vmatpush.bf16.msra.mxu0 %v4275
    %7720 = vmatpush.bf16.msra.mxu0 %v4267
    %7721 = vmatmul.bf16.gmra.mxu0 %v67
    %v7722 = vpop.f32.mrf.mxu0
    %v7723 = vadd.f32 %v7710, %v7722
    %v7724 = vpop.f32.mrf.mxu0
    %7725 = vdwg.mxu0
    %7726 = vmatpush.bf16.msra.mxu0 %v4387
    %7727 = vmatpush.bf16.msra.mxu0 %v4379
    %7728 = vmatpush.bf16.msra.mxu0 %v4371
    %7729 = vmatpush.bf16.msra.mxu0 %v4363
    %7730 = vmatpush.bf16.msra.mxu0 %v4355
    %7731 = vmatpush.bf16.msra.mxu0 %v4347
    %7732 = vmatpush.bf16.msra.mxu0 %v4339
    %7733 = vmatpush.bf16.msra.mxu0 %v4331
    %7734 = vmatmul.bf16.gmra.mxu0 %v68
    %v7735 = vpop.f32.mrf.mxu0
    %v7736 = vadd.f32 %v7723, %v7735
    %v7737 = vpop.f32.mrf.mxu0
    %7738 = vdwg.mxu0
    %7739 = vmatpush.bf16.msra.mxu0 %v4451
    %7740 = vmatpush.bf16.msra.mxu0 %v4443
    %7741 = vmatpush.bf16.msra.mxu0 %v4435
    %7742 = vmatpush.bf16.msra.mxu0 %v4427
    %7743 = vmatpush.bf16.msra.mxu0 %v4419
    %7744 = vmatpush.bf16.msra.mxu0 %v4411
    %7745 = vmatpush.bf16.msra.mxu0 %v4403
    %7746 = vmatpush.bf16.msra.mxu0 %v4395
    %7747 = vmatmul.bf16.gmra.mxu0 %v69
    %v7748 = vpop.f32.mrf.mxu0
    %v7749 = vadd.f32 %v7736, %v7748
    %v7750 = vpop.f32.mrf.mxu0
    %7751 = vdwg.mxu0
    %7752 = vmatpush.bf16.msra.mxu0 %v4515
    %7753 = vmatpush.bf16.msra.mxu0 %v4507
    %7754 = vmatpush.bf16.msra.mxu0 %v4499
    %7755 = vmatpush.bf16.msra.mxu0 %v4491
    %7756 = vmatpush.bf16.msra.mxu0 %v4483
    %7757 = vmatpush.bf16.msra.mxu0 %v4475
    %7758 = vmatpush.bf16.msra.mxu0 %v4467
    %7759 = vmatpush.bf16.msra.mxu0 %v4459
    %7760 = vmatmul.bf16.gmra.mxu0 %v70
    %v7761 = vpop.f32.mrf.mxu0
    %v7762 = vadd.f32 %v7749, %v7761
    %v7763 = vpop.f32.mrf.mxu0
    %7764 = vdwg.mxu0
    %7765 = vmatpush.bf16.msra.mxu0 %v4579
    %7766 = vmatpush.bf16.msra.mxu0 %v4571
    %7767 = vmatpush.bf16.msra.mxu0 %v4563
    %7768 = vmatpush.bf16.msra.mxu0 %v4555
    %7769 = vmatpush.bf16.msra.mxu0 %v4547
    %7770 = vmatpush.bf16.msra.mxu0 %v4539
    %7771 = vmatpush.bf16.msra.mxu0 %v4531
    %7772 = vmatpush.bf16.msra.mxu0 %v4523
    %7773 = vmatmul.bf16.gmra.mxu0 %v71
    %v7774 = vpop.f32.mrf.mxu0
    %v7775 = vadd.f32 %v7762, %v7774
    %v7776 = vpop.f32.mrf.mxu0
    %7777 = vdwg.mxu0
    %7778 = vmatpush.bf16.msra.mxu0 %v4643
    %7779 = vmatpush.bf16.msra.mxu0 %v4635
    %7780 = vmatpush.bf16.msra.mxu0 %v4627
    %7781 = vmatpush.bf16.msra.mxu0 %v4619
    %7782 = vmatpush.bf16.msra.mxu0 %v4611
    %7783 = vmatpush.bf16.msra.mxu0 %v4603
    %7784 = vmatpush.bf16.msra.mxu0 %v4595
    %7785 = vmatpush.bf16.msra.mxu0 %v4587
    %7786 = vmatmul.bf16.gmra.mxu0 %v72
    %v7787 = vpop.f32.mrf.mxu0
    %v7788 = vadd.f32 %v7775, %v7787
    %v7789 = vpop.f32.mrf.mxu0
    %7790 = vdwg.mxu0
    %7791 = vmatpush.bf16.msra.mxu0 %v4707
    %7792 = vmatpush.bf16.msra.mxu0 %v4699
    %7793 = vmatpush.bf16.msra.mxu0 %v4691
    %7794 = vmatpush.bf16.msra.mxu0 %v4683
    %7795 = vmatpush.bf16.msra.mxu0 %v4675
    %7796 = vmatpush.bf16.msra.mxu0 %v4667
    %7797 = vmatpush.bf16.msra.mxu0 %v4659
    %7798 = vmatpush.bf16.msra.mxu0 %v4651
    %7799 = vmatmul.bf16.gmra.mxu0 %v73
    %v7800 = vpop.f32.mrf.mxu0
    %v7801 = vadd.f32 %v7788, %v7800
    %v7802 = vpop.f32.mrf.mxu0
    %7803 = vdwg.mxu0
    %7804 = vmatpush.bf16.msra.mxu0 %v4771
    %7805 = vmatpush.bf16.msra.mxu0 %v4763
    %7806 = vmatpush.bf16.msra.mxu0 %v4755
    %7807 = vmatpush.bf16.msra.mxu0 %v4747
    %7808 = vmatpush.bf16.msra.mxu0 %v4739
    %7809 = vmatpush.bf16.msra.mxu0 %v4731
    %7810 = vmatpush.bf16.msra.mxu0 %v4723
    %7811 = vmatpush.bf16.msra.mxu0 %v4715
    %7812 = vmatmul.bf16.gmra.mxu0 %v74
    %v7813 = vpop.f32.mrf.mxu0
    %v7814 = vadd.f32 %v7801, %v7813
    %v7815 = vpop.f32.mrf.mxu0
    %7816 = vdwg.mxu0
    %7817 = vmatpush.bf16.msra.mxu0 %v4835
    %7818 = vmatpush.bf16.msra.mxu0 %v4827
    %7819 = vmatpush.bf16.msra.mxu0 %v4819
    %7820 = vmatpush.bf16.msra.mxu0 %v4811
    %7821 = vmatpush.bf16.msra.mxu0 %v4803
    %7822 = vmatpush.bf16.msra.mxu0 %v4795
    %7823 = vmatpush.bf16.msra.mxu0 %v4787
    %7824 = vmatpush.bf16.msra.mxu0 %v4779
    %7825 = vmatmul.bf16.gmra.mxu0 %v75
    %v7826 = vpop.f32.mrf.mxu0
    %v7827 = vadd.f32 %v7814, %v7826
    %v7828 = vpop.f32.mrf.mxu0
    %7829 = vdwg.mxu0
    %7830 = vmatpush.bf16.msra.mxu0 %v4899
    %7831 = vmatpush.bf16.msra.mxu0 %v4891
    %7832 = vmatpush.bf16.msra.mxu0 %v4883
    %7833 = vmatpush.bf16.msra.mxu0 %v4875
    %7834 = vmatpush.bf16.msra.mxu0 %v4867
    %7835 = vmatpush.bf16.msra.mxu0 %v4859
    %7836 = vmatpush.bf16.msra.mxu0 %v4851
    %7837 = vmatpush.bf16.msra.mxu0 %v4843
    %7838 = vmatmul.bf16.gmra.mxu0 %v76
    %v7839 = vpop.f32.mrf.mxu0
    %v7840 = vadd.f32 %v7827, %v7839
    %v7841 = vpop.f32.mrf.mxu0
    %7842 = vdwg.mxu0
    %7843 = vmatpush.bf16.msra.mxu0 %v4963
    %7844 = vmatpush.bf16.msra.mxu0 %v4955
    %7845 = vmatpush.bf16.msra.mxu0 %v4947
    %7846 = vmatpush.bf16.msra.mxu0 %v4939
    %7847 = vmatpush.bf16.msra.mxu0 %v4931
    %7848 = vmatpush.bf16.msra.mxu0 %v4923
    %7849 = vmatpush.bf16.msra.mxu0 %v4915
    %7850 = vmatpush.bf16.msra.mxu0 %v4907
    %7851 = vmatmul.bf16.gmra.mxu0 %v77
    %v7852 = vpop.f32.mrf.mxu0
    %v7853 = vadd.f32 %v7840, %v7852
    %v7854 = vpop.f32.mrf.mxu0
    %7855 = vdwg.mxu0
    %7856 = vmatpush.bf16.msra.mxu0 %v5027
    %7857 = vmatpush.bf16.msra.mxu0 %v5019
    %7858 = vmatpush.bf16.msra.mxu0 %v5011
    %7859 = vmatpush.bf16.msra.mxu0 %v5003
    %7860 = vmatpush.bf16.msra.mxu0 %v4995
    %7861 = vmatpush.bf16.msra.mxu0 %v4987
    %7862 = vmatpush.bf16.msra.mxu0 %v4979
    %7863 = vmatpush.bf16.msra.mxu0 %v4971
    %7864 = vmatmul.bf16.gmra.mxu0 %v78
    %v7865 = vpop.f32.mrf.mxu0
    %v7866 = vadd.f32 %v7853, %v7865
    %v7867 = vpop.f32.mrf.mxu0
    %7868 = vdwg.mxu0
    %7869 = vmatpush.bf16.msra.mxu0 %v5091
    %7870 = vmatpush.bf16.msra.mxu0 %v5083
    %7871 = vmatpush.bf16.msra.mxu0 %v5075
    %7872 = vmatpush.bf16.msra.mxu0 %v5067
    %7873 = vmatpush.bf16.msra.mxu0 %v5059
    %7874 = vmatpush.bf16.msra.mxu0 %v5051
    %7875 = vmatpush.bf16.msra.mxu0 %v5043
    %7876 = vmatpush.bf16.msra.mxu0 %v5035
    %7877 = vmatmul.bf16.gmra.mxu0 %v79
    %v7878 = vpop.f32.mrf.mxu0
    %v7879 = vadd.f32 %v7866, %v7878
    %v7880 = vpop.f32.mrf.mxu0
    %7881 = vdwg.mxu0
    %7882 = vmatpush.bf16.msra.mxu0 %v5155
    %7883 = vmatpush.bf16.msra.mxu0 %v5147
    %7884 = vmatpush.bf16.msra.mxu0 %v5139
    %7885 = vmatpush.bf16.msra.mxu0 %v5131
    %7886 = vmatpush.bf16.msra.mxu0 %v5123
    %7887 = vmatpush.bf16.msra.mxu0 %v5115
    %7888 = vmatpush.bf16.msra.mxu0 %v5107
    %7889 = vmatpush.bf16.msra.mxu0 %v5099
    %7890 = vmatmul.bf16.gmra.mxu0 %v80
    %v7891 = vpop.f32.mrf.mxu0
    %v7892 = vadd.f32 %v7879, %v7891
    %v7893 = vpop.f32.mrf.mxu0
    %7894 = vdwg.mxu0
    %7895 = vmatpush.bf16.msra.mxu0 %v5219
    %7896 = vmatpush.bf16.msra.mxu0 %v5211
    %7897 = vmatpush.bf16.msra.mxu0 %v5203
    %7898 = vmatpush.bf16.msra.mxu0 %v5195
    %7899 = vmatpush.bf16.msra.mxu0 %v5187
    %7900 = vmatpush.bf16.msra.mxu0 %v5179
    %7901 = vmatpush.bf16.msra.mxu0 %v5171
    %7902 = vmatpush.bf16.msra.mxu0 %v5163
    %7903 = vmatmul.bf16.gmra.mxu0 %v81
    %v7904 = vpop.f32.mrf.mxu0
    %v7905 = vadd.f32 %v7892, %v7904
    %v7906 = vpop.f32.mrf.mxu0
    %7907 = vdwg.mxu0
    %v7908 = vld [vmem:[%s3] sm:$0xff]
    %v7909 = vld [vmem:[%s3 + $0x8] sm:$0xff]
    %v7910 = vld [vmem:[%s3 + $0x10] sm:$0xff]
    %v7911 = vld [vmem:[%s3 + $0x18] sm:$0xff]
    %v7912 = vld [vmem:[%s3 + $0x20] sm:$0xff]
    %v7913 = vld [vmem:[%s3 + $0x28] sm:$0xff]
    %v7914 = vld [vmem:[%s3 + $0x30] sm:$0xff]
    %v7915 = vld [vmem:[%s3 + $0x38] sm:$0xff]
    %v7916 = vld [vmem:[%s3 + $0x40] sm:$0xff]
    %v7917 = vld [vmem:[%s3 + $0x48] sm:$0xff]
    %v7918 = vld [vmem:[%s3 + $0x50] sm:$0xff]
    %v7919 = vld [vmem:[%s3 + $0x58] sm:$0xff]
    %v7920 = vld [vmem:[%s3 + $0x60] sm:$0xff]
    %v7921 = vld [vmem:[%s3 + $0x68] sm:$0xff]
    %v7922 = vld [vmem:[%s3 + $0x70] sm:$0xff]
    %v7923 = vld [vmem:[%s3 + $0x78] sm:$0xff]
    %v7924 = vld [vmem:[%s3 + $0x80] sm:$0xff]
    %v7925 = vld [vmem:[%s3 + $0x88] sm:$0xff]
    %v7926 = vld [vmem:[%s3 + $0x90] sm:$0xff]
    %v7927 = vld [vmem:[%s3 + $0x98] sm:$0xff]
    %v7928 = vld [vmem:[%s3 + $0xa0] sm:$0xff]
    %v7929 = vld [vmem:[%s3 + $0xa8] sm:$0xff]
    %v7930 = vld [vmem:[%s3 + $0xb0] sm:$0xff]
    %v7931 = vld [vmem:[%s3 + $0xb8] sm:$0xff]
    %v7932 = vld [vmem:[%s3 + $0xc0] sm:$0xff]
    %v7933 = vld [vmem:[%s3 + $0xc8] sm:$0xff]
    %v7934 = vld [vmem:[%s3 + $0xd0] sm:$0xff]
    %v7935 = vld [vmem:[%s3 + $0xd8] sm:$0xff]
    %v7936 = vld [vmem:[%s3 + $0xe0] sm:$0xff]
    %v7937 = vld [vmem:[%s3 + $0xe8] sm:$0xff]
    %v7938 = vld [vmem:[%s3 + $0xf0] sm:$0xff]
    %v7939 = vld [vmem:[%s3 + $0xf8] sm:$0xff]
    %v7940 = vld [vmem:[%s3 + $0x100] sm:$0xff]
    %v7941 = vld [vmem:[%s3 + $0x108] sm:$0xff]
    %v7942 = vld [vmem:[%s3 + $0x110] sm:$0xff]
    %v7943 = vld [vmem:[%s3 + $0x118] sm:$0xff]
    %v7944 = vld [vmem:[%s3 + $0x120] sm:$0xff]
    %v7945 = vld [vmem:[%s3 + $0x128] sm:$0xff]
    %v7946 = vld [vmem:[%s3 + $0x130] sm:$0xff]
    %v7947 = vld [vmem:[%s3 + $0x138] sm:$0xff]
    %v7948 = vld [vmem:[%s3 + $0x140] sm:$0xff]
    %v7949 = vld [vmem:[%s3 + $0x148] sm:$0xff]
    %v7950 = vld [vmem:[%s3 + $0x150] sm:$0xff]
    %v7951 = vld [vmem:[%s3 + $0x158] sm:$0xff]
    %v7952 = vld [vmem:[%s3 + $0x160] sm:$0xff]
    %v7953 = vld [vmem:[%s3 + $0x168] sm:$0xff]
    %v7954 = vld [vmem:[%s3 + $0x170] sm:$0xff]
    %v7955 = vld [vmem:[%s3 + $0x178] sm:$0xff]
    %v7956 = vld [vmem:[%s3 + $0x180] sm:$0xff]
    %v7957 = vld [vmem:[%s3 + $0x188] sm:$0xff]
    %v7958 = vld [vmem:[%s3 + $0x190] sm:$0xff]
    %v7959 = vld [vmem:[%s3 + $0x198] sm:$0xff]
    %v7960 = vld [vmem:[%s3 + $0x1a0] sm:$0xff]
    %v7961 = vld [vmem:[%s3 + $0x1a8] sm:$0xff]
    %v7962 = vld [vmem:[%s3 + $0x1b0] sm:$0xff]
    %v7963 = vld [vmem:[%s3 + $0x1b8] sm:$0xff]
    %v7964 = vld [vmem:[%s3 + $0x1c0] sm:$0xff]
    %v7965 = vld [vmem:[%s3 + $0x1c8] sm:$0xff]
    %v7966 = vld [vmem:[%s3 + $0x1d0] sm:$0xff]
    %v7967 = vld [vmem:[%s3 + $0x1d8] sm:$0xff]
    %v7968 = vld [vmem:[%s3 + $0x1e0] sm:$0xff]
    %v7969 = vld [vmem:[%s3 + $0x1e8] sm:$0xff]
    %v7970 = vld [vmem:[%s3 + $0x1f0] sm:$0xff]
    %v7971 = vld [vmem:[%s3 + $0x1f8] sm:$0xff]
    %v7972 = vld [vmem:[%s3 + $0x200] sm:$0xff]
    %v7973 = vld [vmem:[%s3 + $0x208] sm:$0xff]
    %v7974 = vld [vmem:[%s3 + $0x210] sm:$0xff]
    %v7975 = vld [vmem:[%s3 + $0x218] sm:$0xff]
    %v7976 = vld [vmem:[%s3 + $0x220] sm:$0xff]
    %v7977 = vld [vmem:[%s3 + $0x228] sm:$0xff]
    %v7978 = vld [vmem:[%s3 + $0x230] sm:$0xff]
    %v7979 = vld [vmem:[%s3 + $0x238] sm:$0xff]
    %v7980 = vld [vmem:[%s3 + $0x240] sm:$0xff]
    %v7981 = vld [vmem:[%s3 + $0x248] sm:$0xff]
    %v7982 = vld [vmem:[%s3 + $0x250] sm:$0xff]
    %v7983 = vld [vmem:[%s3 + $0x258] sm:$0xff]
    %v7984 = vld [vmem:[%s3 + $0x260] sm:$0xff]
    %v7985 = vld [vmem:[%s3 + $0x268] sm:$0xff]
    %v7986 = vld [vmem:[%s3 + $0x270] sm:$0xff]
    %v7987 = vld [vmem:[%s3 + $0x278] sm:$0xff]
    %v7988 = vld [vmem:[%s3 + $0x280] sm:$0xff]
    %v7989 = vld [vmem:[%s3 + $0x288] sm:$0xff]
    %v7990 = vld [vmem:[%s3 + $0x290] sm:$0xff]
    %v7991 = vld [vmem:[%s3 + $0x298] sm:$0xff]
    %v7992 = vld [vmem:[%s3 + $0x2a0] sm:$0xff]
    %v7993 = vld [vmem:[%s3 + $0x2a8] sm:$0xff]
    %v7994 = vld [vmem:[%s3 + $0x2b0] sm:$0xff]
    %v7995 = vld [vmem:[%s3 + $0x2b8] sm:$0xff]
    %v7996 = vld [vmem:[%s3 + $0x2c0] sm:$0xff]
    %v7997 = vld [vmem:[%s3 + $0x2c8] sm:$0xff]
    %v7998 = vld [vmem:[%s3 + $0x2d0] sm:$0xff]
    %v7999 = vld [vmem:[%s3 + $0x2d8] sm:$0xff]
    %v8000 = vld [vmem:[%s3 + $0x2e0] sm:$0xff]
    %v8001 = vld [vmem:[%s3 + $0x2e8] sm:$0xff]
    %v8002 = vld [vmem:[%s3 + $0x2f0] sm:$0xff]
    %v8003 = vld [vmem:[%s3 + $0x2f8] sm:$0xff]
    %v8004 = vld [vmem:[%s3 + $0x300] sm:$0xff]
    %v8005 = vld [vmem:[%s3 + $0x308] sm:$0xff]
    %v8006 = vld [vmem:[%s3 + $0x310] sm:$0xff]
    %v8007 = vld [vmem:[%s3 + $0x318] sm:$0xff]
    %v8008 = vld [vmem:[%s3 + $0x320] sm:$0xff]
    %v8009 = vld [vmem:[%s3 + $0x328] sm:$0xff]
    %v8010 = vld [vmem:[%s3 + $0x330] sm:$0xff]
    %v8011 = vld [vmem:[%s3 + $0x338] sm:$0xff]
    %v8012 = vld [vmem:[%s3 + $0x340] sm:$0xff]
    %v8013 = vld [vmem:[%s3 + $0x348] sm:$0xff]
    %v8014 = vld [vmem:[%s3 + $0x350] sm:$0xff]
    %v8015 = vld [vmem:[%s3 + $0x358] sm:$0xff]
    %v8016 = vld [vmem:[%s3 + $0x360] sm:$0xff]
    %v8017 = vld [vmem:[%s3 + $0x368] sm:$0xff]
    %v8018 = vld [vmem:[%s3 + $0x370] sm:$0xff]
    %v8019 = vld [vmem:[%s3 + $0x378] sm:$0xff]
    %v8020 = vld [vmem:[%s3 + $0x380] sm:$0xff]
    %v8021 = vld [vmem:[%s3 + $0x388] sm:$0xff]
    %v8022 = vld [vmem:[%s3 + $0x390] sm:$0xff]
    %v8023 = vld [vmem:[%s3 + $0x398] sm:$0xff]
    %v8024 = vld [vmem:[%s3 + $0x3a0] sm:$0xff]
    %v8025 = vld [vmem:[%s3 + $0x3a8] sm:$0xff]
    %v8026 = vld [vmem:[%s3 + $0x3b0] sm:$0xff]
    %v8027 = vld [vmem:[%s3 + $0x3b8] sm:$0xff]
    %v8028 = vld [vmem:[%s3 + $0x3c0] sm:$0xff]
    %v8029 = vld [vmem:[%s3 + $0x3c8] sm:$0xff]
    %v8030 = vld [vmem:[%s3 + $0x3d0] sm:$0xff]
    %v8031 = vld [vmem:[%s3 + $0x3d8] sm:$0xff]
    %v8032 = vld [vmem:[%s3 + $0x3e0] sm:$0xff]
    %v8033 = vld [vmem:[%s3 + $0x3e8] sm:$0xff]
    %v8034 = vld [vmem:[%s3 + $0x3f0] sm:$0xff]
    %v8035 = vld [vmem:[%s3 + $0x3f8] sm:$0xff]
    %v8036 = vld [vmem:[%s4] sm:$0x1]
    %v8038 = vperm.slane %v8036, 0
    %8040 = vmatpush.msra.mxu0 %v7923
    %8041 = vmatpush.msra.mxu0 %v7922
    %8042 = vmatpush.msra.mxu0 %v7921
    %8043 = vmatpush.msra.mxu0 %v7920
    %8044 = vmatpush.msra.mxu0 %v7919
    %8045 = vmatpush.msra.mxu0 %v7918
    %8046 = vmatpush.msra.mxu0 %v7917
    %8047 = vmatpush.msra.mxu0 %v7916
    %8048 = vmatpush.msra.mxu0 %v7915
    %8049 = vmatpush.msra.mxu0 %v7914
    %8050 = vmatpush.msra.mxu0 %v7913
    %8051 = vmatpush.msra.mxu0 %v7912
    %8052 = vmatpush.msra.mxu0 %v7911
    %8053 = vmatpush.msra.mxu0 %v7910
    %8054 = vmatpush.msra.mxu0 %v7909
    %8055 = vmatpush.msra.mxu0 %v7908
    %8056 = vmatmul.f32.gmra.mxu0 %v6449
    %v8057 = vpop.f32.mrf.mxu0
    %v8058 = vadd.f32 %v8038, %v8057
    %8059 = vdwg.mxu0
    %8060 = vmatpush.msra.mxu0 %v7939
    %8061 = vmatpush.msra.mxu0 %v7938
    %8062 = vmatpush.msra.mxu0 %v7937
    %8063 = vmatpush.msra.mxu0 %v7936
    %8064 = vmatpush.msra.mxu0 %v7935
    %8065 = vmatpush.msra.mxu0 %v7934
    %8066 = vmatpush.msra.mxu0 %v7933
    %8067 = vmatpush.msra.mxu0 %v7932
    %8068 = vmatpush.msra.mxu0 %v7931
    %8069 = vmatpush.msra.mxu0 %v7930
    %8070 = vmatpush.msra.mxu0 %v7929
    %8071 = vmatpush.msra.mxu0 %v7928
    %8072 = vmatpush.msra.mxu0 %v7927
    %8073 = vmatpush.msra.mxu0 %v7926
    %8074 = vmatpush.msra.mxu0 %v7925
    %8075 = vmatpush.msra.mxu0 %v7924
    %8076 = vmatmul.f32.gmra.mxu0 %v6657
    %v8077 = vpop.f32.mrf.mxu0
    %v8078 = vadd.f32 %v8058, %v8077
    %8079 = vdwg.mxu0
    %8080 = vmatpush.msra.mxu0 %v7955
    %8081 = vmatpush.msra.mxu0 %v7954
    %8082 = vmatpush.msra.mxu0 %v7953
    %8083 = vmatpush.msra.mxu0 %v7952
    %8084 = vmatpush.msra.mxu0 %v7951
    %8085 = vmatpush.msra.mxu0 %v7950
    %8086 = vmatpush.msra.mxu0 %v7949
    %8087 = vmatpush.msra.mxu0 %v7948
    %8088 = vmatpush.msra.mxu0 %v7947
    %8089 = vmatpush.msra.mxu0 %v7946
    %8090 = vmatpush.msra.mxu0 %v7945
    %8091 = vmatpush.msra.mxu0 %v7944
    %8092 = vmatpush.msra.mxu0 %v7943
    %8093 = vmatpush.msra.mxu0 %v7942
    %8094 = vmatpush.msra.mxu0 %v7941
    %8095 = vmatpush.msra.mxu0 %v7940
    %8096 = vmatmul.f32.gmra.mxu0 %v6865
    %v8097 = vpop.f32.mrf.mxu0
    %v8098 = vadd.f32 %v8078, %v8097
    %8099 = vdwg.mxu0
    %8100 = vmatpush.msra.mxu0 %v7971
    %8101 = vmatpush.msra.mxu0 %v7970
    %8102 = vmatpush.msra.mxu0 %v7969
    %8103 = vmatpush.msra.mxu0 %v7968
    %8104 = vmatpush.msra.mxu0 %v7967
    %8105 = vmatpush.msra.mxu0 %v7966
    %8106 = vmatpush.msra.mxu0 %v7965
    %8107 = vmatpush.msra.mxu0 %v7964
    %8108 = vmatpush.msra.mxu0 %v7963
    %8109 = vmatpush.msra.mxu0 %v7962
    %8110 = vmatpush.msra.mxu0 %v7961
    %8111 = vmatpush.msra.mxu0 %v7960
    %8112 = vmatpush.msra.mxu0 %v7959
    %8113 = vmatpush.msra.mxu0 %v7958
    %8114 = vmatpush.msra.mxu0 %v7957
    %8115 = vmatpush.msra.mxu0 %v7956
    %8116 = vmatmul.f32.gmra.mxu0 %v7073
    %v8117 = vpop.f32.mrf.mxu0
    %v8118 = vadd.f32 %v8098, %v8117
    %8119 = vdwg.mxu0
    %8120 = vmatpush.msra.mxu0 %v7987
    %8121 = vmatpush.msra.mxu0 %v7986
    %8122 = vmatpush.msra.mxu0 %v7985
    %8123 = vmatpush.msra.mxu0 %v7984
    %8124 = vmatpush.msra.mxu0 %v7983
    %8125 = vmatpush.msra.mxu0 %v7982
    %8126 = vmatpush.msra.mxu0 %v7981
    %8127 = vmatpush.msra.mxu0 %v7980
    %8128 = vmatpush.msra.mxu0 %v7979
    %8129 = vmatpush.msra.mxu0 %v7978
    %8130 = vmatpush.msra.mxu0 %v7977
    %8131 = vmatpush.msra.mxu0 %v7976
    %8132 = vmatpush.msra.mxu0 %v7975
    %8133 = vmatpush.msra.mxu0 %v7974
    %8134 = vmatpush.msra.mxu0 %v7973
    %8135 = vmatpush.msra.mxu0 %v7972
    %8136 = vmatmul.f32.gmra.mxu0 %v7281
    %v8137 = vpop.f32.mrf.mxu0
    %v8138 = vadd.f32 %v8118, %v8137
    %8139 = vdwg.mxu0
    %8140 = vmatpush.msra.mxu0 %v8003
    %8141 = vmatpush.msra.mxu0 %v8002
    %8142 = vmatpush.msra.mxu0 %v8001
    %8143 = vmatpush.msra.mxu0 %v8000
    %8144 = vmatpush.msra.mxu0 %v7999
    %8145 = vmatpush.msra.mxu0 %v7998
    %8146 = vmatpush.msra.mxu0 %v7997
    %8147 = vmatpush.msra.mxu0 %v7996
    %8148 = vmatpush.msra.mxu0 %v7995
    %8149 = vmatpush.msra.mxu0 %v7994
    %8150 = vmatpush.msra.mxu0 %v7993
    %8151 = vmatpush.msra.mxu0 %v7992
    %8152 = vmatpush.msra.mxu0 %v7991
    %8153 = vmatpush.msra.mxu0 %v7990
    %8154 = vmatpush.msra.mxu0 %v7989
    %8155 = vmatpush.msra.mxu0 %v7988
    %8156 = vmatmul.f32.gmra.mxu0 %v7489
    %v8157 = vpop.f32.mrf.mxu0
    %v8158 = vadd.f32 %v8138, %v8157
    %8159 = vdwg.mxu0
    %8160 = vmatpush.msra.mxu0 %v8019
    %8161 = vmatpush.msra.mxu0 %v8018
    %8162 = vmatpush.msra.mxu0 %v8017
    %8163 = vmatpush.msra.mxu0 %v8016
    %8164 = vmatpush.msra.mxu0 %v8015
    %8165 = vmatpush.msra.mxu0 %v8014
    %8166 = vmatpush.msra.mxu0 %v8013
    %8167 = vmatpush.msra.mxu0 %v8012
    %8168 = vmatpush.msra.mxu0 %v8011
    %8169 = vmatpush.msra.mxu0 %v8010
    %8170 = vmatpush.msra.mxu0 %v8009
    %8171 = vmatpush.msra.mxu0 %v8008
    %8172 = vmatpush.msra.mxu0 %v8007
    %8173 = vmatpush.msra.mxu0 %v8006
    %8174 = vmatpush.msra.mxu0 %v8005
    %8175 = vmatpush.msra.mxu0 %v8004
    %8176 = vmatmul.f32.gmra.mxu0 %v7697
    %v8177 = vpop.f32.mrf.mxu0
    %v8178 = vadd.f32 %v8158, %v8177
    %8179 = vdwg.mxu0
    %8180 = vmatpush.msra.mxu0 %v8035
    %8181 = vmatpush.msra.mxu0 %v8034
    %8182 = vmatpush.msra.mxu0 %v8033
    %8183 = vmatpush.msra.mxu0 %v8032
    %8184 = vmatpush.msra.mxu0 %v8031
    %8185 = vmatpush.msra.mxu0 %v8030
    %8186 = vmatpush.msra.mxu0 %v8029
    %8187 = vmatpush.msra.mxu0 %v8028
    %8188 = vmatpush.msra.mxu0 %v8027
    %8189 = vmatpush.msra.mxu0 %v8026
    %8190 = vmatpush.msra.mxu0 %v8025
    %8191 = vmatpush.msra.mxu0 %v8024
    %8192 = vmatpush.msra.mxu0 %v8023
    %8193 = vmatpush.msra.mxu0 %v8022
    %8194 = vmatpush.msra.mxu0 %v8021
    %8195 = vmatpush.msra.mxu0 %v8020
    %8196 = vmatmul.f32.gmra.mxu0 %v7905
    %v8197 = vpop.f32.mrf.mxu0
    %v8198 = vadd.f32 %v8178, %v8197
    %8199 = vdwg.mxu0
    %vm8200 = vcmask 25600
    %8201 = vst.msk [vmem:[#allocation2] sm:$0x3] %vm8200, %v8198
    // Predicated region
    $region22: #{simple_cnn_forward.11} parent=1 // pred_check
      _
    $region23: #{simple_cnn_forward.11} parent=1 // pred_check_branch
      %8203 = sbr.rel (0) target = $region25
    $region24: #{simple_cnn_forward.11} parent=1 // pred_region
      %8205 = vsyncadd [#allocation3], 0
      %s8207 = sshll.u32 [#allocation2], 4
      %s8208 = int_to_ptr.vmem [resolvable:$true] %s8207
      %s8209 = sshll.u32 %s5, 4
      %s8210 = int_to_ptr.hbm [resolvable:$true] %s8209
      %8212 = dma.vmem_to_hbm [thread:$0]  %s8208, 32, %s8210, [#allocation3]
    $region25: #{simple_cnn_forward.11} parent=1 // pred_fallthru
      _
    // Predicated region
    $region26: #{simple_cnn_forward.11} parent=1 // pred_check
      _
    $region27: #{simple_cnn_forward.11} parent=1 // pred_check_branch
      %8214 = sbr.rel (0) target = $region29
    $region28: #{simple_cnn_forward.11} parent=1 // pred_region
      %8216 = dma.done [#allocation3], 32
    $region29: #{simple_cnn_forward.11} parent=1 // pred_fallthru
      _
    %8217 = vsyncpa [#allocation3], 1

</llo_original>
